<compile_context>
chip_gen: v7x
topology: tpu7x:2x2x1
jax: 0.10.0
libtpu: 0.0.40
codegen_flags: <defaults>
</compile_context>

<pallas_src>
import functools
import math

import jax
import jax.numpy as jnp
import numpy as np
from jax.experimental import pallas as pl
from jax.experimental.pallas import tpu as pltpu

EPS = 1e-5          # BatchNorm eps (PyTorch default)
NEG_SLOPE = 0.2     # LeakyReLU slope in conv_fuse
N_ATT_LAYERS = 4    # att_per_layer


# ----------------------------------------------------------------------------
# Kernel
# ----------------------------------------------------------------------------
def pct_kernel(x_ref, w1_ref, b1_ref, w2_ref, b2_ref,
               wq_ref, bq_ref, wk_ref, bk_ref, wv_ref, bv_ref,
               wo_ref, bo_ref, wf_ref, bf_ref, o_ref):
    B, TN, C_in = x_ref.shape
    E = w2_ref.shape[1]                 # 64
    F4 = bf_ref.shape[-1]               # 256
    n_layers = wq_ref.shape[0]          # 4
    BN = B * TN

    # ---- point-wise 1x1 convs (BN folded into weights/bias) + ReLU ----------
    x2 = x_ref[...].reshape(BN, C_in)                                   # bf16
    h = jnp.dot(x2, w1_ref[...], preferred_element_type=jnp.float32) + b1_ref[...]
    h = jnp.maximum(h, 0.0)
    h = jnp.dot(h.astype(jnp.bfloat16), w2_ref[...],
                preferred_element_type=jnp.float32) + b2_ref[...]
    h = jnp.maximum(h, 0.0)                                             # (BN, E)

    # single re-layout to point-major rows (row = n*B + b); every op below is a
    # plain (rows, features) matmul or a batched-over-points contraction.
    h_bf = jnp.transpose(h.astype(jnp.bfloat16).reshape(B, TN, E),
                         (1, 0, 2)).reshape(BN, E)

    # split-K accumulator for conv_fuse (cat of the 4 attention outputs).
    fused = jnp.zeros((BN, F4), jnp.float32)

    # ---- 4 x MultiheadAttention (seq = B, attention-batch = N, 1 head) ------
    for i in range(n_layers):
        # pre-split Q/K/V projections; 1/sqrt(E) folded into wq/bq host-side.
        q = (jnp.dot(h_bf, wq_ref[i], preferred_element_type=jnp.float32)
             + bq_ref[i]).astype(jnp.bfloat16).reshape(TN, B, E)
        k = (jnp.dot(h_bf, wk_ref[i], preferred_element_type=jnp.float32)
             + bk_ref[i]).astype(jnp.bfloat16).reshape(TN, B, E)
        v = (jnp.dot(h_bf, wv_ref[i], preferred_element_type=jnp.float32)
             + bv_ref[i]).astype(jnp.bfloat16).reshape(TN, B, E)

        # scores: batched over points, E-contraction on the MXU -> (TN, B, B)
        s = jnp.einsum('nle,nme->nlm', q, k,
                       preferred_element_type=jnp.float32)
        s = s - jnp.max(s, axis=-1, keepdims=True)
        p = jnp.exp(s)
        a = p / jnp.sum(p, axis=-1, keepdims=True)                      # softmax
        o = jnp.einsum('nlm,nme->nle', a.astype(jnp.bfloat16), v,
                       preferred_element_type=jnp.float32)              # (TN,B,E)

        # out-projection; output feeds the next layer and the split-K sum.
        o_proj = jnp.dot(o.astype(jnp.bfloat16).reshape(BN, E), wo_ref[i],
                         preferred_element_type=jnp.float32) + bo_ref[i]
        h_bf = o_proj.astype(jnp.bfloat16)
        fused = fused + jnp.dot(h_bf, wf_ref[i],
                                preferred_element_type=jnp.float32)

    # ---- conv_fuse bias + LeakyReLU ------------------------------------------
    fused = fused + bf_ref[...]
    fused = jnp.where(fused >= 0.0, fused, NEG_SLOPE * fused)

    # ---- running max-pool over the points axis, accumulated in the output ---
    tile_max = jnp.max(fused.reshape(TN, B, F4), axis=0)                # (B, F4)
    t = pl.program_id(1)

    @pl.when(t == 0)
    def _init():
        o_ref[0] = tile_max

    @pl.when(t > 0)
    def _accumulate():
        o_ref[0] = jnp.maximum(o_ref[0], tile_max)


# ----------------------------------------------------------------------------
# Tiling selection (per-generation) and wrapper
# ----------------------------------------------------------------------------
def _chip_info():
    try:
        vmem = int(pltpu.get_tpu_info().vmem_capacity_bytes)
    except Exception:
        vmem = 64 << 20                                   # conservative (v7x)
    kind = ""
    try:
        kind = jax.devices()[0].device_kind.lower()
    except Exception:
        pass
    multi_core = any(tag in kind for tag in ("v4", "v5p", "v7", "7x"))
    return vmem, multi_core


def _select_tiling(B, N, tile_n=None):
    vmem, multi_core = _chip_info()
    # Row budget per grid step for the (B*tile_n, .) matmuls: larger on
    # 128 MiB-VMEM parts (v5e/v6e), smaller on 64 MiB / 2-TC parts (v7x).
    target_rows = 2048 if vmem >= (96 << 20) else 1024

    if tile_n is None:
        cands = [c for c in range(8, N + 1, 8) if N % c == 0]
        if N not in cands:
            cands.append(N)                               # full axis always legal
        fitting = [c for c in cands if B * c <= target_rows]
        pool = fitting if fitting else [min(cands)]

        def pref(c):
            tiles = N // c
            return ((tiles % 2 == 0) or (not multi_core) or tiles == 1,  # even split for 2 TCs
                    (B * c) % 128 == 0,                                  # MXU M alignment (v5e)
                    c)                                                   # biggest tile
        tile_n = max(pool, key=pref)

    if N % tile_n != 0 or not (tile_n % 8 == 0 or tile_n == N):
        raise ValueError(f"bad tile_n={tile_n} for N={N}")
    num_tiles = N // tile_n
    nc = 2 if (multi_core and num_tiles >= 2 and num_tiles % 2 == 0) else 1
    return tile_n, nc, num_tiles // nc


def pct_forward(x_ncl, p, tile_n=None):
    """x_ncl: (B, C_in, N) like the PyTorch module input."""
    B, C_in, N = x_ncl.shape
    tile_n, nc, nt = _select_tiling(B, N, tile_n)
    return _pct_forward(x_ncl, p, tile_n, nc, nt)


@functools.partial(jax.jit, static_argnums=(2, 3, 4))
def _pct_forward(x_ncl, p, tile_n, nc, nt):
    B, C_in, N = x_ncl.shape
    F4 = p['bf'].shape[-1]                    # 256

    x = jnp.transpose(x_ncl, (0, 2, 1)).astype(jnp.bfloat16)   # (B, N, C_in)

    def resident(a):          # whole array in VMEM, constant block index
        shape = a.shape
        return pl.BlockSpec(shape, lambda c, t: (0,) * len(shape))

    grid_spec = pltpu.PrefetchScalarGridSpec(
        num_scalar_prefetch=0,
        grid=(nc, nt),
        in_specs=[
            pl.BlockSpec((B, tile_n, C_in), lambda c, t: (0, c * nt + t, 0)),
            resident(p['w1']), resident(p['b1']),
            resident(p['w2']), resident(p['b2']),
            resident(p['wq']), resident(p['bq']),
            resident(p['wk']), resident(p['bk']),
            resident(p['wv']), resident(p['bv']),
            resident(p['wo']), resident(p['bo']),
            resident(p['wf']), resident(p['bf']),
        ],
        out_specs=pl.BlockSpec((1, B, F4), lambda c, t: (c, 0, 0)),
    )

    partial_pool = pl.pallas_call(
        pct_kernel,
        out_shape=jax.ShapeDtypeStruct((nc, B, F4), jnp.float32),
        grid_spec=grid_spec,
        compiler_params=pltpu.CompilerParams(
            dimension_semantics=("parallel", "arbitrary"),
            vmem_limit_bytes=40 * 1024 * 1024),
    )(x, p['w1'], p['b1'], p['w2'], p['b2'],
      p['wq'], p['bq'], p['wk'], p['bk'], p['wv'], p['bv'],
      p['wo'], p['bo'], p['wf'], p['bf'])

    pooled = jnp.max(partial_pool, axis=0)                # (B, 256) cross-chunk max
    return pooled @ p['wl'] + p['bl']                     # final Linear(256, out_dim)


# ----------------------------------------------------------------------------
# Deterministic parameter init (PyTorch layout) and conversion to kernel layout
# ----------------------------------------------------------------------------
def init_torch_params(key, input_dim=3, output_dim=4, embed=64, fuse=256):
    ks = iter(jax.random.split(key, 32))

    def nrm(shape, scale=0.1):
        return scale * jax.random.normal(next(ks), shape, dtype=jnp.float32)

    def bn_params(c):
        return (1.0 + nrm((c,)), nrm((c,)), nrm((c,)), 1.0 + jnp.abs(nrm((c,))))

    tp = {}
    tp['w1'] = nrm((embed, input_dim))            # Conv1d(3, 64, 1, bias=False)
    tp['bn1'] = bn_params(embed)
    tp['w2'] = nrm((embed, embed))                # Conv1d(64, 64, 1, bias=False)
    tp['bn2'] = bn_params(embed)
    tp['in_w'] = nrm((N_ATT_LAYERS, 3 * embed, embed))   # MHA in_proj_weight
    tp['in_b'] = nrm((N_ATT_LAYERS, 3 * embed))          # MHA in_proj_bias
    tp['out_w'] = nrm((N_ATT_LAYERS, embed, embed))      # MHA out_proj.weight
    tp['out_b'] = nrm((N_ATT_LAYERS, embed))             # MHA out_proj.bias
    tp['wf'] = nrm((fuse, fuse))                  # Conv1d(256, 256, 1, bias=False)
    tp['bnf'] = bn_params(fuse)
    tp['wl'] = nrm((output_dim, fuse))            # Linear(256, 4)
    tp['bl'] = nrm((output_dim,))
    return tp


def to_kernel_params(tp, embed=64):
    E = embed
    L = tp['in_w'].shape[0]
    scale = 1.0 / math.sqrt(E)

    def fold_bn(w, bn):
        """Fold BatchNorm (inference) into a bias-free conv weight.  w: (Cout, Cin)."""
        g, b, m, v = bn
        s = g * jax.lax.rsqrt(v + EPS)
        return (w * s[:, None]).T, (b - m * s).reshape(1, -1)

    p = {}
    w1t, b1 = fold_bn(tp['w1'], tp['bn1'])
    w2t, b2 = fold_bn(tp['w2'], tp['bn2'])
    wft, bf = fold_bn(tp['wf'], tp['bnf'])
    p['w1'] = w1t.astype(jnp.bfloat16); p['b1'] = b1
    p['w2'] = w2t.astype(jnp.bfloat16); p['b2'] = b2
    # conv_fuse weight pre-split per attention layer for split-K accumulation
    p['wf'] = jnp.stack([wft[i * E:(i + 1) * E, :]
                         for i in range(L)]).astype(jnp.bfloat16)        # (L,64,256)
    p['bf'] = bf
    # separate Q/K/V projections (y = x @ W^T + b); 1/sqrt(E) folded into Q
    in_w, in_b = tp['in_w'], tp['in_b']
    p['wq'] = (jnp.transpose(in_w[:, 0:E, :], (0, 2, 1)) * scale).astype(jnp.bfloat16)
    p['bq'] = (in_b[:, 0:E] * scale).reshape(L, 1, E)
    p['wk'] = jnp.transpose(in_w[:, E:2 * E, :], (0, 2, 1)).astype(jnp.bfloat16)
    p['bk'] = in_b[:, E:2 * E].reshape(L, 1, E)
    p['wv'] = jnp.transpose(in_w[:, 2 * E:3 * E, :], (0, 2, 1)).astype(jnp.bfloat16)
    p['bv'] = in_b[:, 2 * E:3 * E].reshape(L, 1, E)
    p['wo'] = jnp.transpose(tp['out_w'], (0, 2, 1)).astype(jnp.bfloat16)  # (L,64,64)
    p['bo'] = tp['out_b'].reshape(L, 1, E)
    p['wl'] = tp['wl'].T                          # (256, out_dim), used in wrapper
    p['bl'] = tp['bl'].reshape(1, -1)
    return p


# ----------------------------------------------------------------------------
# Pure-JAX f32 reference that mirrors the PyTorch forward (sanity check)
# ----------------------------------------------------------------------------
def reference_forward(x, tp):
    def conv1d(h, w):                      # w: (Cout, Cin), kernel_size=1, no bias
        return jnp.einsum('bcn,dc->bdn', h, w)

    def bn1d(h, g, b, m, v):
        return ((h - m[None, :, None]) / jnp.sqrt(v[None, :, None] + EPS)
                * g[None, :, None] + b[None, :, None])

    h = jax.nn.relu(bn1d(conv1d(x, tp['w1']), *tp['bn1']))
    h = jax.nn.relu(bn1d(conv1d(h, tp['w2']), *tp['bn2']))
    xb = jnp.transpose(h, (0, 2, 1))       # (B, N, 64); MHA sees L=B, batch=N
    E = xb.shape[-1]
    att_list = []
    for i in range(N_ATT_LAYERS):
        wq, wk, wv = (tp['in_w'][i][0:E], tp['in_w'][i][E:2 * E], tp['in_w'][i][2 * E:3 * E])
        bq, bk, bv = (tp['in_b'][i][0:E], tp['in_b'][i][E:2 * E], tp['in_b'][i][2 * E:3 * E])
        q = xb @ wq.T + bq
        k = xb @ wk.T + bk
        v = xb @ wv.T + bv
        s = jnp.einsum('lne,mne->nlm', q, k) / math.sqrt(E)
        a = jax.nn.softmax(s, axis=-1)
        o = jnp.einsum('nlm,mne->lne', a, v)
        o = o @ tp['out_w'][i].T + tp['out_b'][i]
        att_list.append(o)
        xb = o
    cat = jnp.concatenate(att_list, axis=-1)          # (B, N, 256)
    hc = jnp.transpose(cat, (0, 2, 1))                # (B, 256, N)
    hf = bn1d(conv1d(hc, tp['wf']), *tp['bnf'])
    hf = jnp.where(hf >= 0, hf, NEG_SLOPE * hf)
    pooled = jnp.max(hf, axis=-1)                     # (B, 256)
    return pooled @ tp['wl'].T + tp['bl']


if __name__ == "__main__":
    key = jax.random.PRNGKey(0)
    kp, kx = jax.random.split(key)

    B, C_IN, N_PTS, OUT_DIM = 2, 3, 32, 4
    tp = init_torch_params(kp, input_dim=C_IN, output_dim=OUT_DIM)
    kparams = to_kernel_params(tp)

    x_ncl = jax.random.normal(kx, (B, C_IN, N_PTS), dtype=jnp.float32)  # PyTorch NCL input

    ref = jax.block_until_ready(reference_forward(x_ncl, tp))

    def check(out, tag):
        assert out.shape == (B, OUT_DIM), out.shape
        if not np.allclose(np.asarray(out), np.asarray(ref), atol=4e-2, rtol=4e-2):
            diff = np.max(np.abs(np.asarray(out) - np.asarray(ref)))
            raise AssertionError(f"{tag}: mismatch vs reference, max abs diff = {diff}")

    # tile_n=8 exercises the sequential running-max accumulator (and the 2-way
    # chunk split on multi-TensorCore chips); the second call uses the
    # per-generation auto tile picker.
    out_tiled = jax.block_until_ready(pct_forward(x_ncl, kparams, tile_n=8))
    check(out_tiled, "tiled")
    out_auto = jax.block_until_ready(pct_forward(x_ncl, kparams))
    check(out_auto, "auto")
    print("KERNEL_OK")
</pallas_src>

<mosaic_0001>
module attributes {stable_mosaic.version = 11 : i64} {
  func.func @pct_kernel(%arg0: i32, %arg1: i32, %arg2: memref<2x8x3xbf16, #tpu.memory_space<vmem>>, %arg3: memref<3x64xbf16, #tpu.memory_space<vmem>>, %arg4: memref<1x64xf32, #tpu.memory_space<vmem>>, %arg5: memref<64x64xbf16, #tpu.memory_space<vmem>>, %arg6: memref<1x64xf32, #tpu.memory_space<vmem>>, %arg7: memref<4x64x64xbf16, #tpu.memory_space<vmem>>, %arg8: memref<4x1x64xf32, #tpu.memory_space<vmem>>, %arg9: memref<4x64x64xbf16, #tpu.memory_space<vmem>>, %arg10: memref<4x1x64xf32, #tpu.memory_space<vmem>>, %arg11: memref<4x64x64xbf16, #tpu.memory_space<vmem>>, %arg12: memref<4x1x64xf32, #tpu.memory_space<vmem>>, %arg13: memref<4x64x64xbf16, #tpu.memory_space<vmem>>, %arg14: memref<4x1x64xf32, #tpu.memory_space<vmem>>, %arg15: memref<4x64x256xbf16, #tpu.memory_space<vmem>>, %arg16: memref<1x256xf32, #tpu.memory_space<vmem>>, %arg17: memref<1x2x256xf32, #tpu.memory_space<vmem>>) attributes {dimension_semantics = [#tpu.dimension_semantics<parallel>, #tpu.dimension_semantics<arbitrary>], iteration_bounds = array<i64: 1, 4>, scalar_prefetch = 0 : i64, scratch_operands = 0 : i64, tpu.core_type = #tpu.core_type<tc>, window_params = [{transform_indices = @transform_0, window_bounds = array<i64: 2, 8, 3>}, {pipeline_mode = #tpu.pipeline_mode<synchronous>, transform_indices = @transform_1, window_bounds = array<i64: 3, 64>}, {pipeline_mode = #tpu.pipeline_mode<synchronous>, transform_indices = @transform_2, window_bounds = array<i64: 1, 64>}, {pipeline_mode = #tpu.pipeline_mode<synchronous>, transform_indices = @transform_3, window_bounds = array<i64: 64, 64>}, {pipeline_mode = #tpu.pipeline_mode<synchronous>, transform_indices = @transform_4, window_bounds = array<i64: 1, 64>}, {pipeline_mode = #tpu.pipeline_mode<synchronous>, transform_indices = @transform_5, window_bounds = array<i64: 4, 64, 64>}, {pipeline_mode = #tpu.pipeline_mode<synchronous>, transform_indices = @transform_6, window_bounds = array<i64: 4, 1, 64>}, {pipeline_mode = #tpu.pipeline_mode<synchronous>, transform_indices = @transform_7, window_bounds = array<i64: 4, 64, 64>}, {pipeline_mode = #tpu.pipeline_mode<synchronous>, transform_indices = @transform_8, window_bounds = array<i64: 4, 1, 64>}, {pipeline_mode = #tpu.pipeline_mode<synchronous>, transform_indices = @transform_9, window_bounds = array<i64: 4, 64, 64>}, {pipeline_mode = #tpu.pipeline_mode<synchronous>, transform_indices = @transform_10, window_bounds = array<i64: 4, 1, 64>}, {pipeline_mode = #tpu.pipeline_mode<synchronous>, transform_indices = @transform_11, window_bounds = array<i64: 4, 64, 64>}, {pipeline_mode = #tpu.pipeline_mode<synchronous>, transform_indices = @transform_12, window_bounds = array<i64: 4, 1, 64>}, {pipeline_mode = #tpu.pipeline_mode<synchronous>, transform_indices = @transform_13, window_bounds = array<i64: 4, 64, 256>}, {pipeline_mode = #tpu.pipeline_mode<synchronous>, transform_indices = @transform_14, window_bounds = array<i64: 1, 256>}, {transform_indices = @transform_15, window_bounds = array<i64: 1, 2, 256>}]} {
    %c0 = arith.constant 0 : index
    %c0_0 = arith.constant 0 : index
    %c0_1 = arith.constant 0 : index
    %0 = vector.load %arg2[%c0, %c0_0, %c0_1] : memref<2x8x3xbf16, #tpu.memory_space<vmem>>, vector<2x8x3xbf16>
    %1 = vector.shape_cast %0 : vector<2x8x3xbf16> to vector<16x3xbf16>
    %c0_2 = arith.constant 0 : index
    %c0_3 = arith.constant 0 : index
    %2 = vector.load %arg3[%c0_2, %c0_3] : memref<3x64xbf16, #tpu.memory_space<vmem>>, vector<3x64xbf16>
    %cst = arith.constant dense<0.000000e+00> : vector<16x64xf32>
    %3 = tpu.matmul %1, %2, %cst {dimension_numbers = #tpu.dot_dimension_numbers<[1], [0], [0], [1], [0, 0, 1, 1], [], []>} : vector<16x3xbf16>, vector<3x64xbf16>, vector<16x64xf32> -> vector<16x64xf32>
    %c0_4 = arith.constant 0 : index
    %c0_5 = arith.constant 0 : index
    %4 = vector.load %arg4[%c0_4, %c0_5] : memref<1x64xf32, #tpu.memory_space<vmem>>, vector<1x64xf32>
    %5 = vector.broadcast %4 : vector<1x64xf32> to vector<16x64xf32>
    %6 = arith.addf %3, %5 : vector<16x64xf32>
    %cst_6 = arith.constant 0.000000e+00 : f32
    %7 = vector.broadcast %cst_6 : f32 to vector<16x64xf32>
    %8 = arith.maximumf %6, %7 : vector<16x64xf32>
    %9 = arith.truncf %8 : vector<16x64xf32> to vector<16x64xbf16>
    %c0_7 = arith.constant 0 : index
    %c0_8 = arith.constant 0 : index
    %10 = vector.load %arg5[%c0_7, %c0_8] : memref<64x64xbf16, #tpu.memory_space<vmem>>, vector<64x64xbf16>
    %cst_9 = arith.constant dense<0.000000e+00> : vector<16x64xf32>
    %11 = tpu.matmul %9, %10, %cst_9 {dimension_numbers = #tpu.dot_dimension_numbers<[1], [0], [0], [1], [0, 0, 1, 1], [], []>} : vector<16x64xbf16>, vector<64x64xbf16>, vector<16x64xf32> -> vector<16x64xf32>
    %c0_10 = arith.constant 0 : index
    %c0_11 = arith.constant 0 : index
    %12 = vector.load %arg6[%c0_10, %c0_11] : memref<1x64xf32, #tpu.memory_space<vmem>>, vector<1x64xf32>
    %13 = vector.broadcast %12 : vector<1x64xf32> to vector<16x64xf32>
    %14 = arith.addf %11, %13 : vector<16x64xf32>
    %cst_12 = arith.constant 0.000000e+00 : f32
    %15 = vector.broadcast %cst_12 : f32 to vector<16x64xf32>
    %16 = arith.maximumf %14, %15 : vector<16x64xf32>
    %17 = arith.truncf %16 : vector<16x64xf32> to vector<16x64xbf16>
    %18 = vector.shape_cast %17 : vector<16x64xbf16> to vector<2x8x64xbf16>
    %19 = tpu.transpose %18, [1, 0, 2] : vector<2x8x64xbf16> -> vector<8x2x64xbf16>
    %20 = vector.shape_cast %19 : vector<8x2x64xbf16> to vector<16x64xbf16>
    %cst_13 = arith.constant 0.000000e+00 : f32
    %21 = vector.broadcast %cst_13 : f32 to vector<16x256xf32>
    %c0_14 = arith.constant 0 : index
    %c0_15 = arith.constant 0 : index
    %c0_16 = arith.constant 0 : index
    %22 = vector.load %arg7[%c0_14, %c0_15, %c0_16] : memref<4x64x64xbf16, #tpu.memory_space<vmem>>, vector<1x64x64xbf16>
    %23 = vector.shape_cast %22 : vector<1x64x64xbf16> to vector<64x64xbf16>
    %cst_17 = arith.constant dense<0.000000e+00> : vector<16x64xf32>
    %24 = tpu.matmul %20, %23, %cst_17 {dimension_numbers = #tpu.dot_dimension_numbers<[1], [0], [0], [1], [0, 0, 1, 1], [], []>} : vector<16x64xbf16>, vector<64x64xbf16>, vector<16x64xf32> -> vector<16x64xf32>
    %c0_18 = arith.constant 0 : index
    %c0_19 = arith.constant 0 : index
    %c0_20 = arith.constant 0 : index
    %25 = vector.load %arg8[%c0_18, %c0_19, %c0_20] : memref<4x1x64xf32, #tpu.memory_space<vmem>>, vector<1x1x64xf32>
    %26 = vector.shape_cast %25 : vector<1x1x64xf32> to vector<1x64xf32>
    %27 = vector.broadcast %26 : vector<1x64xf32> to vector<16x64xf32>
    %28 = arith.addf %24, %27 : vector<16x64xf32>
    %29 = arith.truncf %28 : vector<16x64xf32> to vector<16x64xbf16>
    %30 = vector.shape_cast %29 : vector<16x64xbf16> to vector<8x2x64xbf16>
    %c0_21 = arith.constant 0 : index
    %c0_22 = arith.constant 0 : index
    %c0_23 = arith.constant 0 : index
    %31 = vector.load %arg9[%c0_21, %c0_22, %c0_23] : memref<4x64x64xbf16, #tpu.memory_space<vmem>>, vector<1x64x64xbf16>
    %32 = vector.shape_cast %31 : vector<1x64x64xbf16> to vector<64x64xbf16>
    %cst_24 = arith.constant dense<0.000000e+00> : vector<16x64xf32>
    %33 = tpu.matmul %20, %32, %cst_24 {dimension_numbers = #tpu.dot_dimension_numbers<[1], [0], [0], [1], [0, 0, 1, 1], [], []>} : vector<16x64xbf16>, vector<64x64xbf16>, vector<16x64xf32> -> vector<16x64xf32>
    %c0_25 = arith.constant 0 : index
    %c0_26 = arith.constant 0 : index
    %c0_27 = arith.constant 0 : index
    %34 = vector.load %arg10[%c0_25, %c0_26, %c0_27] : memref<4x1x64xf32, #tpu.memory_space<vmem>>, vector<1x1x64xf32>
    %35 = vector.shape_cast %34 : vector<1x1x64xf32> to vector<1x64xf32>
    %36 = vector.broadcast %35 : vector<1x64xf32> to vector<16x64xf32>
    %37 = arith.addf %33, %36 : vector<16x64xf32>
    %38 = arith.truncf %37 : vector<16x64xf32> to vector<16x64xbf16>
    %39 = vector.shape_cast %38 : vector<16x64xbf16> to vector<8x2x64xbf16>
    %c0_28 = arith.constant 0 : index
    %c0_29 = arith.constant 0 : index
    %c0_30 = arith.constant 0 : index
    %40 = vector.load %arg11[%c0_28, %c0_29, %c0_30] : memref<4x64x64xbf16, #tpu.memory_space<vmem>>, vector<1x64x64xbf16>
    %41 = vector.shape_cast %40 : vector<1x64x64xbf16> to vector<64x64xbf16>
    %cst_31 = arith.constant dense<0.000000e+00> : vector<16x64xf32>
    %42 = tpu.matmul %20, %41, %cst_31 {dimension_numbers = #tpu.dot_dimension_numbers<[1], [0], [0], [1], [0, 0, 1, 1], [], []>} : vector<16x64xbf16>, vector<64x64xbf16>, vector<16x64xf32> -> vector<16x64xf32>
    %c0_32 = arith.constant 0 : index
    %c0_33 = arith.constant 0 : index
    %c0_34 = arith.constant 0 : index
    %43 = vector.load %arg12[%c0_32, %c0_33, %c0_34] : memref<4x1x64xf32, #tpu.memory_space<vmem>>, vector<1x1x64xf32>
    %44 = vector.shape_cast %43 : vector<1x1x64xf32> to vector<1x64xf32>
    %45 = vector.broadcast %44 : vector<1x64xf32> to vector<16x64xf32>
    %46 = arith.addf %42, %45 : vector<16x64xf32>
    %47 = arith.truncf %46 : vector<16x64xf32> to vector<16x64xbf16>
    %48 = vector.shape_cast %47 : vector<16x64xbf16> to vector<8x2x64xbf16>
    "tpu.trace_start"() <{level = 10 : i32, message = "nle,nme->nlm"}> : () -> ()
    %cst_35 = arith.constant dense<0.000000e+00> : vector<8x2x2xf32>
    %49 = tpu.matmul %30, %39, %cst_35 {dimension_numbers = #tpu.dot_dimension_numbers<[2], [2], [1], [1], [0, 0, 0, 1, 1, 1], [0], [0]>} : vector<8x2x64xbf16>, vector<8x2x64xbf16>, vector<8x2x2xf32> -> vector<8x2x2xf32>
    "tpu.trace_stop"() : () -> ()
    %cst_36 = arith.constant dense<0xFF800000> : vector<8x2xf32>
    %50 = vector.multi_reduction <maximumf>, %49, %cst_36 [2] : vector<8x2x2xf32> to vector<8x2xf32>
    %51 = vector.shape_cast %50 : vector<8x2xf32> to vector<8x2x1xf32>
    %52 = vector.broadcast %51 : vector<8x2x1xf32> to vector<8x2x2xf32>
    %53 = arith.subf %49, %52 : vector<8x2x2xf32>
    %54 = math.exp %53 : vector<8x2x2xf32>
    %cst_37 = arith.constant dense<0.000000e+00> : vector<8x2xf32>
    %55 = vector.multi_reduction <add>, %54, %cst_37 [2] : vector<8x2x2xf32> to vector<8x2xf32>
    %56 = vector.shape_cast %55 : vector<8x2xf32> to vector<8x2x1xf32>
    %57 = vector.broadcast %56 : vector<8x2x1xf32> to vector<8x2x2xf32>
    %58 = arith.divf %54, %57 : vector<8x2x2xf32>
    %59 = arith.truncf %58 : vector<8x2x2xf32> to vector<8x2x2xbf16>
    "tpu.trace_start"() <{level = 10 : i32, message = "nlm,nme->nle"}> : () -> ()
    %cst_38 = arith.constant dense<0.000000e+00> : vector<8x2x64xf32>
    %60 = tpu.matmul %59, %48, %cst_38 {dimension_numbers = #tpu.dot_dimension_numbers<[2], [1], [1], [2], [0, 0, 0, 1, 1, 2], [0], [0]>} : vector<8x2x2xbf16>, vector<8x2x64xbf16>, vector<8x2x64xf32> -> vector<8x2x64xf32>
    "tpu.trace_stop"() : () -> ()
    %61 = arith.truncf %60 : vector<8x2x64xf32> to vector<8x2x64xbf16>
    %62 = vector.shape_cast %61 : vector<8x2x64xbf16> to vector<16x64xbf16>
    %c0_39 = arith.constant 0 : index
    %c0_40 = arith.constant 0 : index
    %c0_41 = arith.constant 0 : index
    %63 = vector.load %arg13[%c0_39, %c0_40, %c0_41] : memref<4x64x64xbf16, #tpu.memory_space<vmem>>, vector<1x64x64xbf16>
    %64 = vector.shape_cast %63 : vector<1x64x64xbf16> to vector<64x64xbf16>
    %cst_42 = arith.constant dense<0.000000e+00> : vector<16x64xf32>
    %65 = tpu.matmul %62, %64, %cst_42 {dimension_numbers = #tpu.dot_dimension_numbers<[1], [0], [0], [1], [0, 0, 1, 1], [], []>} : vector<16x64xbf16>, vector<64x64xbf16>, vector<16x64xf32> -> vector<16x64xf32>
    %c0_43 = arith.constant 0 : index
    %c0_44 = arith.constant 0 : index
    %c0_45 = arith.constant 0 : index
    %66 = vector.load %arg14[%c0_43, %c0_44, %c0_45] : memref<4x1x64xf32, #tpu.memory_space<vmem>>, vector<1x1x64xf32>
    %67 = vector.shape_cast %66 : vector<1x1x64xf32> to vector<1x64xf32>
    %68 = vector.broadcast %67 : vector<1x64xf32> to vector<16x64xf32>
    %69 = arith.addf %65, %68 : vector<16x64xf32>
    %70 = arith.truncf %69 : vector<16x64xf32> to vector<16x64xbf16>
    %c0_46 = arith.constant 0 : index
    %c0_47 = arith.constant 0 : index
    %c0_48 = arith.constant 0 : index
    %71 = vector.load %arg15[%c0_46, %c0_47, %c0_48] : memref<4x64x256xbf16, #tpu.memory_space<vmem>>, vector<1x64x256xbf16>
    %72 = vector.shape_cast %71 : vector<1x64x256xbf16> to vector<64x256xbf16>
    %cst_49 = arith.constant dense<0.000000e+00> : vector<16x256xf32>
    %73 = tpu.matmul %70, %72, %cst_49 {dimension_numbers = #tpu.dot_dimension_numbers<[1], [0], [0], [1], [0, 0, 1, 1], [], []>} : vector<16x64xbf16>, vector<64x256xbf16>, vector<16x256xf32> -> vector<16x256xf32>
    %74 = arith.addf %21, %73 : vector<16x256xf32>
    %c1 = arith.constant 1 : index
    %c0_50 = arith.constant 0 : index
    %c0_51 = arith.constant 0 : index
    %75 = vector.load %arg7[%c1, %c0_50, %c0_51] : memref<4x64x64xbf16, #tpu.memory_space<vmem>>, vector<1x64x64xbf16>
    %76 = vector.shape_cast %75 : vector<1x64x64xbf16> to vector<64x64xbf16>
    %cst_52 = arith.constant dense<0.000000e+00> : vector<16x64xf32>
    %77 = tpu.matmul %70, %76, %cst_52 {dimension_numbers = #tpu.dot_dimension_numbers<[1], [0], [0], [1], [0, 0, 1, 1], [], []>} : vector<16x64xbf16>, vector<64x64xbf16>, vector<16x64xf32> -> vector<16x64xf32>
    %c1_53 = arith.constant 1 : index
    %c0_54 = arith.constant 0 : index
    %c0_55 = arith.constant 0 : index
    %78 = vector.load %arg8[%c1_53, %c0_54, %c0_55] : memref<4x1x64xf32, #tpu.memory_space<vmem>>, vector<1x1x64xf32>
    %79 = vector.shape_cast %78 : vector<1x1x64xf32> to vector<1x64xf32>
    %80 = vector.broadcast %79 : vector<1x64xf32> to vector<16x64xf32>
    %81 = arith.addf %77, %80 : vector<16x64xf32>
    %82 = arith.truncf %81 : vector<16x64xf32> to vector<16x64xbf16>
    %83 = vector.shape_cast %82 : vector<16x64xbf16> to vector<8x2x64xbf16>
    %c1_56 = arith.constant 1 : index
    %c0_57 = arith.constant 0 : index
    %c0_58 = arith.constant 0 : index
    %84 = vector.load %arg9[%c1_56, %c0_57, %c0_58] : memref<4x64x64xbf16, #tpu.memory_space<vmem>>, vector<1x64x64xbf16>
    %85 = vector.shape_cast %84 : vector<1x64x64xbf16> to vector<64x64xbf16>
    %cst_59 = arith.constant dense<0.000000e+00> : vector<16x64xf32>
    %86 = tpu.matmul %70, %85, %cst_59 {dimension_numbers = #tpu.dot_dimension_numbers<[1], [0], [0], [1], [0, 0, 1, 1], [], []>} : vector<16x64xbf16>, vector<64x64xbf16>, vector<16x64xf32> -> vector<16x64xf32>
    %c1_60 = arith.constant 1 : index
    %c0_61 = arith.constant 0 : index
    %c0_62 = arith.constant 0 : index
    %87 = vector.load %arg10[%c1_60, %c0_61, %c0_62] : memref<4x1x64xf32, #tpu.memory_space<vmem>>, vector<1x1x64xf32>
    %88 = vector.shape_cast %87 : vector<1x1x64xf32> to vector<1x64xf32>
    %89 = vector.broadcast %88 : vector<1x64xf32> to vector<16x64xf32>
    %90 = arith.addf %86, %89 : vector<16x64xf32>
    %91 = arith.truncf %90 : vector<16x64xf32> to vector<16x64xbf16>
    %92 = vector.shape_cast %91 : vector<16x64xbf16> to vector<8x2x64xbf16>
    %c1_63 = arith.constant 1 : index
    %c0_64 = arith.constant 0 : index
    %c0_65 = arith.constant 0 : index
    %93 = vector.load %arg11[%c1_63, %c0_64, %c0_65] : memref<4x64x64xbf16, #tpu.memory_space<vmem>>, vector<1x64x64xbf16>
    %94 = vector.shape_cast %93 : vector<1x64x64xbf16> to vector<64x64xbf16>
    %cst_66 = arith.constant dense<0.000000e+00> : vector<16x64xf32>
    %95 = tpu.matmul %70, %94, %cst_66 {dimension_numbers = #tpu.dot_dimension_numbers<[1], [0], [0], [1], [0, 0, 1, 1], [], []>} : vector<16x64xbf16>, vector<64x64xbf16>, vector<16x64xf32> -> vector<16x64xf32>
    %c1_67 = arith.constant 1 : index
    %c0_68 = arith.constant 0 : index
    %c0_69 = arith.constant 0 : index
    %96 = vector.load %arg12[%c1_67, %c0_68, %c0_69] : memref<4x1x64xf32, #tpu.memory_space<vmem>>, vector<1x1x64xf32>
    %97 = vector.shape_cast %96 : vector<1x1x64xf32> to vector<1x64xf32>
    %98 = vector.broadcast %97 : vector<1x64xf32> to vector<16x64xf32>
    %99 = arith.addf %95, %98 : vector<16x64xf32>
    %100 = arith.truncf %99 : vector<16x64xf32> to vector<16x64xbf16>
    %101 = vector.shape_cast %100 : vector<16x64xbf16> to vector<8x2x64xbf16>
    "tpu.trace_start"() <{level = 10 : i32, message = "nle,nme->nlm"}> : () -> ()
    %cst_70 = arith.constant dense<0.000000e+00> : vector<8x2x2xf32>
    %102 = tpu.matmul %83, %92, %cst_70 {dimension_numbers = #tpu.dot_dimension_numbers<[2], [2], [1], [1], [0, 0, 0, 1, 1, 1], [0], [0]>} : vector<8x2x64xbf16>, vector<8x2x64xbf16>, vector<8x2x2xf32> -> vector<8x2x2xf32>
    "tpu.trace_stop"() : () -> ()
    %cst_71 = arith.constant dense<0xFF800000> : vector<8x2xf32>
    %103 = vector.multi_reduction <maximumf>, %102, %cst_71 [2] : vector<8x2x2xf32> to vector<8x2xf32>
    %104 = vector.shape_cast %103 : vector<8x2xf32> to vector<8x2x1xf32>
    %105 = vector.broadcast %104 : vector<8x2x1xf32> to vector<8x2x2xf32>
    %106 = arith.subf %102, %105 : vector<8x2x2xf32>
    %107 = math.exp %106 : vector<8x2x2xf32>
    %cst_72 = arith.constant dense<0.000000e+00> : vector<8x2xf32>
    %108 = vector.multi_reduction <add>, %107, %cst_72 [2] : vector<8x2x2xf32> to vector<8x2xf32>
    %109 = vector.shape_cast %108 : vector<8x2xf32> to vector<8x2x1xf32>
    %110 = vector.broadcast %109 : vector<8x2x1xf32> to vector<8x2x2xf32>
    %111 = arith.divf %107, %110 : vector<8x2x2xf32>
    %112 = arith.truncf %111 : vector<8x2x2xf32> to vector<8x2x2xbf16>
    "tpu.trace_start"() <{level = 10 : i32, message = "nlm,nme->nle"}> : () -> ()
    %cst_73 = arith.constant dense<0.000000e+00> : vector<8x2x64xf32>
    %113 = tpu.matmul %112, %101, %cst_73 {dimension_numbers = #tpu.dot_dimension_numbers<[2], [1], [1], [2], [0, 0, 0, 1, 1, 2], [0], [0]>} : vector<8x2x2xbf16>, vector<8x2x64xbf16>, vector<8x2x64xf32> -> vector<8x2x64xf32>
    "tpu.trace_stop"() : () -> ()
    %114 = arith.truncf %113 : vector<8x2x64xf32> to vector<8x2x64xbf16>
    %115 = vector.shape_cast %114 : vector<8x2x64xbf16> to vector<16x64xbf16>
    %c1_74 = arith.constant 1 : index
    %c0_75 = arith.constant 0 : index
    %c0_76 = arith.constant 0 : index
    %116 = vector.load %arg13[%c1_74, %c0_75, %c0_76] : memref<4x64x64xbf16, #tpu.memory_space<vmem>>, vector<1x64x64xbf16>
    %117 = vector.shape_cast %116 : vector<1x64x64xbf16> to vector<64x64xbf16>
    %cst_77 = arith.constant dense<0.000000e+00> : vector<16x64xf32>
    %118 = tpu.matmul %115, %117, %cst_77 {dimension_numbers = #tpu.dot_dimension_numbers<[1], [0], [0], [1], [0, 0, 1, 1], [], []>} : vector<16x64xbf16>, vector<64x64xbf16>, vector<16x64xf32> -> vector<16x64xf32>
    %c1_78 = arith.constant 1 : index
    %c0_79 = arith.constant 0 : index
    %c0_80 = arith.constant 0 : index
    %119 = vector.load %arg14[%c1_78, %c0_79, %c0_80] : memref<4x1x64xf32, #tpu.memory_space<vmem>>, vector<1x1x64xf32>
    %120 = vector.shape_cast %119 : vector<1x1x64xf32> to vector<1x64xf32>
    %121 = vector.broadcast %120 : vector<1x64xf32> to vector<16x64xf32>
    %122 = arith.addf %118, %121 : vector<16x64xf32>
    %123 = arith.truncf %122 : vector<16x64xf32> to vector<16x64xbf16>
    %c1_81 = arith.constant 1 : index
    %c0_82 = arith.constant 0 : index
    %c0_83 = arith.constant 0 : index
    %124 = vector.load %arg15[%c1_81, %c0_82, %c0_83] : memref<4x64x256xbf16, #tpu.memory_space<vmem>>, vector<1x64x256xbf16>
    %125 = vector.shape_cast %124 : vector<1x64x256xbf16> to vector<64x256xbf16>
    %cst_84 = arith.constant dense<0.000000e+00> : vector<16x256xf32>
    %126 = tpu.matmul %123, %125, %cst_84 {dimension_numbers = #tpu.dot_dimension_numbers<[1], [0], [0], [1], [0, 0, 1, 1], [], []>} : vector<16x64xbf16>, vector<64x256xbf16>, vector<16x256xf32> -> vector<16x256xf32>
    %127 = arith.addf %74, %126 : vector<16x256xf32>
    %c2 = arith.constant 2 : index
    %c0_85 = arith.constant 0 : index
    %c0_86 = arith.constant 0 : index
    %128 = vector.load %arg7[%c2, %c0_85, %c0_86] : memref<4x64x64xbf16, #tpu.memory_space<vmem>>, vector<1x64x64xbf16>
    %129 = vector.shape_cast %128 : vector<1x64x64xbf16> to vector<64x64xbf16>
    %cst_87 = arith.constant dense<0.000000e+00> : vector<16x64xf32>
    %130 = tpu.matmul %123, %129, %cst_87 {dimension_numbers = #tpu.dot_dimension_numbers<[1], [0], [0], [1], [0, 0, 1, 1], [], []>} : vector<16x64xbf16>, vector<64x64xbf16>, vector<16x64xf32> -> vector<16x64xf32>
    %c2_88 = arith.constant 2 : index
    %c0_89 = arith.constant 0 : index
    %c0_90 = arith.constant 0 : index
    %131 = vector.load %arg8[%c2_88, %c0_89, %c0_90] : memref<4x1x64xf32, #tpu.memory_space<vmem>>, vector<1x1x64xf32>
    %132 = vector.shape_cast %131 : vector<1x1x64xf32> to vector<1x64xf32>
    %133 = vector.broadcast %132 : vector<1x64xf32> to vector<16x64xf32>
    %134 = arith.addf %130, %133 : vector<16x64xf32>
    %135 = arith.truncf %134 : vector<16x64xf32> to vector<16x64xbf16>
    %136 = vector.shape_cast %135 : vector<16x64xbf16> to vector<8x2x64xbf16>
    %c2_91 = arith.constant 2 : index
    %c0_92 = arith.constant 0 : index
    %c0_93 = arith.constant 0 : index
    %137 = vector.load %arg9[%c2_91, %c0_92, %c0_93] : memref<4x64x64xbf16, #tpu.memory_space<vmem>>, vector<1x64x64xbf16>
    %138 = vector.shape_cast %137 : vector<1x64x64xbf16> to vector<64x64xbf16>
    %cst_94 = arith.constant dense<0.000000e+00> : vector<16x64xf32>
    %139 = tpu.matmul %123, %138, %cst_94 {dimension_numbers = #tpu.dot_dimension_numbers<[1], [0], [0], [1], [0, 0, 1, 1], [], []>} : vector<16x64xbf16>, vector<64x64xbf16>, vector<16x64xf32> -> vector<16x64xf32>
    %c2_95 = arith.constant 2 : index
    %c0_96 = arith.constant 0 : index
    %c0_97 = arith.constant 0 : index
    %140 = vector.load %arg10[%c2_95, %c0_96, %c0_97] : memref<4x1x64xf32, #tpu.memory_space<vmem>>, vector<1x1x64xf32>
    %141 = vector.shape_cast %140 : vector<1x1x64xf32> to vector<1x64xf32>
    %142 = vector.broadcast %141 : vector<1x64xf32> to vector<16x64xf32>
    %143 = arith.addf %139, %142 : vector<16x64xf32>
    %144 = arith.truncf %143 : vector<16x64xf32> to vector<16x64xbf16>
    %145 = vector.shape_cast %144 : vector<16x64xbf16> to vector<8x2x64xbf16>
    %c2_98 = arith.constant 2 : index
    %c0_99 = arith.constant 0 : index
    %c0_100 = arith.constant 0 : index
    %146 = vector.load %arg11[%c2_98, %c0_99, %c0_100] : memref<4x64x64xbf16, #tpu.memory_space<vmem>>, vector<1x64x64xbf16>
    %147 = vector.shape_cast %146 : vector<1x64x64xbf16> to vector<64x64xbf16>
    %cst_101 = arith.constant dense<0.000000e+00> : vector<16x64xf32>
    %148 = tpu.matmul %123, %147, %cst_101 {dimension_numbers = #tpu.dot_dimension_numbers<[1], [0], [0], [1], [0, 0, 1, 1], [], []>} : vector<16x64xbf16>, vector<64x64xbf16>, vector<16x64xf32> -> vector<16x64xf32>
    %c2_102 = arith.constant 2 : index
    %c0_103 = arith.constant 0 : index
    %c0_104 = arith.constant 0 : index
    %149 = vector.load %arg12[%c2_102, %c0_103, %c0_104] : memref<4x1x64xf32, #tpu.memory_space<vmem>>, vector<1x1x64xf32>
    %150 = vector.shape_cast %149 : vector<1x1x64xf32> to vector<1x64xf32>
    %151 = vector.broadcast %150 : vector<1x64xf32> to vector<16x64xf32>
    %152 = arith.addf %148, %151 : vector<16x64xf32>
    %153 = arith.truncf %152 : vector<16x64xf32> to vector<16x64xbf16>
    %154 = vector.shape_cast %153 : vector<16x64xbf16> to vector<8x2x64xbf16>
    "tpu.trace_start"() <{level = 10 : i32, message = "nle,nme->nlm"}> : () -> ()
    %cst_105 = arith.constant dense<0.000000e+00> : vector<8x2x2xf32>
    %155 = tpu.matmul %136, %145, %cst_105 {dimension_numbers = #tpu.dot_dimension_numbers<[2], [2], [1], [1], [0, 0, 0, 1, 1, 1], [0], [0]>} : vector<8x2x64xbf16>, vector<8x2x64xbf16>, vector<8x2x2xf32> -> vector<8x2x2xf32>
    "tpu.trace_stop"() : () -> ()
    %cst_106 = arith.constant dense<0xFF800000> : vector<8x2xf32>
    %156 = vector.multi_reduction <maximumf>, %155, %cst_106 [2] : vector<8x2x2xf32> to vector<8x2xf32>
    %157 = vector.shape_cast %156 : vector<8x2xf32> to vector<8x2x1xf32>
    %158 = vector.broadcast %157 : vector<8x2x1xf32> to vector<8x2x2xf32>
    %159 = arith.subf %155, %158 : vector<8x2x2xf32>
    %160 = math.exp %159 : vector<8x2x2xf32>
    %cst_107 = arith.constant dense<0.000000e+00> : vector<8x2xf32>
    %161 = vector.multi_reduction <add>, %160, %cst_107 [2] : vector<8x2x2xf32> to vector<8x2xf32>
    %162 = vector.shape_cast %161 : vector<8x2xf32> to vector<8x2x1xf32>
    %163 = vector.broadcast %162 : vector<8x2x1xf32> to vector<8x2x2xf32>
    %164 = arith.divf %160, %163 : vector<8x2x2xf32>
    %165 = arith.truncf %164 : vector<8x2x2xf32> to vector<8x2x2xbf16>
    "tpu.trace_start"() <{level = 10 : i32, message = "nlm,nme->nle"}> : () -> ()
    %cst_108 = arith.constant dense<0.000000e+00> : vector<8x2x64xf32>
    %166 = tpu.matmul %165, %154, %cst_108 {dimension_numbers = #tpu.dot_dimension_numbers<[2], [1], [1], [2], [0, 0, 0, 1, 1, 2], [0], [0]>} : vector<8x2x2xbf16>, vector<8x2x64xbf16>, vector<8x2x64xf32> -> vector<8x2x64xf32>
    "tpu.trace_stop"() : () -> ()
    %167 = arith.truncf %166 : vector<8x2x64xf32> to vector<8x2x64xbf16>
    %168 = vector.shape_cast %167 : vector<8x2x64xbf16> to vector<16x64xbf16>
    %c2_109 = arith.constant 2 : index
    %c0_110 = arith.constant 0 : index
    %c0_111 = arith.constant 0 : index
    %169 = vector.load %arg13[%c2_109, %c0_110, %c0_111] : memref<4x64x64xbf16, #tpu.memory_space<vmem>>, vector<1x64x64xbf16>
    %170 = vector.shape_cast %169 : vector<1x64x64xbf16> to vector<64x64xbf16>
    %cst_112 = arith.constant dense<0.000000e+00> : vector<16x64xf32>
    %171 = tpu.matmul %168, %170, %cst_112 {dimension_numbers = #tpu.dot_dimension_numbers<[1], [0], [0], [1], [0, 0, 1, 1], [], []>} : vector<16x64xbf16>, vector<64x64xbf16>, vector<16x64xf32> -> vector<16x64xf32>
    %c2_113 = arith.constant 2 : index
    %c0_114 = arith.constant 0 : index
    %c0_115 = arith.constant 0 : index
    %172 = vector.load %arg14[%c2_113, %c0_114, %c0_115] : memref<4x1x64xf32, #tpu.memory_space<vmem>>, vector<1x1x64xf32>
    %173 = vector.shape_cast %172 : vector<1x1x64xf32> to vector<1x64xf32>
    %174 = vector.broadcast %173 : vector<1x64xf32> to vector<16x64xf32>
    %175 = arith.addf %171, %174 : vector<16x64xf32>
    %176 = arith.truncf %175 : vector<16x64xf32> to vector<16x64xbf16>
    %c2_116 = arith.constant 2 : index
    %c0_117 = arith.constant 0 : index
    %c0_118 = arith.constant 0 : index
    %177 = vector.load %arg15[%c2_116, %c0_117, %c0_118] : memref<4x64x256xbf16, #tpu.memory_space<vmem>>, vector<1x64x256xbf16>
    %178 = vector.shape_cast %177 : vector<1x64x256xbf16> to vector<64x256xbf16>
    %cst_119 = arith.constant dense<0.000000e+00> : vector<16x256xf32>
    %179 = tpu.matmul %176, %178, %cst_119 {dimension_numbers = #tpu.dot_dimension_numbers<[1], [0], [0], [1], [0, 0, 1, 1], [], []>} : vector<16x64xbf16>, vector<64x256xbf16>, vector<16x256xf32> -> vector<16x256xf32>
    %180 = arith.addf %127, %179 : vector<16x256xf32>
    %c3 = arith.constant 3 : index
    %c0_120 = arith.constant 0 : index
    %c0_121 = arith.constant 0 : index
    %181 = vector.load %arg7[%c3, %c0_120, %c0_121] : memref<4x64x64xbf16, #tpu.memory_space<vmem>>, vector<1x64x64xbf16>
    %182 = vector.shape_cast %181 : vector<1x64x64xbf16> to vector<64x64xbf16>
    %cst_122 = arith.constant dense<0.000000e+00> : vector<16x64xf32>
    %183 = tpu.matmul %176, %182, %cst_122 {dimension_numbers = #tpu.dot_dimension_numbers<[1], [0], [0], [1], [0, 0, 1, 1], [], []>} : vector<16x64xbf16>, vector<64x64xbf16>, vector<16x64xf32> -> vector<16x64xf32>
    %c3_123 = arith.constant 3 : index
    %c0_124 = arith.constant 0 : index
    %c0_125 = arith.constant 0 : index
    %184 = vector.load %arg8[%c3_123, %c0_124, %c0_125] : memref<4x1x64xf32, #tpu.memory_space<vmem>>, vector<1x1x64xf32>
    %185 = vector.shape_cast %184 : vector<1x1x64xf32> to vector<1x64xf32>
    %186 = vector.broadcast %185 : vector<1x64xf32> to vector<16x64xf32>
    %187 = arith.addf %183, %186 : vector<16x64xf32>
    %188 = arith.truncf %187 : vector<16x64xf32> to vector<16x64xbf16>
    %189 = vector.shape_cast %188 : vector<16x64xbf16> to vector<8x2x64xbf16>
    %c3_126 = arith.constant 3 : index
    %c0_127 = arith.constant 0 : index
    %c0_128 = arith.constant 0 : index
    %190 = vector.load %arg9[%c3_126, %c0_127, %c0_128] : memref<4x64x64xbf16, #tpu.memory_space<vmem>>, vector<1x64x64xbf16>
    %191 = vector.shape_cast %190 : vector<1x64x64xbf16> to vector<64x64xbf16>
    %cst_129 = arith.constant dense<0.000000e+00> : vector<16x64xf32>
    %192 = tpu.matmul %176, %191, %cst_129 {dimension_numbers = #tpu.dot_dimension_numbers<[1], [0], [0], [1], [0, 0, 1, 1], [], []>} : vector<16x64xbf16>, vector<64x64xbf16>, vector<16x64xf32> -> vector<16x64xf32>
    %c3_130 = arith.constant 3 : index
    %c0_131 = arith.constant 0 : index
    %c0_132 = arith.constant 0 : index
    %193 = vector.load %arg10[%c3_130, %c0_131, %c0_132] : memref<4x1x64xf32, #tpu.memory_space<vmem>>, vector<1x1x64xf32>
    %194 = vector.shape_cast %193 : vector<1x1x64xf32> to vector<1x64xf32>
    %195 = vector.broadcast %194 : vector<1x64xf32> to vector<16x64xf32>
    %196 = arith.addf %192, %195 : vector<16x64xf32>
    %197 = arith.truncf %196 : vector<16x64xf32> to vector<16x64xbf16>
    %198 = vector.shape_cast %197 : vector<16x64xbf16> to vector<8x2x64xbf16>
    %c3_133 = arith.constant 3 : index
    %c0_134 = arith.constant 0 : index
    %c0_135 = arith.constant 0 : index
    %199 = vector.load %arg11[%c3_133, %c0_134, %c0_135] : memref<4x64x64xbf16, #tpu.memory_space<vmem>>, vector<1x64x64xbf16>
    %200 = vector.shape_cast %199 : vector<1x64x64xbf16> to vector<64x64xbf16>
    %cst_136 = arith.constant dense<0.000000e+00> : vector<16x64xf32>
    %201 = tpu.matmul %176, %200, %cst_136 {dimension_numbers = #tpu.dot_dimension_numbers<[1], [0], [0], [1], [0, 0, 1, 1], [], []>} : vector<16x64xbf16>, vector<64x64xbf16>, vector<16x64xf32> -> vector<16x64xf32>
    %c3_137 = arith.constant 3 : index
    %c0_138 = arith.constant 0 : index
    %c0_139 = arith.constant 0 : index
    %202 = vector.load %arg12[%c3_137, %c0_138, %c0_139] : memref<4x1x64xf32, #tpu.memory_space<vmem>>, vector<1x1x64xf32>
    %203 = vector.shape_cast %202 : vector<1x1x64xf32> to vector<1x64xf32>
    %204 = vector.broadcast %203 : vector<1x64xf32> to vector<16x64xf32>
    %205 = arith.addf %201, %204 : vector<16x64xf32>
    %206 = arith.truncf %205 : vector<16x64xf32> to vector<16x64xbf16>
    %207 = vector.shape_cast %206 : vector<16x64xbf16> to vector<8x2x64xbf16>
    "tpu.trace_start"() <{level = 10 : i32, message = "nle,nme->nlm"}> : () -> ()
    %cst_140 = arith.constant dense<0.000000e+00> : vector<8x2x2xf32>
    %208 = tpu.matmul %189, %198, %cst_140 {dimension_numbers = #tpu.dot_dimension_numbers<[2], [2], [1], [1], [0, 0, 0, 1, 1, 1], [0], [0]>} : vector<8x2x64xbf16>, vector<8x2x64xbf16>, vector<8x2x2xf32> -> vector<8x2x2xf32>
    "tpu.trace_stop"() : () -> ()
    %cst_141 = arith.constant dense<0xFF800000> : vector<8x2xf32>
    %209 = vector.multi_reduction <maximumf>, %208, %cst_141 [2] : vector<8x2x2xf32> to vector<8x2xf32>
    %210 = vector.shape_cast %209 : vector<8x2xf32> to vector<8x2x1xf32>
    %211 = vector.broadcast %210 : vector<8x2x1xf32> to vector<8x2x2xf32>
    %212 = arith.subf %208, %211 : vector<8x2x2xf32>
    %213 = math.exp %212 : vector<8x2x2xf32>
    %cst_142 = arith.constant dense<0.000000e+00> : vector<8x2xf32>
    %214 = vector.multi_reduction <add>, %213, %cst_142 [2] : vector<8x2x2xf32> to vector<8x2xf32>
    %215 = vector.shape_cast %214 : vector<8x2xf32> to vector<8x2x1xf32>
    %216 = vector.broadcast %215 : vector<8x2x1xf32> to vector<8x2x2xf32>
    %217 = arith.divf %213, %216 : vector<8x2x2xf32>
    %218 = arith.truncf %217 : vector<8x2x2xf32> to vector<8x2x2xbf16>
    "tpu.trace_start"() <{level = 10 : i32, message = "nlm,nme->nle"}> : () -> ()
    %cst_143 = arith.constant dense<0.000000e+00> : vector<8x2x64xf32>
    %219 = tpu.matmul %218, %207, %cst_143 {dimension_numbers = #tpu.dot_dimension_numbers<[2], [1], [1], [2], [0, 0, 0, 1, 1, 2], [0], [0]>} : vector<8x2x2xbf16>, vector<8x2x64xbf16>, vector<8x2x64xf32> -> vector<8x2x64xf32>
    "tpu.trace_stop"() : () -> ()
    %220 = arith.truncf %219 : vector<8x2x64xf32> to vector<8x2x64xbf16>
    %221 = vector.shape_cast %220 : vector<8x2x64xbf16> to vector<16x64xbf16>
    %c3_144 = arith.constant 3 : index
    %c0_145 = arith.constant 0 : index
    %c0_146 = arith.constant 0 : index
    %222 = vector.load %arg13[%c3_144, %c0_145, %c0_146] : memref<4x64x64xbf16, #tpu.memory_space<vmem>>, vector<1x64x64xbf16>
    %223 = vector.shape_cast %222 : vector<1x64x64xbf16> to vector<64x64xbf16>
    %cst_147 = arith.constant dense<0.000000e+00> : vector<16x64xf32>
    %224 = tpu.matmul %221, %223, %cst_147 {dimension_numbers = #tpu.dot_dimension_numbers<[1], [0], [0], [1], [0, 0, 1, 1], [], []>} : vector<16x64xbf16>, vector<64x64xbf16>, vector<16x64xf32> -> vector<16x64xf32>
    %c3_148 = arith.constant 3 : index
    %c0_149 = arith.constant 0 : index
    %c0_150 = arith.constant 0 : index
    %225 = vector.load %arg14[%c3_148, %c0_149, %c0_150] : memref<4x1x64xf32, #tpu.memory_space<vmem>>, vector<1x1x64xf32>
    %226 = vector.shape_cast %225 : vector<1x1x64xf32> to vector<1x64xf32>
    %227 = vector.broadcast %226 : vector<1x64xf32> to vector<16x64xf32>
    %228 = arith.addf %224, %227 : vector<16x64xf32>
    %229 = arith.truncf %228 : vector<16x64xf32> to vector<16x64xbf16>
    %c3_151 = arith.constant 3 : index
    %c0_152 = arith.constant 0 : index
    %c0_153 = arith.constant 0 : index
    %230 = vector.load %arg15[%c3_151, %c0_152, %c0_153] : memref<4x64x256xbf16, #tpu.memory_space<vmem>>, vector<1x64x256xbf16>
    %231 = vector.shape_cast %230 : vector<1x64x256xbf16> to vector<64x256xbf16>
    %cst_154 = arith.constant dense<0.000000e+00> : vector<16x256xf32>
    %232 = tpu.matmul %229, %231, %cst_154 {dimension_numbers = #tpu.dot_dimension_numbers<[1], [0], [0], [1], [0, 0, 1, 1], [], []>} : vector<16x64xbf16>, vector<64x256xbf16>, vector<16x256xf32> -> vector<16x256xf32>
    %233 = arith.addf %180, %232 : vector<16x256xf32>
    %c0_155 = arith.constant 0 : index
    %c0_156 = arith.constant 0 : index
    %234 = vector.load %arg16[%c0_155, %c0_156] : memref<1x256xf32, #tpu.memory_space<vmem>>, vector<1x256xf32>
    %235 = vector.broadcast %234 : vector<1x256xf32> to vector<16x256xf32>
    %236 = arith.addf %233, %235 : vector<16x256xf32>
    %cst_157 = arith.constant 0.000000e+00 : f32
    %237 = vector.broadcast %cst_157 : f32 to vector<16x256xf32>
    %238 = arith.cmpf oge, %236, %237 : vector<16x256xf32>
    %cst_158 = arith.constant 2.000000e-01 : f32
    %239 = vector.broadcast %cst_158 : f32 to vector<16x256xf32>
    %240 = arith.mulf %239, %236 : vector<16x256xf32>
    %241 = arith.select %238, %236, %240 : vector<16x256xi1>, vector<16x256xf32>
    %242 = vector.shape_cast %241 : vector<16x256xf32> to vector<8x2x256xf32>
    %cst_159 = arith.constant dense<0xFF800000> : vector<2x256xf32>
    %243 = vector.multi_reduction <maximumf>, %242, %cst_159 [0] : vector<8x2x256xf32> to vector<2x256xf32>
    %c0_i32 = arith.constant 0 : i32
    %244 = arith.cmpi eq, %arg1, %c0_i32 : i32
    %245 = arith.extui %244 : i1 to i32
    %c0_i32_160 = arith.constant 0 : i32
    %246 = arith.cmpi ne, %245, %c0_i32_160 : i32
    scf.if %246 {
      %c0_163 = arith.constant 0 : index
      %c0_164 = arith.constant 0 : index
      %c0_165 = arith.constant 0 : index
      %250 = vector.load %arg17[%c0_163, %c0_164, %c0_165] : memref<1x2x256xf32, #tpu.memory_space<vmem>>, vector<1x2x256xf32>
      %251 = vector.shape_cast %250 : vector<1x2x256xf32> to vector<2x256xf32>
      %252 = vector.shape_cast %243 : vector<2x256xf32> to vector<1x2x256xf32>
      tpu.vector_store %arg17[%c0_163, %c0_164, %c0_165], %252 {strides = array<i32>} : memref<1x2x256xf32, #tpu.memory_space<vmem>>, vector<1x2x256xf32>,
    } else {
    }
    %c0_i32_161 = arith.constant 0 : i32
    %247 = arith.cmpi sgt, %arg1, %c0_i32_161 : i32
    %248 = arith.extui %247 : i1 to i32
    %c0_i32_162 = arith.constant 0 : i32
    %249 = arith.cmpi ne, %248, %c0_i32_162 : i32
    scf.if %249 {
      %c0_163 = arith.constant 0 : index
      %c0_164 = arith.constant 0 : index
      %c0_165 = arith.constant 0 : index
      %250 = vector.load %arg17[%c0_163, %c0_164, %c0_165] : memref<1x2x256xf32, #tpu.memory_space<vmem>>, vector<1x2x256xf32>
      %251 = vector.shape_cast %250 : vector<1x2x256xf32> to vector<2x256xf32>
      %252 = arith.maximumf %251, %243 : vector<2x256xf32>
      %c0_166 = arith.constant 0 : index
      %c0_167 = arith.constant 0 : index
      %c0_168 = arith.constant 0 : index
      %253 = vector.load %arg17[%c0_166, %c0_167, %c0_168] : memref<1x2x256xf32, #tpu.memory_space<vmem>>, vector<1x2x256xf32>
      %254 = vector.shape_cast %253 : vector<1x2x256xf32> to vector<2x256xf32>
      %255 = vector.shape_cast %252 : vector<2x256xf32> to vector<1x2x256xf32>
      tpu.vector_store %arg17[%c0_166, %c0_167, %c0_168], %255 {strides = array<i32>} : memref<1x2x256xf32, #tpu.memory_space<vmem>>, vector<1x2x256xf32>,
    } else {
    }
    return
  }
  func.func @transform_0(%arg0: i32, %arg1: i32) -> (i32, i32, i32) {
    %c4_i32 = arith.constant 4 : i32
    %0 = arith.muli %arg0, %c4_i32 : i32
    %1 = arith.addi %0, %arg1 : i32
    %c0_i32 = arith.constant 0 : i32
    %c0_i32_0 = arith.constant 0 : i32
    %c0_i32_1 = arith.constant 0 : i32
    return %c0_i32, %1, %c0_i32_0 : i32, i32, i32
  }
  func.func @transform_1(%arg0: i32, %arg1: i32) -> (i32, i32) {
    %c0_i32 = arith.constant 0 : i32
    %c0_i32_0 = arith.constant 0 : i32
    %c0_i32_1 = arith.constant 0 : i32
    return %c0_i32, %c0_i32_0 : i32, i32
  }
  func.func @transform_2(%arg0: i32, %arg1: i32) -> (i32, i32) {
    %c0_i32 = arith.constant 0 : i32
    %c0_i32_0 = arith.constant 0 : i32
    %c0_i32_1 = arith.constant 0 : i32
    return %c0_i32, %c0_i32_0 : i32, i32
  }
  func.func @transform_3(%arg0: i32, %arg1: i32) -> (i32, i32) {
    %c0_i32 = arith.constant 0 : i32
    %c0_i32_0 = arith.constant 0 : i32
    %c0_i32_1 = arith.constant 0 : i32
    return %c0_i32, %c0_i32_0 : i32, i32
  }
  func.func @transform_4(%arg0: i32, %arg1: i32) -> (i32, i32) {
    %c0_i32 = arith.constant 0 : i32
    %c0_i32_0 = arith.constant 0 : i32
    %c0_i32_1 = arith.constant 0 : i32
    return %c0_i32, %c0_i32_0 : i32, i32
  }
  func.func @transform_5(%arg0: i32, %arg1: i32) -> (i32, i32, i32) {
    %c0_i32 = arith.constant 0 : i32
    %c0_i32_0 = arith.constant 0 : i32
    %c0_i32_1 = arith.constant 0 : i32
    %c0_i32_2 = arith.constant 0 : i32
    return %c0_i32, %c0_i32_0, %c0_i32_1 : i32, i32, i32
  }
  func.func @transform_6(%arg0: i32, %arg1: i32) -> (i32, i32, i32) {
    %c0_i32 = arith.constant 0 : i32
    %c0_i32_0 = arith.constant 0 : i32
    %c0_i32_1 = arith.constant 0 : i32
    %c0_i32_2 = arith.constant 0 : i32
    return %c0_i32, %c0_i32_0, %c0_i32_1 : i32, i32, i32
  }
  func.func @transform_7(%arg0: i32, %arg1: i32) -> (i32, i32, i32) {
    %c0_i32 = arith.constant 0 : i32
    %c0_i32_0 = arith.constant 0 : i32
    %c0_i32_1 = arith.constant 0 : i32
    %c0_i32_2 = arith.constant 0 : i32
    return %c0_i32, %c0_i32_0, %c0_i32_1 : i32, i32, i32
  }
  func.func @transform_8(%arg0: i32, %arg1: i32) -> (i32, i32, i32) {
    %c0_i32 = arith.constant 0 : i32
    %c0_i32_0 = arith.constant 0 : i32
    %c0_i32_1 = arith.constant 0 : i32
    %c0_i32_2 = arith.constant 0 : i32
    return %c0_i32, %c0_i32_0, %c0_i32_1 : i32, i32, i32
  }
  func.func @transform_9(%arg0: i32, %arg1: i32) -> (i32, i32, i32) {
    %c0_i32 = arith.constant 0 : i32
    %c0_i32_0 = arith.constant 0 : i32
    %c0_i32_1 = arith.constant 0 : i32
    %c0_i32_2 = arith.constant 0 : i32
    return %c0_i32, %c0_i32_0, %c0_i32_1 : i32, i32, i32
  }
  func.func @transform_10(%arg0: i32, %arg1: i32) -> (i32, i32, i32) {
    %c0_i32 = arith.constant 0 : i32
    %c0_i32_0 = arith.constant 0 : i32
    %c0_i32_1 = arith.constant 0 : i32
    %c0_i32_2 = arith.constant 0 : i32
    return %c0_i32, %c0_i32_0, %c0_i32_1 : i32, i32, i32
  }
  func.func @transform_11(%arg0: i32, %arg1: i32) -> (i32, i32, i32) {
    %c0_i32 = arith.constant 0 : i32
    %c0_i32_0 = arith.constant 0 : i32
    %c0_i32_1 = arith.constant 0 : i32
    %c0_i32_2 = arith.constant 0 : i32
    return %c0_i32, %c0_i32_0, %c0_i32_1 : i32, i32, i32
  }
  func.func @transform_12(%arg0: i32, %arg1: i32) -> (i32, i32, i32) {
    %c0_i32 = arith.constant 0 : i32
    %c0_i32_0 = arith.constant 0 : i32
    %c0_i32_1 = arith.constant 0 : i32
    %c0_i32_2 = arith.constant 0 : i32
    return %c0_i32, %c0_i32_0, %c0_i32_1 : i32, i32, i32
  }
  func.func @transform_13(%arg0: i32, %arg1: i32) -> (i32, i32, i32) {
    %c0_i32 = arith.constant 0 : i32
    %c0_i32_0 = arith.constant 0 : i32
    %c0_i32_1 = arith.constant 0 : i32
    %c0_i32_2 = arith.constant 0 : i32
    return %c0_i32, %c0_i32_0, %c0_i32_1 : i32, i32, i32
  }
  func.func @transform_14(%arg0: i32, %arg1: i32) -> (i32, i32) {
    %c0_i32 = arith.constant 0 : i32
    %c0_i32_0 = arith.constant 0 : i32
    %c0_i32_1 = arith.constant 0 : i32
    return %c0_i32, %c0_i32_0 : i32, i32
  }
  func.func @transform_15(%arg0: i32, %arg1: i32) -> (i32, i32, i32) {
    %c0_i32 = arith.constant 0 : i32
    %c0_i32_0 = arith.constant 0 : i32
    %c0_i32_1 = arith.constant 0 : i32
    return %arg0, %c0_i32, %c0_i32_0 : i32, i32, i32
  }
}

</mosaic_0001>

<llo_original>
// kernel: _pct_forward.1
$region0: #{_pct_forward.1}
  #allocation0 [shape = 'u32[]', space=smem, size = 0x4, offset = 0x4, fixed_abs, tag = 'smem constant byte address 0x4 - core index']
  #allocation1 [shape = 'u32[144,128]{1,0:T(1,128)}', space=vmem, size = 0x12000, scoped, tag = 'internal scratch']
  %s0 = inlined_call_operand.vmem [shape: bf16[2,32,3], index: 0, kind: input, shape index: {}]
  %s1 = inlined_call_operand.vmem [shape: bf16[3,64], index: 1, kind: input, shape index: {}]
  %s2 = inlined_call_operand.vmem [shape: f32[1,64], index: 2, kind: input, shape index: {}]
  %s3 = inlined_call_operand.vmem [shape: bf16[64,64], index: 3, kind: input, shape index: {}]
  %s4 = inlined_call_operand.vmem [shape: f32[1,64], index: 4, kind: input, shape index: {}]
  %s5 = inlined_call_operand.hbm [shape: bf16[4,64,64], index: 5, kind: input, shape index: {}]
  %s6 = inlined_call_operand.vmem [shape: f32[4,1,64], index: 6, kind: input, shape index: {}]
  %s7 = inlined_call_operand.hbm [shape: bf16[4,64,64], index: 7, kind: input, shape index: {}]
  %s8 = inlined_call_operand.vmem [shape: f32[4,1,64], index: 8, kind: input, shape index: {}]
  %s9 = inlined_call_operand.hbm [shape: bf16[4,64,64], index: 9, kind: input, shape index: {}]
  %s10 = inlined_call_operand.vmem [shape: f32[4,1,64], index: 10, kind: input, shape index: {}]
  %s11 = inlined_call_operand.hbm [shape: bf16[4,64,64], index: 11, kind: input, shape index: {}]
  %s12 = inlined_call_operand.vmem [shape: f32[4,1,64], index: 12, kind: input, shape index: {}]
  %s13 = inlined_call_operand.hbm [shape: bf16[4,64,256], index: 13, kind: input, shape index: {}]
  %s14 = inlined_call_operand.vmem [shape: f32[1,256], index: 14, kind: input, shape index: {}]
  %s15 = inlined_call_operand.vmem [shape: f32[1,2,256], index: 15, kind: output, shape index: {}]
  %s16 = sld [smem:[#allocation0]]
  $region162: #{_pct_forward.1} parent=0
    _
  %s18 = ssub.s32 1, %s16
  %s19 = scalar_select 0, %s18, %s16
  $region1: #{_pct_forward.1} parent=0
    #allocation2 [shape = 'u8[8192]{0}', space=vmem, size = 0x2000, scoped, tag = 'input window, operand 0']
    #allocation3 [shape = 'u8[65536]{0}', space=vmem, size = 0x10000, scoped, tag = 'input window, operand 5, single buffered']
    #allocation4 [shape = 's32[2]{0}', space=sflag, size = 0x8, scoped, tag = 'scoped memory for _pct_forward.1']
    #allocation5 [shape = 'u8[65536]{0}', space=vmem, size = 0x10000, scoped, tag = 'input window, operand 7, single buffered']
    #allocation6 [shape = 's32[1]{0}', space=sflag, size = 0x4, scoped, tag = 'scoped memory for _pct_forward.1']
    #allocation7 [shape = 'u8[65536]{0}', space=vmem, size = 0x10000, scoped, tag = 'input window, operand 9, single buffered']
    #allocation8 [shape = 'u8[65536]{0}', space=vmem, size = 0x10000, scoped, tag = 'input window, operand 11, single buffered']
    #allocation9 [shape = 's32[1]{0}', space=sflag, size = 0x4, scoped, tag = 'scoped memory for _pct_forward.1']
    #allocation10 [shape = 'u8[131072]{0}', space=vmem, size = 0x20000, scoped, tag = 'input window, operand 13, single buffered']
    %20 = vsyncpa [#allocation4], 0
    %21 = vsyncpa [#allocation6], 0
    %22 = vsyncpa [#allocation9], 0
    loop: start=0, step=1, limit=6
    $region2: #{_pct_forward.1} parent=1 // loop_pre_header
      _
    $region3: #{_pct_forward.1} parent=1 // loop_header
      %s24 = sphi 0, %s28
      %p25 = scmp.ge.s32.totalorder %s24, 6
      %s31 = sphi 0, %s43
      %s32 = sphi 0, %s39
      %s33 = sphi 0, %s31
      %s34 = sphi 0, %s32
      %s35 = sphi 0, %s33
      %s36 = sphi 0, %s34
      %s50 = sphi 0, %s52
      %s53 = sphi 0, %s50
      %s54 = sphi 0, %s53
      %s70 = sphi 0, %s54
      %s74 = sphi 0, %s74
      %s76 = sphi 0, %s74
      %s77 = sphi 0, %s76
      %s91 = sphi 0, %s77
      %s95 = sphi 0, %s95
      %s97 = sphi 0, %s95
      %s98 = sphi 0, %s97
      %s112 = sphi 0, %s98
      %s116 = sphi 0, %s116
      %s118 = sphi 0, %s116
      %s119 = sphi 0, %s118
      %s133 = sphi 0, %s119
      %s137 = sphi 0, %s137
      %s139 = sphi 0, %s137
      %s140 = sphi 0, %s139
      %s154 = sphi 0, %s140
      %s158 = sphi 0, %s158
      %s160 = sphi 0, %s158
      %s161 = sphi 0, %s160
      %s175 = sphi 0, %s161
      %s179 = sphi 0, %s179
      %s181 = sphi 0, %s179
      %s182 = sphi 0, %s181
      %s196 = sphi 0, %s182
      %s200 = sphi 0, %s200
      %s202 = sphi 0, %s200
      %s203 = sphi 0, %s202
      %s217 = sphi 0, %s203
      %s221 = sphi 0, %s221
      %s223 = sphi 0, %s221
      %s224 = sphi 0, %s223
      %s238 = sphi 0, %s224
      %s242 = sphi 0, %s242
      %s244 = sphi 0, %s242
      %s245 = sphi 0, %s244
      %s259 = sphi 0, %s245
      %s263 = sphi 0, %s263
      %s265 = sphi 0, %s263
      %s266 = sphi 0, %s265
      %s280 = sphi 0, %s266
      %s284 = sphi 0, %s284
      %s286 = sphi 0, %s284
      %s287 = sphi 0, %s286
      %s301 = sphi 0, %s287
      %s305 = sphi 0, %s305
      %s307 = sphi 0, %s305
      %s308 = sphi 0, %s307
      %s322 = sphi 0, %s308
      %s326 = sphi 0, %s326
      %s328 = sphi 0, %s326
      %s329 = sphi 0, %s328
      %s343 = sphi 0, %s329
      %s347 = sphi 0, %s347
      %s349 = sphi 0, %s347
      %s350 = sphi 0, %s349
      %s364 = sphi 0, %s350
      %s370 = sphi 0, %s372
      %s373 = sphi 0, %s370
      %s374 = sphi 0, %s373
      %s390 = sphi 0, %s374
    $region4: #{_pct_forward.1} parent=1 // loop_header_branch
      %27 = sbr.rel (%p25) target = $region8
    $region5: #{_pct_forward.1} parent=1 // loop_body
      %s29 = ssub.s32 %s24, 1
      %s30 = ssub.s32 %s24, 2
      %s37 = sadd.s32 1, %s32
      %p38 = scmp.ge.s32.totalorder %s37, 4
      %s39 = scalar_select %p38, 0, %s37
      %s40 = sadd.s32 1, %s31
      %s41 = scalar_select %p38, %s40, %s31
      %p42 = scmp.ge.s32.totalorder %s41, 1
      %s43 = scalar_select %p42, 0, %s41
      %s44 = smul.u32 %s31, 4
      %s45 = sadd.s32 %s44, %s32
      %s46 = smul.u32 %s43, 4
      %s47 = sadd.s32 %s46, %s39
      %s48 = ssub.s32 %s45, %s47
      %p49 = scmp.eq.s32.totalorder %s48, 0
      %s51 = sadd.s32 %s50, 1
      %s52 = scalar_select %p49, %s50, %s51
      %p55 = pneg %p49
      %p56 = scmp.eq.s32.totalorder %s24, 3
      %p57 = por %p55, %p56
      %p58 = scmp.ne.s32.totalorder %s50, %s53
      %p59 = scmp.eq.s32.totalorder %s24, 0
      %p60 = por %p58, %p59
      %p61 = scmp.ne.s32.totalorder %s50, %s53
      %p62 = scmp.eq.s32.totalorder %s29, 3
      %p63 = por %p61, %p62
      %p64 = scmp.ne.s32.totalorder %s53, %s54
      %p65 = scmp.eq.s32.totalorder %s29, 0
      %p66 = por %p64, %p65
      %p67 = scmp.ne.s32.totalorder %s53, %s54
      %p68 = scmp.eq.s32.totalorder %s30, 3
      %p69 = por %p67, %p68
      %p71 = scmp.ne.s32.totalorder %s54, %s70
      %p72 = scmp.eq.s32.totalorder %s30, 0
      %p73 = por %p71, %p72
      %s75 = sadd.s32 %s74, 1
      %p78 = scmp.eq.s32.totalorder %s24, 3
      %p79 = scmp.ne.s32.totalorder %s74, %s76
      %p80 = scmp.eq.s32.totalorder %s24, 0
      %p81 = por %p79, %p80
      %p82 = scmp.ne.s32.totalorder %s74, %s76
      %p83 = scmp.eq.s32.totalorder %s29, 3
      %p84 = por %p82, %p83
      %p85 = scmp.ne.s32.totalorder %s76, %s77
      %p86 = scmp.eq.s32.totalorder %s29, 0
      %p87 = por %p85, %p86
      %p88 = scmp.ne.s32.totalorder %s76, %s77
      %p89 = scmp.eq.s32.totalorder %s30, 3
      %p90 = por %p88, %p89
      %p92 = scmp.ne.s32.totalorder %s77, %s91
      %p93 = scmp.eq.s32.totalorder %s30, 0
      %p94 = por %p92, %p93
      %s96 = sadd.s32 %s95, 1
      %p99 = scmp.eq.s32.totalorder %s24, 3
      %p100 = scmp.ne.s32.totalorder %s95, %s97
      %p101 = scmp.eq.s32.totalorder %s24, 0
      %p102 = por %p100, %p101
      %p103 = scmp.ne.s32.totalorder %s95, %s97
      %p104 = scmp.eq.s32.totalorder %s29, 3
      %p105 = por %p103, %p104
      %p106 = scmp.ne.s32.totalorder %s97, %s98
      %p107 = scmp.eq.s32.totalorder %s29, 0
      %p108 = por %p106, %p107
      %p109 = scmp.ne.s32.totalorder %s97, %s98
      %p110 = scmp.eq.s32.totalorder %s30, 3
      %p111 = por %p109, %p110
      %p113 = scmp.ne.s32.totalorder %s98, %s112
      %p114 = scmp.eq.s32.totalorder %s30, 0
      %p115 = por %p113, %p114
      %s117 = sadd.s32 %s116, 1
      %p120 = scmp.eq.s32.totalorder %s24, 3
      %p121 = scmp.ne.s32.totalorder %s116, %s118
      %p122 = scmp.eq.s32.totalorder %s24, 0
      %p123 = por %p121, %p122
      %p124 = scmp.ne.s32.totalorder %s116, %s118
      %p125 = scmp.eq.s32.totalorder %s29, 3
      %p126 = por %p124, %p125
      %p127 = scmp.ne.s32.totalorder %s118, %s119
      %p128 = scmp.eq.s32.totalorder %s29, 0
      %p129 = por %p127, %p128
      %p130 = scmp.ne.s32.totalorder %s118, %s119
      %p131 = scmp.eq.s32.totalorder %s30, 3
      %p132 = por %p130, %p131
      %p134 = scmp.ne.s32.totalorder %s119, %s133
      %p135 = scmp.eq.s32.totalorder %s30, 0
      %p136 = por %p134, %p135
      %s138 = sadd.s32 %s137, 1
      %p141 = scmp.eq.s32.totalorder %s24, 3
      %p142 = scmp.ne.s32.totalorder %s137, %s139
      %p143 = scmp.eq.s32.totalorder %s24, 0
      %p144 = por %p142, %p143
      %p145 = scmp.ne.s32.totalorder %s137, %s139
      %p146 = scmp.eq.s32.totalorder %s29, 3
      %p147 = por %p145, %p146
      %p148 = scmp.ne.s32.totalorder %s139, %s140
      %p149 = scmp.eq.s32.totalorder %s29, 0
      %p150 = por %p148, %p149
      %p151 = scmp.ne.s32.totalorder %s139, %s140
      %p152 = scmp.eq.s32.totalorder %s30, 3
      %p153 = por %p151, %p152
      %p155 = scmp.ne.s32.totalorder %s140, %s154
      %p156 = scmp.eq.s32.totalorder %s30, 0
      %p157 = por %p155, %p156
      %s159 = sadd.s32 %s158, 1
      %p162 = scmp.eq.s32.totalorder %s24, 3
      %p163 = scmp.ne.s32.totalorder %s158, %s160
      %p164 = scmp.eq.s32.totalorder %s24, 0
      %p165 = por %p163, %p164
      %p166 = scmp.ne.s32.totalorder %s158, %s160
      %p167 = scmp.eq.s32.totalorder %s29, 3
      %p168 = por %p166, %p167
      %p169 = scmp.ne.s32.totalorder %s160, %s161
      %p170 = scmp.eq.s32.totalorder %s29, 0
      %p171 = por %p169, %p170
      %p172 = scmp.ne.s32.totalorder %s160, %s161
      %p173 = scmp.eq.s32.totalorder %s30, 3
      %p174 = por %p172, %p173
      %p176 = scmp.ne.s32.totalorder %s161, %s175
      %p177 = scmp.eq.s32.totalorder %s30, 0
      %p178 = por %p176, %p177
      %s180 = sadd.s32 %s179, 1
      %p183 = scmp.eq.s32.totalorder %s24, 3
      %p184 = scmp.ne.s32.totalorder %s179, %s181
      %p185 = scmp.eq.s32.totalorder %s24, 0
      %p186 = por %p184, %p185
      %p187 = scmp.ne.s32.totalorder %s179, %s181
      %p188 = scmp.eq.s32.totalorder %s29, 3
      %p189 = por %p187, %p188
      %p190 = scmp.ne.s32.totalorder %s181, %s182
      %p191 = scmp.eq.s32.totalorder %s29, 0
      %p192 = por %p190, %p191
      %p193 = scmp.ne.s32.totalorder %s181, %s182
      %p194 = scmp.eq.s32.totalorder %s30, 3
      %p195 = por %p193, %p194
      %p197 = scmp.ne.s32.totalorder %s182, %s196
      %p198 = scmp.eq.s32.totalorder %s30, 0
      %p199 = por %p197, %p198
      %s201 = sadd.s32 %s200, 1
      %p204 = scmp.eq.s32.totalorder %s24, 3
      %p205 = scmp.ne.s32.totalorder %s200, %s202
      %p206 = scmp.eq.s32.totalorder %s24, 0
      %p207 = por %p205, %p206
      %p208 = scmp.ne.s32.totalorder %s200, %s202
      %p209 = scmp.eq.s32.totalorder %s29, 3
      %p210 = por %p208, %p209
      %p211 = scmp.ne.s32.totalorder %s202, %s203
      %p212 = scmp.eq.s32.totalorder %s29, 0
      %p213 = por %p211, %p212
      %p214 = scmp.ne.s32.totalorder %s202, %s203
      %p215 = scmp.eq.s32.totalorder %s30, 3
      %p216 = por %p214, %p215
      %p218 = scmp.ne.s32.totalorder %s203, %s217
      %p219 = scmp.eq.s32.totalorder %s30, 0
      %p220 = por %p218, %p219
      %s222 = sadd.s32 %s221, 1
      %p225 = scmp.eq.s32.totalorder %s24, 3
      %p226 = scmp.ne.s32.totalorder %s221, %s223
      %p227 = scmp.eq.s32.totalorder %s24, 0
      %p228 = por %p226, %p227
      %p229 = scmp.ne.s32.totalorder %s221, %s223
      %p230 = scmp.eq.s32.totalorder %s29, 3
      %p231 = por %p229, %p230
      %p232 = scmp.ne.s32.totalorder %s223, %s224
      %p233 = scmp.eq.s32.totalorder %s29, 0
      %p234 = por %p232, %p233
      %p235 = scmp.ne.s32.totalorder %s223, %s224
      %p236 = scmp.eq.s32.totalorder %s30, 3
      %p237 = por %p235, %p236
      %p239 = scmp.ne.s32.totalorder %s224, %s238
      %p240 = scmp.eq.s32.totalorder %s30, 0
      %p241 = por %p239, %p240
      %s243 = sadd.s32 %s242, 1
      %p246 = scmp.eq.s32.totalorder %s24, 3
      %p247 = scmp.ne.s32.totalorder %s242, %s244
      %p248 = scmp.eq.s32.totalorder %s24, 0
      %p249 = por %p247, %p248
      %p250 = scmp.ne.s32.totalorder %s242, %s244
      %p251 = scmp.eq.s32.totalorder %s29, 3
      %p252 = por %p250, %p251
      %p253 = scmp.ne.s32.totalorder %s244, %s245
      %p254 = scmp.eq.s32.totalorder %s29, 0
      %p255 = por %p253, %p254
      %p256 = scmp.ne.s32.totalorder %s244, %s245
      %p257 = scmp.eq.s32.totalorder %s30, 3
      %p258 = por %p256, %p257
      %p260 = scmp.ne.s32.totalorder %s245, %s259
      %p261 = scmp.eq.s32.totalorder %s30, 0
      %p262 = por %p260, %p261
      %s264 = sadd.s32 %s263, 1
      %p267 = scmp.eq.s32.totalorder %s24, 3
      %p268 = scmp.ne.s32.totalorder %s263, %s265
      %p269 = scmp.eq.s32.totalorder %s24, 0
      %p270 = por %p268, %p269
      %p271 = scmp.ne.s32.totalorder %s263, %s265
      %p272 = scmp.eq.s32.totalorder %s29, 3
      %p273 = por %p271, %p272
      %p274 = scmp.ne.s32.totalorder %s265, %s266
      %p275 = scmp.eq.s32.totalorder %s29, 0
      %p276 = por %p274, %p275
      %p277 = scmp.ne.s32.totalorder %s265, %s266
      %p278 = scmp.eq.s32.totalorder %s30, 3
      %p279 = por %p277, %p278
      %p281 = scmp.ne.s32.totalorder %s266, %s280
      %p282 = scmp.eq.s32.totalorder %s30, 0
      %p283 = por %p281, %p282
      %s285 = sadd.s32 %s284, 1
      %p288 = scmp.eq.s32.totalorder %s24, 3
      %p289 = scmp.ne.s32.totalorder %s284, %s286
      %p290 = scmp.eq.s32.totalorder %s24, 0
      %p291 = por %p289, %p290
      %p292 = scmp.ne.s32.totalorder %s284, %s286
      %p293 = scmp.eq.s32.totalorder %s29, 3
      %p294 = por %p292, %p293
      %p295 = scmp.ne.s32.totalorder %s286, %s287
      %p296 = scmp.eq.s32.totalorder %s29, 0
      %p297 = por %p295, %p296
      %p298 = scmp.ne.s32.totalorder %s286, %s287
      %p299 = scmp.eq.s32.totalorder %s30, 3
      %p300 = por %p298, %p299
      %p302 = scmp.ne.s32.totalorder %s287, %s301
      %p303 = scmp.eq.s32.totalorder %s30, 0
      %p304 = por %p302, %p303
      %s306 = sadd.s32 %s305, 1
      %p309 = scmp.eq.s32.totalorder %s24, 3
      %p310 = scmp.ne.s32.totalorder %s305, %s307
      %p311 = scmp.eq.s32.totalorder %s24, 0
      %p312 = por %p310, %p311
      %p313 = scmp.ne.s32.totalorder %s305, %s307
      %p314 = scmp.eq.s32.totalorder %s29, 3
      %p315 = por %p313, %p314
      %p316 = scmp.ne.s32.totalorder %s307, %s308
      %p317 = scmp.eq.s32.totalorder %s29, 0
      %p318 = por %p316, %p317
      %p319 = scmp.ne.s32.totalorder %s307, %s308
      %p320 = scmp.eq.s32.totalorder %s30, 3
      %p321 = por %p319, %p320
      %p323 = scmp.ne.s32.totalorder %s308, %s322
      %p324 = scmp.eq.s32.totalorder %s30, 0
      %p325 = por %p323, %p324
      %s327 = sadd.s32 %s326, 1
      %p330 = scmp.eq.s32.totalorder %s24, 3
      %p331 = scmp.ne.s32.totalorder %s326, %s328
      %p332 = scmp.eq.s32.totalorder %s24, 0
      %p333 = por %p331, %p332
      %p334 = scmp.ne.s32.totalorder %s326, %s328
      %p335 = scmp.eq.s32.totalorder %s29, 3
      %p336 = por %p334, %p335
      %p337 = scmp.ne.s32.totalorder %s328, %s329
      %p338 = scmp.eq.s32.totalorder %s29, 0
      %p339 = por %p337, %p338
      %p340 = scmp.ne.s32.totalorder %s328, %s329
      %p341 = scmp.eq.s32.totalorder %s30, 3
      %p342 = por %p340, %p341
      %p344 = scmp.ne.s32.totalorder %s329, %s343
      %p345 = scmp.eq.s32.totalorder %s30, 0
      %p346 = por %p344, %p345
      %s348 = sadd.s32 %s347, 1
      %p351 = scmp.eq.s32.totalorder %s24, 3
      %p352 = scmp.ne.s32.totalorder %s347, %s349
      %p353 = scmp.eq.s32.totalorder %s24, 0
      %p354 = por %p352, %p353
      %p355 = scmp.ne.s32.totalorder %s347, %s349
      %p356 = scmp.eq.s32.totalorder %s29, 3
      %p357 = por %p355, %p356
      %p358 = scmp.ne.s32.totalorder %s349, %s350
      %p359 = scmp.eq.s32.totalorder %s29, 0
      %p360 = por %p358, %p359
      %p361 = scmp.ne.s32.totalorder %s349, %s350
      %p362 = scmp.eq.s32.totalorder %s30, 3
      %p363 = por %p361, %p362
      %p365 = scmp.ne.s32.totalorder %s350, %s364
      %p366 = scmp.eq.s32.totalorder %s30, 0
      %p367 = por %p365, %p366
      %s368 = ssub.s32 %s31, %s43
      %p369 = scmp.eq.s32.totalorder %s368, 0
      %s371 = sadd.s32 %s370, 1
      %s372 = scalar_select %p369, %s370, %s371
      %p375 = pneg %p369
      %p376 = scmp.eq.s32.totalorder %s24, 3
      %p377 = por %p375, %p376
      %p378 = scmp.ne.s32.totalorder %s370, %s373
      %p379 = scmp.eq.s32.totalorder %s24, 0
      %p380 = por %p378, %p379
      %p381 = scmp.ne.s32.totalorder %s370, %s373
      %p382 = scmp.eq.s32.totalorder %s29, 3
      %p383 = por %p381, %p382
      %p384 = scmp.ne.s32.totalorder %s373, %s374
      %p385 = scmp.eq.s32.totalorder %s29, 0
      %p386 = por %p384, %p385
      %p387 = scmp.ne.s32.totalorder %s373, %s374
      %p388 = scmp.eq.s32.totalorder %s30, 3
      %p389 = por %p387, %p388
      %p391 = scmp.ne.s32.totalorder %s374, %s390
      %p392 = scmp.eq.s32.totalorder %s30, 0
      %p393 = por %p391, %p392
      %p394 = scmp.le.s32.totalorder 1, %s24
      %p395 = scmp.lt.s32.totalorder %s24, 5
      %p396 = pnand %p394, %p395
      %p397 = pneg %p396
      // Predicated region
      $region9: #{_pct_forward.1} parent=5 // pred_check
        _
      $region10: #{_pct_forward.1} parent=5 // pred_check_branch
        %399 = sbr.rel (%p396) target = $region12
      $region11: #{_pct_forward.1} parent=5 // pred_region
        %s400 = ssub.s32 %s24, 1
        // Predicated region
        $region13: #{_pct_forward.1} parent=11 // pred_check
          %p401 = pneg %p87
        $region14: #{_pct_forward.1} parent=11 // pred_check_branch
          %403 = sbr.rel (%p401) target = $region16
        $region15: #{_pct_forward.1} parent=11 // pred_region
          _
        $region16: #{_pct_forward.1} parent=11 // pred_fallthru
          _
        // Predicated region
        $region17: #{_pct_forward.1} parent=11 // pred_check
          %p404 = pneg %p108
        $region18: #{_pct_forward.1} parent=11 // pred_check_branch
          %406 = sbr.rel (%p404) target = $region20
        $region19: #{_pct_forward.1} parent=11 // pred_region
          _
        $region20: #{_pct_forward.1} parent=11 // pred_fallthru
          _
        // Predicated region
        $region21: #{_pct_forward.1} parent=11 // pred_check
          %p407 = pneg %p129
        $region22: #{_pct_forward.1} parent=11 // pred_check_branch
          %409 = sbr.rel (%p407) target = $region24
        $region23: #{_pct_forward.1} parent=11 // pred_region
          _
        $region24: #{_pct_forward.1} parent=11 // pred_fallthru
          _
        // Predicated region
        $region25: #{_pct_forward.1} parent=11 // pred_check
          %p410 = pneg %p150
        $region26: #{_pct_forward.1} parent=11 // pred_check_branch
          %412 = sbr.rel (%p410) target = $region28
        $region27: #{_pct_forward.1} parent=11 // pred_region
          _
        $region28: #{_pct_forward.1} parent=11 // pred_fallthru
          _
        // Predicated region
        $region29: #{_pct_forward.1} parent=11 // pred_check
          %p413 = pneg %p171
        $region30: #{_pct_forward.1} parent=11 // pred_check_branch
          %415 = sbr.rel (%p413) target = $region32
        $region31: #{_pct_forward.1} parent=11 // pred_region
          %s417 = ssub.s32 2048, 2048
          %418 = vsyncadd [#allocation4], %s417
          %s419 = sshll.u32 [#allocation3], 4
          %s420 = int_to_ptr.vmem [resolvable:$true] %s419
          %425 = dma.hbm_to_vmem [thread:$0]  %s5, 2048, %s420, [#allocation4], 64, 64, 4
        $region32: #{_pct_forward.1} parent=11 // pred_fallthru
          _
        // Predicated region
        $region33: #{_pct_forward.1} parent=11 // pred_check
          %p426 = pneg %p192
        $region34: #{_pct_forward.1} parent=11 // pred_check_branch
          %428 = sbr.rel (%p426) target = $region36
        $region35: #{_pct_forward.1} parent=11 // pred_region
          _
        $region36: #{_pct_forward.1} parent=11 // pred_fallthru
          _
        // Predicated region
        $region37: #{_pct_forward.1} parent=11 // pred_check
          %p429 = pneg %p213
        $region38: #{_pct_forward.1} parent=11 // pred_check_branch
          %431 = sbr.rel (%p429) target = $region40
        $region39: #{_pct_forward.1} parent=11 // pred_region
          %s433 = ssub.s32 2048, 2048
          %434 = vsyncadd [#allocation6], %s433
          %s435 = sshll.u32 [#allocation5], 4
          %s436 = int_to_ptr.vmem [resolvable:$true] %s435
          %441 = dma.hbm_to_vmem [thread:$0]  %s7, 2048, %s436, [#allocation6], 64, 64, 4
        $region40: #{_pct_forward.1} parent=11 // pred_fallthru
          _
        // Predicated region
        $region41: #{_pct_forward.1} parent=11 // pred_check
          %p442 = pneg %p234
        $region42: #{_pct_forward.1} parent=11 // pred_check_branch
          %444 = sbr.rel (%p442) target = $region44
        $region43: #{_pct_forward.1} parent=11 // pred_region
          _
        $region44: #{_pct_forward.1} parent=11 // pred_fallthru
          _
        // Predicated region
        $region45: #{_pct_forward.1} parent=11 // pred_check
          %p445 = pneg %p255
        $region46: #{_pct_forward.1} parent=11 // pred_check_branch
          %447 = sbr.rel (%p445) target = $region48
        $region47: #{_pct_forward.1} parent=11 // pred_region
          %s449 = ssub.s32 2048, 2048
          %450 = vsyncadd [#allocation6], %s449
          %s451 = sshll.u32 [#allocation7], 4
          %s452 = int_to_ptr.vmem [resolvable:$true] %s451
          %457 = dma.hbm_to_vmem [thread:$0]  %s9, 2048, %s452, [#allocation6], 64, 64, 4
        $region48: #{_pct_forward.1} parent=11 // pred_fallthru
          _
        // Predicated region
        $region49: #{_pct_forward.1} parent=11 // pred_check
          %p458 = pneg %p276
        $region50: #{_pct_forward.1} parent=11 // pred_check_branch
          %460 = sbr.rel (%p458) target = $region52
        $region51: #{_pct_forward.1} parent=11 // pred_region
          _
        $region52: #{_pct_forward.1} parent=11 // pred_fallthru
          _
        // Predicated region
        $region53: #{_pct_forward.1} parent=11 // pred_check
          %p461 = pneg %p297
        $region54: #{_pct_forward.1} parent=11 // pred_check_branch
          %463 = sbr.rel (%p461) target = $region56
        $region55: #{_pct_forward.1} parent=11 // pred_region
          %s465 = ssub.s32 2048, 2048
          %466 = vsyncadd [#allocation9], %s465
          %s467 = sshll.u32 [#allocation8], 4
          %s468 = int_to_ptr.vmem [resolvable:$true] %s467
          %473 = dma.hbm_to_vmem [thread:$0]  %s11, 2048, %s468, [#allocation9], 64, 64, 4
        $region56: #{_pct_forward.1} parent=11 // pred_fallthru
          _
        // Predicated region
        $region57: #{_pct_forward.1} parent=11 // pred_check
          %p474 = pneg %p318
        $region58: #{_pct_forward.1} parent=11 // pred_check_branch
          %476 = sbr.rel (%p474) target = $region60
        $region59: #{_pct_forward.1} parent=11 // pred_region
          _
        $region60: #{_pct_forward.1} parent=11 // pred_fallthru
          _
        // Predicated region
        $region61: #{_pct_forward.1} parent=11 // pred_check
          %p477 = pneg %p339
        $region62: #{_pct_forward.1} parent=11 // pred_check_branch
          %479 = sbr.rel (%p477) target = $region64
        $region63: #{_pct_forward.1} parent=11 // pred_region
          %s481 = ssub.s32 4096, 4096
          %482 = vsyncadd [#allocation9], %s481
          %s483 = sshll.u32 [#allocation10], 4
          %s484 = int_to_ptr.vmem [resolvable:$true] %s483
          %489 = dma.hbm_to_vmem [thread:$0]  %s13, 4096, %s484, [#allocation9], 128, 128, 8
        $region64: #{_pct_forward.1} parent=11 // pred_fallthru
          _
        // Predicated region
        $region65: #{_pct_forward.1} parent=11 // pred_check
          %p490 = pneg %p360
        $region66: #{_pct_forward.1} parent=11 // pred_check_branch
          %492 = sbr.rel (%p490) target = $region68
        $region67: #{_pct_forward.1} parent=11 // pred_region
          _
        $region68: #{_pct_forward.1} parent=11 // pred_fallthru
          _
      $region12: #{_pct_forward.1} parent=5 // pred_fallthru
        _
      %p493 = scmp.lt.s32.totalorder %s24, 4
      // Predicated region
      $region69: #{_pct_forward.1} parent=5 // pred_check
        %p494 = pneg %p493
      $region70: #{_pct_forward.1} parent=5 // pred_check_branch
        %496 = sbr.rel (%p494) target = $region72
      $region71: #{_pct_forward.1} parent=5 // pred_region
        // Predicated region
        $region73: #{_pct_forward.1} parent=71 // pred_check
          %p497 = pneg %p60
        $region74: #{_pct_forward.1} parent=71 // pred_check_branch
          %499 = sbr.rel (%p497) target = $region76
        $region75: #{_pct_forward.1} parent=71 // pred_region
          %s500 = sand.u32 %s50, 1
          %s501 = sand.u32 %s50, 1
          %s502 = smul.addr %s501, 8
          %s503 = scalar_lea.vmem [#allocation2], %s502
          %s504 = smul.u32 %s31, 4
          %s505 = sadd.s32 %s504, %s32
          %s506 = smul.addr %s505, 4
          %s507 = scalar_lea.vmem %s0, %s506
          // Predicated region
          $region77: #{_pct_forward.1} parent=75 // pred_check
            _
          $region78: #{_pct_forward.1} parent=75 // pred_check_branch
            %509 = sbr.rel (0) target = $region80
          $region79: #{_pct_forward.1} parent=75 // pred_region
            // Predicated region
            $region81: #{_pct_forward.1} parent=79 // pred_check
              _
            $region82: #{_pct_forward.1} parent=79 // pred_check_branch
              %511 = sbr.rel target = $region84
            $region83: #{_pct_forward.1} parent=79 // pred_region
              // Predicated region
              $region96: #{_pct_forward.1} parent=83 // pred_check
                _
              $region97: #{_pct_forward.1} parent=83 // pred_check_branch
                %528 = sbr.rel (0) target = $region99
              $region98: #{_pct_forward.1} parent=83 // pred_region
                loop: start=0, step=1, limit=1
                $region100: #{_pct_forward.1} parent=98 // loop_pre_header
                  _
                $region101: #{_pct_forward.1} parent=98 // loop_header
                  %s530 = sphi 0, %s534
                  %p531 = scmp.ge.s32.totalorder %s530, 1
                  %s535 = sphi %s507, %s507
                  %s536 = sphi %s503, %s503
                $region102: #{_pct_forward.1} parent=98 // loop_header_branch
                  %533 = sbr.rel (%p531) target = $region106
                $region103: #{_pct_forward.1} parent=98 // loop_body
                  _
                $region104: #{_pct_forward.1} parent=98 // loop_footer
                  %s534 = sadd.s32 1, %s530
                $region105: #{_pct_forward.1} parent=98 // loop_footer_branch
                  %529 = sbr.rel target = $region101
                $region106: #{_pct_forward.1} parent=98 // loop_exit
                  _
                loop: start=0, step=1, limit=1
                $region107: #{_pct_forward.1} parent=98 // loop_pre_header
                  _
                $region108: #{_pct_forward.1} parent=98 // loop_header
                  %s539 = sphi 0, %s543
                  %p540 = scmp.ge.s32.totalorder %s539, 1
                  %s544 = sphi %s507, %s507
                  %s545 = sphi %s503, %s503
                $region109: #{_pct_forward.1} parent=98 // loop_header_branch
                  %542 = sbr.rel (%p540) target = $region113
                $region110: #{_pct_forward.1} parent=98 // loop_body
                  %v546 = vld [vmem:[%s544] sm:$0xf]
                  %547 = vst [vmem:[%s545] sm:$0xf] %v546
                  %v548 = vld [vmem:[%s544 + $0x10] sm:$0xf]
                  %549 = vst [vmem:[%s545 + $0x4] sm:$0xf] %v548
                $region111: #{_pct_forward.1} parent=98 // loop_footer
                  %s543 = sadd.s32 1, %s539
                $region112: #{_pct_forward.1} parent=98 // loop_footer_branch
                  %538 = sbr.rel target = $region108
                $region113: #{_pct_forward.1} parent=98 // loop_exit
                  _
              $region99: #{_pct_forward.1} parent=83 // pred_fallthru
                _
            $region84: #{_pct_forward.1} parent=79 // pred_fallthru
              _
            // Predicated region
            $region85: #{_pct_forward.1} parent=79 // pred_check
              _
            $region86: #{_pct_forward.1} parent=79 // pred_check_branch
              %513 = sbr.rel (0) target = $region88
            $region87: #{_pct_forward.1} parent=79 // pred_region
              loop: start=0, step=1, limit=1
              $region89: #{_pct_forward.1} parent=87 // loop_pre_header
                _
              $region90: #{_pct_forward.1} parent=87 // loop_header
                %s516 = sphi 0, %s520
                %p517 = scmp.ge.s32.totalorder %s516, 1
                %s521 = sphi %s507, %s507
                %s522 = sphi %s503, %s503
              $region91: #{_pct_forward.1} parent=87 // loop_header_branch
                %519 = sbr.rel (%p517) target = $region95
              $region92: #{_pct_forward.1} parent=87 // loop_body
                %v523 = vld [vmem:[%s521] sm:$0xf]
                %524 = vst [vmem:[%s522] sm:$0xf] %v523
                %v525 = vld [vmem:[%s521 + $0x10] sm:$0xf]
                %526 = vst [vmem:[%s522 + $0x4] sm:$0xf] %v525
              $region93: #{_pct_forward.1} parent=87 // loop_footer
                %s520 = sadd.s32 1, %s516
              $region94: #{_pct_forward.1} parent=87 // loop_footer_branch
                %515 = sbr.rel target = $region90
              $region95: #{_pct_forward.1} parent=87 // loop_exit
                _
            $region88: #{_pct_forward.1} parent=79 // pred_fallthru
              _
          $region80: #{_pct_forward.1} parent=75 // pred_fallthru
            _
          %550 = vnop
        $region76: #{_pct_forward.1} parent=71 // pred_fallthru
          _
      $region72: #{_pct_forward.1} parent=5 // pred_fallthru
        _
      %p551 = scmp.le.s32.totalorder 1, %s24
      %p552 = scmp.lt.s32.totalorder %s24, 5
      %p553 = pnand %p551, %p552
      %p554 = pneg %p553
      // Predicated region
      $region114: #{_pct_forward.1} parent=5 // pred_check
        _
      $region115: #{_pct_forward.1} parent=5 // pred_check_branch
        %556 = sbr.rel (%p553) target = $region117
      $region116: #{_pct_forward.1} parent=5 // pred_region
        %s557 = ssub.s32 %s24, 1
        %s558 = sand.u32 %s53, 1
        %s559 = sand.u32 %s53, 1
        %s560 = smul.addr %s559, 8
        %s561 = scalar_lea.vmem [#allocation2], %s560
        // Predicated region
        $region118: #{_pct_forward.1} parent=116 // pred_check
          %p562 = pneg %p66
        $region119: #{_pct_forward.1} parent=116 // pred_check_branch
          %564 = sbr.rel (%p562) target = $region121
        $region120: #{_pct_forward.1} parent=116 // pred_region
          _
        $region121: #{_pct_forward.1} parent=116 // pred_fallthru
          _
        // Predicated region
        $region122: #{_pct_forward.1} parent=116 // pred_check
          %p565 = pneg %p171
        $region123: #{_pct_forward.1} parent=116 // pred_check_branch
          %567 = sbr.rel (%p565) target = $region125
        $region124: #{_pct_forward.1} parent=116 // pred_region
          %568 = dma.done [#allocation4], 2048
        $region125: #{_pct_forward.1} parent=116 // pred_fallthru
          _
        // Predicated region
        $region126: #{_pct_forward.1} parent=116 // pred_check
          %p569 = pneg %p213
        $region127: #{_pct_forward.1} parent=116 // pred_check_branch
          %571 = sbr.rel (%p569) target = $region129
        $region128: #{_pct_forward.1} parent=116 // pred_region
          %572 = dma.done [#allocation6], 2048
        $region129: #{_pct_forward.1} parent=116 // pred_fallthru
          _
        // Predicated region
        $region130: #{_pct_forward.1} parent=116 // pred_check
          %p573 = pneg %p255
        $region131: #{_pct_forward.1} parent=116 // pred_check_branch
          %575 = sbr.rel (%p573) target = $region133
        $region132: #{_pct_forward.1} parent=116 // pred_region
          %576 = dma.done [#allocation6], 2048
        $region133: #{_pct_forward.1} parent=116 // pred_fallthru
          _
        // Predicated region
        $region134: #{_pct_forward.1} parent=116 // pred_check
          %p577 = pneg %p297
        $region135: #{_pct_forward.1} parent=116 // pred_check_branch
          %579 = sbr.rel (%p577) target = $region137
        $region136: #{_pct_forward.1} parent=116 // pred_region
          %580 = dma.done [#allocation9], 2048
        $region137: #{_pct_forward.1} parent=116 // pred_fallthru
          _
        // Predicated region
        $region138: #{_pct_forward.1} parent=116 // pred_check
          %p581 = pneg %p339
        $region139: #{_pct_forward.1} parent=116 // pred_check_branch
          %583 = sbr.rel (%p581) target = $region141
        $region140: #{_pct_forward.1} parent=116 // pred_region
          %584 = dma.done [#allocation9], 4096
        $region141: #{_pct_forward.1} parent=116 // pred_fallthru
          _
        %s585 = sand.u32 %s53, 1
        %s586 = sand.u32 %s53, 1
        %s587 = smul.addr %s586, 8
        %s588 = scalar_lea.vmem [#allocation2], %s587
        %p589 = pneg %p66
        %p590 = pneg %p63
        %p591 = pneg %p87
        %p592 = pneg %p84
        %p593 = pneg %p108
        %p594 = pneg %p105
        %p595 = pneg %p129
        %p596 = pneg %p126
        %p597 = pneg %p150
        %p598 = pneg %p147
        %p599 = pneg %p171
        %p600 = pneg %p168
        %p601 = pneg %p192
        %p602 = pneg %p189
        %p603 = pneg %p213
        %p604 = pneg %p210
        %p605 = pneg %p234
        %p606 = pneg %p231
        %p607 = pneg %p255
        %p608 = pneg %p252
        %p609 = pneg %p276
        %p610 = pneg %p273
        %p611 = pneg %p297
        %p612 = pneg %p294
        %p613 = pneg %p318
        %p614 = pneg %p315
        %p615 = pneg %p339
        %p616 = pneg %p336
        %p617 = pneg %p360
        %p618 = pneg %p357
        %p619 = pneg %p386
        %p620 = pneg %p383
        %p621 = scmp.lt.s32.totalorder %s33, 0
        %s622 = scalar_select %p621, %s33, 0
        %s623 = smul.addr %s622, 2
        %s624 = smul.addr %s623, 2
        %s625 = scalar_lea.vmem %s15, %s624
        %s626 = smul.u32 %s33, 4
        %s627 = sadd.s32 %s626, %s34
        %p628 = scmp.lt.s32.totalorder %s33, 0
        %s629 = scalar_select %p628, %s33, 0
        %s630 = smul.addr %s629, 2
        %s631 = smul.addr %s630, 2
        %s632 = scalar_lea.vmem %s15, %s631
        %v634 = vld [vmem:[%s561] sm:$0xf]
        %v635 = vld [vmem:[%s561 + $0x4] sm:$0xf]
        %v636 = vld [vmem:[%s1] sm:$0x3]
        %v637 = vld [vmem:[%s2] sm:$0x1]
        %v639 = vlaneseq
        %v640 = vshrl.u32 %v639, 7
        %v641 = vsub.s32 0, %v640
        %v642 = vrot.slane %v637, %v641
        %v646 = vunpack.c.l.b16 %v634
        %v647 = vunpack.c.l.b16 %v635
        %v648 = vpack.c.b16 %v647, %v646
        %vm649 = vcmask 23552
        %v651 = vsel %vm649, %v648, 0
        %vm653 = vcmask 1040384
        %vm654 = vcmask 1041408
        %v655 = vsel %vm653, 4294967295, 65535
        %v656 = vsel %vm654, %v655, 0
        %v658 = vand.u32 %v636, %v656
        %660 = vmatprep.subr.bf16.mxu0 0
        %661 = vmatpush1.bf16.msra.mxu0 %v658
        %662 = vmatprep.subr.bf16.mxu0 0
        %663 = vmatpush1.bf16.msra.mxu0 0
        %664 = vmatprep.subr.bf16.mxu0 0
        %665 = vmatpush1.bf16.msra.mxu0 0
        %666 = vmatprep.subr.bf16.mxu0 0
        %667 = vmatpush1.bf16.msra.mxu0 0
        %668 = vmatprep.subr.bf16.mxu0 0
        %669 = vmatpush1.bf16.msra.mxu0 0
        %670 = vmatprep.subr.bf16.mxu0 0
        %671 = vmatpush1.bf16.msra.mxu0 0
        %672 = vmatprep.subr.bf16.mxu0 0
        %673 = vmatpush1.bf16.msra.mxu0 0
        %674 = vmatprep.subr.bf16.mxu0 0
        %675 = vmatpush1.bf16.msra.mxu0 0
        %676 = vmatprep.subr.bf16.mxu0 0
        %677 = vmatpush1.bf16.msra.mxu0 0
        %678 = vmatprep.subr.bf16.mxu0 0
        %679 = vmatpush1.bf16.msra.mxu0 0
        %680 = vmatprep.subr.bf16.mxu0 0
        %681 = vmatpush1.bf16.msra.mxu0 0
        %682 = vmatprep.subr.bf16.mxu0 0
        %683 = vmatpush1.bf16.msra.mxu0 0
        %684 = vmatprep.subr.bf16.mxu0 0
        %685 = vmatpush1.bf16.msra.mxu0 0
        %686 = vmatprep.subr.bf16.mxu0 0
        %687 = vmatpush1.bf16.msra.mxu0 0
        %688 = vmatprep.subr.bf16.mxu0 0
        %689 = vmatpush1.bf16.msra.mxu0 0
        %690 = vmatprep.subr.bf16.mxu0 0
        %691 = vmatpush1.bf16.msra.mxu0 0
        %692 = vmatprep.mubr.bf16.mxu0 0
        %693 = vmatmul.mubr.bf16.gmra.mrb[0].mxu0 %v651
        %v694 = vpop.f32.mrb[0].mxu0
        %v695 = vadd.f32 %v642, %v694
        %v696 = vpop.f32.mrb[0].mxu0
        %v697 = vpop.f32.mrb[0].mxu0
        %v698 = vadd.f32 %v642, %v697
        %v699 = vpop.f32.mrb[0].mxu0
        %700 = vdwg.mxu0
        %v701 = vmax.f32 %v695, 0.0
        %v702 = vmax.f32 %v698, 0.0
        %v703 = vpack.c.bf16 %v702, %v701
        %v704 = vld [vmem:[%s3] sm:$0xf]
        %v705 = vld [vmem:[%s3 + $0x4] sm:$0xf]
        %v706 = vld [vmem:[%s3 + $0x8] sm:$0xf]
        %v707 = vld [vmem:[%s3 + $0xc] sm:$0xf]
        %v708 = vld [vmem:[%s3 + $0x10] sm:$0xf]
        %v709 = vld [vmem:[%s3 + $0x14] sm:$0xf]
        %v710 = vld [vmem:[%s3 + $0x18] sm:$0xf]
        %v711 = vld [vmem:[%s3 + $0x1c] sm:$0xf]
        %v712 = vld [vmem:[%s4] sm:$0x1]
        %v714 = vlaneseq
        %v715 = vshrl.u32 %v714, 7
        %v716 = vsub.s32 0, %v715
        %v717 = vrot.slane %v712, %v716
        %v727 = vunpack.c.l.b16 %v704
        %v728 = vunpack.c.l.b16 %v705
        %v729 = vunpack.c.l.b16 %v706
        %v730 = vunpack.c.l.b16 %v707
        %v731 = vunpack.c.l.b16 %v708
        %v732 = vunpack.c.l.b16 %v709
        %v733 = vunpack.c.l.b16 %v710
        %v734 = vunpack.c.l.b16 %v711
        %v735 = vpack.c.b16 %v728, %v727
        %v736 = vpack.c.b16 %v730, %v729
        %v737 = vpack.c.b16 %v732, %v731
        %v738 = vpack.c.b16 %v734, %v733
        %vm743 = vcmask 523264
        %v745 = vsel %vm743, %v703, 0
        %747 = vmatprep.subr.bf16.mxu0 0
        %748 = vmatpush1.bf16.msra.mxu0 %v735
        %749 = vmatprep.subr.bf16.mxu0 0
        %750 = vmatpush1.bf16.msra.mxu0 %v736
        %751 = vmatprep.subr.bf16.mxu0 0
        %752 = vmatpush1.bf16.msra.mxu0 %v737
        %753 = vmatprep.subr.bf16.mxu0 0
        %754 = vmatpush1.bf16.msra.mxu0 %v738
        %755 = vmatprep.subr.bf16.mxu0 0
        %756 = vmatpush1.bf16.msra.mxu0 0
        %757 = vmatprep.subr.bf16.mxu0 0
        %758 = vmatpush1.bf16.msra.mxu0 0
        %759 = vmatprep.subr.bf16.mxu0 0
        %760 = vmatpush1.bf16.msra.mxu0 0
        %761 = vmatprep.subr.bf16.mxu0 0
        %762 = vmatpush1.bf16.msra.mxu0 0
        %763 = vmatprep.subr.bf16.mxu0 0
        %764 = vmatpush1.bf16.msra.mxu0 0
        %765 = vmatprep.subr.bf16.mxu0 0
        %766 = vmatpush1.bf16.msra.mxu0 0
        %767 = vmatprep.subr.bf16.mxu0 0
        %768 = vmatpush1.bf16.msra.mxu0 0
        %769 = vmatprep.subr.bf16.mxu0 0
        %770 = vmatpush1.bf16.msra.mxu0 0
        %771 = vmatprep.subr.bf16.mxu0 0
        %772 = vmatpush1.bf16.msra.mxu0 0
        %773 = vmatprep.subr.bf16.mxu0 0
        %774 = vmatpush1.bf16.msra.mxu0 0
        %775 = vmatprep.subr.bf16.mxu0 0
        %776 = vmatpush1.bf16.msra.mxu0 0
        %777 = vmatprep.subr.bf16.mxu0 0
        %778 = vmatpush1.bf16.msra.mxu0 0
        %779 = vmatprep.mubr.bf16.mxu0 0
        %780 = vmatmul.mubr.bf16.gmra.mrb[0].mxu0 %v745
        %v781 = vpop.f32.mrb[0].mxu0
        %v782 = vadd.f32 %v717, %v781
        %v783 = vpop.f32.mrb[0].mxu0
        %v784 = vpop.f32.mrb[0].mxu0
        %v785 = vadd.f32 %v717, %v784
        %v786 = vpop.f32.mrb[0].mxu0
        %787 = vdwg.mxu0
        %v788 = vmax.f32 %v782, 0.0
        %v789 = vmax.f32 %v785, 0.0
        %v790 = vpack.c.bf16 %v789, %v788
        %v792 = vunpack.c.l.b16 %v790
        %v793 = vunpack.c.h.b16 %v790
        %v794 = vpack.c.b16 %v792, %v792
        %v795 = vpack.c.b16 %v793, %v793
        %v798 = vpack.i.b16 %v795, %v794
        %v799 = vshrl.u32 %v794, 16
        %v800 = vshrl.u32 %v795, 16
        %v801 = vpack.i.b16 %v800, %v799
        %v804 = vunpack.c.l.s4 1983009808
        %v805 = vunpack.c.0.s8 %v804
        %v806 = vlaneseq
        %v807 = vshrl.u32 %v806, 7
        %v808 = vsub.s32 %v805, %v807
        %v809 = vrot.slane %v798, %v808
        %v810 = vcombine.high %v809, 0
        %v812 = vunpack.c.l.s4 1934713408
        %v813 = vunpack.c.0.s8 %v812
        %v814 = vlaneseq
        %v815 = vshrl.u32 %v814, 7
        %v816 = vsub.s32 %v813, %v815
        %v817 = vrot.slane %v809, %v816
        %v819 = vunpack.c.l.s4 1934713408
        %v820 = vunpack.c.0.s8 %v819
        %v821 = vlaneseq
        %v822 = vshrl.u32 %v821, 7
        %v823 = vsub.s32 %v820, %v822
        %v824 = vrot.slane %v810, %v823
        %v825 = vcombine.high %v817, 0
        %v826 = vcombine.high %v824, 0
        %v829 = vunpack.c.l.s4 1983009808
        %v830 = vunpack.c.0.s8 %v829
        %v831 = vlaneseq
        %v832 = vshrl.u32 %v831, 7
        %v833 = vsub.s32 %v830, %v832
        %v834 = vrot.slane %v801, %v833
        %v835 = vcombine.high %v834, 0
        %v837 = vunpack.c.l.s4 1934713408
        %v838 = vunpack.c.0.s8 %v837
        %v839 = vlaneseq
        %v840 = vshrl.u32 %v839, 7
        %v841 = vsub.s32 %v838, %v840
        %v842 = vrot.slane %v834, %v841
        %v844 = vunpack.c.l.s4 1934713408
        %v845 = vunpack.c.0.s8 %v844
        %v846 = vlaneseq
        %v847 = vshrl.u32 %v846, 7
        %v848 = vsub.s32 %v845, %v847
        %v849 = vrot.slane %v835, %v848
        %v850 = vcombine.high %v842, 0
        %v851 = vcombine.high %v849, 0
        %v852 = vld [vmem:[#allocation3] sm:$0xf]
        %v853 = vld [vmem:[#allocation3 + $0x4] sm:$0xf]
        %v854 = vld [vmem:[#allocation3 + $0x8] sm:$0xf]
        %v855 = vld [vmem:[#allocation3 + $0xc] sm:$0xf]
        %v856 = vld [vmem:[#allocation3 + $0x10] sm:$0xf]
        %v857 = vld [vmem:[#allocation3 + $0x14] sm:$0xf]
        %v858 = vld [vmem:[#allocation3 + $0x18] sm:$0xf]
        %v859 = vld [vmem:[#allocation3 + $0x1c] sm:$0xf]
        %v860 = vld [vmem:[%s6] sm:$0x1]
        %v862 = vlaneseq
        %v863 = vshrl.u32 %v862, 7
        %v864 = vsub.s32 0, %v863
        %v865 = vrot.slane %v860, %v864
        %v875 = vcombine.low %v817, %v842
        %v876 = vcombine.low %v825, %v850
        %v877 = vcombine.low %v824, %v849
        %v878 = vcombine.low %v826, %v851
        %v880 = vunpack.c.l.s4 1966171168
        %v881 = vunpack.c.0.s8 %v880
        %v882 = vlaneseq
        %v883 = vshrl.u32 %v882, 7
        %v884 = vsub.s32 %v881, %v883
        %v885 = vrot.slane %v875, %v884
        %v887 = vunpack.c.l.s4 1966171168
        %v888 = vunpack.c.0.s8 %v887
        %v889 = vlaneseq
        %v890 = vshrl.u32 %v889, 7
        %v891 = vsub.s32 %v888, %v890
        %v892 = vrot.slane %v876, %v891
        %v894 = vunpack.c.l.s4 1966171168
        %v895 = vunpack.c.0.s8 %v894
        %v896 = vlaneseq
        %v897 = vshrl.u32 %v896, 7
        %v898 = vsub.s32 %v895, %v897
        %v899 = vrot.slane %v877, %v898
        %v901 = vunpack.c.l.s4 1966171168
        %v902 = vunpack.c.0.s8 %v901
        %v903 = vlaneseq
        %v904 = vshrl.u32 %v903, 7
        %v905 = vsub.s32 %v902, %v904
        %v906 = vrot.slane %v878, %v905
        %v907 = vcombine.low %v885, %v892
        %v908 = vcombine.low %v899, %v906
        %v910 = vunpack.c.l.s4 1966171168
        %v911 = vunpack.c.0.s8 %v910
        %v912 = vlaneseq
        %v913 = vshrl.u32 %v912, 7
        %v914 = vsub.s32 %v911, %v913
        %v915 = vrot.slane %v907, %v914
        %v917 = vunpack.c.l.s4 1966171168
        %v918 = vunpack.c.0.s8 %v917
        %v919 = vlaneseq
        %v920 = vshrl.u32 %v919, 7
        %v921 = vsub.s32 %v918, %v920
        %v922 = vrot.slane %v908, %v921
        %v923 = vcombine.low %v915, %v922
        %v932 = vunpack.c.l.b16 %v852
        %v933 = vunpack.c.l.b16 %v853
        %v934 = vunpack.c.l.b16 %v854
        %v935 = vunpack.c.l.b16 %v855
        %v936 = vunpack.c.l.b16 %v856
        %v937 = vunpack.c.l.b16 %v857
        %v938 = vunpack.c.l.b16 %v858
        %v939 = vunpack.c.l.b16 %v859
        %v940 = vpack.c.b16 %v933, %v932
        %v941 = vpack.c.b16 %v935, %v934
        %v942 = vpack.c.b16 %v937, %v936
        %v943 = vpack.c.b16 %v939, %v938
        %v949 = vsel %vm743, %v923, 0
        %951 = vmatprep.subr.bf16.mxu0 0
        %952 = vmatpush1.bf16.msra.mxu0 %v940
        %953 = vmatprep.subr.bf16.mxu0 0
        %954 = vmatpush1.bf16.msra.mxu0 %v941
        %955 = vmatprep.subr.bf16.mxu0 0
        %956 = vmatpush1.bf16.msra.mxu0 %v942
        %957 = vmatprep.subr.bf16.mxu0 0
        %958 = vmatpush1.bf16.msra.mxu0 %v943
        %959 = vmatprep.subr.bf16.mxu0 0
        %960 = vmatpush1.bf16.msra.mxu0 0
        %961 = vmatprep.subr.bf16.mxu0 0
        %962 = vmatpush1.bf16.msra.mxu0 0
        %963 = vmatprep.subr.bf16.mxu0 0
        %964 = vmatpush1.bf16.msra.mxu0 0
        %965 = vmatprep.subr.bf16.mxu0 0
        %966 = vmatpush1.bf16.msra.mxu0 0
        %967 = vmatprep.subr.bf16.mxu0 0
        %968 = vmatpush1.bf16.msra.mxu0 0
        %969 = vmatprep.subr.bf16.mxu0 0
        %970 = vmatpush1.bf16.msra.mxu0 0
        %971 = vmatprep.subr.bf16.mxu0 0
        %972 = vmatpush1.bf16.msra.mxu0 0
        %973 = vmatprep.subr.bf16.mxu0 0
        %974 = vmatpush1.bf16.msra.mxu0 0
        %975 = vmatprep.subr.bf16.mxu0 0
        %976 = vmatpush1.bf16.msra.mxu0 0
        %977 = vmatprep.subr.bf16.mxu0 0
        %978 = vmatpush1.bf16.msra.mxu0 0
        %979 = vmatprep.subr.bf16.mxu0 0
        %980 = vmatpush1.bf16.msra.mxu0 0
        %981 = vmatprep.subr.bf16.mxu0 0
        %982 = vmatpush1.bf16.msra.mxu0 0
        %983 = vmatprep.mubr.bf16.mxu0 0
        %984 = vmatmul.mubr.bf16.gmra.mrb[0].mxu0 %v949
        %v985 = vpop.f32.mrb[0].mxu0
        %v986 = vadd.f32 %v865, %v985
        %v987 = vpop.f32.mrb[0].mxu0
        %v988 = vpop.f32.mrb[0].mxu0
        %v989 = vadd.f32 %v865, %v988
        %v990 = vpop.f32.mrb[0].mxu0
        %991 = vdwg.mxu0
        %v992 = vpack.c.bf16 %v989, %v986
        %v994 = vcombine.high %v992, %v992
        %v996 = vunpack.c.l.s4 1966171168
        %v997 = vunpack.c.0.s8 %v996
        %v998 = vlaneseq
        %v999 = vshrl.u32 %v998, 7
        %v1000 = vsub.s32 %v997, %v999
        %v1001 = vrot.slane %v992, %v1000
        %v1003 = vunpack.c.l.s4 1966171168
        %v1004 = vunpack.c.0.s8 %v1003
        %v1005 = vlaneseq
        %v1006 = vshrl.u32 %v1005, 7
        %v1007 = vsub.s32 %v1004, %v1006
        %v1008 = vrot.slane %v994, %v1007
        %v1009 = vcombine.high %v1001, %v1001
        %v1010 = vcombine.high %v1008, %v1008
        %v1012 = vunpack.c.l.s4 1966171168
        %v1013 = vunpack.c.0.s8 %v1012
        %v1014 = vlaneseq
        %v1015 = vshrl.u32 %v1014, 7
        %v1016 = vsub.s32 %v1013, %v1015
        %v1017 = vrot.slane %v1001, %v1016
        %v1019 = vunpack.c.l.s4 1966171168
        %v1020 = vunpack.c.0.s8 %v1019
        %v1021 = vlaneseq
        %v1022 = vshrl.u32 %v1021, 7
        %v1023 = vsub.s32 %v1020, %v1022
        %v1024 = vrot.slane %v1008, %v1023
        %v1026 = vunpack.c.l.s4 1966171168
        %v1027 = vunpack.c.0.s8 %v1026
        %v1028 = vlaneseq
        %v1029 = vshrl.u32 %v1028, 7
        %v1030 = vsub.s32 %v1027, %v1029
        %v1031 = vrot.slane %v1009, %v1030
        %v1033 = vunpack.c.l.s4 1966171168
        %v1034 = vunpack.c.0.s8 %v1033
        %v1035 = vlaneseq
        %v1036 = vshrl.u32 %v1035, 7
        %v1037 = vsub.s32 %v1034, %v1036
        %v1038 = vrot.slane %v1010, %v1037
        %v1039 = vcombine.high %v1017, %v1017
        %v1040 = vcombine.high %v1024, %v1024
        %v1041 = vcombine.high %v1031, %v1031
        %v1042 = vcombine.high %v1038, %v1038
        %v1043 = vld [vmem:[#allocation5] sm:$0xf]
        %v1044 = vld [vmem:[#allocation5 + $0x4] sm:$0xf]
        %v1045 = vld [vmem:[#allocation5 + $0x8] sm:$0xf]
        %v1046 = vld [vmem:[#allocation5 + $0xc] sm:$0xf]
        %v1047 = vld [vmem:[#allocation5 + $0x10] sm:$0xf]
        %v1048 = vld [vmem:[#allocation5 + $0x14] sm:$0xf]
        %v1049 = vld [vmem:[#allocation5 + $0x18] sm:$0xf]
        %v1050 = vld [vmem:[#allocation5 + $0x1c] sm:$0xf]
        %v1051 = vld [vmem:[%s8] sm:$0x1]
        %v1053 = vlaneseq
        %v1054 = vshrl.u32 %v1053, 7
        %v1055 = vsub.s32 0, %v1054
        %v1056 = vrot.slane %v1051, %v1055
        %v1066 = vunpack.c.l.b16 %v1043
        %v1067 = vunpack.c.l.b16 %v1044
        %v1068 = vunpack.c.l.b16 %v1045
        %v1069 = vunpack.c.l.b16 %v1046
        %v1070 = vunpack.c.l.b16 %v1047
        %v1071 = vunpack.c.l.b16 %v1048
        %v1072 = vunpack.c.l.b16 %v1049
        %v1073 = vunpack.c.l.b16 %v1050
        %v1074 = vpack.c.b16 %v1067, %v1066
        %v1075 = vpack.c.b16 %v1069, %v1068
        %v1076 = vpack.c.b16 %v1071, %v1070
        %v1077 = vpack.c.b16 %v1073, %v1072
        %1082 = vmatprep.subr.bf16.mxu0 0
        %1083 = vmatpush1.bf16.msra.mxu0 %v1074
        %1084 = vmatprep.subr.bf16.mxu0 0
        %1085 = vmatpush1.bf16.msra.mxu0 %v1075
        %1086 = vmatprep.subr.bf16.mxu0 0
        %1087 = vmatpush1.bf16.msra.mxu0 %v1076
        %1088 = vmatprep.subr.bf16.mxu0 0
        %1089 = vmatpush1.bf16.msra.mxu0 %v1077
        %1090 = vmatprep.subr.bf16.mxu0 0
        %1091 = vmatpush1.bf16.msra.mxu0 0
        %1092 = vmatprep.subr.bf16.mxu0 0
        %1093 = vmatpush1.bf16.msra.mxu0 0
        %1094 = vmatprep.subr.bf16.mxu0 0
        %1095 = vmatpush1.bf16.msra.mxu0 0
        %1096 = vmatprep.subr.bf16.mxu0 0
        %1097 = vmatpush1.bf16.msra.mxu0 0
        %1098 = vmatprep.subr.bf16.mxu0 0
        %1099 = vmatpush1.bf16.msra.mxu0 0
        %1100 = vmatprep.subr.bf16.mxu0 0
        %1101 = vmatpush1.bf16.msra.mxu0 0
        %1102 = vmatprep.subr.bf16.mxu0 0
        %1103 = vmatpush1.bf16.msra.mxu0 0
        %1104 = vmatprep.subr.bf16.mxu0 0
        %1105 = vmatpush1.bf16.msra.mxu0 0
        %1106 = vmatprep.subr.bf16.mxu0 0
        %1107 = vmatpush1.bf16.msra.mxu0 0
        %1108 = vmatprep.subr.bf16.mxu0 0
        %1109 = vmatpush1.bf16.msra.mxu0 0
        %1110 = vmatprep.subr.bf16.mxu0 0
        %1111 = vmatpush1.bf16.msra.mxu0 0
        %1112 = vmatprep.subr.bf16.mxu0 0
        %1113 = vmatpush1.bf16.msra.mxu0 0
        %1114 = vmatprep.mubr.bf16.mxu0 0
        %1115 = vmatmul.mubr.bf16.gmra.mrb[0].mxu0 %v949
        %v1116 = vpop.f32.mrb[0].mxu0
        %v1117 = vadd.f32 %v1056, %v1116
        %v1118 = vpop.f32.mrb[0].mxu0
        %v1119 = vpop.f32.mrb[0].mxu0
        %v1120 = vadd.f32 %v1056, %v1119
        %v1121 = vpop.f32.mrb[0].mxu0
        %1122 = vdwg.mxu0
        %v1123 = vpack.c.bf16 %v1120, %v1117
        %v1125 = vcombine.high %v1123, %v1123
        %v1127 = vunpack.c.l.s4 1966171168
        %v1128 = vunpack.c.0.s8 %v1127
        %v1129 = vlaneseq
        %v1130 = vshrl.u32 %v1129, 7
        %v1131 = vsub.s32 %v1128, %v1130
        %v1132 = vrot.slane %v1123, %v1131
        %v1134 = vunpack.c.l.s4 1966171168
        %v1135 = vunpack.c.0.s8 %v1134
        %v1136 = vlaneseq
        %v1137 = vshrl.u32 %v1136, 7
        %v1138 = vsub.s32 %v1135, %v1137
        %v1139 = vrot.slane %v1125, %v1138
        %v1140 = vcombine.high %v1132, %v1132
        %v1141 = vcombine.high %v1139, %v1139
        %v1143 = vunpack.c.l.s4 1966171168
        %v1144 = vunpack.c.0.s8 %v1143
        %v1145 = vlaneseq
        %v1146 = vshrl.u32 %v1145, 7
        %v1147 = vsub.s32 %v1144, %v1146
        %v1148 = vrot.slane %v1132, %v1147
        %v1150 = vunpack.c.l.s4 1966171168
        %v1151 = vunpack.c.0.s8 %v1150
        %v1152 = vlaneseq
        %v1153 = vshrl.u32 %v1152, 7
        %v1154 = vsub.s32 %v1151, %v1153
        %v1155 = vrot.slane %v1139, %v1154
        %v1157 = vunpack.c.l.s4 1966171168
        %v1158 = vunpack.c.0.s8 %v1157
        %v1159 = vlaneseq
        %v1160 = vshrl.u32 %v1159, 7
        %v1161 = vsub.s32 %v1158, %v1160
        %v1162 = vrot.slane %v1140, %v1161
        %v1164 = vunpack.c.l.s4 1966171168
        %v1165 = vunpack.c.0.s8 %v1164
        %v1166 = vlaneseq
        %v1167 = vshrl.u32 %v1166, 7
        %v1168 = vsub.s32 %v1165, %v1167
        %v1169 = vrot.slane %v1141, %v1168
        %v1170 = vcombine.high %v1148, %v1148
        %v1171 = vcombine.high %v1155, %v1155
        %v1172 = vcombine.high %v1162, %v1162
        %v1173 = vcombine.high %v1169, %v1169
        %v1174 = vld [vmem:[#allocation7] sm:$0xf]
        %v1175 = vld [vmem:[#allocation7 + $0x4] sm:$0xf]
        %v1176 = vld [vmem:[#allocation7 + $0x8] sm:$0xf]
        %v1177 = vld [vmem:[#allocation7 + $0xc] sm:$0xf]
        %v1178 = vld [vmem:[#allocation7 + $0x10] sm:$0xf]
        %v1179 = vld [vmem:[#allocation7 + $0x14] sm:$0xf]
        %v1180 = vld [vmem:[#allocation7 + $0x18] sm:$0xf]
        %v1181 = vld [vmem:[#allocation7 + $0x1c] sm:$0xf]
        %v1182 = vld [vmem:[%s10] sm:$0x1]
        %v1184 = vlaneseq
        %v1185 = vshrl.u32 %v1184, 7
        %v1186 = vsub.s32 0, %v1185
        %v1187 = vrot.slane %v1182, %v1186
        %v1197 = vunpack.c.l.b16 %v1174
        %v1198 = vunpack.c.l.b16 %v1175
        %v1199 = vunpack.c.l.b16 %v1176
        %v1200 = vunpack.c.l.b16 %v1177
        %v1201 = vunpack.c.l.b16 %v1178
        %v1202 = vunpack.c.l.b16 %v1179
        %v1203 = vunpack.c.l.b16 %v1180
        %v1204 = vunpack.c.l.b16 %v1181
        %v1205 = vpack.c.b16 %v1198, %v1197
        %v1206 = vpack.c.b16 %v1200, %v1199
        %v1207 = vpack.c.b16 %v1202, %v1201
        %v1208 = vpack.c.b16 %v1204, %v1203
        %1213 = vmatprep.subr.bf16.mxu0 0
        %1214 = vmatpush1.bf16.msra.mxu0 %v1205
        %1215 = vmatprep.subr.bf16.mxu0 0
        %1216 = vmatpush1.bf16.msra.mxu0 %v1206
        %1217 = vmatprep.subr.bf16.mxu0 0
        %1218 = vmatpush1.bf16.msra.mxu0 %v1207
        %1219 = vmatprep.subr.bf16.mxu0 0
        %1220 = vmatpush1.bf16.msra.mxu0 %v1208
        %1221 = vmatprep.subr.bf16.mxu0 0
        %1222 = vmatpush1.bf16.msra.mxu0 0
        %1223 = vmatprep.subr.bf16.mxu0 0
        %1224 = vmatpush1.bf16.msra.mxu0 0
        %1225 = vmatprep.subr.bf16.mxu0 0
        %1226 = vmatpush1.bf16.msra.mxu0 0
        %1227 = vmatprep.subr.bf16.mxu0 0
        %1228 = vmatpush1.bf16.msra.mxu0 0
        %1229 = vmatprep.subr.bf16.mxu0 0
        %1230 = vmatpush1.bf16.msra.mxu0 0
        %1231 = vmatprep.subr.bf16.mxu0 0
        %1232 = vmatpush1.bf16.msra.mxu0 0
        %1233 = vmatprep.subr.bf16.mxu0 0
        %1234 = vmatpush1.bf16.msra.mxu0 0
        %1235 = vmatprep.subr.bf16.mxu0 0
        %1236 = vmatpush1.bf16.msra.mxu0 0
        %1237 = vmatprep.subr.bf16.mxu0 0
        %1238 = vmatpush1.bf16.msra.mxu0 0
        %1239 = vmatprep.subr.bf16.mxu0 0
        %1240 = vmatpush1.bf16.msra.mxu0 0
        %1241 = vmatprep.subr.bf16.mxu0 0
        %1242 = vmatpush1.bf16.msra.mxu0 0
        %1243 = vmatprep.subr.bf16.mxu0 0
        %1244 = vmatpush1.bf16.msra.mxu0 0
        %1245 = vmatprep.mubr.bf16.mxu0 0
        %1246 = vmatmul.mubr.bf16.gmra.mrb[0].mxu0 %v949
        %v1247 = vpop.f32.mrb[0].mxu0
        %v1248 = vadd.f32 %v1187, %v1247
        %v1249 = vpop.f32.mrb[0].mxu0
        %v1250 = vpop.f32.mrb[0].mxu0
        %v1251 = vadd.f32 %v1187, %v1250
        %v1252 = vpop.f32.mrb[0].mxu0
        %1253 = vdwg.mxu0
        %v1254 = vpack.c.bf16 %v1251, %v1248
        %v1256 = vcombine.high %v1254, %v1254
        %v1258 = vunpack.c.l.s4 1966171168
        %v1259 = vunpack.c.0.s8 %v1258
        %v1260 = vlaneseq
        %v1261 = vshrl.u32 %v1260, 7
        %v1262 = vsub.s32 %v1259, %v1261
        %v1263 = vrot.slane %v1254, %v1262
        %v1265 = vunpack.c.l.s4 1966171168
        %v1266 = vunpack.c.0.s8 %v1265
        %v1267 = vlaneseq
        %v1268 = vshrl.u32 %v1267, 7
        %v1269 = vsub.s32 %v1266, %v1268
        %v1270 = vrot.slane %v1256, %v1269
        %v1271 = vcombine.high %v1263, %v1263
        %v1272 = vcombine.high %v1270, %v1270
        %v1274 = vunpack.c.l.s4 1966171168
        %v1275 = vunpack.c.0.s8 %v1274
        %v1276 = vlaneseq
        %v1277 = vshrl.u32 %v1276, 7
        %v1278 = vsub.s32 %v1275, %v1277
        %v1279 = vrot.slane %v1263, %v1278
        %v1281 = vunpack.c.l.s4 1966171168
        %v1282 = vunpack.c.0.s8 %v1281
        %v1283 = vlaneseq
        %v1284 = vshrl.u32 %v1283, 7
        %v1285 = vsub.s32 %v1282, %v1284
        %v1286 = vrot.slane %v1270, %v1285
        %v1288 = vunpack.c.l.s4 1966171168
        %v1289 = vunpack.c.0.s8 %v1288
        %v1290 = vlaneseq
        %v1291 = vshrl.u32 %v1290, 7
        %v1292 = vsub.s32 %v1289, %v1291
        %v1293 = vrot.slane %v1271, %v1292
        %v1295 = vunpack.c.l.s4 1966171168
        %v1296 = vunpack.c.0.s8 %v1295
        %v1297 = vlaneseq
        %v1298 = vshrl.u32 %v1297, 7
        %v1299 = vsub.s32 %v1296, %v1298
        %v1300 = vrot.slane %v1272, %v1299
        %v1301 = vcombine.high %v1279, %v1279
        %v1302 = vcombine.high %v1286, %v1286
        %v1303 = vcombine.high %v1293, %v1293
        %v1304 = vcombine.high %v1300, %v1300
        %v1306 = vsel %vm743, %v1017, 0
        %v1309 = vsel %vm743, %v1148, 0
        %1311 = vmatprep.subr.bf16.mxu0 0
        %1312 = vmatpush1.bf16.xpose.msra.mxu0 %v1309
        %1313 = vmatprep.subr.bf16.mxu0 0
        %1314 = vmatpush1.bf16.xpose.msra.mxu0 0
        %1315 = vmatprep.subr.bf16.mxu0 0
        %1316 = vmatpush1.bf16.xpose.msra.mxu0 0
        %1317 = vmatprep.subr.bf16.mxu0 0
        %1318 = vmatpush1.bf16.xpose.msra.mxu0 0
        %1319 = vmatprep.subr.bf16.mxu0 0
        %1320 = vmatpush1.bf16.xpose.msra.mxu0 0
        %1321 = vmatprep.subr.bf16.mxu0 0
        %1322 = vmatpush1.bf16.xpose.msra.mxu0 0
        %1323 = vmatprep.subr.bf16.mxu0 0
        %1324 = vmatpush1.bf16.xpose.msra.mxu0 0
        %1325 = vmatprep.subr.bf16.mxu0 0
        %1326 = vmatpush1.bf16.xpose.msra.mxu0 0
        %1327 = vmatprep.subr.bf16.mxu0 0
        %1328 = vmatpush1.bf16.xpose.msra.mxu0 0
        %1329 = vmatprep.subr.bf16.mxu0 0
        %1330 = vmatpush1.bf16.xpose.msra.mxu0 0
        %1331 = vmatprep.subr.bf16.mxu0 0
        %1332 = vmatpush1.bf16.xpose.msra.mxu0 0
        %1333 = vmatprep.subr.bf16.mxu0 0
        %1334 = vmatpush1.bf16.xpose.msra.mxu0 0
        %1335 = vmatprep.subr.bf16.mxu0 0
        %1336 = vmatpush1.bf16.xpose.msra.mxu0 0
        %1337 = vmatprep.subr.bf16.mxu0 0
        %1338 = vmatpush1.bf16.xpose.msra.mxu0 0
        %1339 = vmatprep.subr.bf16.mxu0 0
        %1340 = vmatpush1.bf16.xpose.msra.mxu0 0
        %1341 = vmatprep.subr.bf16.mxu0 0
        %1342 = vmatpush1.bf16.xpose.msra.mxu0 0
        %1343 = vmatprep.mubr.bf16.mxu0 0
        %1344 = vmatmul.mubr.bf16.gmra.mrb[0].mxu0 %v1306
        %v1345 = vpop.f32.mrb[0].mxu0
        %v1346 = vadd.f32 0.0, %v1345
        %v1347 = vpop.f32.mrb[0].mxu0
        %v1348 = vpop.f32.mrb[0].mxu0
        %v1349 = vpop.f32.mrb[0].mxu0
        %1350 = vdwg.mxu0
        %v1352 = vsel %vm743, %v1031, 0
        %v1355 = vsel %vm743, %v1162, 0
        %1357 = vmatprep.subr.bf16.mxu0 0
        %1358 = vmatpush1.bf16.xpose.msra.mxu0 %v1355
        %1359 = vmatprep.subr.bf16.mxu0 0
        %1360 = vmatpush1.bf16.xpose.msra.mxu0 0
        %1361 = vmatprep.subr.bf16.mxu0 0
        %1362 = vmatpush1.bf16.xpose.msra.mxu0 0
        %1363 = vmatprep.subr.bf16.mxu0 0
        %1364 = vmatpush1.bf16.xpose.msra.mxu0 0
        %1365 = vmatprep.subr.bf16.mxu0 0
        %1366 = vmatpush1.bf16.xpose.msra.mxu0 0
        %1367 = vmatprep.subr.bf16.mxu0 0
        %1368 = vmatpush1.bf16.xpose.msra.mxu0 0
        %1369 = vmatprep.subr.bf16.mxu0 0
        %1370 = vmatpush1.bf16.xpose.msra.mxu0 0
        %1371 = vmatprep.subr.bf16.mxu0 0
        %1372 = vmatpush1.bf16.xpose.msra.mxu0 0
        %1373 = vmatprep.subr.bf16.mxu0 0
        %1374 = vmatpush1.bf16.xpose.msra.mxu0 0
        %1375 = vmatprep.subr.bf16.mxu0 0
        %1376 = vmatpush1.bf16.xpose.msra.mxu0 0
        %1377 = vmatprep.subr.bf16.mxu0 0
        %1378 = vmatpush1.bf16.xpose.msra.mxu0 0
        %1379 = vmatprep.subr.bf16.mxu0 0
        %1380 = vmatpush1.bf16.xpose.msra.mxu0 0
        %1381 = vmatprep.subr.bf16.mxu0 0
        %1382 = vmatpush1.bf16.xpose.msra.mxu0 0
        %1383 = vmatprep.subr.bf16.mxu0 0
        %1384 = vmatpush1.bf16.xpose.msra.mxu0 0
        %1385 = vmatprep.subr.bf16.mxu0 0
        %1386 = vmatpush1.bf16.xpose.msra.mxu0 0
        %1387 = vmatprep.subr.bf16.mxu0 0
        %1388 = vmatpush1.bf16.xpose.msra.mxu0 0
        %1389 = vmatprep.mubr.bf16.mxu0 0
        %1390 = vmatmul.mubr.bf16.gmra.mrb[0].mxu0 %v1352
        %v1391 = vpop.f32.mrb[0].mxu0
        %v1392 = vadd.f32 0.0, %v1391
        %v1393 = vpop.f32.mrb[0].mxu0
        %v1394 = vpop.f32.mrb[0].mxu0
        %v1395 = vpop.f32.mrb[0].mxu0
        %1396 = vdwg.mxu0
        %v1398 = vsel %vm743, %v1039, 0
        %v1401 = vsel %vm743, %v1170, 0
        %1403 = vmatprep.subr.bf16.mxu0 0
        %1404 = vmatpush1.bf16.xpose.msra.mxu0 %v1401
        %1405 = vmatprep.subr.bf16.mxu0 0
        %1406 = vmatpush1.bf16.xpose.msra.mxu0 0
        %1407 = vmatprep.subr.bf16.mxu0 0
        %1408 = vmatpush1.bf16.xpose.msra.mxu0 0
        %1409 = vmatprep.subr.bf16.mxu0 0
        %1410 = vmatpush1.bf16.xpose.msra.mxu0 0
        %1411 = vmatprep.subr.bf16.mxu0 0
        %1412 = vmatpush1.bf16.xpose.msra.mxu0 0
        %1413 = vmatprep.subr.bf16.mxu0 0
        %1414 = vmatpush1.bf16.xpose.msra.mxu0 0
        %1415 = vmatprep.subr.bf16.mxu0 0
        %1416 = vmatpush1.bf16.xpose.msra.mxu0 0
        %1417 = vmatprep.subr.bf16.mxu0 0
        %1418 = vmatpush1.bf16.xpose.msra.mxu0 0
        %1419 = vmatprep.subr.bf16.mxu0 0
        %1420 = vmatpush1.bf16.xpose.msra.mxu0 0
        %1421 = vmatprep.subr.bf16.mxu0 0
        %1422 = vmatpush1.bf16.xpose.msra.mxu0 0
        %1423 = vmatprep.subr.bf16.mxu0 0
        %1424 = vmatpush1.bf16.xpose.msra.mxu0 0
        %1425 = vmatprep.subr.bf16.mxu0 0
        %1426 = vmatpush1.bf16.xpose.msra.mxu0 0
        %1427 = vmatprep.subr.bf16.mxu0 0
        %1428 = vmatpush1.bf16.xpose.msra.mxu0 0
        %1429 = vmatprep.subr.bf16.mxu0 0
        %1430 = vmatpush1.bf16.xpose.msra.mxu0 0
        %1431 = vmatprep.subr.bf16.mxu0 0
        %1432 = vmatpush1.bf16.xpose.msra.mxu0 0
        %1433 = vmatprep.subr.bf16.mxu0 0
        %1434 = vmatpush1.bf16.xpose.msra.mxu0 0
        %1435 = vmatprep.mubr.bf16.mxu0 0
        %1436 = vmatmul.mubr.bf16.gmra.mrb[0].mxu0 %v1398
        %v1437 = vpop.f32.mrb[0].mxu0
        %v1438 = vadd.f32 0.0, %v1437
        %v1439 = vpop.f32.mrb[0].mxu0
        %v1440 = vpop.f32.mrb[0].mxu0
        %v1441 = vpop.f32.mrb[0].mxu0
        %1442 = vdwg.mxu0
        %v1444 = vsel %vm743, %v1041, 0
        %v1447 = vsel %vm743, %v1172, 0
        %1449 = vmatprep.subr.bf16.mxu0 0
        %1450 = vmatpush1.bf16.xpose.msra.mxu0 %v1447
        %1451 = vmatprep.subr.bf16.mxu0 0
        %1452 = vmatpush1.bf16.xpose.msra.mxu0 0
        %1453 = vmatprep.subr.bf16.mxu0 0
        %1454 = vmatpush1.bf16.xpose.msra.mxu0 0
        %1455 = vmatprep.subr.bf16.mxu0 0
        %1456 = vmatpush1.bf16.xpose.msra.mxu0 0
        %1457 = vmatprep.subr.bf16.mxu0 0
        %1458 = vmatpush1.bf16.xpose.msra.mxu0 0
        %1459 = vmatprep.subr.bf16.mxu0 0
        %1460 = vmatpush1.bf16.xpose.msra.mxu0 0
        %1461 = vmatprep.subr.bf16.mxu0 0
        %1462 = vmatpush1.bf16.xpose.msra.mxu0 0
        %1463 = vmatprep.subr.bf16.mxu0 0
        %1464 = vmatpush1.bf16.xpose.msra.mxu0 0
        %1465 = vmatprep.subr.bf16.mxu0 0
        %1466 = vmatpush1.bf16.xpose.msra.mxu0 0
        %1467 = vmatprep.subr.bf16.mxu0 0
        %1468 = vmatpush1.bf16.xpose.msra.mxu0 0
        %1469 = vmatprep.subr.bf16.mxu0 0
        %1470 = vmatpush1.bf16.xpose.msra.mxu0 0
        %1471 = vmatprep.subr.bf16.mxu0 0
        %1472 = vmatpush1.bf16.xpose.msra.mxu0 0
        %1473 = vmatprep.subr.bf16.mxu0 0
        %1474 = vmatpush1.bf16.xpose.msra.mxu0 0
        %1475 = vmatprep.subr.bf16.mxu0 0
        %1476 = vmatpush1.bf16.xpose.msra.mxu0 0
        %1477 = vmatprep.subr.bf16.mxu0 0
        %1478 = vmatpush1.bf16.xpose.msra.mxu0 0
        %1479 = vmatprep.subr.bf16.mxu0 0
        %1480 = vmatpush1.bf16.xpose.msra.mxu0 0
        %1481 = vmatprep.mubr.bf16.mxu0 0
        %1482 = vmatmul.mubr.bf16.gmra.mrb[0].mxu0 %v1444
        %v1483 = vpop.f32.mrb[0].mxu0
        %v1484 = vadd.f32 0.0, %v1483
        %v1485 = vpop.f32.mrb[0].mxu0
        %v1486 = vpop.f32.mrb[0].mxu0
        %v1487 = vpop.f32.mrb[0].mxu0
        %1488 = vdwg.mxu0
        %v1490 = vsel %vm743, %v1024, 0
        %v1493 = vsel %vm743, %v1155, 0
        %1495 = vmatprep.subr.bf16.mxu0 0
        %1496 = vmatpush1.bf16.xpose.msra.mxu0 %v1493
        %1497 = vmatprep.subr.bf16.mxu0 0
        %1498 = vmatpush1.bf16.xpose.msra.mxu0 0
        %1499 = vmatprep.subr.bf16.mxu0 0
        %1500 = vmatpush1.bf16.xpose.msra.mxu0 0
        %1501 = vmatprep.subr.bf16.mxu0 0
        %1502 = vmatpush1.bf16.xpose.msra.mxu0 0
        %1503 = vmatprep.subr.bf16.mxu0 0
        %1504 = vmatpush1.bf16.xpose.msra.mxu0 0
        %1505 = vmatprep.subr.bf16.mxu0 0
        %1506 = vmatpush1.bf16.xpose.msra.mxu0 0
        %1507 = vmatprep.subr.bf16.mxu0 0
        %1508 = vmatpush1.bf16.xpose.msra.mxu0 0
        %1509 = vmatprep.subr.bf16.mxu0 0
        %1510 = vmatpush1.bf16.xpose.msra.mxu0 0
        %1511 = vmatprep.subr.bf16.mxu0 0
        %1512 = vmatpush1.bf16.xpose.msra.mxu0 0
        %1513 = vmatprep.subr.bf16.mxu0 0
        %1514 = vmatpush1.bf16.xpose.msra.mxu0 0
        %1515 = vmatprep.subr.bf16.mxu0 0
        %1516 = vmatpush1.bf16.xpose.msra.mxu0 0
        %1517 = vmatprep.subr.bf16.mxu0 0
        %1518 = vmatpush1.bf16.xpose.msra.mxu0 0
        %1519 = vmatprep.subr.bf16.mxu0 0
        %1520 = vmatpush1.bf16.xpose.msra.mxu0 0
        %1521 = vmatprep.subr.bf16.mxu0 0
        %1522 = vmatpush1.bf16.xpose.msra.mxu0 0
        %1523 = vmatprep.subr.bf16.mxu0 0
        %1524 = vmatpush1.bf16.xpose.msra.mxu0 0
        %1525 = vmatprep.subr.bf16.mxu0 0
        %1526 = vmatpush1.bf16.xpose.msra.mxu0 0
        %1527 = vmatprep.mubr.bf16.mxu0 0
        %1528 = vmatmul.mubr.bf16.gmra.mrb[0].mxu0 %v1490
        %v1529 = vpop.f32.mrb[0].mxu0
        %v1530 = vadd.f32 0.0, %v1529
        %v1531 = vpop.f32.mrb[0].mxu0
        %v1532 = vpop.f32.mrb[0].mxu0
        %v1533 = vpop.f32.mrb[0].mxu0
        %1534 = vdwg.mxu0
        %v1536 = vsel %vm743, %v1038, 0
        %v1539 = vsel %vm743, %v1169, 0
        %1541 = vmatprep.subr.bf16.mxu0 0
        %1542 = vmatpush1.bf16.xpose.msra.mxu0 %v1539
        %1543 = vmatprep.subr.bf16.mxu0 0
        %1544 = vmatpush1.bf16.xpose.msra.mxu0 0
        %1545 = vmatprep.subr.bf16.mxu0 0
        %1546 = vmatpush1.bf16.xpose.msra.mxu0 0
        %1547 = vmatprep.subr.bf16.mxu0 0
        %1548 = vmatpush1.bf16.xpose.msra.mxu0 0
        %1549 = vmatprep.subr.bf16.mxu0 0
        %1550 = vmatpush1.bf16.xpose.msra.mxu0 0
        %1551 = vmatprep.subr.bf16.mxu0 0
        %1552 = vmatpush1.bf16.xpose.msra.mxu0 0
        %1553 = vmatprep.subr.bf16.mxu0 0
        %1554 = vmatpush1.bf16.xpose.msra.mxu0 0
        %1555 = vmatprep.subr.bf16.mxu0 0
        %1556 = vmatpush1.bf16.xpose.msra.mxu0 0
        %1557 = vmatprep.subr.bf16.mxu0 0
        %1558 = vmatpush1.bf16.xpose.msra.mxu0 0
        %1559 = vmatprep.subr.bf16.mxu0 0
        %1560 = vmatpush1.bf16.xpose.msra.mxu0 0
        %1561 = vmatprep.subr.bf16.mxu0 0
        %1562 = vmatpush1.bf16.xpose.msra.mxu0 0
        %1563 = vmatprep.subr.bf16.mxu0 0
        %1564 = vmatpush1.bf16.xpose.msra.mxu0 0
        %1565 = vmatprep.subr.bf16.mxu0 0
        %1566 = vmatpush1.bf16.xpose.msra.mxu0 0
        %1567 = vmatprep.subr.bf16.mxu0 0
        %1568 = vmatpush1.bf16.xpose.msra.mxu0 0
        %1569 = vmatprep.subr.bf16.mxu0 0
        %1570 = vmatpush1.bf16.xpose.msra.mxu0 0
        %1571 = vmatprep.subr.bf16.mxu0 0
        %1572 = vmatpush1.bf16.xpose.msra.mxu0 0
        %1573 = vmatprep.mubr.bf16.mxu0 0
        %1574 = vmatmul.mubr.bf16.gmra.mrb[0].mxu0 %v1536
        %v1575 = vpop.f32.mrb[0].mxu0
        %v1576 = vadd.f32 0.0, %v1575
        %v1577 = vpop.f32.mrb[0].mxu0
        %v1578 = vpop.f32.mrb[0].mxu0
        %v1579 = vpop.f32.mrb[0].mxu0
        %1580 = vdwg.mxu0
        %v1582 = vsel %vm743, %v1040, 0
        %v1585 = vsel %vm743, %v1171, 0
        %1587 = vmatprep.subr.bf16.mxu0 0
        %1588 = vmatpush1.bf16.xpose.msra.mxu0 %v1585
        %1589 = vmatprep.subr.bf16.mxu0 0
        %1590 = vmatpush1.bf16.xpose.msra.mxu0 0
        %1591 = vmatprep.subr.bf16.mxu0 0
        %1592 = vmatpush1.bf16.xpose.msra.mxu0 0
        %1593 = vmatprep.subr.bf16.mxu0 0
        %1594 = vmatpush1.bf16.xpose.msra.mxu0 0
        %1595 = vmatprep.subr.bf16.mxu0 0
        %1596 = vmatpush1.bf16.xpose.msra.mxu0 0
        %1597 = vmatprep.subr.bf16.mxu0 0
        %1598 = vmatpush1.bf16.xpose.msra.mxu0 0
        %1599 = vmatprep.subr.bf16.mxu0 0
        %1600 = vmatpush1.bf16.xpose.msra.mxu0 0
        %1601 = vmatprep.subr.bf16.mxu0 0
        %1602 = vmatpush1.bf16.xpose.msra.mxu0 0
        %1603 = vmatprep.subr.bf16.mxu0 0
        %1604 = vmatpush1.bf16.xpose.msra.mxu0 0
        %1605 = vmatprep.subr.bf16.mxu0 0
        %1606 = vmatpush1.bf16.xpose.msra.mxu0 0
        %1607 = vmatprep.subr.bf16.mxu0 0
        %1608 = vmatpush1.bf16.xpose.msra.mxu0 0
        %1609 = vmatprep.subr.bf16.mxu0 0
        %1610 = vmatpush1.bf16.xpose.msra.mxu0 0
        %1611 = vmatprep.subr.bf16.mxu0 0
        %1612 = vmatpush1.bf16.xpose.msra.mxu0 0
        %1613 = vmatprep.subr.bf16.mxu0 0
        %1614 = vmatpush1.bf16.xpose.msra.mxu0 0
        %1615 = vmatprep.subr.bf16.mxu0 0
        %1616 = vmatpush1.bf16.xpose.msra.mxu0 0
        %1617 = vmatprep.subr.bf16.mxu0 0
        %1618 = vmatpush1.bf16.xpose.msra.mxu0 0
        %1619 = vmatprep.mubr.bf16.mxu0 0
        %1620 = vmatmul.mubr.bf16.gmra.mrb[0].mxu0 %v1582
        %v1621 = vpop.f32.mrb[0].mxu0
        %v1622 = vadd.f32 0.0, %v1621
        %v1623 = vpop.f32.mrb[0].mxu0
        %v1624 = vpop.f32.mrb[0].mxu0
        %v1625 = vpop.f32.mrb[0].mxu0
        %1626 = vdwg.mxu0
        %v1628 = vsel %vm743, %v1042, 0
        %v1631 = vsel %vm743, %v1173, 0
        %1633 = vmatprep.subr.bf16.mxu0 0
        %1634 = vmatpush1.bf16.xpose.msra.mxu0 %v1631
        %1635 = vmatprep.subr.bf16.mxu0 0
        %1636 = vmatpush1.bf16.xpose.msra.mxu0 0
        %1637 = vmatprep.subr.bf16.mxu0 0
        %1638 = vmatpush1.bf16.xpose.msra.mxu0 0
        %1639 = vmatprep.subr.bf16.mxu0 0
        %1640 = vmatpush1.bf16.xpose.msra.mxu0 0
        %1641 = vmatprep.subr.bf16.mxu0 0
        %1642 = vmatpush1.bf16.xpose.msra.mxu0 0
        %1643 = vmatprep.subr.bf16.mxu0 0
        %1644 = vmatpush1.bf16.xpose.msra.mxu0 0
        %1645 = vmatprep.subr.bf16.mxu0 0
        %1646 = vmatpush1.bf16.xpose.msra.mxu0 0
        %1647 = vmatprep.subr.bf16.mxu0 0
        %1648 = vmatpush1.bf16.xpose.msra.mxu0 0
        %1649 = vmatprep.subr.bf16.mxu0 0
        %1650 = vmatpush1.bf16.xpose.msra.mxu0 0
        %1651 = vmatprep.subr.bf16.mxu0 0
        %1652 = vmatpush1.bf16.xpose.msra.mxu0 0
        %1653 = vmatprep.subr.bf16.mxu0 0
        %1654 = vmatpush1.bf16.xpose.msra.mxu0 0
        %1655 = vmatprep.subr.bf16.mxu0 0
        %1656 = vmatpush1.bf16.xpose.msra.mxu0 0
        %1657 = vmatprep.subr.bf16.mxu0 0
        %1658 = vmatpush1.bf16.xpose.msra.mxu0 0
        %1659 = vmatprep.subr.bf16.mxu0 0
        %1660 = vmatpush1.bf16.xpose.msra.mxu0 0
        %1661 = vmatprep.subr.bf16.mxu0 0
        %1662 = vmatpush1.bf16.xpose.msra.mxu0 0
        %1663 = vmatprep.subr.bf16.mxu0 0
        %1664 = vmatpush1.bf16.xpose.msra.mxu0 0
        %1665 = vmatprep.mubr.bf16.mxu0 0
        %1666 = vmatmul.mubr.bf16.gmra.mrb[0].mxu0 %v1628
        %v1667 = vpop.f32.mrb[0].mxu0
        %v1668 = vadd.f32 0.0, %v1667
        %v1669 = vpop.f32.mrb[0].mxu0
        %v1670 = vpop.f32.mrb[0].mxu0
        %v1671 = vpop.f32.mrb[0].mxu0
        %1672 = vdwg.mxu0
        %vm1673 = vcmask 9216
        %v1674 = vsel %vm1673, %v1346, -inf
        %1675 = vmax.xlane.f32.xlu0 %v1674
        %v1676 = vpop.xlane.xlu0 %1675
        %v1677 = vsel %vm1673, %v1392, -inf
        %1678 = vmax.xlane.f32.xlu0 %v1677
        %v1679 = vpop.xlane.xlu0 %1678
        %v1680 = vsel %vm1673, %v1438, -inf
        %1681 = vmax.xlane.f32.xlu0 %v1680
        %v1682 = vpop.xlane.xlu0 %1681
        %v1683 = vsel %vm1673, %v1484, -inf
        %1684 = vmax.xlane.f32.xlu0 %v1683
        %v1685 = vpop.xlane.xlu0 %1684
        %v1686 = vsel %vm1673, %v1530, -inf
        %1687 = vmax.xlane.f32.xlu0 %v1686
        %v1688 = vpop.xlane.xlu0 %1687
        %v1689 = vsel %vm1673, %v1576, -inf
        %1690 = vmax.xlane.f32.xlu0 %v1689
        %v1691 = vpop.xlane.xlu0 %1690
        %v1692 = vsel %vm1673, %v1622, -inf
        %1693 = vmax.xlane.f32.xlu0 %v1692
        %v1694 = vpop.xlane.xlu0 %1693
        %v1695 = vsel %vm1673, %v1668, -inf
        %1696 = vmax.xlane.f32.xlu0 %v1695
        %v1697 = vpop.xlane.xlu0 %1696
        %v1698 = vsub.f32 %v1346, %v1676
        %v1699 = vsub.f32 %v1392, %v1679
        %v1700 = vsub.f32 %v1438, %v1682
        %v1701 = vsub.f32 %v1484, %v1685
        %v1702 = vsub.f32 %v1530, %v1688
        %v1703 = vsub.f32 %v1576, %v1691
        %v1704 = vsub.f32 %v1622, %v1694
        %v1705 = vsub.f32 %v1668, %v1697
        %v1706 = vmul.f32 %v1698, 1.442695
        %v1707 = vpow.pop %v1706
        %v1708 = vmul.f32 %v1699, 1.442695
        %v1709 = vpow.pop %v1708
        %v1710 = vmul.f32 %v1700, 1.442695
        %v1711 = vpow.pop %v1710
        %v1712 = vmul.f32 %v1701, 1.442695
        %v1713 = vpow.pop %v1712
        %v1714 = vmul.f32 %v1702, 1.442695
        %v1715 = vpow.pop %v1714
        %v1716 = vmul.f32 %v1703, 1.442695
        %v1717 = vpow.pop %v1716
        %v1718 = vmul.f32 %v1704, 1.442695
        %v1719 = vpow.pop %v1718
        %v1720 = vmul.f32 %v1705, 1.442695
        %v1721 = vpow.pop %v1720
        %v1722 = vsel %vm1673, %v1707, 0.0
        %1723 = vadd.xlane.f32.xlu0 %v1722
        %v1724 = vpop.xlane.xlu0 %1723
        %v1725 = vsel %vm1673, %v1709, 0.0
        %1726 = vadd.xlane.f32.xlu0 %v1725
        %v1727 = vpop.xlane.xlu0 %1726
        %v1728 = vsel %vm1673, %v1711, 0.0
        %1729 = vadd.xlane.f32.xlu0 %v1728
        %v1730 = vpop.xlane.xlu0 %1729
        %v1731 = vsel %vm1673, %v1713, 0.0
        %1732 = vadd.xlane.f32.xlu0 %v1731
        %v1733 = vpop.xlane.xlu0 %1732
        %v1734 = vsel %vm1673, %v1715, 0.0
        %1735 = vadd.xlane.f32.xlu0 %v1734
        %v1736 = vpop.xlane.xlu0 %1735
        %v1737 = vsel %vm1673, %v1717, 0.0
        %1738 = vadd.xlane.f32.xlu0 %v1737
        %v1739 = vpop.xlane.xlu0 %1738
        %v1740 = vsel %vm1673, %v1719, 0.0
        %1741 = vadd.xlane.f32.xlu0 %v1740
        %v1742 = vpop.xlane.xlu0 %1741
        %v1743 = vsel %vm1673, %v1721, 0.0
        %1744 = vadd.xlane.f32.xlu0 %v1743
        %v1745 = vpop.xlane.xlu0 %1744
        %v1746 = vrcp.pop %v1724
        %v1747 = vmul.f32 %v1707, %v1746
        %v1748 = vrcp.pop %v1727
        %v1749 = vmul.f32 %v1709, %v1748
        %v1750 = vrcp.pop %v1730
        %v1751 = vmul.f32 %v1711, %v1750
        %v1752 = vrcp.pop %v1733
        %v1753 = vmul.f32 %v1713, %v1752
        %v1754 = vrcp.pop %v1736
        %v1755 = vmul.f32 %v1715, %v1754
        %v1756 = vrcp.pop %v1739
        %v1757 = vmul.f32 %v1717, %v1756
        %v1758 = vrcp.pop %v1742
        %v1759 = vmul.f32 %v1719, %v1758
        %v1760 = vrcp.pop %v1745
        %v1761 = vmul.f32 %v1721, %v1760
        %v1762 = vpack.c.bf16 %v1747, %v1747
        %v1763 = vpack.c.bf16 %v1749, %v1749
        %v1764 = vpack.c.bf16 %v1751, %v1751
        %v1765 = vpack.c.bf16 %v1753, %v1753
        %v1766 = vpack.c.bf16 %v1755, %v1755
        %v1767 = vpack.c.bf16 %v1757, %v1757
        %v1768 = vpack.c.bf16 %v1759, %v1759
        %v1769 = vpack.c.bf16 %v1761, %v1761
        %vm1770 = vcmask 15360
        %v1772 = vsel %vm1770, %v1762, 0
        %v1775 = vsel %vm653, %v1279, 0
        %1777 = vmatprep.subr.bf16.mxu0 0
        %1778 = vmatpush1.bf16.msra.mxu0 %v1775
        %1779 = vmatprep.subr.bf16.mxu0 0
        %1780 = vmatpush1.bf16.msra.mxu0 0
        %1781 = vmatprep.subr.bf16.mxu0 0
        %1782 = vmatpush1.bf16.msra.mxu0 0
        %1783 = vmatprep.subr.bf16.mxu0 0
        %1784 = vmatpush1.bf16.msra.mxu0 0
        %1785 = vmatprep.subr.bf16.mxu0 0
        %1786 = vmatpush1.bf16.msra.mxu0 0
        %1787 = vmatprep.subr.bf16.mxu0 0
        %1788 = vmatpush1.bf16.msra.mxu0 0
        %1789 = vmatprep.subr.bf16.mxu0 0
        %1790 = vmatpush1.bf16.msra.mxu0 0
        %1791 = vmatprep.subr.bf16.mxu0 0
        %1792 = vmatpush1.bf16.msra.mxu0 0
        %1793 = vmatprep.subr.bf16.mxu0 0
        %1794 = vmatpush1.bf16.msra.mxu0 0
        %1795 = vmatprep.subr.bf16.mxu0 0
        %1796 = vmatpush1.bf16.msra.mxu0 0
        %1797 = vmatprep.subr.bf16.mxu0 0
        %1798 = vmatpush1.bf16.msra.mxu0 0
        %1799 = vmatprep.subr.bf16.mxu0 0
        %1800 = vmatpush1.bf16.msra.mxu0 0
        %1801 = vmatprep.subr.bf16.mxu0 0
        %1802 = vmatpush1.bf16.msra.mxu0 0
        %1803 = vmatprep.subr.bf16.mxu0 0
        %1804 = vmatpush1.bf16.msra.mxu0 0
        %1805 = vmatprep.subr.bf16.mxu0 0
        %1806 = vmatpush1.bf16.msra.mxu0 0
        %1807 = vmatprep.subr.bf16.mxu0 0
        %1808 = vmatpush1.bf16.msra.mxu0 0
        %1809 = vmatprep.mubr.bf16.mxu0 0
        %1810 = vmatmul.mubr.bf16.gmra.mrb[0].mxu0 %v1772
        %v1811 = vpop.f32.mrb[0].mxu0
        %v1812 = vadd.f32 0.0, %v1811
        %v1813 = vpop.f32.mrb[0].mxu0
        %v1814 = vpop.f32.mrb[0].mxu0
        %v1815 = vpop.f32.mrb[0].mxu0
        %1816 = vdwg.mxu0
        %v1818 = vsel %vm1770, %v1763, 0
        %v1821 = vsel %vm653, %v1293, 0
        %1823 = vmatprep.subr.bf16.mxu0 0
        %1824 = vmatpush1.bf16.msra.mxu0 %v1821
        %1825 = vmatprep.subr.bf16.mxu0 0
        %1826 = vmatpush1.bf16.msra.mxu0 0
        %1827 = vmatprep.subr.bf16.mxu0 0
        %1828 = vmatpush1.bf16.msra.mxu0 0
        %1829 = vmatprep.subr.bf16.mxu0 0
        %1830 = vmatpush1.bf16.msra.mxu0 0
        %1831 = vmatprep.subr.bf16.mxu0 0
        %1832 = vmatpush1.bf16.msra.mxu0 0
        %1833 = vmatprep.subr.bf16.mxu0 0
        %1834 = vmatpush1.bf16.msra.mxu0 0
        %1835 = vmatprep.subr.bf16.mxu0 0
        %1836 = vmatpush1.bf16.msra.mxu0 0
        %1837 = vmatprep.subr.bf16.mxu0 0
        %1838 = vmatpush1.bf16.msra.mxu0 0
        %1839 = vmatprep.subr.bf16.mxu0 0
        %1840 = vmatpush1.bf16.msra.mxu0 0
        %1841 = vmatprep.subr.bf16.mxu0 0
        %1842 = vmatpush1.bf16.msra.mxu0 0
        %1843 = vmatprep.subr.bf16.mxu0 0
        %1844 = vmatpush1.bf16.msra.mxu0 0
        %1845 = vmatprep.subr.bf16.mxu0 0
        %1846 = vmatpush1.bf16.msra.mxu0 0
        %1847 = vmatprep.subr.bf16.mxu0 0
        %1848 = vmatpush1.bf16.msra.mxu0 0
        %1849 = vmatprep.subr.bf16.mxu0 0
        %1850 = vmatpush1.bf16.msra.mxu0 0
        %1851 = vmatprep.subr.bf16.mxu0 0
        %1852 = vmatpush1.bf16.msra.mxu0 0
        %1853 = vmatprep.subr.bf16.mxu0 0
        %1854 = vmatpush1.bf16.msra.mxu0 0
        %1855 = vmatprep.mubr.bf16.mxu0 0
        %1856 = vmatmul.mubr.bf16.gmra.mrb[0].mxu0 %v1818
        %v1857 = vpop.f32.mrb[0].mxu0
        %v1858 = vadd.f32 0.0, %v1857
        %v1859 = vpop.f32.mrb[0].mxu0
        %v1860 = vpop.f32.mrb[0].mxu0
        %v1861 = vpop.f32.mrb[0].mxu0
        %1862 = vdwg.mxu0
        %v1864 = vsel %vm1770, %v1764, 0
        %v1867 = vsel %vm653, %v1301, 0
        %1869 = vmatprep.subr.bf16.mxu0 0
        %1870 = vmatpush1.bf16.msra.mxu0 %v1867
        %1871 = vmatprep.subr.bf16.mxu0 0
        %1872 = vmatpush1.bf16.msra.mxu0 0
        %1873 = vmatprep.subr.bf16.mxu0 0
        %1874 = vmatpush1.bf16.msra.mxu0 0
        %1875 = vmatprep.subr.bf16.mxu0 0
        %1876 = vmatpush1.bf16.msra.mxu0 0
        %1877 = vmatprep.subr.bf16.mxu0 0
        %1878 = vmatpush1.bf16.msra.mxu0 0
        %1879 = vmatprep.subr.bf16.mxu0 0
        %1880 = vmatpush1.bf16.msra.mxu0 0
        %1881 = vmatprep.subr.bf16.mxu0 0
        %1882 = vmatpush1.bf16.msra.mxu0 0
        %1883 = vmatprep.subr.bf16.mxu0 0
        %1884 = vmatpush1.bf16.msra.mxu0 0
        %1885 = vmatprep.subr.bf16.mxu0 0
        %1886 = vmatpush1.bf16.msra.mxu0 0
        %1887 = vmatprep.subr.bf16.mxu0 0
        %1888 = vmatpush1.bf16.msra.mxu0 0
        %1889 = vmatprep.subr.bf16.mxu0 0
        %1890 = vmatpush1.bf16.msra.mxu0 0
        %1891 = vmatprep.subr.bf16.mxu0 0
        %1892 = vmatpush1.bf16.msra.mxu0 0
        %1893 = vmatprep.subr.bf16.mxu0 0
        %1894 = vmatpush1.bf16.msra.mxu0 0
        %1895 = vmatprep.subr.bf16.mxu0 0
        %1896 = vmatpush1.bf16.msra.mxu0 0
        %1897 = vmatprep.subr.bf16.mxu0 0
        %1898 = vmatpush1.bf16.msra.mxu0 0
        %1899 = vmatprep.subr.bf16.mxu0 0
        %1900 = vmatpush1.bf16.msra.mxu0 0
        %1901 = vmatprep.mubr.bf16.mxu0 0
        %1902 = vmatmul.mubr.bf16.gmra.mrb[0].mxu0 %v1864
        %v1903 = vpop.f32.mrb[0].mxu0
        %v1904 = vadd.f32 0.0, %v1903
        %v1905 = vpop.f32.mrb[0].mxu0
        %v1906 = vpop.f32.mrb[0].mxu0
        %v1907 = vpop.f32.mrb[0].mxu0
        %1908 = vdwg.mxu0
        %v1910 = vsel %vm1770, %v1765, 0
        %v1913 = vsel %vm653, %v1303, 0
        %1915 = vmatprep.subr.bf16.mxu0 0
        %1916 = vmatpush1.bf16.msra.mxu0 %v1913
        %1917 = vmatprep.subr.bf16.mxu0 0
        %1918 = vmatpush1.bf16.msra.mxu0 0
        %1919 = vmatprep.subr.bf16.mxu0 0
        %1920 = vmatpush1.bf16.msra.mxu0 0
        %1921 = vmatprep.subr.bf16.mxu0 0
        %1922 = vmatpush1.bf16.msra.mxu0 0
        %1923 = vmatprep.subr.bf16.mxu0 0
        %1924 = vmatpush1.bf16.msra.mxu0 0
        %1925 = vmatprep.subr.bf16.mxu0 0
        %1926 = vmatpush1.bf16.msra.mxu0 0
        %1927 = vmatprep.subr.bf16.mxu0 0
        %1928 = vmatpush1.bf16.msra.mxu0 0
        %1929 = vmatprep.subr.bf16.mxu0 0
        %1930 = vmatpush1.bf16.msra.mxu0 0
        %1931 = vmatprep.subr.bf16.mxu0 0
        %1932 = vmatpush1.bf16.msra.mxu0 0
        %1933 = vmatprep.subr.bf16.mxu0 0
        %1934 = vmatpush1.bf16.msra.mxu0 0
        %1935 = vmatprep.subr.bf16.mxu0 0
        %1936 = vmatpush1.bf16.msra.mxu0 0
        %1937 = vmatprep.subr.bf16.mxu0 0
        %1938 = vmatpush1.bf16.msra.mxu0 0
        %1939 = vmatprep.subr.bf16.mxu0 0
        %1940 = vmatpush1.bf16.msra.mxu0 0
        %1941 = vmatprep.subr.bf16.mxu0 0
        %1942 = vmatpush1.bf16.msra.mxu0 0
        %1943 = vmatprep.subr.bf16.mxu0 0
        %1944 = vmatpush1.bf16.msra.mxu0 0
        %1945 = vmatprep.subr.bf16.mxu0 0
        %1946 = vmatpush1.bf16.msra.mxu0 0
        %1947 = vmatprep.mubr.bf16.mxu0 0
        %1948 = vmatmul.mubr.bf16.gmra.mrb[0].mxu0 %v1910
        %v1949 = vpop.f32.mrb[0].mxu0
        %v1950 = vadd.f32 0.0, %v1949
        %v1951 = vpop.f32.mrb[0].mxu0
        %v1952 = vpop.f32.mrb[0].mxu0
        %v1953 = vpop.f32.mrb[0].mxu0
        %1954 = vdwg.mxu0
        %v1956 = vsel %vm1770, %v1766, 0
        %v1959 = vsel %vm653, %v1286, 0
        %1961 = vmatprep.subr.bf16.mxu0 0
        %1962 = vmatpush1.bf16.msra.mxu0 %v1959
        %1963 = vmatprep.subr.bf16.mxu0 0
        %1964 = vmatpush1.bf16.msra.mxu0 0
        %1965 = vmatprep.subr.bf16.mxu0 0
        %1966 = vmatpush1.bf16.msra.mxu0 0
        %1967 = vmatprep.subr.bf16.mxu0 0
        %1968 = vmatpush1.bf16.msra.mxu0 0
        %1969 = vmatprep.subr.bf16.mxu0 0
        %1970 = vmatpush1.bf16.msra.mxu0 0
        %1971 = vmatprep.subr.bf16.mxu0 0
        %1972 = vmatpush1.bf16.msra.mxu0 0
        %1973 = vmatprep.subr.bf16.mxu0 0
        %1974 = vmatpush1.bf16.msra.mxu0 0
        %1975 = vmatprep.subr.bf16.mxu0 0
        %1976 = vmatpush1.bf16.msra.mxu0 0
        %1977 = vmatprep.subr.bf16.mxu0 0
        %1978 = vmatpush1.bf16.msra.mxu0 0
        %1979 = vmatprep.subr.bf16.mxu0 0
        %1980 = vmatpush1.bf16.msra.mxu0 0
        %1981 = vmatprep.subr.bf16.mxu0 0
        %1982 = vmatpush1.bf16.msra.mxu0 0
        %1983 = vmatprep.subr.bf16.mxu0 0
        %1984 = vmatpush1.bf16.msra.mxu0 0
        %1985 = vmatprep.subr.bf16.mxu0 0
        %1986 = vmatpush1.bf16.msra.mxu0 0
        %1987 = vmatprep.subr.bf16.mxu0 0
        %1988 = vmatpush1.bf16.msra.mxu0 0
        %1989 = vmatprep.subr.bf16.mxu0 0
        %1990 = vmatpush1.bf16.msra.mxu0 0
        %1991 = vmatprep.subr.bf16.mxu0 0
        %1992 = vmatpush1.bf16.msra.mxu0 0
        %1993 = vmatprep.mubr.bf16.mxu0 0
        %1994 = vmatmul.mubr.bf16.gmra.mrb[0].mxu0 %v1956
        %v1995 = vpop.f32.mrb[0].mxu0
        %v1996 = vadd.f32 0.0, %v1995
        %v1997 = vpop.f32.mrb[0].mxu0
        %v1998 = vpop.f32.mrb[0].mxu0
        %v1999 = vpop.f32.mrb[0].mxu0
        %2000 = vdwg.mxu0
        %v2002 = vsel %vm1770, %v1767, 0
        %v2005 = vsel %vm653, %v1300, 0
        %2007 = vmatprep.subr.bf16.mxu0 0
        %2008 = vmatpush1.bf16.msra.mxu0 %v2005
        %2009 = vmatprep.subr.bf16.mxu0 0
        %2010 = vmatpush1.bf16.msra.mxu0 0
        %2011 = vmatprep.subr.bf16.mxu0 0
        %2012 = vmatpush1.bf16.msra.mxu0 0
        %2013 = vmatprep.subr.bf16.mxu0 0
        %2014 = vmatpush1.bf16.msra.mxu0 0
        %2015 = vmatprep.subr.bf16.mxu0 0
        %2016 = vmatpush1.bf16.msra.mxu0 0
        %2017 = vmatprep.subr.bf16.mxu0 0
        %2018 = vmatpush1.bf16.msra.mxu0 0
        %2019 = vmatprep.subr.bf16.mxu0 0
        %2020 = vmatpush1.bf16.msra.mxu0 0
        %2021 = vmatprep.subr.bf16.mxu0 0
        %2022 = vmatpush1.bf16.msra.mxu0 0
        %2023 = vmatprep.subr.bf16.mxu0 0
        %2024 = vmatpush1.bf16.msra.mxu0 0
        %2025 = vmatprep.subr.bf16.mxu0 0
        %2026 = vmatpush1.bf16.msra.mxu0 0
        %2027 = vmatprep.subr.bf16.mxu0 0
        %2028 = vmatpush1.bf16.msra.mxu0 0
        %2029 = vmatprep.subr.bf16.mxu0 0
        %2030 = vmatpush1.bf16.msra.mxu0 0
        %2031 = vmatprep.subr.bf16.mxu0 0
        %2032 = vmatpush1.bf16.msra.mxu0 0
        %2033 = vmatprep.subr.bf16.mxu0 0
        %2034 = vmatpush1.bf16.msra.mxu0 0
        %2035 = vmatprep.subr.bf16.mxu0 0
        %2036 = vmatpush1.bf16.msra.mxu0 0
        %2037 = vmatprep.subr.bf16.mxu0 0
        %2038 = vmatpush1.bf16.msra.mxu0 0
        %2039 = vmatprep.mubr.bf16.mxu0 0
        %2040 = vmatmul.mubr.bf16.gmra.mrb[0].mxu0 %v2002
        %v2041 = vpop.f32.mrb[0].mxu0
        %v2042 = vadd.f32 0.0, %v2041
        %v2043 = vpop.f32.mrb[0].mxu0
        %v2044 = vpop.f32.mrb[0].mxu0
        %v2045 = vpop.f32.mrb[0].mxu0
        %2046 = vdwg.mxu0
        %v2048 = vsel %vm1770, %v1768, 0
        %v2051 = vsel %vm653, %v1302, 0
        %2053 = vmatprep.subr.bf16.mxu0 0
        %2054 = vmatpush1.bf16.msra.mxu0 %v2051
        %2055 = vmatprep.subr.bf16.mxu0 0
        %2056 = vmatpush1.bf16.msra.mxu0 0
        %2057 = vmatprep.subr.bf16.mxu0 0
        %2058 = vmatpush1.bf16.msra.mxu0 0
        %2059 = vmatprep.subr.bf16.mxu0 0
        %2060 = vmatpush1.bf16.msra.mxu0 0
        %2061 = vmatprep.subr.bf16.mxu0 0
        %2062 = vmatpush1.bf16.msra.mxu0 0
        %2063 = vmatprep.subr.bf16.mxu0 0
        %2064 = vmatpush1.bf16.msra.mxu0 0
        %2065 = vmatprep.subr.bf16.mxu0 0
        %2066 = vmatpush1.bf16.msra.mxu0 0
        %2067 = vmatprep.subr.bf16.mxu0 0
        %2068 = vmatpush1.bf16.msra.mxu0 0
        %2069 = vmatprep.subr.bf16.mxu0 0
        %2070 = vmatpush1.bf16.msra.mxu0 0
        %2071 = vmatprep.subr.bf16.mxu0 0
        %2072 = vmatpush1.bf16.msra.mxu0 0
        %2073 = vmatprep.subr.bf16.mxu0 0
        %2074 = vmatpush1.bf16.msra.mxu0 0
        %2075 = vmatprep.subr.bf16.mxu0 0
        %2076 = vmatpush1.bf16.msra.mxu0 0
        %2077 = vmatprep.subr.bf16.mxu0 0
        %2078 = vmatpush1.bf16.msra.mxu0 0
        %2079 = vmatprep.subr.bf16.mxu0 0
        %2080 = vmatpush1.bf16.msra.mxu0 0
        %2081 = vmatprep.subr.bf16.mxu0 0
        %2082 = vmatpush1.bf16.msra.mxu0 0
        %2083 = vmatprep.subr.bf16.mxu0 0
        %2084 = vmatpush1.bf16.msra.mxu0 0
        %2085 = vmatprep.mubr.bf16.mxu0 0
        %2086 = vmatmul.mubr.bf16.gmra.mrb[0].mxu0 %v2048
        %v2087 = vpop.f32.mrb[0].mxu0
        %v2088 = vadd.f32 0.0, %v2087
        %v2089 = vpop.f32.mrb[0].mxu0
        %v2090 = vpop.f32.mrb[0].mxu0
        %v2091 = vpop.f32.mrb[0].mxu0
        %2092 = vdwg.mxu0
        %v2094 = vsel %vm1770, %v1769, 0
        %v2097 = vsel %vm653, %v1304, 0
        %2099 = vmatprep.subr.bf16.mxu0 0
        %2100 = vmatpush1.bf16.msra.mxu0 %v2097
        %2101 = vmatprep.subr.bf16.mxu0 0
        %2102 = vmatpush1.bf16.msra.mxu0 0
        %2103 = vmatprep.subr.bf16.mxu0 0
        %2104 = vmatpush1.bf16.msra.mxu0 0
        %2105 = vmatprep.subr.bf16.mxu0 0
        %2106 = vmatpush1.bf16.msra.mxu0 0
        %2107 = vmatprep.subr.bf16.mxu0 0
        %2108 = vmatpush1.bf16.msra.mxu0 0
        %2109 = vmatprep.subr.bf16.mxu0 0
        %2110 = vmatpush1.bf16.msra.mxu0 0
        %2111 = vmatprep.subr.bf16.mxu0 0
        %2112 = vmatpush1.bf16.msra.mxu0 0
        %2113 = vmatprep.subr.bf16.mxu0 0
        %2114 = vmatpush1.bf16.msra.mxu0 0
        %2115 = vmatprep.subr.bf16.mxu0 0
        %2116 = vmatpush1.bf16.msra.mxu0 0
        %2117 = vmatprep.subr.bf16.mxu0 0
        %2118 = vmatpush1.bf16.msra.mxu0 0
        %2119 = vmatprep.subr.bf16.mxu0 0
        %2120 = vmatpush1.bf16.msra.mxu0 0
        %2121 = vmatprep.subr.bf16.mxu0 0
        %2122 = vmatpush1.bf16.msra.mxu0 0
        %2123 = vmatprep.subr.bf16.mxu0 0
        %2124 = vmatpush1.bf16.msra.mxu0 0
        %2125 = vmatprep.subr.bf16.mxu0 0
        %2126 = vmatpush1.bf16.msra.mxu0 0
        %2127 = vmatprep.subr.bf16.mxu0 0
        %2128 = vmatpush1.bf16.msra.mxu0 0
        %2129 = vmatprep.subr.bf16.mxu0 0
        %2130 = vmatpush1.bf16.msra.mxu0 0
        %2131 = vmatprep.mubr.bf16.mxu0 0
        %2132 = vmatmul.mubr.bf16.gmra.mrb[0].mxu0 %v2094
        %v2133 = vpop.f32.mrb[0].mxu0
        %v2134 = vadd.f32 0.0, %v2133
        %v2135 = vpop.f32.mrb[0].mxu0
        %v2136 = vpop.f32.mrb[0].mxu0
        %v2137 = vpop.f32.mrb[0].mxu0
        %2138 = vdwg.mxu0
        %v2139 = vpack.c.bf16 %v1812, %v1812
        %v2140 = vpack.c.bf16 %v1858, %v1858
        %v2141 = vpack.c.bf16 %v1904, %v1904
        %v2142 = vpack.c.bf16 %v1950, %v1950
        %v2143 = vpack.c.bf16 %v1996, %v1996
        %v2144 = vpack.c.bf16 %v2042, %v2042
        %v2145 = vpack.c.bf16 %v2088, %v2088
        %v2146 = vpack.c.bf16 %v2134, %v2134
        %v2147 = vld [vmem:[#allocation8] sm:$0xf]
        %v2148 = vld [vmem:[#allocation8 + $0x4] sm:$0xf]
        %v2149 = vld [vmem:[#allocation8 + $0x8] sm:$0xf]
        %v2150 = vld [vmem:[#allocation8 + $0xc] sm:$0xf]
        %v2151 = vld [vmem:[#allocation8 + $0x10] sm:$0xf]
        %v2152 = vld [vmem:[#allocation8 + $0x14] sm:$0xf]
        %v2153 = vld [vmem:[#allocation8 + $0x18] sm:$0xf]
        %v2154 = vld [vmem:[#allocation8 + $0x1c] sm:$0xf]
        %v2155 = vld [vmem:[%s12] sm:$0x1]
        %v2157 = vlaneseq
        %v2158 = vshrl.u32 %v2157, 7
        %v2159 = vsub.s32 0, %v2158
        %v2160 = vrot.slane %v2155, %v2159
        %v2170 = vcombine.low %v2139, %v2140
        %v2171 = vcombine.low %v2141, %v2142
        %v2172 = vcombine.low %v2143, %v2144
        %v2173 = vcombine.low %v2145, %v2146
        %v2175 = vunpack.c.l.s4 1966171168
        %v2176 = vunpack.c.0.s8 %v2175
        %v2177 = vlaneseq
        %v2178 = vshrl.u32 %v2177, 7
        %v2179 = vsub.s32 %v2176, %v2178
        %v2180 = vrot.slane %v2170, %v2179
        %v2182 = vunpack.c.l.s4 1966171168
        %v2183 = vunpack.c.0.s8 %v2182
        %v2184 = vlaneseq
        %v2185 = vshrl.u32 %v2184, 7
        %v2186 = vsub.s32 %v2183, %v2185
        %v2187 = vrot.slane %v2171, %v2186
        %v2189 = vunpack.c.l.s4 1966171168
        %v2190 = vunpack.c.0.s8 %v2189
        %v2191 = vlaneseq
        %v2192 = vshrl.u32 %v2191, 7
        %v2193 = vsub.s32 %v2190, %v2192
        %v2194 = vrot.slane %v2172, %v2193
        %v2196 = vunpack.c.l.s4 1966171168
        %v2197 = vunpack.c.0.s8 %v2196
        %v2198 = vlaneseq
        %v2199 = vshrl.u32 %v2198, 7
        %v2200 = vsub.s32 %v2197, %v2199
        %v2201 = vrot.slane %v2173, %v2200
        %v2202 = vcombine.low %v2180, %v2187
        %v2203 = vcombine.low %v2194, %v2201
        %v2205 = vunpack.c.l.s4 1966171168
        %v2206 = vunpack.c.0.s8 %v2205
        %v2207 = vlaneseq
        %v2208 = vshrl.u32 %v2207, 7
        %v2209 = vsub.s32 %v2206, %v2208
        %v2210 = vrot.slane %v2202, %v2209
        %v2212 = vunpack.c.l.s4 1966171168
        %v2213 = vunpack.c.0.s8 %v2212
        %v2214 = vlaneseq
        %v2215 = vshrl.u32 %v2214, 7
        %v2216 = vsub.s32 %v2213, %v2215
        %v2217 = vrot.slane %v2203, %v2216
        %v2218 = vcombine.low %v2210, %v2217
        %v2227 = vunpack.c.l.b16 %v2147
        %v2228 = vunpack.c.l.b16 %v2148
        %v2229 = vunpack.c.l.b16 %v2149
        %v2230 = vunpack.c.l.b16 %v2150
        %v2231 = vunpack.c.l.b16 %v2151
        %v2232 = vunpack.c.l.b16 %v2152
        %v2233 = vunpack.c.l.b16 %v2153
        %v2234 = vunpack.c.l.b16 %v2154
        %v2235 = vpack.c.b16 %v2228, %v2227
        %v2236 = vpack.c.b16 %v2230, %v2229
        %v2237 = vpack.c.b16 %v2232, %v2231
        %v2238 = vpack.c.b16 %v2234, %v2233
        %v2244 = vsel %vm743, %v2218, 0
        %2246 = vmatprep.subr.bf16.mxu0 0
        %2247 = vmatpush1.bf16.msra.mxu0 %v2235
        %2248 = vmatprep.subr.bf16.mxu0 0
        %2249 = vmatpush1.bf16.msra.mxu0 %v2236
        %2250 = vmatprep.subr.bf16.mxu0 0
        %2251 = vmatpush1.bf16.msra.mxu0 %v2237
        %2252 = vmatprep.subr.bf16.mxu0 0
        %2253 = vmatpush1.bf16.msra.mxu0 %v2238
        %2254 = vmatprep.subr.bf16.mxu0 0
        %2255 = vmatpush1.bf16.msra.mxu0 0
        %2256 = vmatprep.subr.bf16.mxu0 0
        %2257 = vmatpush1.bf16.msra.mxu0 0
        %2258 = vmatprep.subr.bf16.mxu0 0
        %2259 = vmatpush1.bf16.msra.mxu0 0
        %2260 = vmatprep.subr.bf16.mxu0 0
        %2261 = vmatpush1.bf16.msra.mxu0 0
        %2262 = vmatprep.subr.bf16.mxu0 0
        %2263 = vmatpush1.bf16.msra.mxu0 0
        %2264 = vmatprep.subr.bf16.mxu0 0
        %2265 = vmatpush1.bf16.msra.mxu0 0
        %2266 = vmatprep.subr.bf16.mxu0 0
        %2267 = vmatpush1.bf16.msra.mxu0 0
        %2268 = vmatprep.subr.bf16.mxu0 0
        %2269 = vmatpush1.bf16.msra.mxu0 0
        %2270 = vmatprep.subr.bf16.mxu0 0
        %2271 = vmatpush1.bf16.msra.mxu0 0
        %2272 = vmatprep.subr.bf16.mxu0 0
        %2273 = vmatpush1.bf16.msra.mxu0 0
        %2274 = vmatprep.subr.bf16.mxu0 0
        %2275 = vmatpush1.bf16.msra.mxu0 0
        %2276 = vmatprep.subr.bf16.mxu0 0
        %2277 = vmatpush1.bf16.msra.mxu0 0
        %2278 = vmatprep.mubr.bf16.mxu0 0
        %2279 = vmatmul.mubr.bf16.gmra.mrb[0].mxu0 %v2244
        %v2280 = vpop.f32.mrb[0].mxu0
        %v2281 = vadd.f32 %v2160, %v2280
        %v2282 = vpop.f32.mrb[0].mxu0
        %v2283 = vpop.f32.mrb[0].mxu0
        %v2284 = vadd.f32 %v2160, %v2283
        %v2285 = vpop.f32.mrb[0].mxu0
        %2286 = vdwg.mxu0
        %v2287 = vpack.c.bf16 %v2284, %v2281
        %v2288 = vld [vmem:[#allocation10] sm:$0xff]
        %v2289 = vld [vmem:[#allocation10 + $0x8] sm:$0xff]
        %v2290 = vld [vmem:[#allocation10 + $0x10] sm:$0xff]
        %v2291 = vld [vmem:[#allocation10 + $0x18] sm:$0xff]
        %v2292 = vld [vmem:[#allocation10 + $0x20] sm:$0xff]
        %v2293 = vld [vmem:[#allocation10 + $0x28] sm:$0xff]
        %v2294 = vld [vmem:[#allocation10 + $0x30] sm:$0xff]
        %v2295 = vld [vmem:[#allocation10 + $0x38] sm:$0xff]
        %s2296 = scalar_lea.vmem [#allocation3], 32
        %v2297 = vld [vmem:[%s2296] sm:$0xf]
        %v2298 = vld [vmem:[%s2296 + $0x4] sm:$0xf]
        %v2299 = vld [vmem:[%s2296 + $0x8] sm:$0xf]
        %v2300 = vld [vmem:[%s2296 + $0xc] sm:$0xf]
        %v2301 = vld [vmem:[%s2296 + $0x10] sm:$0xf]
        %v2302 = vld [vmem:[%s2296 + $0x14] sm:$0xf]
        %v2303 = vld [vmem:[%s2296 + $0x18] sm:$0xf]
        %v2304 = vld [vmem:[%s2296 + $0x1c] sm:$0xf]
        %s2305 = scalar_lea.vmem %s6, 1
        %v2306 = vld [vmem:[%s2305] sm:$0x1]
        %v2308 = vlaneseq
        %v2309 = vshrl.u32 %v2308, 7
        %v2310 = vsub.s32 0, %v2309
        %v2311 = vrot.slane %v2306, %v2310
        %v2321 = vunpack.c.l.b16 %v2297
        %v2322 = vunpack.c.l.b16 %v2298
        %v2323 = vunpack.c.l.b16 %v2299
        %v2324 = vunpack.c.l.b16 %v2300
        %v2325 = vunpack.c.l.b16 %v2301
        %v2326 = vunpack.c.l.b16 %v2302
        %v2327 = vunpack.c.l.b16 %v2303
        %v2328 = vunpack.c.l.b16 %v2304
        %v2329 = vpack.c.b16 %v2322, %v2321
        %v2330 = vpack.c.b16 %v2324, %v2323
        %v2331 = vpack.c.b16 %v2326, %v2325
        %v2332 = vpack.c.b16 %v2328, %v2327
        %v2338 = vsel %vm743, %v2287, 0
        %2340 = vmatprep.subr.bf16.mxu0 0
        %2341 = vmatpush1.bf16.msra.mxu0 %v2329
        %2342 = vmatprep.subr.bf16.mxu0 0
        %2343 = vmatpush1.bf16.msra.mxu0 %v2330
        %2344 = vmatprep.subr.bf16.mxu0 0
        %2345 = vmatpush1.bf16.msra.mxu0 %v2331
        %2346 = vmatprep.subr.bf16.mxu0 0
        %2347 = vmatpush1.bf16.msra.mxu0 %v2332
        %2348 = vmatprep.subr.bf16.mxu0 0
        %2349 = vmatpush1.bf16.msra.mxu0 0
        %2350 = vmatprep.subr.bf16.mxu0 0
        %2351 = vmatpush1.bf16.msra.mxu0 0
        %2352 = vmatprep.subr.bf16.mxu0 0
        %2353 = vmatpush1.bf16.msra.mxu0 0
        %2354 = vmatprep.subr.bf16.mxu0 0
        %2355 = vmatpush1.bf16.msra.mxu0 0
        %2356 = vmatprep.subr.bf16.mxu0 0
        %2357 = vmatpush1.bf16.msra.mxu0 0
        %2358 = vmatprep.subr.bf16.mxu0 0
        %2359 = vmatpush1.bf16.msra.mxu0 0
        %2360 = vmatprep.subr.bf16.mxu0 0
        %2361 = vmatpush1.bf16.msra.mxu0 0
        %2362 = vmatprep.subr.bf16.mxu0 0
        %2363 = vmatpush1.bf16.msra.mxu0 0
        %2364 = vmatprep.subr.bf16.mxu0 0
        %2365 = vmatpush1.bf16.msra.mxu0 0
        %2366 = vmatprep.subr.bf16.mxu0 0
        %2367 = vmatpush1.bf16.msra.mxu0 0
        %2368 = vmatprep.subr.bf16.mxu0 0
        %2369 = vmatpush1.bf16.msra.mxu0 0
        %2370 = vmatprep.subr.bf16.mxu0 0
        %2371 = vmatpush1.bf16.msra.mxu0 0
        %2372 = vmatprep.mubr.bf16.mxu0 0
        %2373 = vmatmul.mubr.bf16.gmra.mrb[0].mxu0 %v2338
        %v2374 = vpop.f32.mrb[0].mxu0
        %v2375 = vadd.f32 %v2311, %v2374
        %v2376 = vpop.f32.mrb[0].mxu0
        %v2377 = vpop.f32.mrb[0].mxu0
        %v2378 = vadd.f32 %v2311, %v2377
        %v2379 = vpop.f32.mrb[0].mxu0
        %2380 = vdwg.mxu0
        %v2381 = vpack.c.bf16 %v2378, %v2375
        %v2383 = vcombine.high %v2381, %v2381
        %v2385 = vunpack.c.l.s4 1966171168
        %v2386 = vunpack.c.0.s8 %v2385
        %v2387 = vlaneseq
        %v2388 = vshrl.u32 %v2387, 7
        %v2389 = vsub.s32 %v2386, %v2388
        %v2390 = vrot.slane %v2381, %v2389
        %v2392 = vunpack.c.l.s4 1966171168
        %v2393 = vunpack.c.0.s8 %v2392
        %v2394 = vlaneseq
        %v2395 = vshrl.u32 %v2394, 7
        %v2396 = vsub.s32 %v2393, %v2395
        %v2397 = vrot.slane %v2383, %v2396
        %v2398 = vcombine.high %v2390, %v2390
        %v2399 = vcombine.high %v2397, %v2397
        %v2401 = vunpack.c.l.s4 1966171168
        %v2402 = vunpack.c.0.s8 %v2401
        %v2403 = vlaneseq
        %v2404 = vshrl.u32 %v2403, 7
        %v2405 = vsub.s32 %v2402, %v2404
        %v2406 = vrot.slane %v2390, %v2405
        %v2408 = vunpack.c.l.s4 1966171168
        %v2409 = vunpack.c.0.s8 %v2408
        %v2410 = vlaneseq
        %v2411 = vshrl.u32 %v2410, 7
        %v2412 = vsub.s32 %v2409, %v2411
        %v2413 = vrot.slane %v2397, %v2412
        %v2415 = vunpack.c.l.s4 1966171168
        %v2416 = vunpack.c.0.s8 %v2415
        %v2417 = vlaneseq
        %v2418 = vshrl.u32 %v2417, 7
        %v2419 = vsub.s32 %v2416, %v2418
        %v2420 = vrot.slane %v2398, %v2419
        %v2422 = vunpack.c.l.s4 1966171168
        %v2423 = vunpack.c.0.s8 %v2422
        %v2424 = vlaneseq
        %v2425 = vshrl.u32 %v2424, 7
        %v2426 = vsub.s32 %v2423, %v2425
        %v2427 = vrot.slane %v2399, %v2426
        %v2428 = vcombine.high %v2406, %v2406
        %v2429 = vcombine.high %v2413, %v2413
        %v2430 = vcombine.high %v2420, %v2420
        %v2431 = vcombine.high %v2427, %v2427
        %s2432 = scalar_lea.vmem [#allocation5], 32
        %v2433 = vld [vmem:[%s2432] sm:$0xf]
        %v2434 = vld [vmem:[%s2432 + $0x4] sm:$0xf]
        %v2435 = vld [vmem:[%s2432 + $0x8] sm:$0xf]
        %v2436 = vld [vmem:[%s2432 + $0xc] sm:$0xf]
        %v2437 = vld [vmem:[%s2432 + $0x10] sm:$0xf]
        %v2438 = vld [vmem:[%s2432 + $0x14] sm:$0xf]
        %v2439 = vld [vmem:[%s2432 + $0x18] sm:$0xf]
        %v2440 = vld [vmem:[%s2432 + $0x1c] sm:$0xf]
        %s2441 = scalar_lea.vmem %s8, 1
        %v2442 = vld [vmem:[%s2441] sm:$0x1]
        %v2444 = vlaneseq
        %v2445 = vshrl.u32 %v2444, 7
        %v2446 = vsub.s32 0, %v2445
        %v2447 = vrot.slane %v2442, %v2446
        %v2457 = vunpack.c.l.b16 %v2433
        %v2458 = vunpack.c.l.b16 %v2434
        %v2459 = vunpack.c.l.b16 %v2435
        %v2460 = vunpack.c.l.b16 %v2436
        %v2461 = vunpack.c.l.b16 %v2437
        %v2462 = vunpack.c.l.b16 %v2438
        %v2463 = vunpack.c.l.b16 %v2439
        %v2464 = vunpack.c.l.b16 %v2440
        %v2465 = vpack.c.b16 %v2458, %v2457
        %v2466 = vpack.c.b16 %v2460, %v2459
        %v2467 = vpack.c.b16 %v2462, %v2461
        %v2468 = vpack.c.b16 %v2464, %v2463
        %2473 = vmatprep.subr.bf16.mxu0 0
        %2474 = vmatpush1.bf16.msra.mxu0 %v2465
        %2475 = vmatprep.subr.bf16.mxu0 0
        %2476 = vmatpush1.bf16.msra.mxu0 %v2466
        %2477 = vmatprep.subr.bf16.mxu0 0
        %2478 = vmatpush1.bf16.msra.mxu0 %v2467
        %2479 = vmatprep.subr.bf16.mxu0 0
        %2480 = vmatpush1.bf16.msra.mxu0 %v2468
        %2481 = vmatprep.subr.bf16.mxu0 0
        %2482 = vmatpush1.bf16.msra.mxu0 0
        %2483 = vmatprep.subr.bf16.mxu0 0
        %2484 = vmatpush1.bf16.msra.mxu0 0
        %2485 = vmatprep.subr.bf16.mxu0 0
        %2486 = vmatpush1.bf16.msra.mxu0 0
        %2487 = vmatprep.subr.bf16.mxu0 0
        %2488 = vmatpush1.bf16.msra.mxu0 0
        %2489 = vmatprep.subr.bf16.mxu0 0
        %2490 = vmatpush1.bf16.msra.mxu0 0
        %2491 = vmatprep.subr.bf16.mxu0 0
        %2492 = vmatpush1.bf16.msra.mxu0 0
        %2493 = vmatprep.subr.bf16.mxu0 0
        %2494 = vmatpush1.bf16.msra.mxu0 0
        %2495 = vmatprep.subr.bf16.mxu0 0
        %2496 = vmatpush1.bf16.msra.mxu0 0
        %2497 = vmatprep.subr.bf16.mxu0 0
        %2498 = vmatpush1.bf16.msra.mxu0 0
        %2499 = vmatprep.subr.bf16.mxu0 0
        %2500 = vmatpush1.bf16.msra.mxu0 0
        %2501 = vmatprep.subr.bf16.mxu0 0
        %2502 = vmatpush1.bf16.msra.mxu0 0
        %2503 = vmatprep.subr.bf16.mxu0 0
        %2504 = vmatpush1.bf16.msra.mxu0 0
        %2505 = vmatprep.mubr.bf16.mxu0 0
        %2506 = vmatmul.mubr.bf16.gmra.mrb[0].mxu0 %v2338
        %v2507 = vpop.f32.mrb[0].mxu0
        %v2508 = vadd.f32 %v2447, %v2507
        %v2509 = vpop.f32.mrb[0].mxu0
        %v2510 = vpop.f32.mrb[0].mxu0
        %v2511 = vadd.f32 %v2447, %v2510
        %v2512 = vpop.f32.mrb[0].mxu0
        %2513 = vdwg.mxu0
        %v2514 = vpack.c.bf16 %v2511, %v2508
        %v2516 = vcombine.high %v2514, %v2514
        %v2518 = vunpack.c.l.s4 1966171168
        %v2519 = vunpack.c.0.s8 %v2518
        %v2520 = vlaneseq
        %v2521 = vshrl.u32 %v2520, 7
        %v2522 = vsub.s32 %v2519, %v2521
        %v2523 = vrot.slane %v2514, %v2522
        %v2525 = vunpack.c.l.s4 1966171168
        %v2526 = vunpack.c.0.s8 %v2525
        %v2527 = vlaneseq
        %v2528 = vshrl.u32 %v2527, 7
        %v2529 = vsub.s32 %v2526, %v2528
        %v2530 = vrot.slane %v2516, %v2529
        %v2531 = vcombine.high %v2523, %v2523
        %v2532 = vcombine.high %v2530, %v2530
        %v2534 = vunpack.c.l.s4 1966171168
        %v2535 = vunpack.c.0.s8 %v2534
        %v2536 = vlaneseq
        %v2537 = vshrl.u32 %v2536, 7
        %v2538 = vsub.s32 %v2535, %v2537
        %v2539 = vrot.slane %v2523, %v2538
        %v2541 = vunpack.c.l.s4 1966171168
        %v2542 = vunpack.c.0.s8 %v2541
        %v2543 = vlaneseq
        %v2544 = vshrl.u32 %v2543, 7
        %v2545 = vsub.s32 %v2542, %v2544
        %v2546 = vrot.slane %v2530, %v2545
        %v2548 = vunpack.c.l.s4 1966171168
        %v2549 = vunpack.c.0.s8 %v2548
        %v2550 = vlaneseq
        %v2551 = vshrl.u32 %v2550, 7
        %v2552 = vsub.s32 %v2549, %v2551
        %v2553 = vrot.slane %v2531, %v2552
        %v2555 = vunpack.c.l.s4 1966171168
        %v2556 = vunpack.c.0.s8 %v2555
        %v2557 = vlaneseq
        %v2558 = vshrl.u32 %v2557, 7
        %v2559 = vsub.s32 %v2556, %v2558
        %v2560 = vrot.slane %v2532, %v2559
        %v2561 = vcombine.high %v2539, %v2539
        %v2562 = vcombine.high %v2546, %v2546
        %v2563 = vcombine.high %v2553, %v2553
        %v2564 = vcombine.high %v2560, %v2560
        %s2565 = scalar_lea.vmem [#allocation7], 32
        %v2566 = vld [vmem:[%s2565] sm:$0xf]
        %v2567 = vld [vmem:[%s2565 + $0x4] sm:$0xf]
        %v2568 = vld [vmem:[%s2565 + $0x8] sm:$0xf]
        %v2569 = vld [vmem:[%s2565 + $0xc] sm:$0xf]
        %v2570 = vld [vmem:[%s2565 + $0x10] sm:$0xf]
        %v2571 = vld [vmem:[%s2565 + $0x14] sm:$0xf]
        %v2572 = vld [vmem:[%s2565 + $0x18] sm:$0xf]
        %v2573 = vld [vmem:[%s2565 + $0x1c] sm:$0xf]
        %s2574 = scalar_lea.vmem %s10, 1
        %v2575 = vld [vmem:[%s2574] sm:$0x1]
        %v2577 = vlaneseq
        %v2578 = vshrl.u32 %v2577, 7
        %v2579 = vsub.s32 0, %v2578
        %v2580 = vrot.slane %v2575, %v2579
        %v2590 = vunpack.c.l.b16 %v2566
        %v2591 = vunpack.c.l.b16 %v2567
        %v2592 = vunpack.c.l.b16 %v2568
        %v2593 = vunpack.c.l.b16 %v2569
        %v2594 = vunpack.c.l.b16 %v2570
        %v2595 = vunpack.c.l.b16 %v2571
        %v2596 = vunpack.c.l.b16 %v2572
        %v2597 = vunpack.c.l.b16 %v2573
        %v2598 = vpack.c.b16 %v2591, %v2590
        %v2599 = vpack.c.b16 %v2593, %v2592
        %v2600 = vpack.c.b16 %v2595, %v2594
        %v2601 = vpack.c.b16 %v2597, %v2596
        %2606 = vmatprep.subr.bf16.mxu0 0
        %2607 = vmatpush1.bf16.msra.mxu0 %v2598
        %2608 = vmatprep.subr.bf16.mxu0 0
        %2609 = vmatpush1.bf16.msra.mxu0 %v2599
        %2610 = vmatprep.subr.bf16.mxu0 0
        %2611 = vmatpush1.bf16.msra.mxu0 %v2600
        %2612 = vmatprep.subr.bf16.mxu0 0
        %2613 = vmatpush1.bf16.msra.mxu0 %v2601
        %2614 = vmatprep.subr.bf16.mxu0 0
        %2615 = vmatpush1.bf16.msra.mxu0 0
        %2616 = vmatprep.subr.bf16.mxu0 0
        %2617 = vmatpush1.bf16.msra.mxu0 0
        %2618 = vmatprep.subr.bf16.mxu0 0
        %2619 = vmatpush1.bf16.msra.mxu0 0
        %2620 = vmatprep.subr.bf16.mxu0 0
        %2621 = vmatpush1.bf16.msra.mxu0 0
        %2622 = vmatprep.subr.bf16.mxu0 0
        %2623 = vmatpush1.bf16.msra.mxu0 0
        %2624 = vmatprep.subr.bf16.mxu0 0
        %2625 = vmatpush1.bf16.msra.mxu0 0
        %2626 = vmatprep.subr.bf16.mxu0 0
        %2627 = vmatpush1.bf16.msra.mxu0 0
        %2628 = vmatprep.subr.bf16.mxu0 0
        %2629 = vmatpush1.bf16.msra.mxu0 0
        %2630 = vmatprep.subr.bf16.mxu0 0
        %2631 = vmatpush1.bf16.msra.mxu0 0
        %2632 = vmatprep.subr.bf16.mxu0 0
        %2633 = vmatpush1.bf16.msra.mxu0 0
        %2634 = vmatprep.subr.bf16.mxu0 0
        %2635 = vmatpush1.bf16.msra.mxu0 0
        %2636 = vmatprep.subr.bf16.mxu0 0
        %2637 = vmatpush1.bf16.msra.mxu0 0
        %2638 = vmatprep.mubr.bf16.mxu0 0
        %2639 = vmatmul.mubr.bf16.gmra.mrb[0].mxu0 %v2338
        %v2640 = vpop.f32.mrb[0].mxu0
        %v2641 = vadd.f32 %v2580, %v2640
        %v2642 = vpop.f32.mrb[0].mxu0
        %v2643 = vpop.f32.mrb[0].mxu0
        %v2644 = vadd.f32 %v2580, %v2643
        %v2645 = vpop.f32.mrb[0].mxu0
        %2646 = vdwg.mxu0
        %v2647 = vpack.c.bf16 %v2644, %v2641
        %v2649 = vcombine.high %v2647, %v2647
        %v2651 = vunpack.c.l.s4 1966171168
        %v2652 = vunpack.c.0.s8 %v2651
        %v2653 = vlaneseq
        %v2654 = vshrl.u32 %v2653, 7
        %v2655 = vsub.s32 %v2652, %v2654
        %v2656 = vrot.slane %v2647, %v2655
        %v2658 = vunpack.c.l.s4 1966171168
        %v2659 = vunpack.c.0.s8 %v2658
        %v2660 = vlaneseq
        %v2661 = vshrl.u32 %v2660, 7
        %v2662 = vsub.s32 %v2659, %v2661
        %v2663 = vrot.slane %v2649, %v2662
        %v2664 = vcombine.high %v2656, %v2656
        %v2665 = vcombine.high %v2663, %v2663
        %v2667 = vunpack.c.l.s4 1966171168
        %v2668 = vunpack.c.0.s8 %v2667
        %v2669 = vlaneseq
        %v2670 = vshrl.u32 %v2669, 7
        %v2671 = vsub.s32 %v2668, %v2670
        %v2672 = vrot.slane %v2656, %v2671
        %v2674 = vunpack.c.l.s4 1966171168
        %v2675 = vunpack.c.0.s8 %v2674
        %v2676 = vlaneseq
        %v2677 = vshrl.u32 %v2676, 7
        %v2678 = vsub.s32 %v2675, %v2677
        %v2679 = vrot.slane %v2663, %v2678
        %v2681 = vunpack.c.l.s4 1966171168
        %v2682 = vunpack.c.0.s8 %v2681
        %v2683 = vlaneseq
        %v2684 = vshrl.u32 %v2683, 7
        %v2685 = vsub.s32 %v2682, %v2684
        %v2686 = vrot.slane %v2664, %v2685
        %v2688 = vunpack.c.l.s4 1966171168
        %v2689 = vunpack.c.0.s8 %v2688
        %v2690 = vlaneseq
        %v2691 = vshrl.u32 %v2690, 7
        %v2692 = vsub.s32 %v2689, %v2691
        %v2693 = vrot.slane %v2665, %v2692
        %v2694 = vcombine.high %v2672, %v2672
        %v2695 = vcombine.high %v2679, %v2679
        %v2696 = vcombine.high %v2686, %v2686
        %v2697 = vcombine.high %v2693, %v2693
        %v2699 = vsel %vm743, %v2406, 0
        %v2702 = vsel %vm743, %v2539, 0
        %2704 = vmatprep.subr.bf16.mxu0 0
        %2705 = vmatpush1.bf16.xpose.msra.mxu0 %v2702
        %2706 = vmatprep.subr.bf16.mxu0 0
        %2707 = vmatpush1.bf16.xpose.msra.mxu0 0
        %2708 = vmatprep.subr.bf16.mxu0 0
        %2709 = vmatpush1.bf16.xpose.msra.mxu0 0
        %2710 = vmatprep.subr.bf16.mxu0 0
        %2711 = vmatpush1.bf16.xpose.msra.mxu0 0
        %2712 = vmatprep.subr.bf16.mxu0 0
        %2713 = vmatpush1.bf16.xpose.msra.mxu0 0
        %2714 = vmatprep.subr.bf16.mxu0 0
        %2715 = vmatpush1.bf16.xpose.msra.mxu0 0
        %2716 = vmatprep.subr.bf16.mxu0 0
        %2717 = vmatpush1.bf16.xpose.msra.mxu0 0
        %2718 = vmatprep.subr.bf16.mxu0 0
        %2719 = vmatpush1.bf16.xpose.msra.mxu0 0
        %2720 = vmatprep.subr.bf16.mxu0 0
        %2721 = vmatpush1.bf16.xpose.msra.mxu0 0
        %2722 = vmatprep.subr.bf16.mxu0 0
        %2723 = vmatpush1.bf16.xpose.msra.mxu0 0
        %2724 = vmatprep.subr.bf16.mxu0 0
        %2725 = vmatpush1.bf16.xpose.msra.mxu0 0
        %2726 = vmatprep.subr.bf16.mxu0 0
        %2727 = vmatpush1.bf16.xpose.msra.mxu0 0
        %2728 = vmatprep.subr.bf16.mxu0 0
        %2729 = vmatpush1.bf16.xpose.msra.mxu0 0
        %2730 = vmatprep.subr.bf16.mxu0 0
        %2731 = vmatpush1.bf16.xpose.msra.mxu0 0
        %2732 = vmatprep.subr.bf16.mxu0 0
        %2733 = vmatpush1.bf16.xpose.msra.mxu0 0
        %2734 = vmatprep.subr.bf16.mxu0 0
        %2735 = vmatpush1.bf16.xpose.msra.mxu0 0
        %2736 = vmatprep.mubr.bf16.mxu0 0
        %2737 = vmatmul.mubr.bf16.gmra.mrb[0].mxu0 %v2699
        %v2738 = vpop.f32.mrb[0].mxu0
        %v2739 = vadd.f32 0.0, %v2738
        %v2740 = vpop.f32.mrb[0].mxu0
        %v2741 = vpop.f32.mrb[0].mxu0
        %v2742 = vpop.f32.mrb[0].mxu0
        %2743 = vdwg.mxu0
        %v2745 = vsel %vm743, %v2420, 0
        %v2748 = vsel %vm743, %v2553, 0
        %2750 = vmatprep.subr.bf16.mxu0 0
        %2751 = vmatpush1.bf16.xpose.msra.mxu0 %v2748
        %2752 = vmatprep.subr.bf16.mxu0 0
        %2753 = vmatpush1.bf16.xpose.msra.mxu0 0
        %2754 = vmatprep.subr.bf16.mxu0 0
        %2755 = vmatpush1.bf16.xpose.msra.mxu0 0
        %2756 = vmatprep.subr.bf16.mxu0 0
        %2757 = vmatpush1.bf16.xpose.msra.mxu0 0
        %2758 = vmatprep.subr.bf16.mxu0 0
        %2759 = vmatpush1.bf16.xpose.msra.mxu0 0
        %2760 = vmatprep.subr.bf16.mxu0 0
        %2761 = vmatpush1.bf16.xpose.msra.mxu0 0
        %2762 = vmatprep.subr.bf16.mxu0 0
        %2763 = vmatpush1.bf16.xpose.msra.mxu0 0
        %2764 = vmatprep.subr.bf16.mxu0 0
        %2765 = vmatpush1.bf16.xpose.msra.mxu0 0
        %2766 = vmatprep.subr.bf16.mxu0 0
        %2767 = vmatpush1.bf16.xpose.msra.mxu0 0
        %2768 = vmatprep.subr.bf16.mxu0 0
        %2769 = vmatpush1.bf16.xpose.msra.mxu0 0
        %2770 = vmatprep.subr.bf16.mxu0 0
        %2771 = vmatpush1.bf16.xpose.msra.mxu0 0
        %2772 = vmatprep.subr.bf16.mxu0 0
        %2773 = vmatpush1.bf16.xpose.msra.mxu0 0
        %2774 = vmatprep.subr.bf16.mxu0 0
        %2775 = vmatpush1.bf16.xpose.msra.mxu0 0
        %2776 = vmatprep.subr.bf16.mxu0 0
        %2777 = vmatpush1.bf16.xpose.msra.mxu0 0
        %2778 = vmatprep.subr.bf16.mxu0 0
        %2779 = vmatpush1.bf16.xpose.msra.mxu0 0
        %2780 = vmatprep.subr.bf16.mxu0 0
        %2781 = vmatpush1.bf16.xpose.msra.mxu0 0
        %2782 = vmatprep.mubr.bf16.mxu0 0
        %2783 = vmatmul.mubr.bf16.gmra.mrb[0].mxu0 %v2745
        %v2784 = vpop.f32.mrb[0].mxu0
        %v2785 = vadd.f32 0.0, %v2784
        %v2786 = vpop.f32.mrb[0].mxu0
        %v2787 = vpop.f32.mrb[0].mxu0
        %v2788 = vpop.f32.mrb[0].mxu0
        %2789 = vdwg.mxu0
        %v2791 = vsel %vm743, %v2428, 0
        %v2794 = vsel %vm743, %v2561, 0
        %2796 = vmatprep.subr.bf16.mxu0 0
        %2797 = vmatpush1.bf16.xpose.msra.mxu0 %v2794
        %2798 = vmatprep.subr.bf16.mxu0 0
        %2799 = vmatpush1.bf16.xpose.msra.mxu0 0
        %2800 = vmatprep.subr.bf16.mxu0 0
        %2801 = vmatpush1.bf16.xpose.msra.mxu0 0
        %2802 = vmatprep.subr.bf16.mxu0 0
        %2803 = vmatpush1.bf16.xpose.msra.mxu0 0
        %2804 = vmatprep.subr.bf16.mxu0 0
        %2805 = vmatpush1.bf16.xpose.msra.mxu0 0
        %2806 = vmatprep.subr.bf16.mxu0 0
        %2807 = vmatpush1.bf16.xpose.msra.mxu0 0
        %2808 = vmatprep.subr.bf16.mxu0 0
        %2809 = vmatpush1.bf16.xpose.msra.mxu0 0
        %2810 = vmatprep.subr.bf16.mxu0 0
        %2811 = vmatpush1.bf16.xpose.msra.mxu0 0
        %2812 = vmatprep.subr.bf16.mxu0 0
        %2813 = vmatpush1.bf16.xpose.msra.mxu0 0
        %2814 = vmatprep.subr.bf16.mxu0 0
        %2815 = vmatpush1.bf16.xpose.msra.mxu0 0
        %2816 = vmatprep.subr.bf16.mxu0 0
        %2817 = vmatpush1.bf16.xpose.msra.mxu0 0
        %2818 = vmatprep.subr.bf16.mxu0 0
        %2819 = vmatpush1.bf16.xpose.msra.mxu0 0
        %2820 = vmatprep.subr.bf16.mxu0 0
        %2821 = vmatpush1.bf16.xpose.msra.mxu0 0
        %2822 = vmatprep.subr.bf16.mxu0 0
        %2823 = vmatpush1.bf16.xpose.msra.mxu0 0
        %2824 = vmatprep.subr.bf16.mxu0 0
        %2825 = vmatpush1.bf16.xpose.msra.mxu0 0
        %2826 = vmatprep.subr.bf16.mxu0 0
        %2827 = vmatpush1.bf16.xpose.msra.mxu0 0
        %2828 = vmatprep.mubr.bf16.mxu0 0
        %2829 = vmatmul.mubr.bf16.gmra.mrb[0].mxu0 %v2791
        %v2830 = vpop.f32.mrb[0].mxu0
        %v2831 = vadd.f32 0.0, %v2830
        %v2832 = vpop.f32.mrb[0].mxu0
        %v2833 = vpop.f32.mrb[0].mxu0
        %v2834 = vpop.f32.mrb[0].mxu0
        %2835 = vdwg.mxu0
        %v2837 = vsel %vm743, %v2430, 0
        %v2840 = vsel %vm743, %v2563, 0
        %2842 = vmatprep.subr.bf16.mxu0 0
        %2843 = vmatpush1.bf16.xpose.msra.mxu0 %v2840
        %2844 = vmatprep.subr.bf16.mxu0 0
        %2845 = vmatpush1.bf16.xpose.msra.mxu0 0
        %2846 = vmatprep.subr.bf16.mxu0 0
        %2847 = vmatpush1.bf16.xpose.msra.mxu0 0
        %2848 = vmatprep.subr.bf16.mxu0 0
        %2849 = vmatpush1.bf16.xpose.msra.mxu0 0
        %2850 = vmatprep.subr.bf16.mxu0 0
        %2851 = vmatpush1.bf16.xpose.msra.mxu0 0
        %2852 = vmatprep.subr.bf16.mxu0 0
        %2853 = vmatpush1.bf16.xpose.msra.mxu0 0
        %2854 = vmatprep.subr.bf16.mxu0 0
        %2855 = vmatpush1.bf16.xpose.msra.mxu0 0
        %2856 = vmatprep.subr.bf16.mxu0 0
        %2857 = vmatpush1.bf16.xpose.msra.mxu0 0
        %2858 = vmatprep.subr.bf16.mxu0 0
        %2859 = vmatpush1.bf16.xpose.msra.mxu0 0
        %2860 = vmatprep.subr.bf16.mxu0 0
        %2861 = vmatpush1.bf16.xpose.msra.mxu0 0
        %2862 = vmatprep.subr.bf16.mxu0 0
        %2863 = vmatpush1.bf16.xpose.msra.mxu0 0
        %2864 = vmatprep.subr.bf16.mxu0 0
        %2865 = vmatpush1.bf16.xpose.msra.mxu0 0
        %2866 = vmatprep.subr.bf16.mxu0 0
        %2867 = vmatpush1.bf16.xpose.msra.mxu0 0
        %2868 = vmatprep.subr.bf16.mxu0 0
        %2869 = vmatpush1.bf16.xpose.msra.mxu0 0
        %2870 = vmatprep.subr.bf16.mxu0 0
        %2871 = vmatpush1.bf16.xpose.msra.mxu0 0
        %2872 = vmatprep.subr.bf16.mxu0 0
        %2873 = vmatpush1.bf16.xpose.msra.mxu0 0
        %2874 = vmatprep.mubr.bf16.mxu0 0
        %2875 = vmatmul.mubr.bf16.gmra.mrb[0].mxu0 %v2837
        %v2876 = vpop.f32.mrb[0].mxu0
        %v2877 = vadd.f32 0.0, %v2876
        %v2878 = vpop.f32.mrb[0].mxu0
        %v2879 = vpop.f32.mrb[0].mxu0
        %v2880 = vpop.f32.mrb[0].mxu0
        %2881 = vdwg.mxu0
        %v2883 = vsel %vm743, %v2413, 0
        %v2886 = vsel %vm743, %v2546, 0
        %2888 = vmatprep.subr.bf16.mxu0 0
        %2889 = vmatpush1.bf16.xpose.msra.mxu0 %v2886
        %2890 = vmatprep.subr.bf16.mxu0 0
        %2891 = vmatpush1.bf16.xpose.msra.mxu0 0
        %2892 = vmatprep.subr.bf16.mxu0 0
        %2893 = vmatpush1.bf16.xpose.msra.mxu0 0
        %2894 = vmatprep.subr.bf16.mxu0 0
        %2895 = vmatpush1.bf16.xpose.msra.mxu0 0
        %2896 = vmatprep.subr.bf16.mxu0 0
        %2897 = vmatpush1.bf16.xpose.msra.mxu0 0
        %2898 = vmatprep.subr.bf16.mxu0 0
        %2899 = vmatpush1.bf16.xpose.msra.mxu0 0
        %2900 = vmatprep.subr.bf16.mxu0 0
        %2901 = vmatpush1.bf16.xpose.msra.mxu0 0
        %2902 = vmatprep.subr.bf16.mxu0 0
        %2903 = vmatpush1.bf16.xpose.msra.mxu0 0
        %2904 = vmatprep.subr.bf16.mxu0 0
        %2905 = vmatpush1.bf16.xpose.msra.mxu0 0
        %2906 = vmatprep.subr.bf16.mxu0 0
        %2907 = vmatpush1.bf16.xpose.msra.mxu0 0
        %2908 = vmatprep.subr.bf16.mxu0 0
        %2909 = vmatpush1.bf16.xpose.msra.mxu0 0
        %2910 = vmatprep.subr.bf16.mxu0 0
        %2911 = vmatpush1.bf16.xpose.msra.mxu0 0
        %2912 = vmatprep.subr.bf16.mxu0 0
        %2913 = vmatpush1.bf16.xpose.msra.mxu0 0
        %2914 = vmatprep.subr.bf16.mxu0 0
        %2915 = vmatpush1.bf16.xpose.msra.mxu0 0
        %2916 = vmatprep.subr.bf16.mxu0 0
        %2917 = vmatpush1.bf16.xpose.msra.mxu0 0
        %2918 = vmatprep.subr.bf16.mxu0 0
        %2919 = vmatpush1.bf16.xpose.msra.mxu0 0
        %2920 = vmatprep.mubr.bf16.mxu0 0
        %2921 = vmatmul.mubr.bf16.gmra.mrb[0].mxu0 %v2883
        %v2922 = vpop.f32.mrb[0].mxu0
        %v2923 = vadd.f32 0.0, %v2922
        %v2924 = vpop.f32.mrb[0].mxu0
        %v2925 = vpop.f32.mrb[0].mxu0
        %v2926 = vpop.f32.mrb[0].mxu0
        %2927 = vdwg.mxu0
        %v2929 = vsel %vm743, %v2427, 0
        %v2932 = vsel %vm743, %v2560, 0
        %2934 = vmatprep.subr.bf16.mxu0 0
        %2935 = vmatpush1.bf16.xpose.msra.mxu0 %v2932
        %2936 = vmatprep.subr.bf16.mxu0 0
        %2937 = vmatpush1.bf16.xpose.msra.mxu0 0
        %2938 = vmatprep.subr.bf16.mxu0 0
        %2939 = vmatpush1.bf16.xpose.msra.mxu0 0
        %2940 = vmatprep.subr.bf16.mxu0 0
        %2941 = vmatpush1.bf16.xpose.msra.mxu0 0
        %2942 = vmatprep.subr.bf16.mxu0 0
        %2943 = vmatpush1.bf16.xpose.msra.mxu0 0
        %2944 = vmatprep.subr.bf16.mxu0 0
        %2945 = vmatpush1.bf16.xpose.msra.mxu0 0
        %2946 = vmatprep.subr.bf16.mxu0 0
        %2947 = vmatpush1.bf16.xpose.msra.mxu0 0
        %2948 = vmatprep.subr.bf16.mxu0 0
        %2949 = vmatpush1.bf16.xpose.msra.mxu0 0
        %2950 = vmatprep.subr.bf16.mxu0 0
        %2951 = vmatpush1.bf16.xpose.msra.mxu0 0
        %2952 = vmatprep.subr.bf16.mxu0 0
        %2953 = vmatpush1.bf16.xpose.msra.mxu0 0
        %2954 = vmatprep.subr.bf16.mxu0 0
        %2955 = vmatpush1.bf16.xpose.msra.mxu0 0
        %2956 = vmatprep.subr.bf16.mxu0 0
        %2957 = vmatpush1.bf16.xpose.msra.mxu0 0
        %2958 = vmatprep.subr.bf16.mxu0 0
        %2959 = vmatpush1.bf16.xpose.msra.mxu0 0
        %2960 = vmatprep.subr.bf16.mxu0 0
        %2961 = vmatpush1.bf16.xpose.msra.mxu0 0
        %2962 = vmatprep.subr.bf16.mxu0 0
        %2963 = vmatpush1.bf16.xpose.msra.mxu0 0
        %2964 = vmatprep.subr.bf16.mxu0 0
        %2965 = vmatpush1.bf16.xpose.msra.mxu0 0
        %2966 = vmatprep.mubr.bf16.mxu0 0
        %2967 = vmatmul.mubr.bf16.gmra.mrb[0].mxu0 %v2929
        %v2968 = vpop.f32.mrb[0].mxu0
        %v2969 = vadd.f32 0.0, %v2968
        %v2970 = vpop.f32.mrb[0].mxu0
        %v2971 = vpop.f32.mrb[0].mxu0
        %v2972 = vpop.f32.mrb[0].mxu0
        %2973 = vdwg.mxu0
        %v2975 = vsel %vm743, %v2429, 0
        %v2978 = vsel %vm743, %v2562, 0
        %2980 = vmatprep.subr.bf16.mxu0 0
        %2981 = vmatpush1.bf16.xpose.msra.mxu0 %v2978
        %2982 = vmatprep.subr.bf16.mxu0 0
        %2983 = vmatpush1.bf16.xpose.msra.mxu0 0
        %2984 = vmatprep.subr.bf16.mxu0 0
        %2985 = vmatpush1.bf16.xpose.msra.mxu0 0
        %2986 = vmatprep.subr.bf16.mxu0 0
        %2987 = vmatpush1.bf16.xpose.msra.mxu0 0
        %2988 = vmatprep.subr.bf16.mxu0 0
        %2989 = vmatpush1.bf16.xpose.msra.mxu0 0
        %2990 = vmatprep.subr.bf16.mxu0 0
        %2991 = vmatpush1.bf16.xpose.msra.mxu0 0
        %2992 = vmatprep.subr.bf16.mxu0 0
        %2993 = vmatpush1.bf16.xpose.msra.mxu0 0
        %2994 = vmatprep.subr.bf16.mxu0 0
        %2995 = vmatpush1.bf16.xpose.msra.mxu0 0
        %2996 = vmatprep.subr.bf16.mxu0 0
        %2997 = vmatpush1.bf16.xpose.msra.mxu0 0
        %2998 = vmatprep.subr.bf16.mxu0 0
        %2999 = vmatpush1.bf16.xpose.msra.mxu0 0
        %3000 = vmatprep.subr.bf16.mxu0 0
        %3001 = vmatpush1.bf16.xpose.msra.mxu0 0
        %3002 = vmatprep.subr.bf16.mxu0 0
        %3003 = vmatpush1.bf16.xpose.msra.mxu0 0
        %3004 = vmatprep.subr.bf16.mxu0 0
        %3005 = vmatpush1.bf16.xpose.msra.mxu0 0
        %3006 = vmatprep.subr.bf16.mxu0 0
        %3007 = vmatpush1.bf16.xpose.msra.mxu0 0
        %3008 = vmatprep.subr.bf16.mxu0 0
        %3009 = vmatpush1.bf16.xpose.msra.mxu0 0
        %3010 = vmatprep.subr.bf16.mxu0 0
        %3011 = vmatpush1.bf16.xpose.msra.mxu0 0
        %3012 = vmatprep.mubr.bf16.mxu0 0
        %3013 = vmatmul.mubr.bf16.gmra.mrb[0].mxu0 %v2975
        %v3014 = vpop.f32.mrb[0].mxu0
        %v3015 = vadd.f32 0.0, %v3014
        %v3016 = vpop.f32.mrb[0].mxu0
        %v3017 = vpop.f32.mrb[0].mxu0
        %v3018 = vpop.f32.mrb[0].mxu0
        %3019 = vdwg.mxu0
        %v3021 = vsel %vm743, %v2431, 0
        %v3024 = vsel %vm743, %v2564, 0
        %3026 = vmatprep.subr.bf16.mxu0 0
        %3027 = vmatpush1.bf16.xpose.msra.mxu0 %v3024
        %3028 = vmatprep.subr.bf16.mxu0 0
        %3029 = vmatpush1.bf16.xpose.msra.mxu0 0
        %3030 = vmatprep.subr.bf16.mxu0 0
        %3031 = vmatpush1.bf16.xpose.msra.mxu0 0
        %3032 = vmatprep.subr.bf16.mxu0 0
        %3033 = vmatpush1.bf16.xpose.msra.mxu0 0
        %3034 = vmatprep.subr.bf16.mxu0 0
        %3035 = vmatpush1.bf16.xpose.msra.mxu0 0
        %3036 = vmatprep.subr.bf16.mxu0 0
        %3037 = vmatpush1.bf16.xpose.msra.mxu0 0
        %3038 = vmatprep.subr.bf16.mxu0 0
        %3039 = vmatpush1.bf16.xpose.msra.mxu0 0
        %3040 = vmatprep.subr.bf16.mxu0 0
        %3041 = vmatpush1.bf16.xpose.msra.mxu0 0
        %3042 = vmatprep.subr.bf16.mxu0 0
        %3043 = vmatpush1.bf16.xpose.msra.mxu0 0
        %3044 = vmatprep.subr.bf16.mxu0 0
        %3045 = vmatpush1.bf16.xpose.msra.mxu0 0
        %3046 = vmatprep.subr.bf16.mxu0 0
        %3047 = vmatpush1.bf16.xpose.msra.mxu0 0
        %3048 = vmatprep.subr.bf16.mxu0 0
        %3049 = vmatpush1.bf16.xpose.msra.mxu0 0
        %3050 = vmatprep.subr.bf16.mxu0 0
        %3051 = vmatpush1.bf16.xpose.msra.mxu0 0
        %3052 = vmatprep.subr.bf16.mxu0 0
        %3053 = vmatpush1.bf16.xpose.msra.mxu0 0
        %3054 = vmatprep.subr.bf16.mxu0 0
        %3055 = vmatpush1.bf16.xpose.msra.mxu0 0
        %3056 = vmatprep.subr.bf16.mxu0 0
        %3057 = vmatpush1.bf16.xpose.msra.mxu0 0
        %3058 = vmatprep.mubr.bf16.mxu0 0
        %3059 = vmatmul.mubr.bf16.gmra.mrb[0].mxu0 %v3021
        %v3060 = vpop.f32.mrb[0].mxu0
        %v3061 = vadd.f32 0.0, %v3060
        %v3062 = vpop.f32.mrb[0].mxu0
        %v3063 = vpop.f32.mrb[0].mxu0
        %v3064 = vpop.f32.mrb[0].mxu0
        %3065 = vdwg.mxu0
        %v3066 = vsel %vm1673, %v2739, -inf
        %3067 = vmax.xlane.f32.xlu0 %v3066
        %v3068 = vpop.xlane.xlu0 %3067
        %v3069 = vsel %vm1673, %v2785, -inf
        %3070 = vmax.xlane.f32.xlu0 %v3069
        %v3071 = vpop.xlane.xlu0 %3070
        %v3072 = vsel %vm1673, %v2831, -inf
        %3073 = vmax.xlane.f32.xlu0 %v3072
        %v3074 = vpop.xlane.xlu0 %3073
        %v3075 = vsel %vm1673, %v2877, -inf
        %3076 = vmax.xlane.f32.xlu0 %v3075
        %v3077 = vpop.xlane.xlu0 %3076
        %v3078 = vsel %vm1673, %v2923, -inf
        %3079 = vmax.xlane.f32.xlu0 %v3078
        %v3080 = vpop.xlane.xlu0 %3079
        %v3081 = vsel %vm1673, %v2969, -inf
        %3082 = vmax.xlane.f32.xlu0 %v3081
        %v3083 = vpop.xlane.xlu0 %3082
        %v3084 = vsel %vm1673, %v3015, -inf
        %3085 = vmax.xlane.f32.xlu0 %v3084
        %v3086 = vpop.xlane.xlu0 %3085
        %v3087 = vsel %vm1673, %v3061, -inf
        %3088 = vmax.xlane.f32.xlu0 %v3087
        %v3089 = vpop.xlane.xlu0 %3088
        %v3090 = vsub.f32 %v2739, %v3068
        %v3091 = vsub.f32 %v2785, %v3071
        %v3092 = vsub.f32 %v2831, %v3074
        %v3093 = vsub.f32 %v2877, %v3077
        %v3094 = vsub.f32 %v2923, %v3080
        %v3095 = vsub.f32 %v2969, %v3083
        %v3096 = vsub.f32 %v3015, %v3086
        %v3097 = vsub.f32 %v3061, %v3089
        %v3098 = vmul.f32 %v3090, 1.442695
        %v3099 = vpow.pop %v3098
        %v3100 = vmul.f32 %v3091, 1.442695
        %v3101 = vpow.pop %v3100
        %v3102 = vmul.f32 %v3092, 1.442695
        %v3103 = vpow.pop %v3102
        %v3104 = vmul.f32 %v3093, 1.442695
        %v3105 = vpow.pop %v3104
        %v3106 = vmul.f32 %v3094, 1.442695
        %v3107 = vpow.pop %v3106
        %v3108 = vmul.f32 %v3095, 1.442695
        %v3109 = vpow.pop %v3108
        %v3110 = vmul.f32 %v3096, 1.442695
        %v3111 = vpow.pop %v3110
        %v3112 = vmul.f32 %v3097, 1.442695
        %v3113 = vpow.pop %v3112
        %v3114 = vsel %vm1673, %v3099, 0.0
        %3115 = vadd.xlane.f32.xlu0 %v3114
        %v3116 = vpop.xlane.xlu0 %3115
        %v3117 = vsel %vm1673, %v3101, 0.0
        %3118 = vadd.xlane.f32.xlu0 %v3117
        %v3119 = vpop.xlane.xlu0 %3118
        %v3120 = vsel %vm1673, %v3103, 0.0
        %3121 = vadd.xlane.f32.xlu0 %v3120
        %v3122 = vpop.xlane.xlu0 %3121
        %v3123 = vsel %vm1673, %v3105, 0.0
        %3124 = vadd.xlane.f32.xlu0 %v3123
        %v3125 = vpop.xlane.xlu0 %3124
        %v3126 = vsel %vm1673, %v3107, 0.0
        %3127 = vadd.xlane.f32.xlu0 %v3126
        %v3128 = vpop.xlane.xlu0 %3127
        %v3129 = vsel %vm1673, %v3109, 0.0
        %3130 = vadd.xlane.f32.xlu0 %v3129
        %v3131 = vpop.xlane.xlu0 %3130
        %v3132 = vsel %vm1673, %v3111, 0.0
        %3133 = vadd.xlane.f32.xlu0 %v3132
        %v3134 = vpop.xlane.xlu0 %3133
        %v3135 = vsel %vm1673, %v3113, 0.0
        %3136 = vadd.xlane.f32.xlu0 %v3135
        %v3137 = vpop.xlane.xlu0 %3136
        %v3138 = vrcp.pop %v3116
        %v3139 = vmul.f32 %v3099, %v3138
        %v3140 = vrcp.pop %v3119
        %v3141 = vmul.f32 %v3101, %v3140
        %v3142 = vrcp.pop %v3122
        %v3143 = vmul.f32 %v3103, %v3142
        %v3144 = vrcp.pop %v3125
        %v3145 = vmul.f32 %v3105, %v3144
        %v3146 = vrcp.pop %v3128
        %v3147 = vmul.f32 %v3107, %v3146
        %v3148 = vrcp.pop %v3131
        %v3149 = vmul.f32 %v3109, %v3148
        %v3150 = vrcp.pop %v3134
        %v3151 = vmul.f32 %v3111, %v3150
        %v3152 = vrcp.pop %v3137
        %v3153 = vmul.f32 %v3113, %v3152
        %v3154 = vpack.c.bf16 %v3139, %v3139
        %v3155 = vpack.c.bf16 %v3141, %v3141
        %v3156 = vpack.c.bf16 %v3143, %v3143
        %v3157 = vpack.c.bf16 %v3145, %v3145
        %v3158 = vpack.c.bf16 %v3147, %v3147
        %v3159 = vpack.c.bf16 %v3149, %v3149
        %v3160 = vpack.c.bf16 %v3151, %v3151
        %v3161 = vpack.c.bf16 %v3153, %v3153
        %v3163 = vsel %vm1770, %v3154, 0
        %v3166 = vsel %vm653, %v2672, 0
        %3168 = vmatprep.subr.bf16.mxu0 0
        %3169 = vmatpush1.bf16.msra.mxu0 %v3166
        %3170 = vmatprep.subr.bf16.mxu0 0
        %3171 = vmatpush1.bf16.msra.mxu0 0
        %3172 = vmatprep.subr.bf16.mxu0 0
        %3173 = vmatpush1.bf16.msra.mxu0 0
        %3174 = vmatprep.subr.bf16.mxu0 0
        %3175 = vmatpush1.bf16.msra.mxu0 0
        %3176 = vmatprep.subr.bf16.mxu0 0
        %3177 = vmatpush1.bf16.msra.mxu0 0
        %3178 = vmatprep.subr.bf16.mxu0 0
        %3179 = vmatpush1.bf16.msra.mxu0 0
        %3180 = vmatprep.subr.bf16.mxu0 0
        %3181 = vmatpush1.bf16.msra.mxu0 0
        %3182 = vmatprep.subr.bf16.mxu0 0
        %3183 = vmatpush1.bf16.msra.mxu0 0
        %3184 = vmatprep.subr.bf16.mxu0 0
        %3185 = vmatpush1.bf16.msra.mxu0 0
        %3186 = vmatprep.subr.bf16.mxu0 0
        %3187 = vmatpush1.bf16.msra.mxu0 0
        %3188 = vmatprep.subr.bf16.mxu0 0
        %3189 = vmatpush1.bf16.msra.mxu0 0
        %3190 = vmatprep.subr.bf16.mxu0 0
        %3191 = vmatpush1.bf16.msra.mxu0 0
        %3192 = vmatprep.subr.bf16.mxu0 0
        %3193 = vmatpush1.bf16.msra.mxu0 0
        %3194 = vmatprep.subr.bf16.mxu0 0
        %3195 = vmatpush1.bf16.msra.mxu0 0
        %3196 = vmatprep.subr.bf16.mxu0 0
        %3197 = vmatpush1.bf16.msra.mxu0 0
        %3198 = vmatprep.subr.bf16.mxu0 0
        %3199 = vmatpush1.bf16.msra.mxu0 0
        %3200 = vmatprep.mubr.bf16.mxu0 0
        %3201 = vmatmul.mubr.bf16.gmra.mrb[0].mxu0 %v3163
        %v3202 = vpop.f32.mrb[0].mxu0
        %v3203 = vadd.f32 0.0, %v3202
        %v3204 = vpop.f32.mrb[0].mxu0
        %v3205 = vpop.f32.mrb[0].mxu0
        %v3206 = vpop.f32.mrb[0].mxu0
        %3207 = vdwg.mxu0
        %v3209 = vsel %vm1770, %v3155, 0
        %v3212 = vsel %vm653, %v2686, 0
        %3214 = vmatprep.subr.bf16.mxu0 0
        %3215 = vmatpush1.bf16.msra.mxu0 %v3212
        %3216 = vmatprep.subr.bf16.mxu0 0
        %3217 = vmatpush1.bf16.msra.mxu0 0
        %3218 = vmatprep.subr.bf16.mxu0 0
        %3219 = vmatpush1.bf16.msra.mxu0 0
        %3220 = vmatprep.subr.bf16.mxu0 0
        %3221 = vmatpush1.bf16.msra.mxu0 0
        %3222 = vmatprep.subr.bf16.mxu0 0
        %3223 = vmatpush1.bf16.msra.mxu0 0
        %3224 = vmatprep.subr.bf16.mxu0 0
        %3225 = vmatpush1.bf16.msra.mxu0 0
        %3226 = vmatprep.subr.bf16.mxu0 0
        %3227 = vmatpush1.bf16.msra.mxu0 0
        %3228 = vmatprep.subr.bf16.mxu0 0
        %3229 = vmatpush1.bf16.msra.mxu0 0
        %3230 = vmatprep.subr.bf16.mxu0 0
        %3231 = vmatpush1.bf16.msra.mxu0 0
        %3232 = vmatprep.subr.bf16.mxu0 0
        %3233 = vmatpush1.bf16.msra.mxu0 0
        %3234 = vmatprep.subr.bf16.mxu0 0
        %3235 = vmatpush1.bf16.msra.mxu0 0
        %3236 = vmatprep.subr.bf16.mxu0 0
        %3237 = vmatpush1.bf16.msra.mxu0 0
        %3238 = vmatprep.subr.bf16.mxu0 0
        %3239 = vmatpush1.bf16.msra.mxu0 0
        %3240 = vmatprep.subr.bf16.mxu0 0
        %3241 = vmatpush1.bf16.msra.mxu0 0
        %3242 = vmatprep.subr.bf16.mxu0 0
        %3243 = vmatpush1.bf16.msra.mxu0 0
        %3244 = vmatprep.subr.bf16.mxu0 0
        %3245 = vmatpush1.bf16.msra.mxu0 0
        %3246 = vmatprep.mubr.bf16.mxu0 0
        %3247 = vmatmul.mubr.bf16.gmra.mrb[0].mxu0 %v3209
        %v3248 = vpop.f32.mrb[0].mxu0
        %v3249 = vadd.f32 0.0, %v3248
        %v3250 = vpop.f32.mrb[0].mxu0
        %v3251 = vpop.f32.mrb[0].mxu0
        %v3252 = vpop.f32.mrb[0].mxu0
        %3253 = vdwg.mxu0
        %v3255 = vsel %vm1770, %v3156, 0
        %v3258 = vsel %vm653, %v2694, 0
        %3260 = vmatprep.subr.bf16.mxu0 0
        %3261 = vmatpush1.bf16.msra.mxu0 %v3258
        %3262 = vmatprep.subr.bf16.mxu0 0
        %3263 = vmatpush1.bf16.msra.mxu0 0
        %3264 = vmatprep.subr.bf16.mxu0 0
        %3265 = vmatpush1.bf16.msra.mxu0 0
        %3266 = vmatprep.subr.bf16.mxu0 0
        %3267 = vmatpush1.bf16.msra.mxu0 0
        %3268 = vmatprep.subr.bf16.mxu0 0
        %3269 = vmatpush1.bf16.msra.mxu0 0
        %3270 = vmatprep.subr.bf16.mxu0 0
        %3271 = vmatpush1.bf16.msra.mxu0 0
        %3272 = vmatprep.subr.bf16.mxu0 0
        %3273 = vmatpush1.bf16.msra.mxu0 0
        %3274 = vmatprep.subr.bf16.mxu0 0
        %3275 = vmatpush1.bf16.msra.mxu0 0
        %3276 = vmatprep.subr.bf16.mxu0 0
        %3277 = vmatpush1.bf16.msra.mxu0 0
        %3278 = vmatprep.subr.bf16.mxu0 0
        %3279 = vmatpush1.bf16.msra.mxu0 0
        %3280 = vmatprep.subr.bf16.mxu0 0
        %3281 = vmatpush1.bf16.msra.mxu0 0
        %3282 = vmatprep.subr.bf16.mxu0 0
        %3283 = vmatpush1.bf16.msra.mxu0 0
        %3284 = vmatprep.subr.bf16.mxu0 0
        %3285 = vmatpush1.bf16.msra.mxu0 0
        %3286 = vmatprep.subr.bf16.mxu0 0
        %3287 = vmatpush1.bf16.msra.mxu0 0
        %3288 = vmatprep.subr.bf16.mxu0 0
        %3289 = vmatpush1.bf16.msra.mxu0 0
        %3290 = vmatprep.subr.bf16.mxu0 0
        %3291 = vmatpush1.bf16.msra.mxu0 0
        %3292 = vmatprep.mubr.bf16.mxu0 0
        %3293 = vmatmul.mubr.bf16.gmra.mrb[0].mxu0 %v3255
        %v3294 = vpop.f32.mrb[0].mxu0
        %v3295 = vadd.f32 0.0, %v3294
        %v3296 = vpop.f32.mrb[0].mxu0
        %v3297 = vpop.f32.mrb[0].mxu0
        %v3298 = vpop.f32.mrb[0].mxu0
        %3299 = vdwg.mxu0
        %v3301 = vsel %vm1770, %v3157, 0
        %v3304 = vsel %vm653, %v2696, 0
        %3306 = vmatprep.subr.bf16.mxu0 0
        %3307 = vmatpush1.bf16.msra.mxu0 %v3304
        %3308 = vmatprep.subr.bf16.mxu0 0
        %3309 = vmatpush1.bf16.msra.mxu0 0
        %3310 = vmatprep.subr.bf16.mxu0 0
        %3311 = vmatpush1.bf16.msra.mxu0 0
        %3312 = vmatprep.subr.bf16.mxu0 0
        %3313 = vmatpush1.bf16.msra.mxu0 0
        %3314 = vmatprep.subr.bf16.mxu0 0
        %3315 = vmatpush1.bf16.msra.mxu0 0
        %3316 = vmatprep.subr.bf16.mxu0 0
        %3317 = vmatpush1.bf16.msra.mxu0 0
        %3318 = vmatprep.subr.bf16.mxu0 0
        %3319 = vmatpush1.bf16.msra.mxu0 0
        %3320 = vmatprep.subr.bf16.mxu0 0
        %3321 = vmatpush1.bf16.msra.mxu0 0
        %3322 = vmatprep.subr.bf16.mxu0 0
        %3323 = vmatpush1.bf16.msra.mxu0 0
        %3324 = vmatprep.subr.bf16.mxu0 0
        %3325 = vmatpush1.bf16.msra.mxu0 0
        %3326 = vmatprep.subr.bf16.mxu0 0
        %3327 = vmatpush1.bf16.msra.mxu0 0
        %3328 = vmatprep.subr.bf16.mxu0 0
        %3329 = vmatpush1.bf16.msra.mxu0 0
        %3330 = vmatprep.subr.bf16.mxu0 0
        %3331 = vmatpush1.bf16.msra.mxu0 0
        %3332 = vmatprep.subr.bf16.mxu0 0
        %3333 = vmatpush1.bf16.msra.mxu0 0
        %3334 = vmatprep.subr.bf16.mxu0 0
        %3335 = vmatpush1.bf16.msra.mxu0 0
        %3336 = vmatprep.subr.bf16.mxu0 0
        %3337 = vmatpush1.bf16.msra.mxu0 0
        %3338 = vmatprep.mubr.bf16.mxu0 0
        %3339 = vmatmul.mubr.bf16.gmra.mrb[0].mxu0 %v3301
        %v3340 = vpop.f32.mrb[0].mxu0
        %v3341 = vadd.f32 0.0, %v3340
        %v3342 = vpop.f32.mrb[0].mxu0
        %v3343 = vpop.f32.mrb[0].mxu0
        %v3344 = vpop.f32.mrb[0].mxu0
        %3345 = vdwg.mxu0
        %v3347 = vsel %vm1770, %v3158, 0
        %v3350 = vsel %vm653, %v2679, 0
        %3352 = vmatprep.subr.bf16.mxu0 0
        %3353 = vmatpush1.bf16.msra.mxu0 %v3350
        %3354 = vmatprep.subr.bf16.mxu0 0
        %3355 = vmatpush1.bf16.msra.mxu0 0
        %3356 = vmatprep.subr.bf16.mxu0 0
        %3357 = vmatpush1.bf16.msra.mxu0 0
        %3358 = vmatprep.subr.bf16.mxu0 0
        %3359 = vmatpush1.bf16.msra.mxu0 0
        %3360 = vmatprep.subr.bf16.mxu0 0
        %3361 = vmatpush1.bf16.msra.mxu0 0
        %3362 = vmatprep.subr.bf16.mxu0 0
        %3363 = vmatpush1.bf16.msra.mxu0 0
        %3364 = vmatprep.subr.bf16.mxu0 0
        %3365 = vmatpush1.bf16.msra.mxu0 0
        %3366 = vmatprep.subr.bf16.mxu0 0
        %3367 = vmatpush1.bf16.msra.mxu0 0
        %3368 = vmatprep.subr.bf16.mxu0 0
        %3369 = vmatpush1.bf16.msra.mxu0 0
        %3370 = vmatprep.subr.bf16.mxu0 0
        %3371 = vmatpush1.bf16.msra.mxu0 0
        %3372 = vmatprep.subr.bf16.mxu0 0
        %3373 = vmatpush1.bf16.msra.mxu0 0
        %3374 = vmatprep.subr.bf16.mxu0 0
        %3375 = vmatpush1.bf16.msra.mxu0 0
        %3376 = vmatprep.subr.bf16.mxu0 0
        %3377 = vmatpush1.bf16.msra.mxu0 0
        %3378 = vmatprep.subr.bf16.mxu0 0
        %3379 = vmatpush1.bf16.msra.mxu0 0
        %3380 = vmatprep.subr.bf16.mxu0 0
        %3381 = vmatpush1.bf16.msra.mxu0 0
        %3382 = vmatprep.subr.bf16.mxu0 0
        %3383 = vmatpush1.bf16.msra.mxu0 0
        %3384 = vmatprep.mubr.bf16.mxu0 0
        %3385 = vmatmul.mubr.bf16.gmra.mrb[0].mxu0 %v3347
        %v3386 = vpop.f32.mrb[0].mxu0
        %v3387 = vadd.f32 0.0, %v3386
        %v3388 = vpop.f32.mrb[0].mxu0
        %v3389 = vpop.f32.mrb[0].mxu0
        %v3390 = vpop.f32.mrb[0].mxu0
        %3391 = vdwg.mxu0
        %v3393 = vsel %vm1770, %v3159, 0
        %v3396 = vsel %vm653, %v2693, 0
        %3398 = vmatprep.subr.bf16.mxu0 0
        %3399 = vmatpush1.bf16.msra.mxu0 %v3396
        %3400 = vmatprep.subr.bf16.mxu0 0
        %3401 = vmatpush1.bf16.msra.mxu0 0
        %3402 = vmatprep.subr.bf16.mxu0 0
        %3403 = vmatpush1.bf16.msra.mxu0 0
        %3404 = vmatprep.subr.bf16.mxu0 0
        %3405 = vmatpush1.bf16.msra.mxu0 0
        %3406 = vmatprep.subr.bf16.mxu0 0
        %3407 = vmatpush1.bf16.msra.mxu0 0
        %3408 = vmatprep.subr.bf16.mxu0 0
        %3409 = vmatpush1.bf16.msra.mxu0 0
        %3410 = vmatprep.subr.bf16.mxu0 0
        %3411 = vmatpush1.bf16.msra.mxu0 0
        %3412 = vmatprep.subr.bf16.mxu0 0
        %3413 = vmatpush1.bf16.msra.mxu0 0
        %3414 = vmatprep.subr.bf16.mxu0 0
        %3415 = vmatpush1.bf16.msra.mxu0 0
        %3416 = vmatprep.subr.bf16.mxu0 0
        %3417 = vmatpush1.bf16.msra.mxu0 0
        %3418 = vmatprep.subr.bf16.mxu0 0
        %3419 = vmatpush1.bf16.msra.mxu0 0
        %3420 = vmatprep.subr.bf16.mxu0 0
        %3421 = vmatpush1.bf16.msra.mxu0 0
        %3422 = vmatprep.subr.bf16.mxu0 0
        %3423 = vmatpush1.bf16.msra.mxu0 0
        %3424 = vmatprep.subr.bf16.mxu0 0
        %3425 = vmatpush1.bf16.msra.mxu0 0
        %3426 = vmatprep.subr.bf16.mxu0 0
        %3427 = vmatpush1.bf16.msra.mxu0 0
        %3428 = vmatprep.subr.bf16.mxu0 0
        %3429 = vmatpush1.bf16.msra.mxu0 0
        %3430 = vmatprep.mubr.bf16.mxu0 0
        %3431 = vmatmul.mubr.bf16.gmra.mrb[0].mxu0 %v3393
        %v3432 = vpop.f32.mrb[0].mxu0
        %v3433 = vadd.f32 0.0, %v3432
        %v3434 = vpop.f32.mrb[0].mxu0
        %v3435 = vpop.f32.mrb[0].mxu0
        %v3436 = vpop.f32.mrb[0].mxu0
        %3437 = vdwg.mxu0
        %v3439 = vsel %vm1770, %v3160, 0
        %v3442 = vsel %vm653, %v2695, 0
        %3444 = vmatprep.subr.bf16.mxu0 0
        %3445 = vmatpush1.bf16.msra.mxu0 %v3442
        %3446 = vmatprep.subr.bf16.mxu0 0
        %3447 = vmatpush1.bf16.msra.mxu0 0
        %3448 = vmatprep.subr.bf16.mxu0 0
        %3449 = vmatpush1.bf16.msra.mxu0 0
        %3450 = vmatprep.subr.bf16.mxu0 0
        %3451 = vmatpush1.bf16.msra.mxu0 0
        %3452 = vmatprep.subr.bf16.mxu0 0
        %3453 = vmatpush1.bf16.msra.mxu0 0
        %3454 = vmatprep.subr.bf16.mxu0 0
        %3455 = vmatpush1.bf16.msra.mxu0 0
        %3456 = vmatprep.subr.bf16.mxu0 0
        %3457 = vmatpush1.bf16.msra.mxu0 0
        %3458 = vmatprep.subr.bf16.mxu0 0
        %3459 = vmatpush1.bf16.msra.mxu0 0
        %3460 = vmatprep.subr.bf16.mxu0 0
        %3461 = vmatpush1.bf16.msra.mxu0 0
        %3462 = vmatprep.subr.bf16.mxu0 0
        %3463 = vmatpush1.bf16.msra.mxu0 0
        %3464 = vmatprep.subr.bf16.mxu0 0
        %3465 = vmatpush1.bf16.msra.mxu0 0
        %3466 = vmatprep.subr.bf16.mxu0 0
        %3467 = vmatpush1.bf16.msra.mxu0 0
        %3468 = vmatprep.subr.bf16.mxu0 0
        %3469 = vmatpush1.bf16.msra.mxu0 0
        %3470 = vmatprep.subr.bf16.mxu0 0
        %3471 = vmatpush1.bf16.msra.mxu0 0
        %3472 = vmatprep.subr.bf16.mxu0 0
        %3473 = vmatpush1.bf16.msra.mxu0 0
        %3474 = vmatprep.subr.bf16.mxu0 0
        %3475 = vmatpush1.bf16.msra.mxu0 0
        %3476 = vmatprep.mubr.bf16.mxu0 0
        %3477 = vmatmul.mubr.bf16.gmra.mrb[0].mxu0 %v3439
        %v3478 = vpop.f32.mrb[0].mxu0
        %v3479 = vadd.f32 0.0, %v3478
        %v3480 = vpop.f32.mrb[0].mxu0
        %v3481 = vpop.f32.mrb[0].mxu0
        %v3482 = vpop.f32.mrb[0].mxu0
        %3483 = vdwg.mxu0
        %v3485 = vsel %vm1770, %v3161, 0
        %v3488 = vsel %vm653, %v2697, 0
        %3490 = vmatprep.subr.bf16.mxu0 0
        %3491 = vmatpush1.bf16.msra.mxu0 %v3488
        %3492 = vmatprep.subr.bf16.mxu0 0
        %3493 = vmatpush1.bf16.msra.mxu0 0
        %3494 = vmatprep.subr.bf16.mxu0 0
        %3495 = vmatpush1.bf16.msra.mxu0 0
        %3496 = vmatprep.subr.bf16.mxu0 0
        %3497 = vmatpush1.bf16.msra.mxu0 0
        %3498 = vmatprep.subr.bf16.mxu0 0
        %3499 = vmatpush1.bf16.msra.mxu0 0
        %3500 = vmatprep.subr.bf16.mxu0 0
        %3501 = vmatpush1.bf16.msra.mxu0 0
        %3502 = vmatprep.subr.bf16.mxu0 0
        %3503 = vmatpush1.bf16.msra.mxu0 0
        %3504 = vmatprep.subr.bf16.mxu0 0
        %3505 = vmatpush1.bf16.msra.mxu0 0
        %3506 = vmatprep.subr.bf16.mxu0 0
        %3507 = vmatpush1.bf16.msra.mxu0 0
        %3508 = vmatprep.subr.bf16.mxu0 0
        %3509 = vmatpush1.bf16.msra.mxu0 0
        %3510 = vmatprep.subr.bf16.mxu0 0
        %3511 = vmatpush1.bf16.msra.mxu0 0
        %3512 = vmatprep.subr.bf16.mxu0 0
        %3513 = vmatpush1.bf16.msra.mxu0 0
        %3514 = vmatprep.subr.bf16.mxu0 0
        %3515 = vmatpush1.bf16.msra.mxu0 0
        %3516 = vmatprep.subr.bf16.mxu0 0
        %3517 = vmatpush1.bf16.msra.mxu0 0
        %3518 = vmatprep.subr.bf16.mxu0 0
        %3519 = vmatpush1.bf16.msra.mxu0 0
        %3520 = vmatprep.subr.bf16.mxu0 0
        %3521 = vmatpush1.bf16.msra.mxu0 0
        %3522 = vmatprep.mubr.bf16.mxu0 0
        %3523 = vmatmul.mubr.bf16.gmra.mrb[0].mxu0 %v3485
        %v3524 = vpop.f32.mrb[0].mxu0
        %v3525 = vadd.f32 0.0, %v3524
        %v3526 = vpop.f32.mrb[0].mxu0
        %v3527 = vpop.f32.mrb[0].mxu0
        %v3528 = vpop.f32.mrb[0].mxu0
        %3529 = vdwg.mxu0
        %v3530 = vpack.c.bf16 %v3203, %v3203
        %v3531 = vpack.c.bf16 %v3249, %v3249
        %v3532 = vpack.c.bf16 %v3295, %v3295
        %v3533 = vpack.c.bf16 %v3341, %v3341
        %v3534 = vpack.c.bf16 %v3387, %v3387
        %v3535 = vpack.c.bf16 %v3433, %v3433
        %v3536 = vpack.c.bf16 %v3479, %v3479
        %v3537 = vpack.c.bf16 %v3525, %v3525
        %s3538 = scalar_lea.vmem [#allocation8], 32
        %v3539 = vld [vmem:[%s3538] sm:$0xf]
        %v3540 = vld [vmem:[%s3538 + $0x4] sm:$0xf]
        %v3541 = vld [vmem:[%s3538 + $0x8] sm:$0xf]
        %v3542 = vld [vmem:[%s3538 + $0xc] sm:$0xf]
        %v3543 = vld [vmem:[%s3538 + $0x10] sm:$0xf]
        %v3544 = vld [vmem:[%s3538 + $0x14] sm:$0xf]
        %v3545 = vld [vmem:[%s3538 + $0x18] sm:$0xf]
        %v3546 = vld [vmem:[%s3538 + $0x1c] sm:$0xf]
        %s3547 = scalar_lea.vmem %s12, 1
        %v3548 = vld [vmem:[%s3547] sm:$0x1]
        %v3550 = vlaneseq
        %v3551 = vshrl.u32 %v3550, 7
        %v3552 = vsub.s32 0, %v3551
        %v3553 = vrot.slane %v3548, %v3552
        %v3563 = vcombine.low %v3530, %v3531
        %v3564 = vcombine.low %v3532, %v3533
        %v3565 = vcombine.low %v3534, %v3535
        %v3566 = vcombine.low %v3536, %v3537
        %v3568 = vunpack.c.l.s4 1966171168
        %v3569 = vunpack.c.0.s8 %v3568
        %v3570 = vlaneseq
        %v3571 = vshrl.u32 %v3570, 7
        %v3572 = vsub.s32 %v3569, %v3571
        %v3573 = vrot.slane %v3563, %v3572
        %v3575 = vunpack.c.l.s4 1966171168
        %v3576 = vunpack.c.0.s8 %v3575
        %v3577 = vlaneseq
        %v3578 = vshrl.u32 %v3577, 7
        %v3579 = vsub.s32 %v3576, %v3578
        %v3580 = vrot.slane %v3564, %v3579
        %v3582 = vunpack.c.l.s4 1966171168
        %v3583 = vunpack.c.0.s8 %v3582
        %v3584 = vlaneseq
        %v3585 = vshrl.u32 %v3584, 7
        %v3586 = vsub.s32 %v3583, %v3585
        %v3587 = vrot.slane %v3565, %v3586
        %v3589 = vunpack.c.l.s4 1966171168
        %v3590 = vunpack.c.0.s8 %v3589
        %v3591 = vlaneseq
        %v3592 = vshrl.u32 %v3591, 7
        %v3593 = vsub.s32 %v3590, %v3592
        %v3594 = vrot.slane %v3566, %v3593
        %v3595 = vcombine.low %v3573, %v3580
        %v3596 = vcombine.low %v3587, %v3594
        %v3598 = vunpack.c.l.s4 1966171168
        %v3599 = vunpack.c.0.s8 %v3598
        %v3600 = vlaneseq
        %v3601 = vshrl.u32 %v3600, 7
        %v3602 = vsub.s32 %v3599, %v3601
        %v3603 = vrot.slane %v3595, %v3602
        %v3605 = vunpack.c.l.s4 1966171168
        %v3606 = vunpack.c.0.s8 %v3605
        %v3607 = vlaneseq
        %v3608 = vshrl.u32 %v3607, 7
        %v3609 = vsub.s32 %v3606, %v3608
        %v3610 = vrot.slane %v3596, %v3609
        %v3611 = vcombine.low %v3603, %v3610
        %v3620 = vunpack.c.l.b16 %v3539
        %v3621 = vunpack.c.l.b16 %v3540
        %v3622 = vunpack.c.l.b16 %v3541
        %v3623 = vunpack.c.l.b16 %v3542
        %v3624 = vunpack.c.l.b16 %v3543
        %v3625 = vunpack.c.l.b16 %v3544
        %v3626 = vunpack.c.l.b16 %v3545
        %v3627 = vunpack.c.l.b16 %v3546
        %v3628 = vpack.c.b16 %v3621, %v3620
        %v3629 = vpack.c.b16 %v3623, %v3622
        %v3630 = vpack.c.b16 %v3625, %v3624
        %v3631 = vpack.c.b16 %v3627, %v3626
        %v3637 = vsel %vm743, %v3611, 0
        %3639 = vmatprep.subr.bf16.mxu0 0
        %3640 = vmatpush1.bf16.msra.mxu0 %v3628
        %3641 = vmatprep.subr.bf16.mxu0 0
        %3642 = vmatpush1.bf16.msra.mxu0 %v3629
        %3643 = vmatprep.subr.bf16.mxu0 0
        %3644 = vmatpush1.bf16.msra.mxu0 %v3630
        %3645 = vmatprep.subr.bf16.mxu0 0
        %3646 = vmatpush1.bf16.msra.mxu0 %v3631
        %3647 = vmatprep.subr.bf16.mxu0 0
        %3648 = vmatpush1.bf16.msra.mxu0 0
        %3649 = vmatprep.subr.bf16.mxu0 0
        %3650 = vmatpush1.bf16.msra.mxu0 0
        %3651 = vmatprep.subr.bf16.mxu0 0
        %3652 = vmatpush1.bf16.msra.mxu0 0
        %3653 = vmatprep.subr.bf16.mxu0 0
        %3654 = vmatpush1.bf16.msra.mxu0 0
        %3655 = vmatprep.subr.bf16.mxu0 0
        %3656 = vmatpush1.bf16.msra.mxu0 0
        %3657 = vmatprep.subr.bf16.mxu0 0
        %3658 = vmatpush1.bf16.msra.mxu0 0
        %3659 = vmatprep.subr.bf16.mxu0 0
        %3660 = vmatpush1.bf16.msra.mxu0 0
        %3661 = vmatprep.subr.bf16.mxu0 0
        %3662 = vmatpush1.bf16.msra.mxu0 0
        %3663 = vmatprep.subr.bf16.mxu0 0
        %3664 = vmatpush1.bf16.msra.mxu0 0
        %3665 = vmatprep.subr.bf16.mxu0 0
        %3666 = vmatpush1.bf16.msra.mxu0 0
        %3667 = vmatprep.subr.bf16.mxu0 0
        %3668 = vmatpush1.bf16.msra.mxu0 0
        %3669 = vmatprep.subr.bf16.mxu0 0
        %3670 = vmatpush1.bf16.msra.mxu0 0
        %3671 = vmatprep.mubr.bf16.mxu0 0
        %3672 = vmatmul.mubr.bf16.gmra.mrb[0].mxu0 %v3637
        %v3673 = vpop.f32.mrb[0].mxu0
        %v3674 = vadd.f32 %v3553, %v3673
        %v3675 = vpop.f32.mrb[0].mxu0
        %v3676 = vpop.f32.mrb[0].mxu0
        %v3677 = vadd.f32 %v3553, %v3676
        %v3678 = vpop.f32.mrb[0].mxu0
        %3679 = vdwg.mxu0
        %v3680 = vpack.c.bf16 %v3677, %v3674
        %s3681 = scalar_lea.vmem [#allocation10], 64
        %v3682 = vld [vmem:[%s3681] sm:$0xff]
        %v3683 = vld [vmem:[%s3681 + $0x8] sm:$0xff]
        %v3684 = vld [vmem:[%s3681 + $0x10] sm:$0xff]
        %v3685 = vld [vmem:[%s3681 + $0x18] sm:$0xff]
        %v3686 = vld [vmem:[%s3681 + $0x20] sm:$0xff]
        %v3687 = vld [vmem:[%s3681 + $0x28] sm:$0xff]
        %v3688 = vld [vmem:[%s3681 + $0x30] sm:$0xff]
        %v3689 = vld [vmem:[%s3681 + $0x38] sm:$0xff]
        %v3698 = vunpack.c.l.b16 %v3682
        %v3699 = vunpack.c.h.b16 %v3682
        %v3700 = vunpack.c.l.b16 %v3683
        %v3701 = vunpack.c.h.b16 %v3683
        %v3702 = vunpack.c.l.b16 %v3684
        %v3703 = vunpack.c.h.b16 %v3684
        %v3704 = vunpack.c.l.b16 %v3685
        %v3705 = vunpack.c.h.b16 %v3685
        %v3706 = vunpack.c.l.b16 %v3686
        %v3707 = vunpack.c.h.b16 %v3686
        %v3708 = vunpack.c.l.b16 %v3687
        %v3709 = vunpack.c.h.b16 %v3687
        %v3710 = vunpack.c.l.b16 %v3688
        %v3711 = vunpack.c.h.b16 %v3688
        %v3712 = vunpack.c.l.b16 %v3689
        %v3713 = vunpack.c.h.b16 %v3689
        %v3714 = vpack.c.b16 %v3700, %v3698
        %v3715 = vpack.c.b16 %v3701, %v3699
        %v3716 = vpack.c.b16 %v3704, %v3702
        %v3717 = vpack.c.b16 %v3705, %v3703
        %v3718 = vpack.c.b16 %v3708, %v3706
        %v3719 = vpack.c.b16 %v3709, %v3707
        %v3720 = vpack.c.b16 %v3712, %v3710
        %v3721 = vpack.c.b16 %v3713, %v3711
        %v3731 = vsel %vm743, %v3680, 0
        %3733 = vmatprep.subr.bf16.mxu0 %v3715
        %3734 = vmatpush1.bf16.msra.mxu0 %v3714
        %3735 = vmatprep.subr.bf16.mxu0 %v3717
        %3736 = vmatpush1.bf16.msra.mxu0 %v3716
        %3737 = vmatprep.subr.bf16.mxu0 %v3719
        %3738 = vmatpush1.bf16.msra.mxu0 %v3718
        %3739 = vmatprep.subr.bf16.mxu0 %v3721
        %3740 = vmatpush1.bf16.msra.mxu0 %v3720
        %3741 = vmatprep.subr.bf16.mxu0 0
        %3742 = vmatpush1.bf16.msra.mxu0 0
        %3743 = vmatprep.subr.bf16.mxu0 0
        %3744 = vmatpush1.bf16.msra.mxu0 0
        %3745 = vmatprep.subr.bf16.mxu0 0
        %3746 = vmatpush1.bf16.msra.mxu0 0
        %3747 = vmatprep.subr.bf16.mxu0 0
        %3748 = vmatpush1.bf16.msra.mxu0 0
        %3749 = vmatprep.subr.bf16.mxu0 0
        %3750 = vmatpush1.bf16.msra.mxu0 0
        %3751 = vmatprep.subr.bf16.mxu0 0
        %3752 = vmatpush1.bf16.msra.mxu0 0
        %3753 = vmatprep.subr.bf16.mxu0 0
        %3754 = vmatpush1.bf16.msra.mxu0 0
        %3755 = vmatprep.subr.bf16.mxu0 0
        %3756 = vmatpush1.bf16.msra.mxu0 0
        %3757 = vmatprep.subr.bf16.mxu0 0
        %3758 = vmatpush1.bf16.msra.mxu0 0
        %3759 = vmatprep.subr.bf16.mxu0 0
        %3760 = vmatpush1.bf16.msra.mxu0 0
        %3761 = vmatprep.subr.bf16.mxu0 0
        %3762 = vmatpush1.bf16.msra.mxu0 0
        %3763 = vmatprep.subr.bf16.mxu0 0
        %3764 = vmatpush1.bf16.msra.mxu0 0
        %3765 = vmatprep.mubr.bf16.mxu0 0
        %3766 = vmatmul.mubr.bf16.gmra.mrb[0].mxu0 %v3731
        %v3767 = vpop.f32.mrb[0].mxu0
        %v3768 = vadd.f32 0.0, %v3767
        %v3769 = vpop.f32.mrb[0].mxu0
        %v3770 = vadd.f32 0.0, %v3769
        %v3771 = vpop.f32.mrb[0].mxu0
        %v3772 = vadd.f32 0.0, %v3771
        %v3773 = vpop.f32.mrb[0].mxu0
        %v3774 = vadd.f32 0.0, %v3773
        %3775 = vdwg.mxu0
        %v3784 = vunpack.c.l.b16 %v2288
        %v3785 = vunpack.c.h.b16 %v2288
        %v3786 = vunpack.c.l.b16 %v2289
        %v3787 = vunpack.c.h.b16 %v2289
        %v3788 = vunpack.c.l.b16 %v2290
        %v3789 = vunpack.c.h.b16 %v2290
        %v3790 = vunpack.c.l.b16 %v2291
        %v3791 = vunpack.c.h.b16 %v2291
        %v3792 = vunpack.c.l.b16 %v2292
        %v3793 = vunpack.c.h.b16 %v2292
        %v3794 = vunpack.c.l.b16 %v2293
        %v3795 = vunpack.c.h.b16 %v2293
        %v3796 = vunpack.c.l.b16 %v2294
        %v3797 = vunpack.c.h.b16 %v2294
        %v3798 = vunpack.c.l.b16 %v2295
        %v3799 = vunpack.c.h.b16 %v2295
        %v3800 = vpack.c.b16 %v3786, %v3784
        %v3801 = vpack.c.b16 %v3787, %v3785
        %v3802 = vpack.c.b16 %v3790, %v3788
        %v3803 = vpack.c.b16 %v3791, %v3789
        %v3804 = vpack.c.b16 %v3794, %v3792
        %v3805 = vpack.c.b16 %v3795, %v3793
        %v3806 = vpack.c.b16 %v3798, %v3796
        %v3807 = vpack.c.b16 %v3799, %v3797
        %3816 = vmatprep.subr.bf16.mxu0 %v3801
        %3817 = vmatpush1.bf16.msra.mxu0 %v3800
        %3818 = vmatprep.subr.bf16.mxu0 %v3803
        %3819 = vmatpush1.bf16.msra.mxu0 %v3802
        %3820 = vmatprep.subr.bf16.mxu0 %v3805
        %3821 = vmatpush1.bf16.msra.mxu0 %v3804
        %3822 = vmatprep.subr.bf16.mxu0 %v3807
        %3823 = vmatpush1.bf16.msra.mxu0 %v3806
        %3824 = vmatprep.subr.bf16.mxu0 0
        %3825 = vmatpush1.bf16.msra.mxu0 0
        %3826 = vmatprep.subr.bf16.mxu0 0
        %3827 = vmatpush1.bf16.msra.mxu0 0
        %3828 = vmatprep.subr.bf16.mxu0 0
        %3829 = vmatpush1.bf16.msra.mxu0 0
        %3830 = vmatprep.subr.bf16.mxu0 0
        %3831 = vmatpush1.bf16.msra.mxu0 0
        %3832 = vmatprep.subr.bf16.mxu0 0
        %3833 = vmatpush1.bf16.msra.mxu0 0
        %3834 = vmatprep.subr.bf16.mxu0 0
        %3835 = vmatpush1.bf16.msra.mxu0 0
        %3836 = vmatprep.subr.bf16.mxu0 0
        %3837 = vmatpush1.bf16.msra.mxu0 0
        %3838 = vmatprep.subr.bf16.mxu0 0
        %3839 = vmatpush1.bf16.msra.mxu0 0
        %3840 = vmatprep.subr.bf16.mxu0 0
        %3841 = vmatpush1.bf16.msra.mxu0 0
        %3842 = vmatprep.subr.bf16.mxu0 0
        %3843 = vmatpush1.bf16.msra.mxu0 0
        %3844 = vmatprep.subr.bf16.mxu0 0
        %3845 = vmatpush1.bf16.msra.mxu0 0
        %3846 = vmatprep.subr.bf16.mxu0 0
        %3847 = vmatpush1.bf16.msra.mxu0 0
        %3848 = vmatprep.mubr.bf16.mxu0 0
        %3849 = vmatmul.mubr.bf16.gmra.mrb[0].mxu0 %v2338
        %v3850 = vpop.f32.mrb[0].mxu0
        %v3851 = vadd.f32 %v3768, %v3850
        %v3852 = vpop.f32.mrb[0].mxu0
        %v3853 = vadd.f32 %v3770, %v3852
        %v3854 = vpop.f32.mrb[0].mxu0
        %v3855 = vadd.f32 %v3772, %v3854
        %v3856 = vpop.f32.mrb[0].mxu0
        %v3857 = vadd.f32 %v3774, %v3856
        %3858 = vdwg.mxu0
        %s3859 = scalar_lea.vmem [#allocation3], 64
        %v3860 = vld [vmem:[%s3859] sm:$0xf]
        %v3861 = vld [vmem:[%s3859 + $0x4] sm:$0xf]
        %v3862 = vld [vmem:[%s3859 + $0x8] sm:$0xf]
        %v3863 = vld [vmem:[%s3859 + $0xc] sm:$0xf]
        %v3864 = vld [vmem:[%s3859 + $0x10] sm:$0xf]
        %v3865 = vld [vmem:[%s3859 + $0x14] sm:$0xf]
        %v3866 = vld [vmem:[%s3859 + $0x18] sm:$0xf]
        %v3867 = vld [vmem:[%s3859 + $0x1c] sm:$0xf]
        %s3868 = scalar_lea.vmem %s6, 2
        %v3869 = vld [vmem:[%s3868] sm:$0x1]
        %v3871 = vlaneseq
        %v3872 = vshrl.u32 %v3871, 7
        %v3873 = vsub.s32 0, %v3872
        %v3874 = vrot.slane %v3869, %v3873
        %v3884 = vunpack.c.l.b16 %v3860
        %v3885 = vunpack.c.l.b16 %v3861
        %v3886 = vunpack.c.l.b16 %v3862
        %v3887 = vunpack.c.l.b16 %v3863
        %v3888 = vunpack.c.l.b16 %v3864
        %v3889 = vunpack.c.l.b16 %v3865
        %v3890 = vunpack.c.l.b16 %v3866
        %v3891 = vunpack.c.l.b16 %v3867
        %v3892 = vpack.c.b16 %v3885, %v3884
        %v3893 = vpack.c.b16 %v3887, %v3886
        %v3894 = vpack.c.b16 %v3889, %v3888
        %v3895 = vpack.c.b16 %v3891, %v3890
        %3900 = vmatprep.subr.bf16.mxu0 0
        %3901 = vmatpush1.bf16.msra.mxu0 %v3892
        %3902 = vmatprep.subr.bf16.mxu0 0
        %3903 = vmatpush1.bf16.msra.mxu0 %v3893
        %3904 = vmatprep.subr.bf16.mxu0 0
        %3905 = vmatpush1.bf16.msra.mxu0 %v3894
        %3906 = vmatprep.subr.bf16.mxu0 0
        %3907 = vmatpush1.bf16.msra.mxu0 %v3895
        %3908 = vmatprep.subr.bf16.mxu0 0
        %3909 = vmatpush1.bf16.msra.mxu0 0
        %3910 = vmatprep.subr.bf16.mxu0 0
        %3911 = vmatpush1.bf16.msra.mxu0 0
        %3912 = vmatprep.subr.bf16.mxu0 0
        %3913 = vmatpush1.bf16.msra.mxu0 0
        %3914 = vmatprep.subr.bf16.mxu0 0
        %3915 = vmatpush1.bf16.msra.mxu0 0
        %3916 = vmatprep.subr.bf16.mxu0 0
        %3917 = vmatpush1.bf16.msra.mxu0 0
        %3918 = vmatprep.subr.bf16.mxu0 0
        %3919 = vmatpush1.bf16.msra.mxu0 0
        %3920 = vmatprep.subr.bf16.mxu0 0
        %3921 = vmatpush1.bf16.msra.mxu0 0
        %3922 = vmatprep.subr.bf16.mxu0 0
        %3923 = vmatpush1.bf16.msra.mxu0 0
        %3924 = vmatprep.subr.bf16.mxu0 0
        %3925 = vmatpush1.bf16.msra.mxu0 0
        %3926 = vmatprep.subr.bf16.mxu0 0
        %3927 = vmatpush1.bf16.msra.mxu0 0
        %3928 = vmatprep.subr.bf16.mxu0 0
        %3929 = vmatpush1.bf16.msra.mxu0 0
        %3930 = vmatprep.subr.bf16.mxu0 0
        %3931 = vmatpush1.bf16.msra.mxu0 0
        %3932 = vmatprep.mubr.bf16.mxu0 0
        %3933 = vmatmul.mubr.bf16.gmra.mrb[0].mxu0 %v3731
        %v3934 = vpop.f32.mrb[0].mxu0
        %v3935 = vadd.f32 %v3874, %v3934
        %v3936 = vpop.f32.mrb[0].mxu0
        %v3937 = vpop.f32.mrb[0].mxu0
        %v3938 = vadd.f32 %v3874, %v3937
        %v3939 = vpop.f32.mrb[0].mxu0
        %3940 = vdwg.mxu0
        %v3941 = vpack.c.bf16 %v3938, %v3935
        %v3943 = vcombine.high %v3941, %v3941
        %v3945 = vunpack.c.l.s4 1966171168
        %v3946 = vunpack.c.0.s8 %v3945
        %v3947 = vlaneseq
        %v3948 = vshrl.u32 %v3947, 7
        %v3949 = vsub.s32 %v3946, %v3948
        %v3950 = vrot.slane %v3941, %v3949
        %v3952 = vunpack.c.l.s4 1966171168
        %v3953 = vunpack.c.0.s8 %v3952
        %v3954 = vlaneseq
        %v3955 = vshrl.u32 %v3954, 7
        %v3956 = vsub.s32 %v3953, %v3955
        %v3957 = vrot.slane %v3943, %v3956
        %v3958 = vcombine.high %v3950, %v3950
        %v3959 = vcombine.high %v3957, %v3957
        %v3961 = vunpack.c.l.s4 1966171168
        %v3962 = vunpack.c.0.s8 %v3961
        %v3963 = vlaneseq
        %v3964 = vshrl.u32 %v3963, 7
        %v3965 = vsub.s32 %v3962, %v3964
        %v3966 = vrot.slane %v3950, %v3965
        %v3968 = vunpack.c.l.s4 1966171168
        %v3969 = vunpack.c.0.s8 %v3968
        %v3970 = vlaneseq
        %v3971 = vshrl.u32 %v3970, 7
        %v3972 = vsub.s32 %v3969, %v3971
        %v3973 = vrot.slane %v3957, %v3972
        %v3975 = vunpack.c.l.s4 1966171168
        %v3976 = vunpack.c.0.s8 %v3975
        %v3977 = vlaneseq
        %v3978 = vshrl.u32 %v3977, 7
        %v3979 = vsub.s32 %v3976, %v3978
        %v3980 = vrot.slane %v3958, %v3979
        %v3982 = vunpack.c.l.s4 1966171168
        %v3983 = vunpack.c.0.s8 %v3982
        %v3984 = vlaneseq
        %v3985 = vshrl.u32 %v3984, 7
        %v3986 = vsub.s32 %v3983, %v3985
        %v3987 = vrot.slane %v3959, %v3986
        %v3988 = vcombine.high %v3966, %v3966
        %v3989 = vcombine.high %v3973, %v3973
        %v3990 = vcombine.high %v3980, %v3980
        %v3991 = vcombine.high %v3987, %v3987
        %s3992 = scalar_lea.vmem [#allocation5], 64
        %v3993 = vld [vmem:[%s3992] sm:$0xf]
        %v3994 = vld [vmem:[%s3992 + $0x4] sm:$0xf]
        %v3995 = vld [vmem:[%s3992 + $0x8] sm:$0xf]
        %v3996 = vld [vmem:[%s3992 + $0xc] sm:$0xf]
        %v3997 = vld [vmem:[%s3992 + $0x10] sm:$0xf]
        %v3998 = vld [vmem:[%s3992 + $0x14] sm:$0xf]
        %v3999 = vld [vmem:[%s3992 + $0x18] sm:$0xf]
        %v4000 = vld [vmem:[%s3992 + $0x1c] sm:$0xf]
        %s4001 = scalar_lea.vmem %s8, 2
        %v4002 = vld [vmem:[%s4001] sm:$0x1]
        %v4004 = vlaneseq
        %v4005 = vshrl.u32 %v4004, 7
        %v4006 = vsub.s32 0, %v4005
        %v4007 = vrot.slane %v4002, %v4006
        %v4017 = vunpack.c.l.b16 %v3993
        %v4018 = vunpack.c.l.b16 %v3994
        %v4019 = vunpack.c.l.b16 %v3995
        %v4020 = vunpack.c.l.b16 %v3996
        %v4021 = vunpack.c.l.b16 %v3997
        %v4022 = vunpack.c.l.b16 %v3998
        %v4023 = vunpack.c.l.b16 %v3999
        %v4024 = vunpack.c.l.b16 %v4000
        %v4025 = vpack.c.b16 %v4018, %v4017
        %v4026 = vpack.c.b16 %v4020, %v4019
        %v4027 = vpack.c.b16 %v4022, %v4021
        %v4028 = vpack.c.b16 %v4024, %v4023
        %4033 = vmatprep.subr.bf16.mxu0 0
        %4034 = vmatpush1.bf16.msra.mxu0 %v4025
        %4035 = vmatprep.subr.bf16.mxu0 0
        %4036 = vmatpush1.bf16.msra.mxu0 %v4026
        %4037 = vmatprep.subr.bf16.mxu0 0
        %4038 = vmatpush1.bf16.msra.mxu0 %v4027
        %4039 = vmatprep.subr.bf16.mxu0 0
        %4040 = vmatpush1.bf16.msra.mxu0 %v4028
        %4041 = vmatprep.subr.bf16.mxu0 0
        %4042 = vmatpush1.bf16.msra.mxu0 0
        %4043 = vmatprep.subr.bf16.mxu0 0
        %4044 = vmatpush1.bf16.msra.mxu0 0
        %4045 = vmatprep.subr.bf16.mxu0 0
        %4046 = vmatpush1.bf16.msra.mxu0 0
        %4047 = vmatprep.subr.bf16.mxu0 0
        %4048 = vmatpush1.bf16.msra.mxu0 0
        %4049 = vmatprep.subr.bf16.mxu0 0
        %4050 = vmatpush1.bf16.msra.mxu0 0
        %4051 = vmatprep.subr.bf16.mxu0 0
        %4052 = vmatpush1.bf16.msra.mxu0 0
        %4053 = vmatprep.subr.bf16.mxu0 0
        %4054 = vmatpush1.bf16.msra.mxu0 0
        %4055 = vmatprep.subr.bf16.mxu0 0
        %4056 = vmatpush1.bf16.msra.mxu0 0
        %4057 = vmatprep.subr.bf16.mxu0 0
        %4058 = vmatpush1.bf16.msra.mxu0 0
        %4059 = vmatprep.subr.bf16.mxu0 0
        %4060 = vmatpush1.bf16.msra.mxu0 0
        %4061 = vmatprep.subr.bf16.mxu0 0
        %4062 = vmatpush1.bf16.msra.mxu0 0
        %4063 = vmatprep.subr.bf16.mxu0 0
        %4064 = vmatpush1.bf16.msra.mxu0 0
        %4065 = vmatprep.mubr.bf16.mxu0 0
        %4066 = vmatmul.mubr.bf16.gmra.mrb[0].mxu0 %v3731
        %v4067 = vpop.f32.mrb[0].mxu0
        %v4068 = vadd.f32 %v4007, %v4067
        %v4069 = vpop.f32.mrb[0].mxu0
        %v4070 = vpop.f32.mrb[0].mxu0
        %v4071 = vadd.f32 %v4007, %v4070
        %v4072 = vpop.f32.mrb[0].mxu0
        %4073 = vdwg.mxu0
        %v4074 = vpack.c.bf16 %v4071, %v4068
        %v4076 = vcombine.high %v4074, %v4074
        %v4078 = vunpack.c.l.s4 1966171168
        %v4079 = vunpack.c.0.s8 %v4078
        %v4080 = vlaneseq
        %v4081 = vshrl.u32 %v4080, 7
        %v4082 = vsub.s32 %v4079, %v4081
        %v4083 = vrot.slane %v4074, %v4082
        %v4085 = vunpack.c.l.s4 1966171168
        %v4086 = vunpack.c.0.s8 %v4085
        %v4087 = vlaneseq
        %v4088 = vshrl.u32 %v4087, 7
        %v4089 = vsub.s32 %v4086, %v4088
        %v4090 = vrot.slane %v4076, %v4089
        %v4091 = vcombine.high %v4083, %v4083
        %v4092 = vcombine.high %v4090, %v4090
        %v4094 = vunpack.c.l.s4 1966171168
        %v4095 = vunpack.c.0.s8 %v4094
        %v4096 = vlaneseq
        %v4097 = vshrl.u32 %v4096, 7
        %v4098 = vsub.s32 %v4095, %v4097
        %v4099 = vrot.slane %v4083, %v4098
        %v4101 = vunpack.c.l.s4 1966171168
        %v4102 = vunpack.c.0.s8 %v4101
        %v4103 = vlaneseq
        %v4104 = vshrl.u32 %v4103, 7
        %v4105 = vsub.s32 %v4102, %v4104
        %v4106 = vrot.slane %v4090, %v4105
        %v4108 = vunpack.c.l.s4 1966171168
        %v4109 = vunpack.c.0.s8 %v4108
        %v4110 = vlaneseq
        %v4111 = vshrl.u32 %v4110, 7
        %v4112 = vsub.s32 %v4109, %v4111
        %v4113 = vrot.slane %v4091, %v4112
        %v4115 = vunpack.c.l.s4 1966171168
        %v4116 = vunpack.c.0.s8 %v4115
        %v4117 = vlaneseq
        %v4118 = vshrl.u32 %v4117, 7
        %v4119 = vsub.s32 %v4116, %v4118
        %v4120 = vrot.slane %v4092, %v4119
        %v4121 = vcombine.high %v4099, %v4099
        %v4122 = vcombine.high %v4106, %v4106
        %v4123 = vcombine.high %v4113, %v4113
        %v4124 = vcombine.high %v4120, %v4120
        %s4125 = scalar_lea.vmem [#allocation7], 64
        %v4126 = vld [vmem:[%s4125] sm:$0xf]
        %v4127 = vld [vmem:[%s4125 + $0x4] sm:$0xf]
        %v4128 = vld [vmem:[%s4125 + $0x8] sm:$0xf]
        %v4129 = vld [vmem:[%s4125 + $0xc] sm:$0xf]
        %v4130 = vld [vmem:[%s4125 + $0x10] sm:$0xf]
        %v4131 = vld [vmem:[%s4125 + $0x14] sm:$0xf]
        %v4132 = vld [vmem:[%s4125 + $0x18] sm:$0xf]
        %v4133 = vld [vmem:[%s4125 + $0x1c] sm:$0xf]
        %s4134 = scalar_lea.vmem %s10, 2
        %v4135 = vld [vmem:[%s4134] sm:$0x1]
        %v4137 = vlaneseq
        %v4138 = vshrl.u32 %v4137, 7
        %v4139 = vsub.s32 0, %v4138
        %v4140 = vrot.slane %v4135, %v4139
        %v4150 = vunpack.c.l.b16 %v4126
        %v4151 = vunpack.c.l.b16 %v4127
        %v4152 = vunpack.c.l.b16 %v4128
        %v4153 = vunpack.c.l.b16 %v4129
        %v4154 = vunpack.c.l.b16 %v4130
        %v4155 = vunpack.c.l.b16 %v4131
        %v4156 = vunpack.c.l.b16 %v4132
        %v4157 = vunpack.c.l.b16 %v4133
        %v4158 = vpack.c.b16 %v4151, %v4150
        %v4159 = vpack.c.b16 %v4153, %v4152
        %v4160 = vpack.c.b16 %v4155, %v4154
        %v4161 = vpack.c.b16 %v4157, %v4156
        %4166 = vmatprep.subr.bf16.mxu0 0
        %4167 = vmatpush1.bf16.msra.mxu0 %v4158
        %4168 = vmatprep.subr.bf16.mxu0 0
        %4169 = vmatpush1.bf16.msra.mxu0 %v4159
        %4170 = vmatprep.subr.bf16.mxu0 0
        %4171 = vmatpush1.bf16.msra.mxu0 %v4160
        %4172 = vmatprep.subr.bf16.mxu0 0
        %4173 = vmatpush1.bf16.msra.mxu0 %v4161
        %4174 = vmatprep.subr.bf16.mxu0 0
        %4175 = vmatpush1.bf16.msra.mxu0 0
        %4176 = vmatprep.subr.bf16.mxu0 0
        %4177 = vmatpush1.bf16.msra.mxu0 0
        %4178 = vmatprep.subr.bf16.mxu0 0
        %4179 = vmatpush1.bf16.msra.mxu0 0
        %4180 = vmatprep.subr.bf16.mxu0 0
        %4181 = vmatpush1.bf16.msra.mxu0 0
        %4182 = vmatprep.subr.bf16.mxu0 0
        %4183 = vmatpush1.bf16.msra.mxu0 0
        %4184 = vmatprep.subr.bf16.mxu0 0
        %4185 = vmatpush1.bf16.msra.mxu0 0
        %4186 = vmatprep.subr.bf16.mxu0 0
        %4187 = vmatpush1.bf16.msra.mxu0 0
        %4188 = vmatprep.subr.bf16.mxu0 0
        %4189 = vmatpush1.bf16.msra.mxu0 0
        %4190 = vmatprep.subr.bf16.mxu0 0
        %4191 = vmatpush1.bf16.msra.mxu0 0
        %4192 = vmatprep.subr.bf16.mxu0 0
        %4193 = vmatpush1.bf16.msra.mxu0 0
        %4194 = vmatprep.subr.bf16.mxu0 0
        %4195 = vmatpush1.bf16.msra.mxu0 0
        %4196 = vmatprep.subr.bf16.mxu0 0
        %4197 = vmatpush1.bf16.msra.mxu0 0
        %4198 = vmatprep.mubr.bf16.mxu0 0
        %4199 = vmatmul.mubr.bf16.gmra.mrb[0].mxu0 %v3731
        %v4200 = vpop.f32.mrb[0].mxu0
        %v4201 = vadd.f32 %v4140, %v4200
        %v4202 = vpop.f32.mrb[0].mxu0
        %v4203 = vpop.f32.mrb[0].mxu0
        %v4204 = vadd.f32 %v4140, %v4203
        %v4205 = vpop.f32.mrb[0].mxu0
        %4206 = vdwg.mxu0
        %v4207 = vpack.c.bf16 %v4204, %v4201
        %v4209 = vcombine.high %v4207, %v4207
        %v4211 = vunpack.c.l.s4 1966171168
        %v4212 = vunpack.c.0.s8 %v4211
        %v4213 = vlaneseq
        %v4214 = vshrl.u32 %v4213, 7
        %v4215 = vsub.s32 %v4212, %v4214
        %v4216 = vrot.slane %v4207, %v4215
        %v4218 = vunpack.c.l.s4 1966171168
        %v4219 = vunpack.c.0.s8 %v4218
        %v4220 = vlaneseq
        %v4221 = vshrl.u32 %v4220, 7
        %v4222 = vsub.s32 %v4219, %v4221
        %v4223 = vrot.slane %v4209, %v4222
        %v4224 = vcombine.high %v4216, %v4216
        %v4225 = vcombine.high %v4223, %v4223
        %v4227 = vunpack.c.l.s4 1966171168
        %v4228 = vunpack.c.0.s8 %v4227
        %v4229 = vlaneseq
        %v4230 = vshrl.u32 %v4229, 7
        %v4231 = vsub.s32 %v4228, %v4230
        %v4232 = vrot.slane %v4216, %v4231
        %v4234 = vunpack.c.l.s4 1966171168
        %v4235 = vunpack.c.0.s8 %v4234
        %v4236 = vlaneseq
        %v4237 = vshrl.u32 %v4236, 7
        %v4238 = vsub.s32 %v4235, %v4237
        %v4239 = vrot.slane %v4223, %v4238
        %v4241 = vunpack.c.l.s4 1966171168
        %v4242 = vunpack.c.0.s8 %v4241
        %v4243 = vlaneseq
        %v4244 = vshrl.u32 %v4243, 7
        %v4245 = vsub.s32 %v4242, %v4244
        %v4246 = vrot.slane %v4224, %v4245
        %v4248 = vunpack.c.l.s4 1966171168
        %v4249 = vunpack.c.0.s8 %v4248
        %v4250 = vlaneseq
        %v4251 = vshrl.u32 %v4250, 7
        %v4252 = vsub.s32 %v4249, %v4251
        %v4253 = vrot.slane %v4225, %v4252
        %v4254 = vcombine.high %v4232, %v4232
        %v4255 = vcombine.high %v4239, %v4239
        %v4256 = vcombine.high %v4246, %v4246
        %v4257 = vcombine.high %v4253, %v4253
        %v4259 = vsel %vm743, %v3966, 0
        %v4262 = vsel %vm743, %v4099, 0
        %4264 = vmatprep.subr.bf16.mxu0 0
        %4265 = vmatpush1.bf16.xpose.msra.mxu0 %v4262
        %4266 = vmatprep.subr.bf16.mxu0 0
        %4267 = vmatpush1.bf16.xpose.msra.mxu0 0
        %4268 = vmatprep.subr.bf16.mxu0 0
        %4269 = vmatpush1.bf16.xpose.msra.mxu0 0
        %4270 = vmatprep.subr.bf16.mxu0 0
        %4271 = vmatpush1.bf16.xpose.msra.mxu0 0
        %4272 = vmatprep.subr.bf16.mxu0 0
        %4273 = vmatpush1.bf16.xpose.msra.mxu0 0
        %4274 = vmatprep.subr.bf16.mxu0 0
        %4275 = vmatpush1.bf16.xpose.msra.mxu0 0
        %4276 = vmatprep.subr.bf16.mxu0 0
        %4277 = vmatpush1.bf16.xpose.msra.mxu0 0
        %4278 = vmatprep.subr.bf16.mxu0 0
        %4279 = vmatpush1.bf16.xpose.msra.mxu0 0
        %4280 = vmatprep.subr.bf16.mxu0 0
        %4281 = vmatpush1.bf16.xpose.msra.mxu0 0
        %4282 = vmatprep.subr.bf16.mxu0 0
        %4283 = vmatpush1.bf16.xpose.msra.mxu0 0
        %4284 = vmatprep.subr.bf16.mxu0 0
        %4285 = vmatpush1.bf16.xpose.msra.mxu0 0
        %4286 = vmatprep.subr.bf16.mxu0 0
        %4287 = vmatpush1.bf16.xpose.msra.mxu0 0
        %4288 = vmatprep.subr.bf16.mxu0 0
        %4289 = vmatpush1.bf16.xpose.msra.mxu0 0
        %4290 = vmatprep.subr.bf16.mxu0 0
        %4291 = vmatpush1.bf16.xpose.msra.mxu0 0
        %4292 = vmatprep.subr.bf16.mxu0 0
        %4293 = vmatpush1.bf16.xpose.msra.mxu0 0
        %4294 = vmatprep.subr.bf16.mxu0 0
        %4295 = vmatpush1.bf16.xpose.msra.mxu0 0
        %4296 = vmatprep.mubr.bf16.mxu0 0
        %4297 = vmatmul.mubr.bf16.gmra.mrb[0].mxu0 %v4259
        %v4298 = vpop.f32.mrb[0].mxu0
        %v4299 = vadd.f32 0.0, %v4298
        %v4300 = vpop.f32.mrb[0].mxu0
        %v4301 = vpop.f32.mrb[0].mxu0
        %v4302 = vpop.f32.mrb[0].mxu0
        %4303 = vdwg.mxu0
        %v4305 = vsel %vm743, %v3980, 0
        %v4308 = vsel %vm743, %v4113, 0
        %4310 = vmatprep.subr.bf16.mxu0 0
        %4311 = vmatpush1.bf16.xpose.msra.mxu0 %v4308
        %4312 = vmatprep.subr.bf16.mxu0 0
        %4313 = vmatpush1.bf16.xpose.msra.mxu0 0
        %4314 = vmatprep.subr.bf16.mxu0 0
        %4315 = vmatpush1.bf16.xpose.msra.mxu0 0
        %4316 = vmatprep.subr.bf16.mxu0 0
        %4317 = vmatpush1.bf16.xpose.msra.mxu0 0
        %4318 = vmatprep.subr.bf16.mxu0 0
        %4319 = vmatpush1.bf16.xpose.msra.mxu0 0
        %4320 = vmatprep.subr.bf16.mxu0 0
        %4321 = vmatpush1.bf16.xpose.msra.mxu0 0
        %4322 = vmatprep.subr.bf16.mxu0 0
        %4323 = vmatpush1.bf16.xpose.msra.mxu0 0
        %4324 = vmatprep.subr.bf16.mxu0 0
        %4325 = vmatpush1.bf16.xpose.msra.mxu0 0
        %4326 = vmatprep.subr.bf16.mxu0 0
        %4327 = vmatpush1.bf16.xpose.msra.mxu0 0
        %4328 = vmatprep.subr.bf16.mxu0 0
        %4329 = vmatpush1.bf16.xpose.msra.mxu0 0
        %4330 = vmatprep.subr.bf16.mxu0 0
        %4331 = vmatpush1.bf16.xpose.msra.mxu0 0
        %4332 = vmatprep.subr.bf16.mxu0 0
        %4333 = vmatpush1.bf16.xpose.msra.mxu0 0
        %4334 = vmatprep.subr.bf16.mxu0 0
        %4335 = vmatpush1.bf16.xpose.msra.mxu0 0
        %4336 = vmatprep.subr.bf16.mxu0 0
        %4337 = vmatpush1.bf16.xpose.msra.mxu0 0
        %4338 = vmatprep.subr.bf16.mxu0 0
        %4339 = vmatpush1.bf16.xpose.msra.mxu0 0
        %4340 = vmatprep.subr.bf16.mxu0 0
        %4341 = vmatpush1.bf16.xpose.msra.mxu0 0
        %4342 = vmatprep.mubr.bf16.mxu0 0
        %4343 = vmatmul.mubr.bf16.gmra.mrb[0].mxu0 %v4305
        %v4344 = vpop.f32.mrb[0].mxu0
        %v4345 = vadd.f32 0.0, %v4344
        %v4346 = vpop.f32.mrb[0].mxu0
        %v4347 = vpop.f32.mrb[0].mxu0
        %v4348 = vpop.f32.mrb[0].mxu0
        %4349 = vdwg.mxu0
        %v4351 = vsel %vm743, %v3988, 0
        %v4354 = vsel %vm743, %v4121, 0
        %4356 = vmatprep.subr.bf16.mxu0 0
        %4357 = vmatpush1.bf16.xpose.msra.mxu0 %v4354
        %4358 = vmatprep.subr.bf16.mxu0 0
        %4359 = vmatpush1.bf16.xpose.msra.mxu0 0
        %4360 = vmatprep.subr.bf16.mxu0 0
        %4361 = vmatpush1.bf16.xpose.msra.mxu0 0
        %4362 = vmatprep.subr.bf16.mxu0 0
        %4363 = vmatpush1.bf16.xpose.msra.mxu0 0
        %4364 = vmatprep.subr.bf16.mxu0 0
        %4365 = vmatpush1.bf16.xpose.msra.mxu0 0
        %4366 = vmatprep.subr.bf16.mxu0 0
        %4367 = vmatpush1.bf16.xpose.msra.mxu0 0
        %4368 = vmatprep.subr.bf16.mxu0 0
        %4369 = vmatpush1.bf16.xpose.msra.mxu0 0
        %4370 = vmatprep.subr.bf16.mxu0 0
        %4371 = vmatpush1.bf16.xpose.msra.mxu0 0
        %4372 = vmatprep.subr.bf16.mxu0 0
        %4373 = vmatpush1.bf16.xpose.msra.mxu0 0
        %4374 = vmatprep.subr.bf16.mxu0 0
        %4375 = vmatpush1.bf16.xpose.msra.mxu0 0
        %4376 = vmatprep.subr.bf16.mxu0 0
        %4377 = vmatpush1.bf16.xpose.msra.mxu0 0
        %4378 = vmatprep.subr.bf16.mxu0 0
        %4379 = vmatpush1.bf16.xpose.msra.mxu0 0
        %4380 = vmatprep.subr.bf16.mxu0 0
        %4381 = vmatpush1.bf16.xpose.msra.mxu0 0
        %4382 = vmatprep.subr.bf16.mxu0 0
        %4383 = vmatpush1.bf16.xpose.msra.mxu0 0
        %4384 = vmatprep.subr.bf16.mxu0 0
        %4385 = vmatpush1.bf16.xpose.msra.mxu0 0
        %4386 = vmatprep.subr.bf16.mxu0 0
        %4387 = vmatpush1.bf16.xpose.msra.mxu0 0
        %4388 = vmatprep.mubr.bf16.mxu0 0
        %4389 = vmatmul.mubr.bf16.gmra.mrb[0].mxu0 %v4351
        %v4390 = vpop.f32.mrb[0].mxu0
        %v4391 = vadd.f32 0.0, %v4390
        %v4392 = vpop.f32.mrb[0].mxu0
        %v4393 = vpop.f32.mrb[0].mxu0
        %v4394 = vpop.f32.mrb[0].mxu0
        %4395 = vdwg.mxu0
        %v4397 = vsel %vm743, %v3990, 0
        %v4400 = vsel %vm743, %v4123, 0
        %4402 = vmatprep.subr.bf16.mxu0 0
        %4403 = vmatpush1.bf16.xpose.msra.mxu0 %v4400
        %4404 = vmatprep.subr.bf16.mxu0 0
        %4405 = vmatpush1.bf16.xpose.msra.mxu0 0
        %4406 = vmatprep.subr.bf16.mxu0 0
        %4407 = vmatpush1.bf16.xpose.msra.mxu0 0
        %4408 = vmatprep.subr.bf16.mxu0 0
        %4409 = vmatpush1.bf16.xpose.msra.mxu0 0
        %4410 = vmatprep.subr.bf16.mxu0 0
        %4411 = vmatpush1.bf16.xpose.msra.mxu0 0
        %4412 = vmatprep.subr.bf16.mxu0 0
        %4413 = vmatpush1.bf16.xpose.msra.mxu0 0
        %4414 = vmatprep.subr.bf16.mxu0 0
        %4415 = vmatpush1.bf16.xpose.msra.mxu0 0
        %4416 = vmatprep.subr.bf16.mxu0 0
        %4417 = vmatpush1.bf16.xpose.msra.mxu0 0
        %4418 = vmatprep.subr.bf16.mxu0 0
        %4419 = vmatpush1.bf16.xpose.msra.mxu0 0
        %4420 = vmatprep.subr.bf16.mxu0 0
        %4421 = vmatpush1.bf16.xpose.msra.mxu0 0
        %4422 = vmatprep.subr.bf16.mxu0 0
        %4423 = vmatpush1.bf16.xpose.msra.mxu0 0
        %4424 = vmatprep.subr.bf16.mxu0 0
        %4425 = vmatpush1.bf16.xpose.msra.mxu0 0
        %4426 = vmatprep.subr.bf16.mxu0 0
        %4427 = vmatpush1.bf16.xpose.msra.mxu0 0
        %4428 = vmatprep.subr.bf16.mxu0 0
        %4429 = vmatpush1.bf16.xpose.msra.mxu0 0
        %4430 = vmatprep.subr.bf16.mxu0 0
        %4431 = vmatpush1.bf16.xpose.msra.mxu0 0
        %4432 = vmatprep.subr.bf16.mxu0 0
        %4433 = vmatpush1.bf16.xpose.msra.mxu0 0
        %4434 = vmatprep.mubr.bf16.mxu0 0
        %4435 = vmatmul.mubr.bf16.gmra.mrb[0].mxu0 %v4397
        %v4436 = vpop.f32.mrb[0].mxu0
        %v4437 = vadd.f32 0.0, %v4436
        %v4438 = vpop.f32.mrb[0].mxu0
        %v4439 = vpop.f32.mrb[0].mxu0
        %v4440 = vpop.f32.mrb[0].mxu0
        %4441 = vdwg.mxu0
        %v4443 = vsel %vm743, %v3973, 0
        %v4446 = vsel %vm743, %v4106, 0
        %4448 = vmatprep.subr.bf16.mxu0 0
        %4449 = vmatpush1.bf16.xpose.msra.mxu0 %v4446
        %4450 = vmatprep.subr.bf16.mxu0 0
        %4451 = vmatpush1.bf16.xpose.msra.mxu0 0
        %4452 = vmatprep.subr.bf16.mxu0 0
        %4453 = vmatpush1.bf16.xpose.msra.mxu0 0
        %4454 = vmatprep.subr.bf16.mxu0 0
        %4455 = vmatpush1.bf16.xpose.msra.mxu0 0
        %4456 = vmatprep.subr.bf16.mxu0 0
        %4457 = vmatpush1.bf16.xpose.msra.mxu0 0
        %4458 = vmatprep.subr.bf16.mxu0 0
        %4459 = vmatpush1.bf16.xpose.msra.mxu0 0
        %4460 = vmatprep.subr.bf16.mxu0 0
        %4461 = vmatpush1.bf16.xpose.msra.mxu0 0
        %4462 = vmatprep.subr.bf16.mxu0 0
        %4463 = vmatpush1.bf16.xpose.msra.mxu0 0
        %4464 = vmatprep.subr.bf16.mxu0 0
        %4465 = vmatpush1.bf16.xpose.msra.mxu0 0
        %4466 = vmatprep.subr.bf16.mxu0 0
        %4467 = vmatpush1.bf16.xpose.msra.mxu0 0
        %4468 = vmatprep.subr.bf16.mxu0 0
        %4469 = vmatpush1.bf16.xpose.msra.mxu0 0
        %4470 = vmatprep.subr.bf16.mxu0 0
        %4471 = vmatpush1.bf16.xpose.msra.mxu0 0
        %4472 = vmatprep.subr.bf16.mxu0 0
        %4473 = vmatpush1.bf16.xpose.msra.mxu0 0
        %4474 = vmatprep.subr.bf16.mxu0 0
        %4475 = vmatpush1.bf16.xpose.msra.mxu0 0
        %4476 = vmatprep.subr.bf16.mxu0 0
        %4477 = vmatpush1.bf16.xpose.msra.mxu0 0
        %4478 = vmatprep.subr.bf16.mxu0 0
        %4479 = vmatpush1.bf16.xpose.msra.mxu0 0
        %4480 = vmatprep.mubr.bf16.mxu0 0
        %4481 = vmatmul.mubr.bf16.gmra.mrb[0].mxu0 %v4443
        %v4482 = vpop.f32.mrb[0].mxu0
        %v4483 = vadd.f32 0.0, %v4482
        %v4484 = vpop.f32.mrb[0].mxu0
        %v4485 = vpop.f32.mrb[0].mxu0
        %v4486 = vpop.f32.mrb[0].mxu0
        %4487 = vdwg.mxu0
        %v4489 = vsel %vm743, %v3987, 0
        %v4492 = vsel %vm743, %v4120, 0
        %4494 = vmatprep.subr.bf16.mxu0 0
        %4495 = vmatpush1.bf16.xpose.msra.mxu0 %v4492
        %4496 = vmatprep.subr.bf16.mxu0 0
        %4497 = vmatpush1.bf16.xpose.msra.mxu0 0
        %4498 = vmatprep.subr.bf16.mxu0 0
        %4499 = vmatpush1.bf16.xpose.msra.mxu0 0
        %4500 = vmatprep.subr.bf16.mxu0 0
        %4501 = vmatpush1.bf16.xpose.msra.mxu0 0
        %4502 = vmatprep.subr.bf16.mxu0 0
        %4503 = vmatpush1.bf16.xpose.msra.mxu0 0
        %4504 = vmatprep.subr.bf16.mxu0 0
        %4505 = vmatpush1.bf16.xpose.msra.mxu0 0
        %4506 = vmatprep.subr.bf16.mxu0 0
        %4507 = vmatpush1.bf16.xpose.msra.mxu0 0
        %4508 = vmatprep.subr.bf16.mxu0 0
        %4509 = vmatpush1.bf16.xpose.msra.mxu0 0
        %4510 = vmatprep.subr.bf16.mxu0 0
        %4511 = vmatpush1.bf16.xpose.msra.mxu0 0
        %4512 = vmatprep.subr.bf16.mxu0 0
        %4513 = vmatpush1.bf16.xpose.msra.mxu0 0
        %4514 = vmatprep.subr.bf16.mxu0 0
        %4515 = vmatpush1.bf16.xpose.msra.mxu0 0
        %4516 = vmatprep.subr.bf16.mxu0 0
        %4517 = vmatpush1.bf16.xpose.msra.mxu0 0
        %4518 = vmatprep.subr.bf16.mxu0 0
        %4519 = vmatpush1.bf16.xpose.msra.mxu0 0
        %4520 = vmatprep.subr.bf16.mxu0 0
        %4521 = vmatpush1.bf16.xpose.msra.mxu0 0
        %4522 = vmatprep.subr.bf16.mxu0 0
        %4523 = vmatpush1.bf16.xpose.msra.mxu0 0
        %4524 = vmatprep.subr.bf16.mxu0 0
        %4525 = vmatpush1.bf16.xpose.msra.mxu0 0
        %4526 = vmatprep.mubr.bf16.mxu0 0
        %4527 = vmatmul.mubr.bf16.gmra.mrb[0].mxu0 %v4489
        %v4528 = vpop.f32.mrb[0].mxu0
        %v4529 = vadd.f32 0.0, %v4528
        %v4530 = vpop.f32.mrb[0].mxu0
        %v4531 = vpop.f32.mrb[0].mxu0
        %v4532 = vpop.f32.mrb[0].mxu0
        %4533 = vdwg.mxu0
        %v4535 = vsel %vm743, %v3989, 0
        %v4538 = vsel %vm743, %v4122, 0
        %4540 = vmatprep.subr.bf16.mxu0 0
        %4541 = vmatpush1.bf16.xpose.msra.mxu0 %v4538
        %4542 = vmatprep.subr.bf16.mxu0 0
        %4543 = vmatpush1.bf16.xpose.msra.mxu0 0
        %4544 = vmatprep.subr.bf16.mxu0 0
        %4545 = vmatpush1.bf16.xpose.msra.mxu0 0
        %4546 = vmatprep.subr.bf16.mxu0 0
        %4547 = vmatpush1.bf16.xpose.msra.mxu0 0
        %4548 = vmatprep.subr.bf16.mxu0 0
        %4549 = vmatpush1.bf16.xpose.msra.mxu0 0
        %4550 = vmatprep.subr.bf16.mxu0 0
        %4551 = vmatpush1.bf16.xpose.msra.mxu0 0
        %4552 = vmatprep.subr.bf16.mxu0 0
        %4553 = vmatpush1.bf16.xpose.msra.mxu0 0
        %4554 = vmatprep.subr.bf16.mxu0 0
        %4555 = vmatpush1.bf16.xpose.msra.mxu0 0
        %4556 = vmatprep.subr.bf16.mxu0 0
        %4557 = vmatpush1.bf16.xpose.msra.mxu0 0
        %4558 = vmatprep.subr.bf16.mxu0 0
        %4559 = vmatpush1.bf16.xpose.msra.mxu0 0
        %4560 = vmatprep.subr.bf16.mxu0 0
        %4561 = vmatpush1.bf16.xpose.msra.mxu0 0
        %4562 = vmatprep.subr.bf16.mxu0 0
        %4563 = vmatpush1.bf16.xpose.msra.mxu0 0
        %4564 = vmatprep.subr.bf16.mxu0 0
        %4565 = vmatpush1.bf16.xpose.msra.mxu0 0
        %4566 = vmatprep.subr.bf16.mxu0 0
        %4567 = vmatpush1.bf16.xpose.msra.mxu0 0
        %4568 = vmatprep.subr.bf16.mxu0 0
        %4569 = vmatpush1.bf16.xpose.msra.mxu0 0
        %4570 = vmatprep.subr.bf16.mxu0 0
        %4571 = vmatpush1.bf16.xpose.msra.mxu0 0
        %4572 = vmatprep.mubr.bf16.mxu0 0
        %4573 = vmatmul.mubr.bf16.gmra.mrb[0].mxu0 %v4535
        %v4574 = vpop.f32.mrb[0].mxu0
        %v4575 = vadd.f32 0.0, %v4574
        %v4576 = vpop.f32.mrb[0].mxu0
        %v4577 = vpop.f32.mrb[0].mxu0
        %v4578 = vpop.f32.mrb[0].mxu0
        %4579 = vdwg.mxu0
        %v4581 = vsel %vm743, %v3991, 0
        %v4584 = vsel %vm743, %v4124, 0
        %4586 = vmatprep.subr.bf16.mxu0 0
        %4587 = vmatpush1.bf16.xpose.msra.mxu0 %v4584
        %4588 = vmatprep.subr.bf16.mxu0 0
        %4589 = vmatpush1.bf16.xpose.msra.mxu0 0
        %4590 = vmatprep.subr.bf16.mxu0 0
        %4591 = vmatpush1.bf16.xpose.msra.mxu0 0
        %4592 = vmatprep.subr.bf16.mxu0 0
        %4593 = vmatpush1.bf16.xpose.msra.mxu0 0
        %4594 = vmatprep.subr.bf16.mxu0 0
        %4595 = vmatpush1.bf16.xpose.msra.mxu0 0
        %4596 = vmatprep.subr.bf16.mxu0 0
        %4597 = vmatpush1.bf16.xpose.msra.mxu0 0
        %4598 = vmatprep.subr.bf16.mxu0 0
        %4599 = vmatpush1.bf16.xpose.msra.mxu0 0
        %4600 = vmatprep.subr.bf16.mxu0 0
        %4601 = vmatpush1.bf16.xpose.msra.mxu0 0
        %4602 = vmatprep.subr.bf16.mxu0 0
        %4603 = vmatpush1.bf16.xpose.msra.mxu0 0
        %4604 = vmatprep.subr.bf16.mxu0 0
        %4605 = vmatpush1.bf16.xpose.msra.mxu0 0
        %4606 = vmatprep.subr.bf16.mxu0 0
        %4607 = vmatpush1.bf16.xpose.msra.mxu0 0
        %4608 = vmatprep.subr.bf16.mxu0 0
        %4609 = vmatpush1.bf16.xpose.msra.mxu0 0
        %4610 = vmatprep.subr.bf16.mxu0 0
        %4611 = vmatpush1.bf16.xpose.msra.mxu0 0
        %4612 = vmatprep.subr.bf16.mxu0 0
        %4613 = vmatpush1.bf16.xpose.msra.mxu0 0
        %4614 = vmatprep.subr.bf16.mxu0 0
        %4615 = vmatpush1.bf16.xpose.msra.mxu0 0
        %4616 = vmatprep.subr.bf16.mxu0 0
        %4617 = vmatpush1.bf16.xpose.msra.mxu0 0
        %4618 = vmatprep.mubr.bf16.mxu0 0
        %4619 = vmatmul.mubr.bf16.gmra.mrb[0].mxu0 %v4581
        %v4620 = vpop.f32.mrb[0].mxu0
        %v4621 = vadd.f32 0.0, %v4620
        %v4622 = vpop.f32.mrb[0].mxu0
        %v4623 = vpop.f32.mrb[0].mxu0
        %v4624 = vpop.f32.mrb[0].mxu0
        %4625 = vdwg.mxu0
        %v4626 = vsel %vm1673, %v4299, -inf
        %4627 = vmax.xlane.f32.xlu0 %v4626
        %v4628 = vpop.xlane.xlu0 %4627
        %v4629 = vsel %vm1673, %v4345, -inf
        %4630 = vmax.xlane.f32.xlu0 %v4629
        %v4631 = vpop.xlane.xlu0 %4630
        %v4632 = vsel %vm1673, %v4391, -inf
        %4633 = vmax.xlane.f32.xlu0 %v4632
        %v4634 = vpop.xlane.xlu0 %4633
        %v4635 = vsel %vm1673, %v4437, -inf
        %4636 = vmax.xlane.f32.xlu0 %v4635
        %v4637 = vpop.xlane.xlu0 %4636
        %v4638 = vsel %vm1673, %v4483, -inf
        %4639 = vmax.xlane.f32.xlu0 %v4638
        %v4640 = vpop.xlane.xlu0 %4639
        %v4641 = vsel %vm1673, %v4529, -inf
        %4642 = vmax.xlane.f32.xlu0 %v4641
        %v4643 = vpop.xlane.xlu0 %4642
        %v4644 = vsel %vm1673, %v4575, -inf
        %4645 = vmax.xlane.f32.xlu0 %v4644
        %v4646 = vpop.xlane.xlu0 %4645
        %v4647 = vsel %vm1673, %v4621, -inf
        %4648 = vmax.xlane.f32.xlu0 %v4647
        %v4649 = vpop.xlane.xlu0 %4648
        %v4650 = vsub.f32 %v4299, %v4628
        %v4651 = vsub.f32 %v4345, %v4631
        %v4652 = vsub.f32 %v4391, %v4634
        %v4653 = vsub.f32 %v4437, %v4637
        %v4654 = vsub.f32 %v4483, %v4640
        %v4655 = vsub.f32 %v4529, %v4643
        %v4656 = vsub.f32 %v4575, %v4646
        %v4657 = vsub.f32 %v4621, %v4649
        %v4658 = vmul.f32 %v4650, 1.442695
        %v4659 = vpow.pop %v4658
        %v4660 = vmul.f32 %v4651, 1.442695
        %v4661 = vpow.pop %v4660
        %v4662 = vmul.f32 %v4652, 1.442695
        %v4663 = vpow.pop %v4662
        %v4664 = vmul.f32 %v4653, 1.442695
        %v4665 = vpow.pop %v4664
        %v4666 = vmul.f32 %v4654, 1.442695
        %v4667 = vpow.pop %v4666
        %v4668 = vmul.f32 %v4655, 1.442695
        %v4669 = vpow.pop %v4668
        %v4670 = vmul.f32 %v4656, 1.442695
        %v4671 = vpow.pop %v4670
        %v4672 = vmul.f32 %v4657, 1.442695
        %v4673 = vpow.pop %v4672
        %v4674 = vsel %vm1673, %v4659, 0.0
        %4675 = vadd.xlane.f32.xlu0 %v4674
        %v4676 = vpop.xlane.xlu0 %4675
        %v4677 = vsel %vm1673, %v4661, 0.0
        %4678 = vadd.xlane.f32.xlu0 %v4677
        %v4679 = vpop.xlane.xlu0 %4678
        %v4680 = vsel %vm1673, %v4663, 0.0
        %4681 = vadd.xlane.f32.xlu0 %v4680
        %v4682 = vpop.xlane.xlu0 %4681
        %v4683 = vsel %vm1673, %v4665, 0.0
        %4684 = vadd.xlane.f32.xlu0 %v4683
        %v4685 = vpop.xlane.xlu0 %4684
        %v4686 = vsel %vm1673, %v4667, 0.0
        %4687 = vadd.xlane.f32.xlu0 %v4686
        %v4688 = vpop.xlane.xlu0 %4687
        %v4689 = vsel %vm1673, %v4669, 0.0
        %4690 = vadd.xlane.f32.xlu0 %v4689
        %v4691 = vpop.xlane.xlu0 %4690
        %v4692 = vsel %vm1673, %v4671, 0.0
        %4693 = vadd.xlane.f32.xlu0 %v4692
        %v4694 = vpop.xlane.xlu0 %4693
        %v4695 = vsel %vm1673, %v4673, 0.0
        %4696 = vadd.xlane.f32.xlu0 %v4695
        %v4697 = vpop.xlane.xlu0 %4696
        %v4698 = vrcp.pop %v4676
        %v4699 = vmul.f32 %v4659, %v4698
        %v4700 = vrcp.pop %v4679
        %v4701 = vmul.f32 %v4661, %v4700
        %v4702 = vrcp.pop %v4682
        %v4703 = vmul.f32 %v4663, %v4702
        %v4704 = vrcp.pop %v4685
        %v4705 = vmul.f32 %v4665, %v4704
        %v4706 = vrcp.pop %v4688
        %v4707 = vmul.f32 %v4667, %v4706
        %v4708 = vrcp.pop %v4691
        %v4709 = vmul.f32 %v4669, %v4708
        %v4710 = vrcp.pop %v4694
        %v4711 = vmul.f32 %v4671, %v4710
        %v4712 = vrcp.pop %v4697
        %v4713 = vmul.f32 %v4673, %v4712
        %v4714 = vpack.c.bf16 %v4699, %v4699
        %v4715 = vpack.c.bf16 %v4701, %v4701
        %v4716 = vpack.c.bf16 %v4703, %v4703
        %v4717 = vpack.c.bf16 %v4705, %v4705
        %v4718 = vpack.c.bf16 %v4707, %v4707
        %v4719 = vpack.c.bf16 %v4709, %v4709
        %v4720 = vpack.c.bf16 %v4711, %v4711
        %v4721 = vpack.c.bf16 %v4713, %v4713
        %v4723 = vsel %vm1770, %v4714, 0
        %v4726 = vsel %vm653, %v4232, 0
        %4728 = vmatprep.subr.bf16.mxu0 0
        %4729 = vmatpush1.bf16.msra.mxu0 %v4726
        %4730 = vmatprep.subr.bf16.mxu0 0
        %4731 = vmatpush1.bf16.msra.mxu0 0
        %4732 = vmatprep.subr.bf16.mxu0 0
        %4733 = vmatpush1.bf16.msra.mxu0 0
        %4734 = vmatprep.subr.bf16.mxu0 0
        %4735 = vmatpush1.bf16.msra.mxu0 0
        %4736 = vmatprep.subr.bf16.mxu0 0
        %4737 = vmatpush1.bf16.msra.mxu0 0
        %4738 = vmatprep.subr.bf16.mxu0 0
        %4739 = vmatpush1.bf16.msra.mxu0 0
        %4740 = vmatprep.subr.bf16.mxu0 0
        %4741 = vmatpush1.bf16.msra.mxu0 0
        %4742 = vmatprep.subr.bf16.mxu0 0
        %4743 = vmatpush1.bf16.msra.mxu0 0
        %4744 = vmatprep.subr.bf16.mxu0 0
        %4745 = vmatpush1.bf16.msra.mxu0 0
        %4746 = vmatprep.subr.bf16.mxu0 0
        %4747 = vmatpush1.bf16.msra.mxu0 0
        %4748 = vmatprep.subr.bf16.mxu0 0
        %4749 = vmatpush1.bf16.msra.mxu0 0
        %4750 = vmatprep.subr.bf16.mxu0 0
        %4751 = vmatpush1.bf16.msra.mxu0 0
        %4752 = vmatprep.subr.bf16.mxu0 0
        %4753 = vmatpush1.bf16.msra.mxu0 0
        %4754 = vmatprep.subr.bf16.mxu0 0
        %4755 = vmatpush1.bf16.msra.mxu0 0
        %4756 = vmatprep.subr.bf16.mxu0 0
        %4757 = vmatpush1.bf16.msra.mxu0 0
        %4758 = vmatprep.subr.bf16.mxu0 0
        %4759 = vmatpush1.bf16.msra.mxu0 0
        %4760 = vmatprep.mubr.bf16.mxu0 0
        %4761 = vmatmul.mubr.bf16.gmra.mrb[0].mxu0 %v4723
        %v4762 = vpop.f32.mrb[0].mxu0
        %v4763 = vadd.f32 0.0, %v4762
        %v4764 = vpop.f32.mrb[0].mxu0
        %v4765 = vpop.f32.mrb[0].mxu0
        %v4766 = vpop.f32.mrb[0].mxu0
        %4767 = vdwg.mxu0
        %v4769 = vsel %vm1770, %v4715, 0
        %v4772 = vsel %vm653, %v4246, 0
        %4774 = vmatprep.subr.bf16.mxu0 0
        %4775 = vmatpush1.bf16.msra.mxu0 %v4772
        %4776 = vmatprep.subr.bf16.mxu0 0
        %4777 = vmatpush1.bf16.msra.mxu0 0
        %4778 = vmatprep.subr.bf16.mxu0 0
        %4779 = vmatpush1.bf16.msra.mxu0 0
        %4780 = vmatprep.subr.bf16.mxu0 0
        %4781 = vmatpush1.bf16.msra.mxu0 0
        %4782 = vmatprep.subr.bf16.mxu0 0
        %4783 = vmatpush1.bf16.msra.mxu0 0
        %4784 = vmatprep.subr.bf16.mxu0 0
        %4785 = vmatpush1.bf16.msra.mxu0 0
        %4786 = vmatprep.subr.bf16.mxu0 0
        %4787 = vmatpush1.bf16.msra.mxu0 0
        %4788 = vmatprep.subr.bf16.mxu0 0
        %4789 = vmatpush1.bf16.msra.mxu0 0
        %4790 = vmatprep.subr.bf16.mxu0 0
        %4791 = vmatpush1.bf16.msra.mxu0 0
        %4792 = vmatprep.subr.bf16.mxu0 0
        %4793 = vmatpush1.bf16.msra.mxu0 0
        %4794 = vmatprep.subr.bf16.mxu0 0
        %4795 = vmatpush1.bf16.msra.mxu0 0
        %4796 = vmatprep.subr.bf16.mxu0 0
        %4797 = vmatpush1.bf16.msra.mxu0 0
        %4798 = vmatprep.subr.bf16.mxu0 0
        %4799 = vmatpush1.bf16.msra.mxu0 0
        %4800 = vmatprep.subr.bf16.mxu0 0
        %4801 = vmatpush1.bf16.msra.mxu0 0
        %4802 = vmatprep.subr.bf16.mxu0 0
        %4803 = vmatpush1.bf16.msra.mxu0 0
        %4804 = vmatprep.subr.bf16.mxu0 0
        %4805 = vmatpush1.bf16.msra.mxu0 0
        %4806 = vmatprep.mubr.bf16.mxu0 0
        %4807 = vmatmul.mubr.bf16.gmra.mrb[0].mxu0 %v4769
        %v4808 = vpop.f32.mrb[0].mxu0
        %v4809 = vadd.f32 0.0, %v4808
        %v4810 = vpop.f32.mrb[0].mxu0
        %v4811 = vpop.f32.mrb[0].mxu0
        %v4812 = vpop.f32.mrb[0].mxu0
        %4813 = vdwg.mxu0
        %v4815 = vsel %vm1770, %v4716, 0
        %v4818 = vsel %vm653, %v4254, 0
        %4820 = vmatprep.subr.bf16.mxu0 0
        %4821 = vmatpush1.bf16.msra.mxu0 %v4818
        %4822 = vmatprep.subr.bf16.mxu0 0
        %4823 = vmatpush1.bf16.msra.mxu0 0
        %4824 = vmatprep.subr.bf16.mxu0 0
        %4825 = vmatpush1.bf16.msra.mxu0 0
        %4826 = vmatprep.subr.bf16.mxu0 0
        %4827 = vmatpush1.bf16.msra.mxu0 0
        %4828 = vmatprep.subr.bf16.mxu0 0
        %4829 = vmatpush1.bf16.msra.mxu0 0
        %4830 = vmatprep.subr.bf16.mxu0 0
        %4831 = vmatpush1.bf16.msra.mxu0 0
        %4832 = vmatprep.subr.bf16.mxu0 0
        %4833 = vmatpush1.bf16.msra.mxu0 0
        %4834 = vmatprep.subr.bf16.mxu0 0
        %4835 = vmatpush1.bf16.msra.mxu0 0
        %4836 = vmatprep.subr.bf16.mxu0 0
        %4837 = vmatpush1.bf16.msra.mxu0 0
        %4838 = vmatprep.subr.bf16.mxu0 0
        %4839 = vmatpush1.bf16.msra.mxu0 0
        %4840 = vmatprep.subr.bf16.mxu0 0
        %4841 = vmatpush1.bf16.msra.mxu0 0
        %4842 = vmatprep.subr.bf16.mxu0 0
        %4843 = vmatpush1.bf16.msra.mxu0 0
        %4844 = vmatprep.subr.bf16.mxu0 0
        %4845 = vmatpush1.bf16.msra.mxu0 0
        %4846 = vmatprep.subr.bf16.mxu0 0
        %4847 = vmatpush1.bf16.msra.mxu0 0
        %4848 = vmatprep.subr.bf16.mxu0 0
        %4849 = vmatpush1.bf16.msra.mxu0 0
        %4850 = vmatprep.subr.bf16.mxu0 0
        %4851 = vmatpush1.bf16.msra.mxu0 0
        %4852 = vmatprep.mubr.bf16.mxu0 0
        %4853 = vmatmul.mubr.bf16.gmra.mrb[0].mxu0 %v4815
        %v4854 = vpop.f32.mrb[0].mxu0
        %v4855 = vadd.f32 0.0, %v4854
        %v4856 = vpop.f32.mrb[0].mxu0
        %v4857 = vpop.f32.mrb[0].mxu0
        %v4858 = vpop.f32.mrb[0].mxu0
        %4859 = vdwg.mxu0
        %v4861 = vsel %vm1770, %v4717, 0
        %v4864 = vsel %vm653, %v4256, 0
        %4866 = vmatprep.subr.bf16.mxu0 0
        %4867 = vmatpush1.bf16.msra.mxu0 %v4864
        %4868 = vmatprep.subr.bf16.mxu0 0
        %4869 = vmatpush1.bf16.msra.mxu0 0
        %4870 = vmatprep.subr.bf16.mxu0 0
        %4871 = vmatpush1.bf16.msra.mxu0 0
        %4872 = vmatprep.subr.bf16.mxu0 0
        %4873 = vmatpush1.bf16.msra.mxu0 0
        %4874 = vmatprep.subr.bf16.mxu0 0
        %4875 = vmatpush1.bf16.msra.mxu0 0
        %4876 = vmatprep.subr.bf16.mxu0 0
        %4877 = vmatpush1.bf16.msra.mxu0 0
        %4878 = vmatprep.subr.bf16.mxu0 0
        %4879 = vmatpush1.bf16.msra.mxu0 0
        %4880 = vmatprep.subr.bf16.mxu0 0
        %4881 = vmatpush1.bf16.msra.mxu0 0
        %4882 = vmatprep.subr.bf16.mxu0 0
        %4883 = vmatpush1.bf16.msra.mxu0 0
        %4884 = vmatprep.subr.bf16.mxu0 0
        %4885 = vmatpush1.bf16.msra.mxu0 0
        %4886 = vmatprep.subr.bf16.mxu0 0
        %4887 = vmatpush1.bf16.msra.mxu0 0
        %4888 = vmatprep.subr.bf16.mxu0 0
        %4889 = vmatpush1.bf16.msra.mxu0 0
        %4890 = vmatprep.subr.bf16.mxu0 0
        %4891 = vmatpush1.bf16.msra.mxu0 0
        %4892 = vmatprep.subr.bf16.mxu0 0
        %4893 = vmatpush1.bf16.msra.mxu0 0
        %4894 = vmatprep.subr.bf16.mxu0 0
        %4895 = vmatpush1.bf16.msra.mxu0 0
        %4896 = vmatprep.subr.bf16.mxu0 0
        %4897 = vmatpush1.bf16.msra.mxu0 0
        %4898 = vmatprep.mubr.bf16.mxu0 0
        %4899 = vmatmul.mubr.bf16.gmra.mrb[0].mxu0 %v4861
        %v4900 = vpop.f32.mrb[0].mxu0
        %v4901 = vadd.f32 0.0, %v4900
        %v4902 = vpop.f32.mrb[0].mxu0
        %v4903 = vpop.f32.mrb[0].mxu0
        %v4904 = vpop.f32.mrb[0].mxu0
        %4905 = vdwg.mxu0
        %v4907 = vsel %vm1770, %v4718, 0
        %v4910 = vsel %vm653, %v4239, 0
        %4912 = vmatprep.subr.bf16.mxu0 0
        %4913 = vmatpush1.bf16.msra.mxu0 %v4910
        %4914 = vmatprep.subr.bf16.mxu0 0
        %4915 = vmatpush1.bf16.msra.mxu0 0
        %4916 = vmatprep.subr.bf16.mxu0 0
        %4917 = vmatpush1.bf16.msra.mxu0 0
        %4918 = vmatprep.subr.bf16.mxu0 0
        %4919 = vmatpush1.bf16.msra.mxu0 0
        %4920 = vmatprep.subr.bf16.mxu0 0
        %4921 = vmatpush1.bf16.msra.mxu0 0
        %4922 = vmatprep.subr.bf16.mxu0 0
        %4923 = vmatpush1.bf16.msra.mxu0 0
        %4924 = vmatprep.subr.bf16.mxu0 0
        %4925 = vmatpush1.bf16.msra.mxu0 0
        %4926 = vmatprep.subr.bf16.mxu0 0
        %4927 = vmatpush1.bf16.msra.mxu0 0
        %4928 = vmatprep.subr.bf16.mxu0 0
        %4929 = vmatpush1.bf16.msra.mxu0 0
        %4930 = vmatprep.subr.bf16.mxu0 0
        %4931 = vmatpush1.bf16.msra.mxu0 0
        %4932 = vmatprep.subr.bf16.mxu0 0
        %4933 = vmatpush1.bf16.msra.mxu0 0
        %4934 = vmatprep.subr.bf16.mxu0 0
        %4935 = vmatpush1.bf16.msra.mxu0 0
        %4936 = vmatprep.subr.bf16.mxu0 0
        %4937 = vmatpush1.bf16.msra.mxu0 0
        %4938 = vmatprep.subr.bf16.mxu0 0
        %4939 = vmatpush1.bf16.msra.mxu0 0
        %4940 = vmatprep.subr.bf16.mxu0 0
        %4941 = vmatpush1.bf16.msra.mxu0 0
        %4942 = vmatprep.subr.bf16.mxu0 0
        %4943 = vmatpush1.bf16.msra.mxu0 0
        %4944 = vmatprep.mubr.bf16.mxu0 0
        %4945 = vmatmul.mubr.bf16.gmra.mrb[0].mxu0 %v4907
        %v4946 = vpop.f32.mrb[0].mxu0
        %v4947 = vadd.f32 0.0, %v4946
        %v4948 = vpop.f32.mrb[0].mxu0
        %v4949 = vpop.f32.mrb[0].mxu0
        %v4950 = vpop.f32.mrb[0].mxu0
        %4951 = vdwg.mxu0
        %v4953 = vsel %vm1770, %v4719, 0
        %v4956 = vsel %vm653, %v4253, 0
        %4958 = vmatprep.subr.bf16.mxu0 0
        %4959 = vmatpush1.bf16.msra.mxu0 %v4956
        %4960 = vmatprep.subr.bf16.mxu0 0
        %4961 = vmatpush1.bf16.msra.mxu0 0
        %4962 = vmatprep.subr.bf16.mxu0 0
        %4963 = vmatpush1.bf16.msra.mxu0 0
        %4964 = vmatprep.subr.bf16.mxu0 0
        %4965 = vmatpush1.bf16.msra.mxu0 0
        %4966 = vmatprep.subr.bf16.mxu0 0
        %4967 = vmatpush1.bf16.msra.mxu0 0
        %4968 = vmatprep.subr.bf16.mxu0 0
        %4969 = vmatpush1.bf16.msra.mxu0 0
        %4970 = vmatprep.subr.bf16.mxu0 0
        %4971 = vmatpush1.bf16.msra.mxu0 0
        %4972 = vmatprep.subr.bf16.mxu0 0
        %4973 = vmatpush1.bf16.msra.mxu0 0
        %4974 = vmatprep.subr.bf16.mxu0 0
        %4975 = vmatpush1.bf16.msra.mxu0 0
        %4976 = vmatprep.subr.bf16.mxu0 0
        %4977 = vmatpush1.bf16.msra.mxu0 0
        %4978 = vmatprep.subr.bf16.mxu0 0
        %4979 = vmatpush1.bf16.msra.mxu0 0
        %4980 = vmatprep.subr.bf16.mxu0 0
        %4981 = vmatpush1.bf16.msra.mxu0 0
        %4982 = vmatprep.subr.bf16.mxu0 0
        %4983 = vmatpush1.bf16.msra.mxu0 0
        %4984 = vmatprep.subr.bf16.mxu0 0
        %4985 = vmatpush1.bf16.msra.mxu0 0
        %4986 = vmatprep.subr.bf16.mxu0 0
        %4987 = vmatpush1.bf16.msra.mxu0 0
        %4988 = vmatprep.subr.bf16.mxu0 0
        %4989 = vmatpush1.bf16.msra.mxu0 0
        %4990 = vmatprep.mubr.bf16.mxu0 0
        %4991 = vmatmul.mubr.bf16.gmra.mrb[0].mxu0 %v4953
        %v4992 = vpop.f32.mrb[0].mxu0
        %v4993 = vadd.f32 0.0, %v4992
        %v4994 = vpop.f32.mrb[0].mxu0
        %v4995 = vpop.f32.mrb[0].mxu0
        %v4996 = vpop.f32.mrb[0].mxu0
        %4997 = vdwg.mxu0
        %v4999 = vsel %vm1770, %v4720, 0
        %v5002 = vsel %vm653, %v4255, 0
        %5004 = vmatprep.subr.bf16.mxu0 0
        %5005 = vmatpush1.bf16.msra.mxu0 %v5002
        %5006 = vmatprep.subr.bf16.mxu0 0
        %5007 = vmatpush1.bf16.msra.mxu0 0
        %5008 = vmatprep.subr.bf16.mxu0 0
        %5009 = vmatpush1.bf16.msra.mxu0 0
        %5010 = vmatprep.subr.bf16.mxu0 0
        %5011 = vmatpush1.bf16.msra.mxu0 0
        %5012 = vmatprep.subr.bf16.mxu0 0
        %5013 = vmatpush1.bf16.msra.mxu0 0
        %5014 = vmatprep.subr.bf16.mxu0 0
        %5015 = vmatpush1.bf16.msra.mxu0 0
        %5016 = vmatprep.subr.bf16.mxu0 0
        %5017 = vmatpush1.bf16.msra.mxu0 0
        %5018 = vmatprep.subr.bf16.mxu0 0
        %5019 = vmatpush1.bf16.msra.mxu0 0
        %5020 = vmatprep.subr.bf16.mxu0 0
        %5021 = vmatpush1.bf16.msra.mxu0 0
        %5022 = vmatprep.subr.bf16.mxu0 0
        %5023 = vmatpush1.bf16.msra.mxu0 0
        %5024 = vmatprep.subr.bf16.mxu0 0
        %5025 = vmatpush1.bf16.msra.mxu0 0
        %5026 = vmatprep.subr.bf16.mxu0 0
        %5027 = vmatpush1.bf16.msra.mxu0 0
        %5028 = vmatprep.subr.bf16.mxu0 0
        %5029 = vmatpush1.bf16.msra.mxu0 0
        %5030 = vmatprep.subr.bf16.mxu0 0
        %5031 = vmatpush1.bf16.msra.mxu0 0
        %5032 = vmatprep.subr.bf16.mxu0 0
        %5033 = vmatpush1.bf16.msra.mxu0 0
        %5034 = vmatprep.subr.bf16.mxu0 0
        %5035 = vmatpush1.bf16.msra.mxu0 0
        %5036 = vmatprep.mubr.bf16.mxu0 0
        %5037 = vmatmul.mubr.bf16.gmra.mrb[0].mxu0 %v4999
        %v5038 = vpop.f32.mrb[0].mxu0
        %v5039 = vadd.f32 0.0, %v5038
        %v5040 = vpop.f32.mrb[0].mxu0
        %v5041 = vpop.f32.mrb[0].mxu0
        %v5042 = vpop.f32.mrb[0].mxu0
        %5043 = vdwg.mxu0
        %v5045 = vsel %vm1770, %v4721, 0
        %v5048 = vsel %vm653, %v4257, 0
        %5050 = vmatprep.subr.bf16.mxu0 0
        %5051 = vmatpush1.bf16.msra.mxu0 %v5048
        %5052 = vmatprep.subr.bf16.mxu0 0
        %5053 = vmatpush1.bf16.msra.mxu0 0
        %5054 = vmatprep.subr.bf16.mxu0 0
        %5055 = vmatpush1.bf16.msra.mxu0 0
        %5056 = vmatprep.subr.bf16.mxu0 0
        %5057 = vmatpush1.bf16.msra.mxu0 0
        %5058 = vmatprep.subr.bf16.mxu0 0
        %5059 = vmatpush1.bf16.msra.mxu0 0
        %5060 = vmatprep.subr.bf16.mxu0 0
        %5061 = vmatpush1.bf16.msra.mxu0 0
        %5062 = vmatprep.subr.bf16.mxu0 0
        %5063 = vmatpush1.bf16.msra.mxu0 0
        %5064 = vmatprep.subr.bf16.mxu0 0
        %5065 = vmatpush1.bf16.msra.mxu0 0
        %5066 = vmatprep.subr.bf16.mxu0 0
        %5067 = vmatpush1.bf16.msra.mxu0 0
        %5068 = vmatprep.subr.bf16.mxu0 0
        %5069 = vmatpush1.bf16.msra.mxu0 0
        %5070 = vmatprep.subr.bf16.mxu0 0
        %5071 = vmatpush1.bf16.msra.mxu0 0
        %5072 = vmatprep.subr.bf16.mxu0 0
        %5073 = vmatpush1.bf16.msra.mxu0 0
        %5074 = vmatprep.subr.bf16.mxu0 0
        %5075 = vmatpush1.bf16.msra.mxu0 0
        %5076 = vmatprep.subr.bf16.mxu0 0
        %5077 = vmatpush1.bf16.msra.mxu0 0
        %5078 = vmatprep.subr.bf16.mxu0 0
        %5079 = vmatpush1.bf16.msra.mxu0 0
        %5080 = vmatprep.subr.bf16.mxu0 0
        %5081 = vmatpush1.bf16.msra.mxu0 0
        %5082 = vmatprep.mubr.bf16.mxu0 0
        %5083 = vmatmul.mubr.bf16.gmra.mrb[0].mxu0 %v5045
        %v5084 = vpop.f32.mrb[0].mxu0
        %v5085 = vadd.f32 0.0, %v5084
        %v5086 = vpop.f32.mrb[0].mxu0
        %v5087 = vpop.f32.mrb[0].mxu0
        %v5088 = vpop.f32.mrb[0].mxu0
        %5089 = vdwg.mxu0
        %v5090 = vpack.c.bf16 %v4763, %v4763
        %v5091 = vpack.c.bf16 %v4809, %v4809
        %v5092 = vpack.c.bf16 %v4855, %v4855
        %v5093 = vpack.c.bf16 %v4901, %v4901
        %v5094 = vpack.c.bf16 %v4947, %v4947
        %v5095 = vpack.c.bf16 %v4993, %v4993
        %v5096 = vpack.c.bf16 %v5039, %v5039
        %v5097 = vpack.c.bf16 %v5085, %v5085
        %s5098 = scalar_lea.vmem [#allocation8], 64
        %v5099 = vld [vmem:[%s5098] sm:$0xf]
        %v5100 = vld [vmem:[%s5098 + $0x4] sm:$0xf]
        %v5101 = vld [vmem:[%s5098 + $0x8] sm:$0xf]
        %v5102 = vld [vmem:[%s5098 + $0xc] sm:$0xf]
        %v5103 = vld [vmem:[%s5098 + $0x10] sm:$0xf]
        %v5104 = vld [vmem:[%s5098 + $0x14] sm:$0xf]
        %v5105 = vld [vmem:[%s5098 + $0x18] sm:$0xf]
        %v5106 = vld [vmem:[%s5098 + $0x1c] sm:$0xf]
        %s5107 = scalar_lea.vmem %s12, 2
        %v5108 = vld [vmem:[%s5107] sm:$0x1]
        %v5110 = vlaneseq
        %v5111 = vshrl.u32 %v5110, 7
        %v5112 = vsub.s32 0, %v5111
        %v5113 = vrot.slane %v5108, %v5112
        %v5123 = vcombine.low %v5090, %v5091
        %v5124 = vcombine.low %v5092, %v5093
        %v5125 = vcombine.low %v5094, %v5095
        %v5126 = vcombine.low %v5096, %v5097
        %v5128 = vunpack.c.l.s4 1966171168
        %v5129 = vunpack.c.0.s8 %v5128
        %v5130 = vlaneseq
        %v5131 = vshrl.u32 %v5130, 7
        %v5132 = vsub.s32 %v5129, %v5131
        %v5133 = vrot.slane %v5123, %v5132
        %v5135 = vunpack.c.l.s4 1966171168
        %v5136 = vunpack.c.0.s8 %v5135
        %v5137 = vlaneseq
        %v5138 = vshrl.u32 %v5137, 7
        %v5139 = vsub.s32 %v5136, %v5138
        %v5140 = vrot.slane %v5124, %v5139
        %v5142 = vunpack.c.l.s4 1966171168
        %v5143 = vunpack.c.0.s8 %v5142
        %v5144 = vlaneseq
        %v5145 = vshrl.u32 %v5144, 7
        %v5146 = vsub.s32 %v5143, %v5145
        %v5147 = vrot.slane %v5125, %v5146
        %v5149 = vunpack.c.l.s4 1966171168
        %v5150 = vunpack.c.0.s8 %v5149
        %v5151 = vlaneseq
        %v5152 = vshrl.u32 %v5151, 7
        %v5153 = vsub.s32 %v5150, %v5152
        %v5154 = vrot.slane %v5126, %v5153
        %v5155 = vcombine.low %v5133, %v5140
        %v5156 = vcombine.low %v5147, %v5154
        %v5158 = vunpack.c.l.s4 1966171168
        %v5159 = vunpack.c.0.s8 %v5158
        %v5160 = vlaneseq
        %v5161 = vshrl.u32 %v5160, 7
        %v5162 = vsub.s32 %v5159, %v5161
        %v5163 = vrot.slane %v5155, %v5162
        %v5165 = vunpack.c.l.s4 1966171168
        %v5166 = vunpack.c.0.s8 %v5165
        %v5167 = vlaneseq
        %v5168 = vshrl.u32 %v5167, 7
        %v5169 = vsub.s32 %v5166, %v5168
        %v5170 = vrot.slane %v5156, %v5169
        %v5171 = vcombine.low %v5163, %v5170
        %v5180 = vunpack.c.l.b16 %v5099
        %v5181 = vunpack.c.l.b16 %v5100
        %v5182 = vunpack.c.l.b16 %v5101
        %v5183 = vunpack.c.l.b16 %v5102
        %v5184 = vunpack.c.l.b16 %v5103
        %v5185 = vunpack.c.l.b16 %v5104
        %v5186 = vunpack.c.l.b16 %v5105
        %v5187 = vunpack.c.l.b16 %v5106
        %v5188 = vpack.c.b16 %v5181, %v5180
        %v5189 = vpack.c.b16 %v5183, %v5182
        %v5190 = vpack.c.b16 %v5185, %v5184
        %v5191 = vpack.c.b16 %v5187, %v5186
        %v5197 = vsel %vm743, %v5171, 0
        %5199 = vmatprep.subr.bf16.mxu0 0
        %5200 = vmatpush1.bf16.msra.mxu0 %v5188
        %5201 = vmatprep.subr.bf16.mxu0 0
        %5202 = vmatpush1.bf16.msra.mxu0 %v5189
        %5203 = vmatprep.subr.bf16.mxu0 0
        %5204 = vmatpush1.bf16.msra.mxu0 %v5190
        %5205 = vmatprep.subr.bf16.mxu0 0
        %5206 = vmatpush1.bf16.msra.mxu0 %v5191
        %5207 = vmatprep.subr.bf16.mxu0 0
        %5208 = vmatpush1.bf16.msra.mxu0 0
        %5209 = vmatprep.subr.bf16.mxu0 0
        %5210 = vmatpush1.bf16.msra.mxu0 0
        %5211 = vmatprep.subr.bf16.mxu0 0
        %5212 = vmatpush1.bf16.msra.mxu0 0
        %5213 = vmatprep.subr.bf16.mxu0 0
        %5214 = vmatpush1.bf16.msra.mxu0 0
        %5215 = vmatprep.subr.bf16.mxu0 0
        %5216 = vmatpush1.bf16.msra.mxu0 0
        %5217 = vmatprep.subr.bf16.mxu0 0
        %5218 = vmatpush1.bf16.msra.mxu0 0
        %5219 = vmatprep.subr.bf16.mxu0 0
        %5220 = vmatpush1.bf16.msra.mxu0 0
        %5221 = vmatprep.subr.bf16.mxu0 0
        %5222 = vmatpush1.bf16.msra.mxu0 0
        %5223 = vmatprep.subr.bf16.mxu0 0
        %5224 = vmatpush1.bf16.msra.mxu0 0
        %5225 = vmatprep.subr.bf16.mxu0 0
        %5226 = vmatpush1.bf16.msra.mxu0 0
        %5227 = vmatprep.subr.bf16.mxu0 0
        %5228 = vmatpush1.bf16.msra.mxu0 0
        %5229 = vmatprep.subr.bf16.mxu0 0
        %5230 = vmatpush1.bf16.msra.mxu0 0
        %5231 = vmatprep.mubr.bf16.mxu0 0
        %5232 = vmatmul.mubr.bf16.gmra.mrb[0].mxu0 %v5197
        %v5233 = vpop.f32.mrb[0].mxu0
        %v5234 = vadd.f32 %v5113, %v5233
        %v5235 = vpop.f32.mrb[0].mxu0
        %v5236 = vpop.f32.mrb[0].mxu0
        %v5237 = vadd.f32 %v5113, %v5236
        %v5238 = vpop.f32.mrb[0].mxu0
        %5239 = vdwg.mxu0
        %v5240 = vpack.c.bf16 %v5237, %v5234
        %s5241 = scalar_lea.vmem [#allocation10], 128
        %v5242 = vld [vmem:[%s5241] sm:$0xff]
        %v5243 = vld [vmem:[%s5241 + $0x8] sm:$0xff]
        %v5244 = vld [vmem:[%s5241 + $0x10] sm:$0xff]
        %v5245 = vld [vmem:[%s5241 + $0x18] sm:$0xff]
        %v5246 = vld [vmem:[%s5241 + $0x20] sm:$0xff]
        %v5247 = vld [vmem:[%s5241 + $0x28] sm:$0xff]
        %v5248 = vld [vmem:[%s5241 + $0x30] sm:$0xff]
        %v5249 = vld [vmem:[%s5241 + $0x38] sm:$0xff]
        %v5258 = vunpack.c.l.b16 %v5242
        %v5259 = vunpack.c.h.b16 %v5242
        %v5260 = vunpack.c.l.b16 %v5243
        %v5261 = vunpack.c.h.b16 %v5243
        %v5262 = vunpack.c.l.b16 %v5244
        %v5263 = vunpack.c.h.b16 %v5244
        %v5264 = vunpack.c.l.b16 %v5245
        %v5265 = vunpack.c.h.b16 %v5245
        %v5266 = vunpack.c.l.b16 %v5246
        %v5267 = vunpack.c.h.b16 %v5246
        %v5268 = vunpack.c.l.b16 %v5247
        %v5269 = vunpack.c.h.b16 %v5247
        %v5270 = vunpack.c.l.b16 %v5248
        %v5271 = vunpack.c.h.b16 %v5248
        %v5272 = vunpack.c.l.b16 %v5249
        %v5273 = vunpack.c.h.b16 %v5249
        %v5274 = vpack.c.b16 %v5260, %v5258
        %v5275 = vpack.c.b16 %v5261, %v5259
        %v5276 = vpack.c.b16 %v5264, %v5262
        %v5277 = vpack.c.b16 %v5265, %v5263
        %v5278 = vpack.c.b16 %v5268, %v5266
        %v5279 = vpack.c.b16 %v5269, %v5267
        %v5280 = vpack.c.b16 %v5272, %v5270
        %v5281 = vpack.c.b16 %v5273, %v5271
        %v5291 = vsel %vm743, %v5240, 0
        %5293 = vmatprep.subr.bf16.mxu0 %v5275
        %5294 = vmatpush1.bf16.msra.mxu0 %v5274
        %5295 = vmatprep.subr.bf16.mxu0 %v5277
        %5296 = vmatpush1.bf16.msra.mxu0 %v5276
        %5297 = vmatprep.subr.bf16.mxu0 %v5279
        %5298 = vmatpush1.bf16.msra.mxu0 %v5278
        %5299 = vmatprep.subr.bf16.mxu0 %v5281
        %5300 = vmatpush1.bf16.msra.mxu0 %v5280
        %5301 = vmatprep.subr.bf16.mxu0 0
        %5302 = vmatpush1.bf16.msra.mxu0 0
        %5303 = vmatprep.subr.bf16.mxu0 0
        %5304 = vmatpush1.bf16.msra.mxu0 0
        %5305 = vmatprep.subr.bf16.mxu0 0
        %5306 = vmatpush1.bf16.msra.mxu0 0
        %5307 = vmatprep.subr.bf16.mxu0 0
        %5308 = vmatpush1.bf16.msra.mxu0 0
        %5309 = vmatprep.subr.bf16.mxu0 0
        %5310 = vmatpush1.bf16.msra.mxu0 0
        %5311 = vmatprep.subr.bf16.mxu0 0
        %5312 = vmatpush1.bf16.msra.mxu0 0
        %5313 = vmatprep.subr.bf16.mxu0 0
        %5314 = vmatpush1.bf16.msra.mxu0 0
        %5315 = vmatprep.subr.bf16.mxu0 0
        %5316 = vmatpush1.bf16.msra.mxu0 0
        %5317 = vmatprep.subr.bf16.mxu0 0
        %5318 = vmatpush1.bf16.msra.mxu0 0
        %5319 = vmatprep.subr.bf16.mxu0 0
        %5320 = vmatpush1.bf16.msra.mxu0 0
        %5321 = vmatprep.subr.bf16.mxu0 0
        %5322 = vmatpush1.bf16.msra.mxu0 0
        %5323 = vmatprep.subr.bf16.mxu0 0
        %5324 = vmatpush1.bf16.msra.mxu0 0
        %5325 = vmatprep.mubr.bf16.mxu0 0
        %5326 = vmatmul.mubr.bf16.gmra.mrb[0].mxu0 %v5291
        %v5327 = vpop.f32.mrb[0].mxu0
        %v5328 = vadd.f32 0.0, %v5327
        %v5329 = vpop.f32.mrb[0].mxu0
        %v5330 = vadd.f32 0.0, %v5329
        %v5331 = vpop.f32.mrb[0].mxu0
        %v5332 = vadd.f32 0.0, %v5331
        %v5333 = vpop.f32.mrb[0].mxu0
        %v5334 = vadd.f32 0.0, %v5333
        %5335 = vdwg.mxu0
        %v5336 = vadd.f32 %v3851, %v5328
        %v5337 = vadd.f32 %v3853, %v5330
        %v5338 = vadd.f32 %v3855, %v5332
        %v5339 = vadd.f32 %v3857, %v5334
        %s5340 = scalar_lea.vmem [#allocation3], 96
        %v5341 = vld [vmem:[%s5340] sm:$0xf]
        %v5342 = vld [vmem:[%s5340 + $0x4] sm:$0xf]
        %v5343 = vld [vmem:[%s5340 + $0x8] sm:$0xf]
        %v5344 = vld [vmem:[%s5340 + $0xc] sm:$0xf]
        %v5345 = vld [vmem:[%s5340 + $0x10] sm:$0xf]
        %v5346 = vld [vmem:[%s5340 + $0x14] sm:$0xf]
        %v5347 = vld [vmem:[%s5340 + $0x18] sm:$0xf]
        %v5348 = vld [vmem:[%s5340 + $0x1c] sm:$0xf]
        %s5349 = scalar_lea.vmem %s6, 3
        %v5350 = vld [vmem:[%s5349] sm:$0x1]
        %v5352 = vlaneseq
        %v5353 = vshrl.u32 %v5352, 7
        %v5354 = vsub.s32 0, %v5353
        %v5355 = vrot.slane %v5350, %v5354
        %v5365 = vunpack.c.l.b16 %v5341
        %v5366 = vunpack.c.l.b16 %v5342
        %v5367 = vunpack.c.l.b16 %v5343
        %v5368 = vunpack.c.l.b16 %v5344
        %v5369 = vunpack.c.l.b16 %v5345
        %v5370 = vunpack.c.l.b16 %v5346
        %v5371 = vunpack.c.l.b16 %v5347
        %v5372 = vunpack.c.l.b16 %v5348
        %v5373 = vpack.c.b16 %v5366, %v5365
        %v5374 = vpack.c.b16 %v5368, %v5367
        %v5375 = vpack.c.b16 %v5370, %v5369
        %v5376 = vpack.c.b16 %v5372, %v5371
        %5381 = vmatprep.subr.bf16.mxu0 0
        %5382 = vmatpush1.bf16.msra.mxu0 %v5373
        %5383 = vmatprep.subr.bf16.mxu0 0
        %5384 = vmatpush1.bf16.msra.mxu0 %v5374
        %5385 = vmatprep.subr.bf16.mxu0 0
        %5386 = vmatpush1.bf16.msra.mxu0 %v5375
        %5387 = vmatprep.subr.bf16.mxu0 0
        %5388 = vmatpush1.bf16.msra.mxu0 %v5376
        %5389 = vmatprep.subr.bf16.mxu0 0
        %5390 = vmatpush1.bf16.msra.mxu0 0
        %5391 = vmatprep.subr.bf16.mxu0 0
        %5392 = vmatpush1.bf16.msra.mxu0 0
        %5393 = vmatprep.subr.bf16.mxu0 0
        %5394 = vmatpush1.bf16.msra.mxu0 0
        %5395 = vmatprep.subr.bf16.mxu0 0
        %5396 = vmatpush1.bf16.msra.mxu0 0
        %5397 = vmatprep.subr.bf16.mxu0 0
        %5398 = vmatpush1.bf16.msra.mxu0 0
        %5399 = vmatprep.subr.bf16.mxu0 0
        %5400 = vmatpush1.bf16.msra.mxu0 0
        %5401 = vmatprep.subr.bf16.mxu0 0
        %5402 = vmatpush1.bf16.msra.mxu0 0
        %5403 = vmatprep.subr.bf16.mxu0 0
        %5404 = vmatpush1.bf16.msra.mxu0 0
        %5405 = vmatprep.subr.bf16.mxu0 0
        %5406 = vmatpush1.bf16.msra.mxu0 0
        %5407 = vmatprep.subr.bf16.mxu0 0
        %5408 = vmatpush1.bf16.msra.mxu0 0
        %5409 = vmatprep.subr.bf16.mxu0 0
        %5410 = vmatpush1.bf16.msra.mxu0 0
        %5411 = vmatprep.subr.bf16.mxu0 0
        %5412 = vmatpush1.bf16.msra.mxu0 0
        %5413 = vmatprep.mubr.bf16.mxu0 0
        %5414 = vmatmul.mubr.bf16.gmra.mrb[0].mxu0 %v5291
        %v5415 = vpop.f32.mrb[0].mxu0
        %v5416 = vadd.f32 %v5355, %v5415
        %v5417 = vpop.f32.mrb[0].mxu0
        %v5418 = vpop.f32.mrb[0].mxu0
        %v5419 = vadd.f32 %v5355, %v5418
        %v5420 = vpop.f32.mrb[0].mxu0
        %5421 = vdwg.mxu0
        %v5422 = vpack.c.bf16 %v5419, %v5416
        %v5424 = vcombine.high %v5422, %v5422
        %v5426 = vunpack.c.l.s4 1966171168
        %v5427 = vunpack.c.0.s8 %v5426
        %v5428 = vlaneseq
        %v5429 = vshrl.u32 %v5428, 7
        %v5430 = vsub.s32 %v5427, %v5429
        %v5431 = vrot.slane %v5422, %v5430
        %v5433 = vunpack.c.l.s4 1966171168
        %v5434 = vunpack.c.0.s8 %v5433
        %v5435 = vlaneseq
        %v5436 = vshrl.u32 %v5435, 7
        %v5437 = vsub.s32 %v5434, %v5436
        %v5438 = vrot.slane %v5424, %v5437
        %v5439 = vcombine.high %v5431, %v5431
        %v5440 = vcombine.high %v5438, %v5438
        %v5442 = vunpack.c.l.s4 1966171168
        %v5443 = vunpack.c.0.s8 %v5442
        %v5444 = vlaneseq
        %v5445 = vshrl.u32 %v5444, 7
        %v5446 = vsub.s32 %v5443, %v5445
        %v5447 = vrot.slane %v5431, %v5446
        %v5449 = vunpack.c.l.s4 1966171168
        %v5450 = vunpack.c.0.s8 %v5449
        %v5451 = vlaneseq
        %v5452 = vshrl.u32 %v5451, 7
        %v5453 = vsub.s32 %v5450, %v5452
        %v5454 = vrot.slane %v5438, %v5453
        %v5456 = vunpack.c.l.s4 1966171168
        %v5457 = vunpack.c.0.s8 %v5456
        %v5458 = vlaneseq
        %v5459 = vshrl.u32 %v5458, 7
        %v5460 = vsub.s32 %v5457, %v5459
        %v5461 = vrot.slane %v5439, %v5460
        %v5463 = vunpack.c.l.s4 1966171168
        %v5464 = vunpack.c.0.s8 %v5463
        %v5465 = vlaneseq
        %v5466 = vshrl.u32 %v5465, 7
        %v5467 = vsub.s32 %v5464, %v5466
        %v5468 = vrot.slane %v5440, %v5467
        %v5469 = vcombine.high %v5447, %v5447
        %v5470 = vcombine.high %v5454, %v5454
        %v5471 = vcombine.high %v5461, %v5461
        %v5472 = vcombine.high %v5468, %v5468
        %s5473 = scalar_lea.vmem [#allocation5], 96
        %v5474 = vld [vmem:[%s5473] sm:$0xf]
        %v5475 = vld [vmem:[%s5473 + $0x4] sm:$0xf]
        %v5476 = vld [vmem:[%s5473 + $0x8] sm:$0xf]
        %v5477 = vld [vmem:[%s5473 + $0xc] sm:$0xf]
        %v5478 = vld [vmem:[%s5473 + $0x10] sm:$0xf]
        %v5479 = vld [vmem:[%s5473 + $0x14] sm:$0xf]
        %v5480 = vld [vmem:[%s5473 + $0x18] sm:$0xf]
        %v5481 = vld [vmem:[%s5473 + $0x1c] sm:$0xf]
        %s5482 = scalar_lea.vmem %s8, 3
        %v5483 = vld [vmem:[%s5482] sm:$0x1]
        %v5485 = vlaneseq
        %v5486 = vshrl.u32 %v5485, 7
        %v5487 = vsub.s32 0, %v5486
        %v5488 = vrot.slane %v5483, %v5487
        %v5498 = vunpack.c.l.b16 %v5474
        %v5499 = vunpack.c.l.b16 %v5475
        %v5500 = vunpack.c.l.b16 %v5476
        %v5501 = vunpack.c.l.b16 %v5477
        %v5502 = vunpack.c.l.b16 %v5478
        %v5503 = vunpack.c.l.b16 %v5479
        %v5504 = vunpack.c.l.b16 %v5480
        %v5505 = vunpack.c.l.b16 %v5481
        %v5506 = vpack.c.b16 %v5499, %v5498
        %v5507 = vpack.c.b16 %v5501, %v5500
        %v5508 = vpack.c.b16 %v5503, %v5502
        %v5509 = vpack.c.b16 %v5505, %v5504
        %5514 = vmatprep.subr.bf16.mxu0 0
        %5515 = vmatpush1.bf16.msra.mxu0 %v5506
        %5516 = vmatprep.subr.bf16.mxu0 0
        %5517 = vmatpush1.bf16.msra.mxu0 %v5507
        %5518 = vmatprep.subr.bf16.mxu0 0
        %5519 = vmatpush1.bf16.msra.mxu0 %v5508
        %5520 = vmatprep.subr.bf16.mxu0 0
        %5521 = vmatpush1.bf16.msra.mxu0 %v5509
        %5522 = vmatprep.subr.bf16.mxu0 0
        %5523 = vmatpush1.bf16.msra.mxu0 0
        %5524 = vmatprep.subr.bf16.mxu0 0
        %5525 = vmatpush1.bf16.msra.mxu0 0
        %5526 = vmatprep.subr.bf16.mxu0 0
        %5527 = vmatpush1.bf16.msra.mxu0 0
        %5528 = vmatprep.subr.bf16.mxu0 0
        %5529 = vmatpush1.bf16.msra.mxu0 0
        %5530 = vmatprep.subr.bf16.mxu0 0
        %5531 = vmatpush1.bf16.msra.mxu0 0
        %5532 = vmatprep.subr.bf16.mxu0 0
        %5533 = vmatpush1.bf16.msra.mxu0 0
        %5534 = vmatprep.subr.bf16.mxu0 0
        %5535 = vmatpush1.bf16.msra.mxu0 0
        %5536 = vmatprep.subr.bf16.mxu0 0
        %5537 = vmatpush1.bf16.msra.mxu0 0
        %5538 = vmatprep.subr.bf16.mxu0 0
        %5539 = vmatpush1.bf16.msra.mxu0 0
        %5540 = vmatprep.subr.bf16.mxu0 0
        %5541 = vmatpush1.bf16.msra.mxu0 0
        %5542 = vmatprep.subr.bf16.mxu0 0
        %5543 = vmatpush1.bf16.msra.mxu0 0
        %5544 = vmatprep.subr.bf16.mxu0 0
        %5545 = vmatpush1.bf16.msra.mxu0 0
        %5546 = vmatprep.mubr.bf16.mxu0 0
        %5547 = vmatmul.mubr.bf16.gmra.mrb[0].mxu0 %v5291
        %v5548 = vpop.f32.mrb[0].mxu0
        %v5549 = vadd.f32 %v5488, %v5548
        %v5550 = vpop.f32.mrb[0].mxu0
        %v5551 = vpop.f32.mrb[0].mxu0
        %v5552 = vadd.f32 %v5488, %v5551
        %v5553 = vpop.f32.mrb[0].mxu0
        %5554 = vdwg.mxu0
        %v5555 = vpack.c.bf16 %v5552, %v5549
        %v5557 = vcombine.high %v5555, %v5555
        %v5559 = vunpack.c.l.s4 1966171168
        %v5560 = vunpack.c.0.s8 %v5559
        %v5561 = vlaneseq
        %v5562 = vshrl.u32 %v5561, 7
        %v5563 = vsub.s32 %v5560, %v5562
        %v5564 = vrot.slane %v5555, %v5563
        %v5566 = vunpack.c.l.s4 1966171168
        %v5567 = vunpack.c.0.s8 %v5566
        %v5568 = vlaneseq
        %v5569 = vshrl.u32 %v5568, 7
        %v5570 = vsub.s32 %v5567, %v5569
        %v5571 = vrot.slane %v5557, %v5570
        %v5572 = vcombine.high %v5564, %v5564
        %v5573 = vcombine.high %v5571, %v5571
        %v5575 = vunpack.c.l.s4 1966171168
        %v5576 = vunpack.c.0.s8 %v5575
        %v5577 = vlaneseq
        %v5578 = vshrl.u32 %v5577, 7
        %v5579 = vsub.s32 %v5576, %v5578
        %v5580 = vrot.slane %v5564, %v5579
        %v5582 = vunpack.c.l.s4 1966171168
        %v5583 = vunpack.c.0.s8 %v5582
        %v5584 = vlaneseq
        %v5585 = vshrl.u32 %v5584, 7
        %v5586 = vsub.s32 %v5583, %v5585
        %v5587 = vrot.slane %v5571, %v5586
        %v5589 = vunpack.c.l.s4 1966171168
        %v5590 = vunpack.c.0.s8 %v5589
        %v5591 = vlaneseq
        %v5592 = vshrl.u32 %v5591, 7
        %v5593 = vsub.s32 %v5590, %v5592
        %v5594 = vrot.slane %v5572, %v5593
        %v5596 = vunpack.c.l.s4 1966171168
        %v5597 = vunpack.c.0.s8 %v5596
        %v5598 = vlaneseq
        %v5599 = vshrl.u32 %v5598, 7
        %v5600 = vsub.s32 %v5597, %v5599
        %v5601 = vrot.slane %v5573, %v5600
        %v5602 = vcombine.high %v5580, %v5580
        %v5603 = vcombine.high %v5587, %v5587
        %v5604 = vcombine.high %v5594, %v5594
        %v5605 = vcombine.high %v5601, %v5601
        %s5606 = scalar_lea.vmem [#allocation7], 96
        %v5607 = vld [vmem:[%s5606] sm:$0xf]
        %v5608 = vld [vmem:[%s5606 + $0x4] sm:$0xf]
        %v5609 = vld [vmem:[%s5606 + $0x8] sm:$0xf]
        %v5610 = vld [vmem:[%s5606 + $0xc] sm:$0xf]
        %v5611 = vld [vmem:[%s5606 + $0x10] sm:$0xf]
        %v5612 = vld [vmem:[%s5606 + $0x14] sm:$0xf]
        %v5613 = vld [vmem:[%s5606 + $0x18] sm:$0xf]
        %v5614 = vld [vmem:[%s5606 + $0x1c] sm:$0xf]
        %s5615 = scalar_lea.vmem %s10, 3
        %v5616 = vld [vmem:[%s5615] sm:$0x1]
        %v5618 = vlaneseq
        %v5619 = vshrl.u32 %v5618, 7
        %v5620 = vsub.s32 0, %v5619
        %v5621 = vrot.slane %v5616, %v5620
        %v5631 = vunpack.c.l.b16 %v5607
        %v5632 = vunpack.c.l.b16 %v5608
        %v5633 = vunpack.c.l.b16 %v5609
        %v5634 = vunpack.c.l.b16 %v5610
        %v5635 = vunpack.c.l.b16 %v5611
        %v5636 = vunpack.c.l.b16 %v5612
        %v5637 = vunpack.c.l.b16 %v5613
        %v5638 = vunpack.c.l.b16 %v5614
        %v5639 = vpack.c.b16 %v5632, %v5631
        %v5640 = vpack.c.b16 %v5634, %v5633
        %v5641 = vpack.c.b16 %v5636, %v5635
        %v5642 = vpack.c.b16 %v5638, %v5637
        %5647 = vmatprep.subr.bf16.mxu0 0
        %5648 = vmatpush1.bf16.msra.mxu0 %v5639
        %5649 = vmatprep.subr.bf16.mxu0 0
        %5650 = vmatpush1.bf16.msra.mxu0 %v5640
        %5651 = vmatprep.subr.bf16.mxu0 0
        %5652 = vmatpush1.bf16.msra.mxu0 %v5641
        %5653 = vmatprep.subr.bf16.mxu0 0
        %5654 = vmatpush1.bf16.msra.mxu0 %v5642
        %5655 = vmatprep.subr.bf16.mxu0 0
        %5656 = vmatpush1.bf16.msra.mxu0 0
        %5657 = vmatprep.subr.bf16.mxu0 0
        %5658 = vmatpush1.bf16.msra.mxu0 0
        %5659 = vmatprep.subr.bf16.mxu0 0
        %5660 = vmatpush1.bf16.msra.mxu0 0
        %5661 = vmatprep.subr.bf16.mxu0 0
        %5662 = vmatpush1.bf16.msra.mxu0 0
        %5663 = vmatprep.subr.bf16.mxu0 0
        %5664 = vmatpush1.bf16.msra.mxu0 0
        %5665 = vmatprep.subr.bf16.mxu0 0
        %5666 = vmatpush1.bf16.msra.mxu0 0
        %5667 = vmatprep.subr.bf16.mxu0 0
        %5668 = vmatpush1.bf16.msra.mxu0 0
        %5669 = vmatprep.subr.bf16.mxu0 0
        %5670 = vmatpush1.bf16.msra.mxu0 0
        %5671 = vmatprep.subr.bf16.mxu0 0
        %5672 = vmatpush1.bf16.msra.mxu0 0
        %5673 = vmatprep.subr.bf16.mxu0 0
        %5674 = vmatpush1.bf16.msra.mxu0 0
        %5675 = vmatprep.subr.bf16.mxu0 0
        %5676 = vmatpush1.bf16.msra.mxu0 0
        %5677 = vmatprep.subr.bf16.mxu0 0
        %5678 = vmatpush1.bf16.msra.mxu0 0
        %5679 = vmatprep.mubr.bf16.mxu0 0
        %5680 = vmatmul.mubr.bf16.gmra.mrb[0].mxu0 %v5291
        %v5681 = vpop.f32.mrb[0].mxu0
        %v5682 = vadd.f32 %v5621, %v5681
        %v5683 = vpop.f32.mrb[0].mxu0
        %v5684 = vpop.f32.mrb[0].mxu0
        %v5685 = vadd.f32 %v5621, %v5684
        %v5686 = vpop.f32.mrb[0].mxu0
        %5687 = vdwg.mxu0
        %v5688 = vpack.c.bf16 %v5685, %v5682
        %v5690 = vcombine.high %v5688, %v5688
        %v5692 = vunpack.c.l.s4 1966171168
        %v5693 = vunpack.c.0.s8 %v5692
        %v5694 = vlaneseq
        %v5695 = vshrl.u32 %v5694, 7
        %v5696 = vsub.s32 %v5693, %v5695
        %v5697 = vrot.slane %v5688, %v5696
        %v5699 = vunpack.c.l.s4 1966171168
        %v5700 = vunpack.c.0.s8 %v5699
        %v5701 = vlaneseq
        %v5702 = vshrl.u32 %v5701, 7
        %v5703 = vsub.s32 %v5700, %v5702
        %v5704 = vrot.slane %v5690, %v5703
        %v5705 = vcombine.high %v5697, %v5697
        %v5706 = vcombine.high %v5704, %v5704
        %v5708 = vunpack.c.l.s4 1966171168
        %v5709 = vunpack.c.0.s8 %v5708
        %v5710 = vlaneseq
        %v5711 = vshrl.u32 %v5710, 7
        %v5712 = vsub.s32 %v5709, %v5711
        %v5713 = vrot.slane %v5697, %v5712
        %v5715 = vunpack.c.l.s4 1966171168
        %v5716 = vunpack.c.0.s8 %v5715
        %v5717 = vlaneseq
        %v5718 = vshrl.u32 %v5717, 7
        %v5719 = vsub.s32 %v5716, %v5718
        %v5720 = vrot.slane %v5704, %v5719
        %v5722 = vunpack.c.l.s4 1966171168
        %v5723 = vunpack.c.0.s8 %v5722
        %v5724 = vlaneseq
        %v5725 = vshrl.u32 %v5724, 7
        %v5726 = vsub.s32 %v5723, %v5725
        %v5727 = vrot.slane %v5705, %v5726
        %v5729 = vunpack.c.l.s4 1966171168
        %v5730 = vunpack.c.0.s8 %v5729
        %v5731 = vlaneseq
        %v5732 = vshrl.u32 %v5731, 7
        %v5733 = vsub.s32 %v5730, %v5732
        %v5734 = vrot.slane %v5706, %v5733
        %v5735 = vcombine.high %v5713, %v5713
        %v5736 = vcombine.high %v5720, %v5720
        %v5737 = vcombine.high %v5727, %v5727
        %v5738 = vcombine.high %v5734, %v5734
        %v5740 = vsel %vm743, %v5447, 0
        %v5743 = vsel %vm743, %v5580, 0
        %5745 = vmatprep.subr.bf16.mxu0 0
        %5746 = vmatpush1.bf16.xpose.msra.mxu0 %v5743
        %5747 = vmatprep.subr.bf16.mxu0 0
        %5748 = vmatpush1.bf16.xpose.msra.mxu0 0
        %5749 = vmatprep.subr.bf16.mxu0 0
        %5750 = vmatpush1.bf16.xpose.msra.mxu0 0
        %5751 = vmatprep.subr.bf16.mxu0 0
        %5752 = vmatpush1.bf16.xpose.msra.mxu0 0
        %5753 = vmatprep.subr.bf16.mxu0 0
        %5754 = vmatpush1.bf16.xpose.msra.mxu0 0
        %5755 = vmatprep.subr.bf16.mxu0 0
        %5756 = vmatpush1.bf16.xpose.msra.mxu0 0
        %5757 = vmatprep.subr.bf16.mxu0 0
        %5758 = vmatpush1.bf16.xpose.msra.mxu0 0
        %5759 = vmatprep.subr.bf16.mxu0 0
        %5760 = vmatpush1.bf16.xpose.msra.mxu0 0
        %5761 = vmatprep.subr.bf16.mxu0 0
        %5762 = vmatpush1.bf16.xpose.msra.mxu0 0
        %5763 = vmatprep.subr.bf16.mxu0 0
        %5764 = vmatpush1.bf16.xpose.msra.mxu0 0
        %5765 = vmatprep.subr.bf16.mxu0 0
        %5766 = vmatpush1.bf16.xpose.msra.mxu0 0
        %5767 = vmatprep.subr.bf16.mxu0 0
        %5768 = vmatpush1.bf16.xpose.msra.mxu0 0
        %5769 = vmatprep.subr.bf16.mxu0 0
        %5770 = vmatpush1.bf16.xpose.msra.mxu0 0
        %5771 = vmatprep.subr.bf16.mxu0 0
        %5772 = vmatpush1.bf16.xpose.msra.mxu0 0
        %5773 = vmatprep.subr.bf16.mxu0 0
        %5774 = vmatpush1.bf16.xpose.msra.mxu0 0
        %5775 = vmatprep.subr.bf16.mxu0 0
        %5776 = vmatpush1.bf16.xpose.msra.mxu0 0
        %5777 = vmatprep.mubr.bf16.mxu0 0
        %5778 = vmatmul.mubr.bf16.gmra.mrb[0].mxu0 %v5740
        %v5779 = vpop.f32.mrb[0].mxu0
        %v5780 = vadd.f32 0.0, %v5779
        %v5781 = vpop.f32.mrb[0].mxu0
        %v5782 = vpop.f32.mrb[0].mxu0
        %v5783 = vpop.f32.mrb[0].mxu0
        %5784 = vdwg.mxu0
        %v5786 = vsel %vm743, %v5461, 0
        %v5789 = vsel %vm743, %v5594, 0
        %5791 = vmatprep.subr.bf16.mxu0 0
        %5792 = vmatpush1.bf16.xpose.msra.mxu0 %v5789
        %5793 = vmatprep.subr.bf16.mxu0 0
        %5794 = vmatpush1.bf16.xpose.msra.mxu0 0
        %5795 = vmatprep.subr.bf16.mxu0 0
        %5796 = vmatpush1.bf16.xpose.msra.mxu0 0
        %5797 = vmatprep.subr.bf16.mxu0 0
        %5798 = vmatpush1.bf16.xpose.msra.mxu0 0
        %5799 = vmatprep.subr.bf16.mxu0 0
        %5800 = vmatpush1.bf16.xpose.msra.mxu0 0
        %5801 = vmatprep.subr.bf16.mxu0 0
        %5802 = vmatpush1.bf16.xpose.msra.mxu0 0
        %5803 = vmatprep.subr.bf16.mxu0 0
        %5804 = vmatpush1.bf16.xpose.msra.mxu0 0
        %5805 = vmatprep.subr.bf16.mxu0 0
        %5806 = vmatpush1.bf16.xpose.msra.mxu0 0
        %5807 = vmatprep.subr.bf16.mxu0 0
        %5808 = vmatpush1.bf16.xpose.msra.mxu0 0
        %5809 = vmatprep.subr.bf16.mxu0 0
        %5810 = vmatpush1.bf16.xpose.msra.mxu0 0
        %5811 = vmatprep.subr.bf16.mxu0 0
        %5812 = vmatpush1.bf16.xpose.msra.mxu0 0
        %5813 = vmatprep.subr.bf16.mxu0 0
        %5814 = vmatpush1.bf16.xpose.msra.mxu0 0
        %5815 = vmatprep.subr.bf16.mxu0 0
        %5816 = vmatpush1.bf16.xpose.msra.mxu0 0
        %5817 = vmatprep.subr.bf16.mxu0 0
        %5818 = vmatpush1.bf16.xpose.msra.mxu0 0
        %5819 = vmatprep.subr.bf16.mxu0 0
        %5820 = vmatpush1.bf16.xpose.msra.mxu0 0
        %5821 = vmatprep.subr.bf16.mxu0 0
        %5822 = vmatpush1.bf16.xpose.msra.mxu0 0
        %5823 = vmatprep.mubr.bf16.mxu0 0
        %5824 = vmatmul.mubr.bf16.gmra.mrb[0].mxu0 %v5786
        %v5825 = vpop.f32.mrb[0].mxu0
        %v5826 = vadd.f32 0.0, %v5825
        %v5827 = vpop.f32.mrb[0].mxu0
        %v5828 = vpop.f32.mrb[0].mxu0
        %v5829 = vpop.f32.mrb[0].mxu0
        %5830 = vdwg.mxu0
        %v5832 = vsel %vm743, %v5469, 0
        %v5835 = vsel %vm743, %v5602, 0
        %5837 = vmatprep.subr.bf16.mxu0 0
        %5838 = vmatpush1.bf16.xpose.msra.mxu0 %v5835
        %5839 = vmatprep.subr.bf16.mxu0 0
        %5840 = vmatpush1.bf16.xpose.msra.mxu0 0
        %5841 = vmatprep.subr.bf16.mxu0 0
        %5842 = vmatpush1.bf16.xpose.msra.mxu0 0
        %5843 = vmatprep.subr.bf16.mxu0 0
        %5844 = vmatpush1.bf16.xpose.msra.mxu0 0
        %5845 = vmatprep.subr.bf16.mxu0 0
        %5846 = vmatpush1.bf16.xpose.msra.mxu0 0
        %5847 = vmatprep.subr.bf16.mxu0 0
        %5848 = vmatpush1.bf16.xpose.msra.mxu0 0
        %5849 = vmatprep.subr.bf16.mxu0 0
        %5850 = vmatpush1.bf16.xpose.msra.mxu0 0
        %5851 = vmatprep.subr.bf16.mxu0 0
        %5852 = vmatpush1.bf16.xpose.msra.mxu0 0
        %5853 = vmatprep.subr.bf16.mxu0 0
        %5854 = vmatpush1.bf16.xpose.msra.mxu0 0
        %5855 = vmatprep.subr.bf16.mxu0 0
        %5856 = vmatpush1.bf16.xpose.msra.mxu0 0
        %5857 = vmatprep.subr.bf16.mxu0 0
        %5858 = vmatpush1.bf16.xpose.msra.mxu0 0
        %5859 = vmatprep.subr.bf16.mxu0 0
        %5860 = vmatpush1.bf16.xpose.msra.mxu0 0
        %5861 = vmatprep.subr.bf16.mxu0 0
        %5862 = vmatpush1.bf16.xpose.msra.mxu0 0
        %5863 = vmatprep.subr.bf16.mxu0 0
        %5864 = vmatpush1.bf16.xpose.msra.mxu0 0
        %5865 = vmatprep.subr.bf16.mxu0 0
        %5866 = vmatpush1.bf16.xpose.msra.mxu0 0
        %5867 = vmatprep.subr.bf16.mxu0 0
        %5868 = vmatpush1.bf16.xpose.msra.mxu0 0
        %5869 = vmatprep.mubr.bf16.mxu0 0
        %5870 = vmatmul.mubr.bf16.gmra.mrb[0].mxu0 %v5832
        %v5871 = vpop.f32.mrb[0].mxu0
        %v5872 = vadd.f32 0.0, %v5871
        %v5873 = vpop.f32.mrb[0].mxu0
        %v5874 = vpop.f32.mrb[0].mxu0
        %v5875 = vpop.f32.mrb[0].mxu0
        %5876 = vdwg.mxu0
        %v5878 = vsel %vm743, %v5471, 0
        %v5881 = vsel %vm743, %v5604, 0
        %5883 = vmatprep.subr.bf16.mxu0 0
        %5884 = vmatpush1.bf16.xpose.msra.mxu0 %v5881
        %5885 = vmatprep.subr.bf16.mxu0 0
        %5886 = vmatpush1.bf16.xpose.msra.mxu0 0
        %5887 = vmatprep.subr.bf16.mxu0 0
        %5888 = vmatpush1.bf16.xpose.msra.mxu0 0
        %5889 = vmatprep.subr.bf16.mxu0 0
        %5890 = vmatpush1.bf16.xpose.msra.mxu0 0
        %5891 = vmatprep.subr.bf16.mxu0 0
        %5892 = vmatpush1.bf16.xpose.msra.mxu0 0
        %5893 = vmatprep.subr.bf16.mxu0 0
        %5894 = vmatpush1.bf16.xpose.msra.mxu0 0
        %5895 = vmatprep.subr.bf16.mxu0 0
        %5896 = vmatpush1.bf16.xpose.msra.mxu0 0
        %5897 = vmatprep.subr.bf16.mxu0 0
        %5898 = vmatpush1.bf16.xpose.msra.mxu0 0
        %5899 = vmatprep.subr.bf16.mxu0 0
        %5900 = vmatpush1.bf16.xpose.msra.mxu0 0
        %5901 = vmatprep.subr.bf16.mxu0 0
        %5902 = vmatpush1.bf16.xpose.msra.mxu0 0
        %5903 = vmatprep.subr.bf16.mxu0 0
        %5904 = vmatpush1.bf16.xpose.msra.mxu0 0
        %5905 = vmatprep.subr.bf16.mxu0 0
        %5906 = vmatpush1.bf16.xpose.msra.mxu0 0
        %5907 = vmatprep.subr.bf16.mxu0 0
        %5908 = vmatpush1.bf16.xpose.msra.mxu0 0
        %5909 = vmatprep.subr.bf16.mxu0 0
        %5910 = vmatpush1.bf16.xpose.msra.mxu0 0
        %5911 = vmatprep.subr.bf16.mxu0 0
        %5912 = vmatpush1.bf16.xpose.msra.mxu0 0
        %5913 = vmatprep.subr.bf16.mxu0 0
        %5914 = vmatpush1.bf16.xpose.msra.mxu0 0
        %5915 = vmatprep.mubr.bf16.mxu0 0
        %5916 = vmatmul.mubr.bf16.gmra.mrb[0].mxu0 %v5878
        %v5917 = vpop.f32.mrb[0].mxu0
        %v5918 = vadd.f32 0.0, %v5917
        %v5919 = vpop.f32.mrb[0].mxu0
        %v5920 = vpop.f32.mrb[0].mxu0
        %v5921 = vpop.f32.mrb[0].mxu0
        %5922 = vdwg.mxu0
        %v5924 = vsel %vm743, %v5454, 0
        %v5927 = vsel %vm743, %v5587, 0
        %5929 = vmatprep.subr.bf16.mxu0 0
        %5930 = vmatpush1.bf16.xpose.msra.mxu0 %v5927
        %5931 = vmatprep.subr.bf16.mxu0 0
        %5932 = vmatpush1.bf16.xpose.msra.mxu0 0
        %5933 = vmatprep.subr.bf16.mxu0 0
        %5934 = vmatpush1.bf16.xpose.msra.mxu0 0
        %5935 = vmatprep.subr.bf16.mxu0 0
        %5936 = vmatpush1.bf16.xpose.msra.mxu0 0
        %5937 = vmatprep.subr.bf16.mxu0 0
        %5938 = vmatpush1.bf16.xpose.msra.mxu0 0
        %5939 = vmatprep.subr.bf16.mxu0 0
        %5940 = vmatpush1.bf16.xpose.msra.mxu0 0
        %5941 = vmatprep.subr.bf16.mxu0 0
        %5942 = vmatpush1.bf16.xpose.msra.mxu0 0
        %5943 = vmatprep.subr.bf16.mxu0 0
        %5944 = vmatpush1.bf16.xpose.msra.mxu0 0
        %5945 = vmatprep.subr.bf16.mxu0 0
        %5946 = vmatpush1.bf16.xpose.msra.mxu0 0
        %5947 = vmatprep.subr.bf16.mxu0 0
        %5948 = vmatpush1.bf16.xpose.msra.mxu0 0
        %5949 = vmatprep.subr.bf16.mxu0 0
        %5950 = vmatpush1.bf16.xpose.msra.mxu0 0
        %5951 = vmatprep.subr.bf16.mxu0 0
        %5952 = vmatpush1.bf16.xpose.msra.mxu0 0
        %5953 = vmatprep.subr.bf16.mxu0 0
        %5954 = vmatpush1.bf16.xpose.msra.mxu0 0
        %5955 = vmatprep.subr.bf16.mxu0 0
        %5956 = vmatpush1.bf16.xpose.msra.mxu0 0
        %5957 = vmatprep.subr.bf16.mxu0 0
        %5958 = vmatpush1.bf16.xpose.msra.mxu0 0
        %5959 = vmatprep.subr.bf16.mxu0 0
        %5960 = vmatpush1.bf16.xpose.msra.mxu0 0
        %5961 = vmatprep.mubr.bf16.mxu0 0
        %5962 = vmatmul.mubr.bf16.gmra.mrb[0].mxu0 %v5924
        %v5963 = vpop.f32.mrb[0].mxu0
        %v5964 = vadd.f32 0.0, %v5963
        %v5965 = vpop.f32.mrb[0].mxu0
        %v5966 = vpop.f32.mrb[0].mxu0
        %v5967 = vpop.f32.mrb[0].mxu0
        %5968 = vdwg.mxu0
        %v5970 = vsel %vm743, %v5468, 0
        %v5973 = vsel %vm743, %v5601, 0
        %5975 = vmatprep.subr.bf16.mxu0 0
        %5976 = vmatpush1.bf16.xpose.msra.mxu0 %v5973
        %5977 = vmatprep.subr.bf16.mxu0 0
        %5978 = vmatpush1.bf16.xpose.msra.mxu0 0
        %5979 = vmatprep.subr.bf16.mxu0 0
        %5980 = vmatpush1.bf16.xpose.msra.mxu0 0
        %5981 = vmatprep.subr.bf16.mxu0 0
        %5982 = vmatpush1.bf16.xpose.msra.mxu0 0
        %5983 = vmatprep.subr.bf16.mxu0 0
        %5984 = vmatpush1.bf16.xpose.msra.mxu0 0
        %5985 = vmatprep.subr.bf16.mxu0 0
        %5986 = vmatpush1.bf16.xpose.msra.mxu0 0
        %5987 = vmatprep.subr.bf16.mxu0 0
        %5988 = vmatpush1.bf16.xpose.msra.mxu0 0
        %5989 = vmatprep.subr.bf16.mxu0 0
        %5990 = vmatpush1.bf16.xpose.msra.mxu0 0
        %5991 = vmatprep.subr.bf16.mxu0 0
        %5992 = vmatpush1.bf16.xpose.msra.mxu0 0
        %5993 = vmatprep.subr.bf16.mxu0 0
        %5994 = vmatpush1.bf16.xpose.msra.mxu0 0
        %5995 = vmatprep.subr.bf16.mxu0 0
        %5996 = vmatpush1.bf16.xpose.msra.mxu0 0
        %5997 = vmatprep.subr.bf16.mxu0 0
        %5998 = vmatpush1.bf16.xpose.msra.mxu0 0
        %5999 = vmatprep.subr.bf16.mxu0 0
        %6000 = vmatpush1.bf16.xpose.msra.mxu0 0
        %6001 = vmatprep.subr.bf16.mxu0 0
        %6002 = vmatpush1.bf16.xpose.msra.mxu0 0
        %6003 = vmatprep.subr.bf16.mxu0 0
        %6004 = vmatpush1.bf16.xpose.msra.mxu0 0
        %6005 = vmatprep.subr.bf16.mxu0 0
        %6006 = vmatpush1.bf16.xpose.msra.mxu0 0
        %6007 = vmatprep.mubr.bf16.mxu0 0
        %6008 = vmatmul.mubr.bf16.gmra.mrb[0].mxu0 %v5970
        %v6009 = vpop.f32.mrb[0].mxu0
        %v6010 = vadd.f32 0.0, %v6009
        %v6011 = vpop.f32.mrb[0].mxu0
        %v6012 = vpop.f32.mrb[0].mxu0
        %v6013 = vpop.f32.mrb[0].mxu0
        %6014 = vdwg.mxu0
        %v6016 = vsel %vm743, %v5470, 0
        %v6019 = vsel %vm743, %v5603, 0
        %6021 = vmatprep.subr.bf16.mxu0 0
        %6022 = vmatpush1.bf16.xpose.msra.mxu0 %v6019
        %6023 = vmatprep.subr.bf16.mxu0 0
        %6024 = vmatpush1.bf16.xpose.msra.mxu0 0
        %6025 = vmatprep.subr.bf16.mxu0 0
        %6026 = vmatpush1.bf16.xpose.msra.mxu0 0
        %6027 = vmatprep.subr.bf16.mxu0 0
        %6028 = vmatpush1.bf16.xpose.msra.mxu0 0
        %6029 = vmatprep.subr.bf16.mxu0 0
        %6030 = vmatpush1.bf16.xpose.msra.mxu0 0
        %6031 = vmatprep.subr.bf16.mxu0 0
        %6032 = vmatpush1.bf16.xpose.msra.mxu0 0
        %6033 = vmatprep.subr.bf16.mxu0 0
        %6034 = vmatpush1.bf16.xpose.msra.mxu0 0
        %6035 = vmatprep.subr.bf16.mxu0 0
        %6036 = vmatpush1.bf16.xpose.msra.mxu0 0
        %6037 = vmatprep.subr.bf16.mxu0 0
        %6038 = vmatpush1.bf16.xpose.msra.mxu0 0
        %6039 = vmatprep.subr.bf16.mxu0 0
        %6040 = vmatpush1.bf16.xpose.msra.mxu0 0
        %6041 = vmatprep.subr.bf16.mxu0 0
        %6042 = vmatpush1.bf16.xpose.msra.mxu0 0
        %6043 = vmatprep.subr.bf16.mxu0 0
        %6044 = vmatpush1.bf16.xpose.msra.mxu0 0
        %6045 = vmatprep.subr.bf16.mxu0 0
        %6046 = vmatpush1.bf16.xpose.msra.mxu0 0
        %6047 = vmatprep.subr.bf16.mxu0 0
        %6048 = vmatpush1.bf16.xpose.msra.mxu0 0
        %6049 = vmatprep.subr.bf16.mxu0 0
        %6050 = vmatpush1.bf16.xpose.msra.mxu0 0
        %6051 = vmatprep.subr.bf16.mxu0 0
        %6052 = vmatpush1.bf16.xpose.msra.mxu0 0
        %6053 = vmatprep.mubr.bf16.mxu0 0
        %6054 = vmatmul.mubr.bf16.gmra.mrb[0].mxu0 %v6016
        %v6055 = vpop.f32.mrb[0].mxu0
        %v6056 = vadd.f32 0.0, %v6055
        %v6057 = vpop.f32.mrb[0].mxu0
        %v6058 = vpop.f32.mrb[0].mxu0
        %v6059 = vpop.f32.mrb[0].mxu0
        %6060 = vdwg.mxu0
        %v6062 = vsel %vm743, %v5472, 0
        %v6065 = vsel %vm743, %v5605, 0
        %6067 = vmatprep.subr.bf16.mxu0 0
        %6068 = vmatpush1.bf16.xpose.msra.mxu0 %v6065
        %6069 = vmatprep.subr.bf16.mxu0 0
        %6070 = vmatpush1.bf16.xpose.msra.mxu0 0
        %6071 = vmatprep.subr.bf16.mxu0 0
        %6072 = vmatpush1.bf16.xpose.msra.mxu0 0
        %6073 = vmatprep.subr.bf16.mxu0 0
        %6074 = vmatpush1.bf16.xpose.msra.mxu0 0
        %6075 = vmatprep.subr.bf16.mxu0 0
        %6076 = vmatpush1.bf16.xpose.msra.mxu0 0
        %6077 = vmatprep.subr.bf16.mxu0 0
        %6078 = vmatpush1.bf16.xpose.msra.mxu0 0
        %6079 = vmatprep.subr.bf16.mxu0 0
        %6080 = vmatpush1.bf16.xpose.msra.mxu0 0
        %6081 = vmatprep.subr.bf16.mxu0 0
        %6082 = vmatpush1.bf16.xpose.msra.mxu0 0
        %6083 = vmatprep.subr.bf16.mxu0 0
        %6084 = vmatpush1.bf16.xpose.msra.mxu0 0
        %6085 = vmatprep.subr.bf16.mxu0 0
        %6086 = vmatpush1.bf16.xpose.msra.mxu0 0
        %6087 = vmatprep.subr.bf16.mxu0 0
        %6088 = vmatpush1.bf16.xpose.msra.mxu0 0
        %6089 = vmatprep.subr.bf16.mxu0 0
        %6090 = vmatpush1.bf16.xpose.msra.mxu0 0
        %6091 = vmatprep.subr.bf16.mxu0 0
        %6092 = vmatpush1.bf16.xpose.msra.mxu0 0
        %6093 = vmatprep.subr.bf16.mxu0 0
        %6094 = vmatpush1.bf16.xpose.msra.mxu0 0
        %6095 = vmatprep.subr.bf16.mxu0 0
        %6096 = vmatpush1.bf16.xpose.msra.mxu0 0
        %6097 = vmatprep.subr.bf16.mxu0 0
        %6098 = vmatpush1.bf16.xpose.msra.mxu0 0
        %6099 = vmatprep.mubr.bf16.mxu0 0
        %6100 = vmatmul.mubr.bf16.gmra.mrb[0].mxu0 %v6062
        %v6101 = vpop.f32.mrb[0].mxu0
        %v6102 = vadd.f32 0.0, %v6101
        %v6103 = vpop.f32.mrb[0].mxu0
        %v6104 = vpop.f32.mrb[0].mxu0
        %v6105 = vpop.f32.mrb[0].mxu0
        %6106 = vdwg.mxu0
        %v6107 = vsel %vm1673, %v5780, -inf
        %6108 = vmax.xlane.f32.xlu0 %v6107
        %v6109 = vpop.xlane.xlu0 %6108
        %v6110 = vsel %vm1673, %v5826, -inf
        %6111 = vmax.xlane.f32.xlu0 %v6110
        %v6112 = vpop.xlane.xlu0 %6111
        %v6113 = vsel %vm1673, %v5872, -inf
        %6114 = vmax.xlane.f32.xlu0 %v6113
        %v6115 = vpop.xlane.xlu0 %6114
        %v6116 = vsel %vm1673, %v5918, -inf
        %6117 = vmax.xlane.f32.xlu0 %v6116
        %v6118 = vpop.xlane.xlu0 %6117
        %v6119 = vsel %vm1673, %v5964, -inf
        %6120 = vmax.xlane.f32.xlu0 %v6119
        %v6121 = vpop.xlane.xlu0 %6120
        %v6122 = vsel %vm1673, %v6010, -inf
        %6123 = vmax.xlane.f32.xlu0 %v6122
        %v6124 = vpop.xlane.xlu0 %6123
        %v6125 = vsel %vm1673, %v6056, -inf
        %6126 = vmax.xlane.f32.xlu0 %v6125
        %v6127 = vpop.xlane.xlu0 %6126
        %v6128 = vsel %vm1673, %v6102, -inf
        %6129 = vmax.xlane.f32.xlu0 %v6128
        %v6130 = vpop.xlane.xlu0 %6129
        %v6131 = vsub.f32 %v5780, %v6109
        %v6132 = vsub.f32 %v5826, %v6112
        %v6133 = vsub.f32 %v5872, %v6115
        %v6134 = vsub.f32 %v5918, %v6118
        %v6135 = vsub.f32 %v5964, %v6121
        %v6136 = vsub.f32 %v6010, %v6124
        %v6137 = vsub.f32 %v6056, %v6127
        %v6138 = vsub.f32 %v6102, %v6130
        %v6139 = vmul.f32 %v6131, 1.442695
        %v6140 = vpow.pop %v6139
        %v6141 = vmul.f32 %v6132, 1.442695
        %v6142 = vpow.pop %v6141
        %v6143 = vmul.f32 %v6133, 1.442695
        %v6144 = vpow.pop %v6143
        %v6145 = vmul.f32 %v6134, 1.442695
        %v6146 = vpow.pop %v6145
        %v6147 = vmul.f32 %v6135, 1.442695
        %v6148 = vpow.pop %v6147
        %v6149 = vmul.f32 %v6136, 1.442695
        %v6150 = vpow.pop %v6149
        %v6151 = vmul.f32 %v6137, 1.442695
        %v6152 = vpow.pop %v6151
        %v6153 = vmul.f32 %v6138, 1.442695
        %v6154 = vpow.pop %v6153
        %v6155 = vsel %vm1673, %v6140, 0.0
        %6156 = vadd.xlane.f32.xlu0 %v6155
        %v6157 = vpop.xlane.xlu0 %6156
        %v6158 = vsel %vm1673, %v6142, 0.0
        %6159 = vadd.xlane.f32.xlu0 %v6158
        %v6160 = vpop.xlane.xlu0 %6159
        %v6161 = vsel %vm1673, %v6144, 0.0
        %6162 = vadd.xlane.f32.xlu0 %v6161
        %v6163 = vpop.xlane.xlu0 %6162
        %v6164 = vsel %vm1673, %v6146, 0.0
        %6165 = vadd.xlane.f32.xlu0 %v6164
        %v6166 = vpop.xlane.xlu0 %6165
        %v6167 = vsel %vm1673, %v6148, 0.0
        %6168 = vadd.xlane.f32.xlu0 %v6167
        %v6169 = vpop.xlane.xlu0 %6168
        %v6170 = vsel %vm1673, %v6150, 0.0
        %6171 = vadd.xlane.f32.xlu0 %v6170
        %v6172 = vpop.xlane.xlu0 %6171
        %v6173 = vsel %vm1673, %v6152, 0.0
        %6174 = vadd.xlane.f32.xlu0 %v6173
        %v6175 = vpop.xlane.xlu0 %6174
        %v6176 = vsel %vm1673, %v6154, 0.0
        %6177 = vadd.xlane.f32.xlu0 %v6176
        %v6178 = vpop.xlane.xlu0 %6177
        %v6179 = vrcp.pop %v6157
        %v6180 = vmul.f32 %v6140, %v6179
        %v6181 = vrcp.pop %v6160
        %v6182 = vmul.f32 %v6142, %v6181
        %v6183 = vrcp.pop %v6163
        %v6184 = vmul.f32 %v6144, %v6183
        %v6185 = vrcp.pop %v6166
        %v6186 = vmul.f32 %v6146, %v6185
        %v6187 = vrcp.pop %v6169
        %v6188 = vmul.f32 %v6148, %v6187
        %v6189 = vrcp.pop %v6172
        %v6190 = vmul.f32 %v6150, %v6189
        %v6191 = vrcp.pop %v6175
        %v6192 = vmul.f32 %v6152, %v6191
        %v6193 = vrcp.pop %v6178
        %v6194 = vmul.f32 %v6154, %v6193
        %v6195 = vpack.c.bf16 %v6180, %v6180
        %v6196 = vpack.c.bf16 %v6182, %v6182
        %v6197 = vpack.c.bf16 %v6184, %v6184
        %v6198 = vpack.c.bf16 %v6186, %v6186
        %v6199 = vpack.c.bf16 %v6188, %v6188
        %v6200 = vpack.c.bf16 %v6190, %v6190
        %v6201 = vpack.c.bf16 %v6192, %v6192
        %v6202 = vpack.c.bf16 %v6194, %v6194
        %v6204 = vsel %vm1770, %v6195, 0
        %v6207 = vsel %vm653, %v5713, 0
        %6209 = vmatprep.subr.bf16.mxu0 0
        %6210 = vmatpush1.bf16.msra.mxu0 %v6207
        %6211 = vmatprep.subr.bf16.mxu0 0
        %6212 = vmatpush1.bf16.msra.mxu0 0
        %6213 = vmatprep.subr.bf16.mxu0 0
        %6214 = vmatpush1.bf16.msra.mxu0 0
        %6215 = vmatprep.subr.bf16.mxu0 0
        %6216 = vmatpush1.bf16.msra.mxu0 0
        %6217 = vmatprep.subr.bf16.mxu0 0
        %6218 = vmatpush1.bf16.msra.mxu0 0
        %6219 = vmatprep.subr.bf16.mxu0 0
        %6220 = vmatpush1.bf16.msra.mxu0 0
        %6221 = vmatprep.subr.bf16.mxu0 0
        %6222 = vmatpush1.bf16.msra.mxu0 0
        %6223 = vmatprep.subr.bf16.mxu0 0
        %6224 = vmatpush1.bf16.msra.mxu0 0
        %6225 = vmatprep.subr.bf16.mxu0 0
        %6226 = vmatpush1.bf16.msra.mxu0 0
        %6227 = vmatprep.subr.bf16.mxu0 0
        %6228 = vmatpush1.bf16.msra.mxu0 0
        %6229 = vmatprep.subr.bf16.mxu0 0
        %6230 = vmatpush1.bf16.msra.mxu0 0
        %6231 = vmatprep.subr.bf16.mxu0 0
        %6232 = vmatpush1.bf16.msra.mxu0 0
        %6233 = vmatprep.subr.bf16.mxu0 0
        %6234 = vmatpush1.bf16.msra.mxu0 0
        %6235 = vmatprep.subr.bf16.mxu0 0
        %6236 = vmatpush1.bf16.msra.mxu0 0
        %6237 = vmatprep.subr.bf16.mxu0 0
        %6238 = vmatpush1.bf16.msra.mxu0 0
        %6239 = vmatprep.subr.bf16.mxu0 0
        %6240 = vmatpush1.bf16.msra.mxu0 0
        %6241 = vmatprep.mubr.bf16.mxu0 0
        %6242 = vmatmul.mubr.bf16.gmra.mrb[0].mxu0 %v6204
        %v6243 = vpop.f32.mrb[0].mxu0
        %v6244 = vadd.f32 0.0, %v6243
        %v6245 = vpop.f32.mrb[0].mxu0
        %v6246 = vpop.f32.mrb[0].mxu0
        %v6247 = vpop.f32.mrb[0].mxu0
        %6248 = vdwg.mxu0
        %v6250 = vsel %vm1770, %v6196, 0
        %v6253 = vsel %vm653, %v5727, 0
        %6255 = vmatprep.subr.bf16.mxu0 0
        %6256 = vmatpush1.bf16.msra.mxu0 %v6253
        %6257 = vmatprep.subr.bf16.mxu0 0
        %6258 = vmatpush1.bf16.msra.mxu0 0
        %6259 = vmatprep.subr.bf16.mxu0 0
        %6260 = vmatpush1.bf16.msra.mxu0 0
        %6261 = vmatprep.subr.bf16.mxu0 0
        %6262 = vmatpush1.bf16.msra.mxu0 0
        %6263 = vmatprep.subr.bf16.mxu0 0
        %6264 = vmatpush1.bf16.msra.mxu0 0
        %6265 = vmatprep.subr.bf16.mxu0 0
        %6266 = vmatpush1.bf16.msra.mxu0 0
        %6267 = vmatprep.subr.bf16.mxu0 0
        %6268 = vmatpush1.bf16.msra.mxu0 0
        %6269 = vmatprep.subr.bf16.mxu0 0
        %6270 = vmatpush1.bf16.msra.mxu0 0
        %6271 = vmatprep.subr.bf16.mxu0 0
        %6272 = vmatpush1.bf16.msra.mxu0 0
        %6273 = vmatprep.subr.bf16.mxu0 0
        %6274 = vmatpush1.bf16.msra.mxu0 0
        %6275 = vmatprep.subr.bf16.mxu0 0
        %6276 = vmatpush1.bf16.msra.mxu0 0
        %6277 = vmatprep.subr.bf16.mxu0 0
        %6278 = vmatpush1.bf16.msra.mxu0 0
        %6279 = vmatprep.subr.bf16.mxu0 0
        %6280 = vmatpush1.bf16.msra.mxu0 0
        %6281 = vmatprep.subr.bf16.mxu0 0
        %6282 = vmatpush1.bf16.msra.mxu0 0
        %6283 = vmatprep.subr.bf16.mxu0 0
        %6284 = vmatpush1.bf16.msra.mxu0 0
        %6285 = vmatprep.subr.bf16.mxu0 0
        %6286 = vmatpush1.bf16.msra.mxu0 0
        %6287 = vmatprep.mubr.bf16.mxu0 0
        %6288 = vmatmul.mubr.bf16.gmra.mrb[0].mxu0 %v6250
        %v6289 = vpop.f32.mrb[0].mxu0
        %v6290 = vadd.f32 0.0, %v6289
        %v6291 = vpop.f32.mrb[0].mxu0
        %v6292 = vpop.f32.mrb[0].mxu0
        %v6293 = vpop.f32.mrb[0].mxu0
        %6294 = vdwg.mxu0
        %v6296 = vsel %vm1770, %v6197, 0
        %v6299 = vsel %vm653, %v5735, 0
        %6301 = vmatprep.subr.bf16.mxu0 0
        %6302 = vmatpush1.bf16.msra.mxu0 %v6299
        %6303 = vmatprep.subr.bf16.mxu0 0
        %6304 = vmatpush1.bf16.msra.mxu0 0
        %6305 = vmatprep.subr.bf16.mxu0 0
        %6306 = vmatpush1.bf16.msra.mxu0 0
        %6307 = vmatprep.subr.bf16.mxu0 0
        %6308 = vmatpush1.bf16.msra.mxu0 0
        %6309 = vmatprep.subr.bf16.mxu0 0
        %6310 = vmatpush1.bf16.msra.mxu0 0
        %6311 = vmatprep.subr.bf16.mxu0 0
        %6312 = vmatpush1.bf16.msra.mxu0 0
        %6313 = vmatprep.subr.bf16.mxu0 0
        %6314 = vmatpush1.bf16.msra.mxu0 0
        %6315 = vmatprep.subr.bf16.mxu0 0
        %6316 = vmatpush1.bf16.msra.mxu0 0
        %6317 = vmatprep.subr.bf16.mxu0 0
        %6318 = vmatpush1.bf16.msra.mxu0 0
        %6319 = vmatprep.subr.bf16.mxu0 0
        %6320 = vmatpush1.bf16.msra.mxu0 0
        %6321 = vmatprep.subr.bf16.mxu0 0
        %6322 = vmatpush1.bf16.msra.mxu0 0
        %6323 = vmatprep.subr.bf16.mxu0 0
        %6324 = vmatpush1.bf16.msra.mxu0 0
        %6325 = vmatprep.subr.bf16.mxu0 0
        %6326 = vmatpush1.bf16.msra.mxu0 0
        %6327 = vmatprep.subr.bf16.mxu0 0
        %6328 = vmatpush1.bf16.msra.mxu0 0
        %6329 = vmatprep.subr.bf16.mxu0 0
        %6330 = vmatpush1.bf16.msra.mxu0 0
        %6331 = vmatprep.subr.bf16.mxu0 0
        %6332 = vmatpush1.bf16.msra.mxu0 0
        %6333 = vmatprep.mubr.bf16.mxu0 0
        %6334 = vmatmul.mubr.bf16.gmra.mrb[0].mxu0 %v6296
        %v6335 = vpop.f32.mrb[0].mxu0
        %v6336 = vadd.f32 0.0, %v6335
        %v6337 = vpop.f32.mrb[0].mxu0
        %v6338 = vpop.f32.mrb[0].mxu0
        %v6339 = vpop.f32.mrb[0].mxu0
        %6340 = vdwg.mxu0
        %v6342 = vsel %vm1770, %v6198, 0
        %v6345 = vsel %vm653, %v5737, 0
        %6347 = vmatprep.subr.bf16.mxu0 0
        %6348 = vmatpush1.bf16.msra.mxu0 %v6345
        %6349 = vmatprep.subr.bf16.mxu0 0
        %6350 = vmatpush1.bf16.msra.mxu0 0
        %6351 = vmatprep.subr.bf16.mxu0 0
        %6352 = vmatpush1.bf16.msra.mxu0 0
        %6353 = vmatprep.subr.bf16.mxu0 0
        %6354 = vmatpush1.bf16.msra.mxu0 0
        %6355 = vmatprep.subr.bf16.mxu0 0
        %6356 = vmatpush1.bf16.msra.mxu0 0
        %6357 = vmatprep.subr.bf16.mxu0 0
        %6358 = vmatpush1.bf16.msra.mxu0 0
        %6359 = vmatprep.subr.bf16.mxu0 0
        %6360 = vmatpush1.bf16.msra.mxu0 0
        %6361 = vmatprep.subr.bf16.mxu0 0
        %6362 = vmatpush1.bf16.msra.mxu0 0
        %6363 = vmatprep.subr.bf16.mxu0 0
        %6364 = vmatpush1.bf16.msra.mxu0 0
        %6365 = vmatprep.subr.bf16.mxu0 0
        %6366 = vmatpush1.bf16.msra.mxu0 0
        %6367 = vmatprep.subr.bf16.mxu0 0
        %6368 = vmatpush1.bf16.msra.mxu0 0
        %6369 = vmatprep.subr.bf16.mxu0 0
        %6370 = vmatpush1.bf16.msra.mxu0 0
        %6371 = vmatprep.subr.bf16.mxu0 0
        %6372 = vmatpush1.bf16.msra.mxu0 0
        %6373 = vmatprep.subr.bf16.mxu0 0
        %6374 = vmatpush1.bf16.msra.mxu0 0
        %6375 = vmatprep.subr.bf16.mxu0 0
        %6376 = vmatpush1.bf16.msra.mxu0 0
        %6377 = vmatprep.subr.bf16.mxu0 0
        %6378 = vmatpush1.bf16.msra.mxu0 0
        %6379 = vmatprep.mubr.bf16.mxu0 0
        %6380 = vmatmul.mubr.bf16.gmra.mrb[0].mxu0 %v6342
        %v6381 = vpop.f32.mrb[0].mxu0
        %v6382 = vadd.f32 0.0, %v6381
        %v6383 = vpop.f32.mrb[0].mxu0
        %v6384 = vpop.f32.mrb[0].mxu0
        %v6385 = vpop.f32.mrb[0].mxu0
        %6386 = vdwg.mxu0
        %v6388 = vsel %vm1770, %v6199, 0
        %v6391 = vsel %vm653, %v5720, 0
        %6393 = vmatprep.subr.bf16.mxu0 0
        %6394 = vmatpush1.bf16.msra.mxu0 %v6391
        %6395 = vmatprep.subr.bf16.mxu0 0
        %6396 = vmatpush1.bf16.msra.mxu0 0
        %6397 = vmatprep.subr.bf16.mxu0 0
        %6398 = vmatpush1.bf16.msra.mxu0 0
        %6399 = vmatprep.subr.bf16.mxu0 0
        %6400 = vmatpush1.bf16.msra.mxu0 0
        %6401 = vmatprep.subr.bf16.mxu0 0
        %6402 = vmatpush1.bf16.msra.mxu0 0
        %6403 = vmatprep.subr.bf16.mxu0 0
        %6404 = vmatpush1.bf16.msra.mxu0 0
        %6405 = vmatprep.subr.bf16.mxu0 0
        %6406 = vmatpush1.bf16.msra.mxu0 0
        %6407 = vmatprep.subr.bf16.mxu0 0
        %6408 = vmatpush1.bf16.msra.mxu0 0
        %6409 = vmatprep.subr.bf16.mxu0 0
        %6410 = vmatpush1.bf16.msra.mxu0 0
        %6411 = vmatprep.subr.bf16.mxu0 0
        %6412 = vmatpush1.bf16.msra.mxu0 0
        %6413 = vmatprep.subr.bf16.mxu0 0
        %6414 = vmatpush1.bf16.msra.mxu0 0
        %6415 = vmatprep.subr.bf16.mxu0 0
        %6416 = vmatpush1.bf16.msra.mxu0 0
        %6417 = vmatprep.subr.bf16.mxu0 0
        %6418 = vmatpush1.bf16.msra.mxu0 0
        %6419 = vmatprep.subr.bf16.mxu0 0
        %6420 = vmatpush1.bf16.msra.mxu0 0
        %6421 = vmatprep.subr.bf16.mxu0 0
        %6422 = vmatpush1.bf16.msra.mxu0 0
        %6423 = vmatprep.subr.bf16.mxu0 0
        %6424 = vmatpush1.bf16.msra.mxu0 0
        %6425 = vmatprep.mubr.bf16.mxu0 0
        %6426 = vmatmul.mubr.bf16.gmra.mrb[0].mxu0 %v6388
        %v6427 = vpop.f32.mrb[0].mxu0
        %v6428 = vadd.f32 0.0, %v6427
        %v6429 = vpop.f32.mrb[0].mxu0
        %v6430 = vpop.f32.mrb[0].mxu0
        %v6431 = vpop.f32.mrb[0].mxu0
        %6432 = vdwg.mxu0
        %v6434 = vsel %vm1770, %v6200, 0
        %v6437 = vsel %vm653, %v5734, 0
        %6439 = vmatprep.subr.bf16.mxu0 0
        %6440 = vmatpush1.bf16.msra.mxu0 %v6437
        %6441 = vmatprep.subr.bf16.mxu0 0
        %6442 = vmatpush1.bf16.msra.mxu0 0
        %6443 = vmatprep.subr.bf16.mxu0 0
        %6444 = vmatpush1.bf16.msra.mxu0 0
        %6445 = vmatprep.subr.bf16.mxu0 0
        %6446 = vmatpush1.bf16.msra.mxu0 0
        %6447 = vmatprep.subr.bf16.mxu0 0
        %6448 = vmatpush1.bf16.msra.mxu0 0
        %6449 = vmatprep.subr.bf16.mxu0 0
        %6450 = vmatpush1.bf16.msra.mxu0 0
        %6451 = vmatprep.subr.bf16.mxu0 0
        %6452 = vmatpush1.bf16.msra.mxu0 0
        %6453 = vmatprep.subr.bf16.mxu0 0
        %6454 = vmatpush1.bf16.msra.mxu0 0
        %6455 = vmatprep.subr.bf16.mxu0 0
        %6456 = vmatpush1.bf16.msra.mxu0 0
        %6457 = vmatprep.subr.bf16.mxu0 0
        %6458 = vmatpush1.bf16.msra.mxu0 0
        %6459 = vmatprep.subr.bf16.mxu0 0
        %6460 = vmatpush1.bf16.msra.mxu0 0
        %6461 = vmatprep.subr.bf16.mxu0 0
        %6462 = vmatpush1.bf16.msra.mxu0 0
        %6463 = vmatprep.subr.bf16.mxu0 0
        %6464 = vmatpush1.bf16.msra.mxu0 0
        %6465 = vmatprep.subr.bf16.mxu0 0
        %6466 = vmatpush1.bf16.msra.mxu0 0
        %6467 = vmatprep.subr.bf16.mxu0 0
        %6468 = vmatpush1.bf16.msra.mxu0 0
        %6469 = vmatprep.subr.bf16.mxu0 0
        %6470 = vmatpush1.bf16.msra.mxu0 0
        %6471 = vmatprep.mubr.bf16.mxu0 0
        %6472 = vmatmul.mubr.bf16.gmra.mrb[0].mxu0 %v6434
        %v6473 = vpop.f32.mrb[0].mxu0
        %v6474 = vadd.f32 0.0, %v6473
        %v6475 = vpop.f32.mrb[0].mxu0
        %v6476 = vpop.f32.mrb[0].mxu0
        %v6477 = vpop.f32.mrb[0].mxu0
        %6478 = vdwg.mxu0
        %v6480 = vsel %vm1770, %v6201, 0
        %v6483 = vsel %vm653, %v5736, 0
        %6485 = vmatprep.subr.bf16.mxu0 0
        %6486 = vmatpush1.bf16.msra.mxu0 %v6483
        %6487 = vmatprep.subr.bf16.mxu0 0
        %6488 = vmatpush1.bf16.msra.mxu0 0
        %6489 = vmatprep.subr.bf16.mxu0 0
        %6490 = vmatpush1.bf16.msra.mxu0 0
        %6491 = vmatprep.subr.bf16.mxu0 0
        %6492 = vmatpush1.bf16.msra.mxu0 0
        %6493 = vmatprep.subr.bf16.mxu0 0
        %6494 = vmatpush1.bf16.msra.mxu0 0
        %6495 = vmatprep.subr.bf16.mxu0 0
        %6496 = vmatpush1.bf16.msra.mxu0 0
        %6497 = vmatprep.subr.bf16.mxu0 0
        %6498 = vmatpush1.bf16.msra.mxu0 0
        %6499 = vmatprep.subr.bf16.mxu0 0
        %6500 = vmatpush1.bf16.msra.mxu0 0
        %6501 = vmatprep.subr.bf16.mxu0 0
        %6502 = vmatpush1.bf16.msra.mxu0 0
        %6503 = vmatprep.subr.bf16.mxu0 0
        %6504 = vmatpush1.bf16.msra.mxu0 0
        %6505 = vmatprep.subr.bf16.mxu0 0
        %6506 = vmatpush1.bf16.msra.mxu0 0
        %6507 = vmatprep.subr.bf16.mxu0 0
        %6508 = vmatpush1.bf16.msra.mxu0 0
        %6509 = vmatprep.subr.bf16.mxu0 0
        %6510 = vmatpush1.bf16.msra.mxu0 0
        %6511 = vmatprep.subr.bf16.mxu0 0
        %6512 = vmatpush1.bf16.msra.mxu0 0
        %6513 = vmatprep.subr.bf16.mxu0 0
        %6514 = vmatpush1.bf16.msra.mxu0 0
        %6515 = vmatprep.subr.bf16.mxu0 0
        %6516 = vmatpush1.bf16.msra.mxu0 0
        %6517 = vmatprep.mubr.bf16.mxu0 0
        %6518 = vmatmul.mubr.bf16.gmra.mrb[0].mxu0 %v6480
        %v6519 = vpop.f32.mrb[0].mxu0
        %v6520 = vadd.f32 0.0, %v6519
        %v6521 = vpop.f32.mrb[0].mxu0
        %v6522 = vpop.f32.mrb[0].mxu0
        %v6523 = vpop.f32.mrb[0].mxu0
        %6524 = vdwg.mxu0
        %v6526 = vsel %vm1770, %v6202, 0
        %v6529 = vsel %vm653, %v5738, 0
        %6531 = vmatprep.subr.bf16.mxu0 0
        %6532 = vmatpush1.bf16.msra.mxu0 %v6529
        %6533 = vmatprep.subr.bf16.mxu0 0
        %6534 = vmatpush1.bf16.msra.mxu0 0
        %6535 = vmatprep.subr.bf16.mxu0 0
        %6536 = vmatpush1.bf16.msra.mxu0 0
        %6537 = vmatprep.subr.bf16.mxu0 0
        %6538 = vmatpush1.bf16.msra.mxu0 0
        %6539 = vmatprep.subr.bf16.mxu0 0
        %6540 = vmatpush1.bf16.msra.mxu0 0
        %6541 = vmatprep.subr.bf16.mxu0 0
        %6542 = vmatpush1.bf16.msra.mxu0 0
        %6543 = vmatprep.subr.bf16.mxu0 0
        %6544 = vmatpush1.bf16.msra.mxu0 0
        %6545 = vmatprep.subr.bf16.mxu0 0
        %6546 = vmatpush1.bf16.msra.mxu0 0
        %6547 = vmatprep.subr.bf16.mxu0 0
        %6548 = vmatpush1.bf16.msra.mxu0 0
        %6549 = vmatprep.subr.bf16.mxu0 0
        %6550 = vmatpush1.bf16.msra.mxu0 0
        %6551 = vmatprep.subr.bf16.mxu0 0
        %6552 = vmatpush1.bf16.msra.mxu0 0
        %6553 = vmatprep.subr.bf16.mxu0 0
        %6554 = vmatpush1.bf16.msra.mxu0 0
        %6555 = vmatprep.subr.bf16.mxu0 0
        %6556 = vmatpush1.bf16.msra.mxu0 0
        %6557 = vmatprep.subr.bf16.mxu0 0
        %6558 = vmatpush1.bf16.msra.mxu0 0
        %6559 = vmatprep.subr.bf16.mxu0 0
        %6560 = vmatpush1.bf16.msra.mxu0 0
        %6561 = vmatprep.subr.bf16.mxu0 0
        %6562 = vmatpush1.bf16.msra.mxu0 0
        %6563 = vmatprep.mubr.bf16.mxu0 0
        %6564 = vmatmul.mubr.bf16.gmra.mrb[0].mxu0 %v6526
        %v6565 = vpop.f32.mrb[0].mxu0
        %v6566 = vadd.f32 0.0, %v6565
        %v6567 = vpop.f32.mrb[0].mxu0
        %v6568 = vpop.f32.mrb[0].mxu0
        %v6569 = vpop.f32.mrb[0].mxu0
        %6570 = vdwg.mxu0
        %v6571 = vpack.c.bf16 %v6244, %v6244
        %v6572 = vpack.c.bf16 %v6290, %v6290
        %v6573 = vpack.c.bf16 %v6336, %v6336
        %v6574 = vpack.c.bf16 %v6382, %v6382
        %v6575 = vpack.c.bf16 %v6428, %v6428
        %v6576 = vpack.c.bf16 %v6474, %v6474
        %v6577 = vpack.c.bf16 %v6520, %v6520
        %v6578 = vpack.c.bf16 %v6566, %v6566
        %s6579 = scalar_lea.vmem [#allocation8], 96
        %v6580 = vld [vmem:[%s6579] sm:$0xf]
        %v6581 = vld [vmem:[%s6579 + $0x4] sm:$0xf]
        %v6582 = vld [vmem:[%s6579 + $0x8] sm:$0xf]
        %v6583 = vld [vmem:[%s6579 + $0xc] sm:$0xf]
        %v6584 = vld [vmem:[%s6579 + $0x10] sm:$0xf]
        %v6585 = vld [vmem:[%s6579 + $0x14] sm:$0xf]
        %v6586 = vld [vmem:[%s6579 + $0x18] sm:$0xf]
        %v6587 = vld [vmem:[%s6579 + $0x1c] sm:$0xf]
        %s6588 = scalar_lea.vmem %s12, 3
        %v6589 = vld [vmem:[%s6588] sm:$0x1]
        %v6591 = vlaneseq
        %v6592 = vshrl.u32 %v6591, 7
        %v6593 = vsub.s32 0, %v6592
        %v6594 = vrot.slane %v6589, %v6593
        %v6604 = vcombine.low %v6571, %v6572
        %v6605 = vcombine.low %v6573, %v6574
        %v6606 = vcombine.low %v6575, %v6576
        %v6607 = vcombine.low %v6577, %v6578
        %v6609 = vunpack.c.l.s4 1966171168
        %v6610 = vunpack.c.0.s8 %v6609
        %v6611 = vlaneseq
        %v6612 = vshrl.u32 %v6611, 7
        %v6613 = vsub.s32 %v6610, %v6612
        %v6614 = vrot.slane %v6604, %v6613
        %v6616 = vunpack.c.l.s4 1966171168
        %v6617 = vunpack.c.0.s8 %v6616
        %v6618 = vlaneseq
        %v6619 = vshrl.u32 %v6618, 7
        %v6620 = vsub.s32 %v6617, %v6619
        %v6621 = vrot.slane %v6605, %v6620
        %v6623 = vunpack.c.l.s4 1966171168
        %v6624 = vunpack.c.0.s8 %v6623
        %v6625 = vlaneseq
        %v6626 = vshrl.u32 %v6625, 7
        %v6627 = vsub.s32 %v6624, %v6626
        %v6628 = vrot.slane %v6606, %v6627
        %v6630 = vunpack.c.l.s4 1966171168
        %v6631 = vunpack.c.0.s8 %v6630
        %v6632 = vlaneseq
        %v6633 = vshrl.u32 %v6632, 7
        %v6634 = vsub.s32 %v6631, %v6633
        %v6635 = vrot.slane %v6607, %v6634
        %v6636 = vcombine.low %v6614, %v6621
        %v6637 = vcombine.low %v6628, %v6635
        %v6639 = vunpack.c.l.s4 1966171168
        %v6640 = vunpack.c.0.s8 %v6639
        %v6641 = vlaneseq
        %v6642 = vshrl.u32 %v6641, 7
        %v6643 = vsub.s32 %v6640, %v6642
        %v6644 = vrot.slane %v6636, %v6643
        %v6646 = vunpack.c.l.s4 1966171168
        %v6647 = vunpack.c.0.s8 %v6646
        %v6648 = vlaneseq
        %v6649 = vshrl.u32 %v6648, 7
        %v6650 = vsub.s32 %v6647, %v6649
        %v6651 = vrot.slane %v6637, %v6650
        %v6652 = vcombine.low %v6644, %v6651
        %v6661 = vunpack.c.l.b16 %v6580
        %v6662 = vunpack.c.l.b16 %v6581
        %v6663 = vunpack.c.l.b16 %v6582
        %v6664 = vunpack.c.l.b16 %v6583
        %v6665 = vunpack.c.l.b16 %v6584
        %v6666 = vunpack.c.l.b16 %v6585
        %v6667 = vunpack.c.l.b16 %v6586
        %v6668 = vunpack.c.l.b16 %v6587
        %v6669 = vpack.c.b16 %v6662, %v6661
        %v6670 = vpack.c.b16 %v6664, %v6663
        %v6671 = vpack.c.b16 %v6666, %v6665
        %v6672 = vpack.c.b16 %v6668, %v6667
        %v6678 = vsel %vm743, %v6652, 0
        %6680 = vmatprep.subr.bf16.mxu0 0
        %6681 = vmatpush1.bf16.msra.mxu0 %v6669
        %6682 = vmatprep.subr.bf16.mxu0 0
        %6683 = vmatpush1.bf16.msra.mxu0 %v6670
        %6684 = vmatprep.subr.bf16.mxu0 0
        %6685 = vmatpush1.bf16.msra.mxu0 %v6671
        %6686 = vmatprep.subr.bf16.mxu0 0
        %6687 = vmatpush1.bf16.msra.mxu0 %v6672
        %6688 = vmatprep.subr.bf16.mxu0 0
        %6689 = vmatpush1.bf16.msra.mxu0 0
        %6690 = vmatprep.subr.bf16.mxu0 0
        %6691 = vmatpush1.bf16.msra.mxu0 0
        %6692 = vmatprep.subr.bf16.mxu0 0
        %6693 = vmatpush1.bf16.msra.mxu0 0
        %6694 = vmatprep.subr.bf16.mxu0 0
        %6695 = vmatpush1.bf16.msra.mxu0 0
        %6696 = vmatprep.subr.bf16.mxu0 0
        %6697 = vmatpush1.bf16.msra.mxu0 0
        %6698 = vmatprep.subr.bf16.mxu0 0
        %6699 = vmatpush1.bf16.msra.mxu0 0
        %6700 = vmatprep.subr.bf16.mxu0 0
        %6701 = vmatpush1.bf16.msra.mxu0 0
        %6702 = vmatprep.subr.bf16.mxu0 0
        %6703 = vmatpush1.bf16.msra.mxu0 0
        %6704 = vmatprep.subr.bf16.mxu0 0
        %6705 = vmatpush1.bf16.msra.mxu0 0
        %6706 = vmatprep.subr.bf16.mxu0 0
        %6707 = vmatpush1.bf16.msra.mxu0 0
        %6708 = vmatprep.subr.bf16.mxu0 0
        %6709 = vmatpush1.bf16.msra.mxu0 0
        %6710 = vmatprep.subr.bf16.mxu0 0
        %6711 = vmatpush1.bf16.msra.mxu0 0
        %6712 = vmatprep.mubr.bf16.mxu0 0
        %6713 = vmatmul.mubr.bf16.gmra.mrb[0].mxu0 %v6678
        %v6714 = vpop.f32.mrb[0].mxu0
        %v6715 = vadd.f32 %v6594, %v6714
        %v6716 = vpop.f32.mrb[0].mxu0
        %v6717 = vpop.f32.mrb[0].mxu0
        %v6718 = vadd.f32 %v6594, %v6717
        %v6719 = vpop.f32.mrb[0].mxu0
        %6720 = vdwg.mxu0
        %v6721 = vpack.c.bf16 %v6718, %v6715
        %s6722 = scalar_lea.vmem [#allocation10], 192
        %v6723 = vld [vmem:[%s6722] sm:$0xff]
        %v6724 = vld [vmem:[%s6722 + $0x8] sm:$0xff]
        %v6725 = vld [vmem:[%s6722 + $0x10] sm:$0xff]
        %v6726 = vld [vmem:[%s6722 + $0x18] sm:$0xff]
        %v6727 = vld [vmem:[%s6722 + $0x20] sm:$0xff]
        %v6728 = vld [vmem:[%s6722 + $0x28] sm:$0xff]
        %v6729 = vld [vmem:[%s6722 + $0x30] sm:$0xff]
        %v6730 = vld [vmem:[%s6722 + $0x38] sm:$0xff]
        %v6739 = vunpack.c.l.b16 %v6723
        %v6740 = vunpack.c.h.b16 %v6723
        %v6741 = vunpack.c.l.b16 %v6724
        %v6742 = vunpack.c.h.b16 %v6724
        %v6743 = vunpack.c.l.b16 %v6725
        %v6744 = vunpack.c.h.b16 %v6725
        %v6745 = vunpack.c.l.b16 %v6726
        %v6746 = vunpack.c.h.b16 %v6726
        %v6747 = vunpack.c.l.b16 %v6727
        %v6748 = vunpack.c.h.b16 %v6727
        %v6749 = vunpack.c.l.b16 %v6728
        %v6750 = vunpack.c.h.b16 %v6728
        %v6751 = vunpack.c.l.b16 %v6729
        %v6752 = vunpack.c.h.b16 %v6729
        %v6753 = vunpack.c.l.b16 %v6730
        %v6754 = vunpack.c.h.b16 %v6730
        %v6755 = vpack.c.b16 %v6741, %v6739
        %v6756 = vpack.c.b16 %v6742, %v6740
        %v6757 = vpack.c.b16 %v6745, %v6743
        %v6758 = vpack.c.b16 %v6746, %v6744
        %v6759 = vpack.c.b16 %v6749, %v6747
        %v6760 = vpack.c.b16 %v6750, %v6748
        %v6761 = vpack.c.b16 %v6753, %v6751
        %v6762 = vpack.c.b16 %v6754, %v6752
        %v6772 = vsel %vm743, %v6721, 0
        %6774 = vmatprep.subr.bf16.mxu0 %v6756
        %6775 = vmatpush1.bf16.msra.mxu0 %v6755
        %6776 = vmatprep.subr.bf16.mxu0 %v6758
        %6777 = vmatpush1.bf16.msra.mxu0 %v6757
        %6778 = vmatprep.subr.bf16.mxu0 %v6760
        %6779 = vmatpush1.bf16.msra.mxu0 %v6759
        %6780 = vmatprep.subr.bf16.mxu0 %v6762
        %6781 = vmatpush1.bf16.msra.mxu0 %v6761
        %6782 = vmatprep.subr.bf16.mxu0 0
        %6783 = vmatpush1.bf16.msra.mxu0 0
        %6784 = vmatprep.subr.bf16.mxu0 0
        %6785 = vmatpush1.bf16.msra.mxu0 0
        %6786 = vmatprep.subr.bf16.mxu0 0
        %6787 = vmatpush1.bf16.msra.mxu0 0
        %6788 = vmatprep.subr.bf16.mxu0 0
        %6789 = vmatpush1.bf16.msra.mxu0 0
        %6790 = vmatprep.subr.bf16.mxu0 0
        %6791 = vmatpush1.bf16.msra.mxu0 0
        %6792 = vmatprep.subr.bf16.mxu0 0
        %6793 = vmatpush1.bf16.msra.mxu0 0
        %6794 = vmatprep.subr.bf16.mxu0 0
        %6795 = vmatpush1.bf16.msra.mxu0 0
        %6796 = vmatprep.subr.bf16.mxu0 0
        %6797 = vmatpush1.bf16.msra.mxu0 0
        %6798 = vmatprep.subr.bf16.mxu0 0
        %6799 = vmatpush1.bf16.msra.mxu0 0
        %6800 = vmatprep.subr.bf16.mxu0 0
        %6801 = vmatpush1.bf16.msra.mxu0 0
        %6802 = vmatprep.subr.bf16.mxu0 0
        %6803 = vmatpush1.bf16.msra.mxu0 0
        %6804 = vmatprep.subr.bf16.mxu0 0
        %6805 = vmatpush1.bf16.msra.mxu0 0
        %6806 = vmatprep.mubr.bf16.mxu0 0
        %6807 = vmatmul.mubr.bf16.gmra.mrb[0].mxu0 %v6772
        %v6808 = vpop.f32.mrb[0].mxu0
        %v6809 = vadd.f32 0.0, %v6808
        %v6810 = vpop.f32.mrb[0].mxu0
        %v6811 = vadd.f32 0.0, %v6810
        %v6812 = vpop.f32.mrb[0].mxu0
        %v6813 = vadd.f32 0.0, %v6812
        %v6814 = vpop.f32.mrb[0].mxu0
        %v6815 = vadd.f32 0.0, %v6814
        %6816 = vdwg.mxu0
        %v6817 = vadd.f32 %v5336, %v6809
        %v6818 = vadd.f32 %v5337, %v6811
        %v6819 = vadd.f32 %v5338, %v6813
        %v6820 = vadd.f32 %v5339, %v6815
        %v6821 = vld [vmem:[%s14] sm:$0x3]
        %v6823 = vlaneseq
        %v6824 = vshrl.u32 %v6823, 7
        %v6825 = vsub.s32 0, %v6824
        %v6826 = vrot.slane %v6821, %v6825
        %v6827 = vlaneseq
        %v6828 = vshrl.u32 %v6827, 7
        %v6829 = vsub.s32 1, %v6828
        %v6830 = vrot.slane %v6821, %v6829
        %v6833 = vadd.f32 %v6817, %v6826
        %v6834 = vadd.f32 %v6818, %v6830
        %v6835 = vadd.f32 %v6819, %v6826
        %v6836 = vadd.f32 %v6820, %v6830
        %vm6837 = vcmp.ge.f32.partialorder %v6833, 0.0
        %vm6838 = vcmp.ge.f32.partialorder %v6834, 0.0
        %vm6839 = vcmp.ge.f32.partialorder %v6835, 0.0
        %vm6840 = vcmp.ge.f32.partialorder %v6836, 0.0
        %v6841 = vmul.f32 %v6833, 0.2
        %v6842 = vmul.f32 %v6834, 0.2
        %v6843 = vmul.f32 %v6835, 0.2
        %v6844 = vmul.f32 %v6836, 0.2
        %v6845 = vsel %vm6837, %v6833, %v6841
        %v6846 = vsel %vm6838, %v6834, %v6842
        %v6847 = vsel %vm6839, %v6835, %v6843
        %v6848 = vsel %vm6840, %v6836, %v6844
        %v6853 = vcombine.low %v6845, %v6846
        %v6854 = vcombine.high %v6845, %v6846
        %v6856 = vunpack.c.l.s4 1983009808
        %v6857 = vunpack.c.0.s8 %v6856
        %v6858 = vlaneseq
        %v6859 = vshrl.u32 %v6858, 7
        %v6860 = vsub.s32 %v6857, %v6859
        %v6861 = vrot.slane %v6853, %v6860
        %v6863 = vunpack.c.l.s4 1983009808
        %v6864 = vunpack.c.0.s8 %v6863
        %v6865 = vlaneseq
        %v6866 = vshrl.u32 %v6865, 7
        %v6867 = vsub.s32 %v6864, %v6866
        %v6868 = vrot.slane %v6854, %v6867
        %v6869 = vcombine.high %v6861, %v6861
        %v6870 = vcombine.high %v6868, %v6868
        %v6871 = vcombine.low %v6847, %v6848
        %v6872 = vcombine.high %v6847, %v6848
        %v6874 = vunpack.c.l.s4 1983009808
        %v6875 = vunpack.c.0.s8 %v6874
        %v6876 = vlaneseq
        %v6877 = vshrl.u32 %v6876, 7
        %v6878 = vsub.s32 %v6875, %v6877
        %v6879 = vrot.slane %v6871, %v6878
        %v6881 = vunpack.c.l.s4 1983009808
        %v6882 = vunpack.c.0.s8 %v6881
        %v6883 = vlaneseq
        %v6884 = vshrl.u32 %v6883, 7
        %v6885 = vsub.s32 %v6882, %v6884
        %v6886 = vrot.slane %v6872, %v6885
        %v6887 = vcombine.high %v6879, %v6879
        %v6888 = vcombine.high %v6886, %v6886
        %vm6897 = vcmask 1043458
        %vm6898 = vmor %vm6897, %vm654
        %v6899 = vsel %vm6898, %v6861, -inf
        %v6900 = vsel %vm6898, %v6869, -inf
        %v6901 = vsel %vm6898, %v6868, -inf
        %v6902 = vsel %vm6898, %v6870, -inf
        %v6903 = vsel %vm6898, %v6879, -inf
        %v6904 = vmax.f32 %v6899, %v6903
        %v6905 = vsel %vm6898, %v6887, -inf
        %v6906 = vmax.f32 %v6900, %v6905
        %v6907 = vsel %vm6898, %v6886, -inf
        %v6908 = vmax.f32 %v6901, %v6907
        %v6909 = vsel %vm6898, %v6888, -inf
        %v6910 = vmax.f32 %v6902, %v6909
        %v6911 = vmax.f32 %v6904, %v6906
        %v6912 = vmax.f32 %v6908, %v6910
        %v6913 = vmax.f32 %v6911, %v6912
        %p6914 = scmp.eq.s32.totalorder %s34, 0
        // Predicated region
        $region142: #{_pct_forward.1} parent=116 // pred_check
          %p6915 = pneg %p6914
        $region143: #{_pct_forward.1} parent=116 // pred_check_branch
          %6917 = sbr.rel (%p6915) target = $region145
        $region144: #{_pct_forward.1} parent=116 // pred_region
          %6918 = vst [vmem:[%s632] sm:$0xf] %v6913
        $region145: #{_pct_forward.1} parent=116 // pred_fallthru
          _
        %p6919 = scmp.gt.s32.totalorder %s34, 0
        // Predicated region
        $region146: #{_pct_forward.1} parent=116 // pred_check
          %p6920 = pneg %p6919
        $region147: #{_pct_forward.1} parent=116 // pred_check_branch
          %6922 = sbr.rel (%p6920) target = $region149
        $region148: #{_pct_forward.1} parent=116 // pred_region
          %v6923 = vld [vmem:[%s632] sm:$0xf]
          %v6924 = vmax.f32 %v6923, %v6913
          %6925 = vst [vmem:[%s632] sm:$0xf] %v6924
        $region149: #{_pct_forward.1} parent=116 // pred_fallthru
          _
        %p6926 = scmp.lt.s32.totalorder %s33, 0
        %s6927 = scalar_select %p6926, %s33, 0
        %s6928 = smul.addr %s6927, 2
        %s6929 = smul.addr %s6928, 2
        %s6930 = scalar_lea.vmem %s15, %s6929
        // Predicated region
        $region150: #{_pct_forward.1} parent=116 // pred_check
          %p6931 = pneg %p383
        $region151: #{_pct_forward.1} parent=116 // pred_check_branch
          %6933 = sbr.rel (%p6931) target = $region153
        $region152: #{_pct_forward.1} parent=116 // pred_region
          _
        $region153: #{_pct_forward.1} parent=116 // pred_fallthru
          _
        // Predicated region
        $region154: #{_pct_forward.1} parent=116 // pred_check
          %p6934 = pneg %p383
        $region155: #{_pct_forward.1} parent=116 // pred_check_branch
          %6936 = sbr.rel (%p6934) target = $region157
        $region156: #{_pct_forward.1} parent=116 // pred_region
          %p6937 = scmp.lt.s32.totalorder %s33, 0
          %s6938 = scalar_select %p6937, %s33, 0
          %s6939 = smul.addr %s6938, 2
          %s6940 = smul.addr %s6939, 2
          %s6941 = scalar_lea.vmem %s15, %s6940
        $region157: #{_pct_forward.1} parent=116 // pred_fallthru
          _
      $region117: #{_pct_forward.1} parent=5 // pred_fallthru
        _
      %p6942 = scmp.le.s32.totalorder 2, %s24
      // Predicated region
      $region158: #{_pct_forward.1} parent=5 // pred_check
        %p6943 = pneg %p6942
      $region159: #{_pct_forward.1} parent=5 // pred_check_branch
        %6945 = sbr.rel (%p6943) target = $region161
      $region160: #{_pct_forward.1} parent=5 // pred_region
        %s6946 = ssub.s32 %s24, 2
      $region161: #{_pct_forward.1} parent=5 // pred_fallthru
        _
    $region6: #{_pct_forward.1} parent=1 // loop_footer
      %s28 = sadd.s32 1, %s24
    $region7: #{_pct_forward.1} parent=1 // loop_footer_branch
      %23 = sbr.rel target = $region3
    $region8: #{_pct_forward.1} parent=1 // loop_exit
      _
    %6947 = vsyncpa [#allocation4], 1
    %s6948 = scalar_lea.sflag [#allocation4], 1
    %6949 = vsyncpa %s6948, 1
    %6950 = vsyncpa [#allocation6], 1
    %6951 = vsyncpa [#allocation9], 1

</llo_original>
